<compile_context>
chip_gen: v7x
topology: tpu7x:2x2x1
jax: 0.10.0
libtpu: 0.0.40
codegen_flags: <defaults>
</compile_context>

<pallas_src>
import jax
import jax.numpy as jnp
from jax import lax
from jax.experimental import pallas as pl
from jax.experimental.pallas import tpu as pltpu


# (cin, cout, dilation) for the four conv blocks of the 'MultiScale2w' net.
_LAYERS = [(4, 16, 1), (16, 32, 2), (32, 64, 4), (64, 1, 1)]
_PAD = 4      # spatial halo = max dilation across layers
_CP = 128     # channel padding -> lane-dense (128-lane) tiles / MXU K blocks


# ------------------------------ Pallas kernel --------------------------------

def _make_mest_kernel(H, W):
    """Whole 4-layer conv-BN-LeakyReLU (+Sigmoid) net for one batch element."""
    P, CP = _PAD, _CP
    Hp, Wp = H + 2 * P, W + 2 * P
    N = Hp * Wp          # flattened padded spatial size (rows of the activation slab)
    M = H * Wp           # rows of each layer's full-width output slab
    HALO = P * Wp        # rows in one top/bottom spatial-halo band
    L = len(_LAYERS)

    def kernel(ctx_ref, w_ref, b_ref, o_ref, buf_ref):
        # -- per-batch-element init -------------------------------------------------
        # Top/bottom spatial-halo bands of the activation buffer must be zero (they are
        # never overwritten by the layer stores).  W-halo columns are re-zeroed by the
        # interior mask at every layer store.
        zband = jnp.zeros((HALO, CP), jnp.bfloat16)
        buf_ref[pl.ds(0, HALO), :] = zband
        buf_ref[pl.ds(HALO + M, HALO), :] = zband

        # Hoisted interior-column mask: 1.0 on real columns, 0.0 on the W halo.
        col = lax.broadcasted_iota(jnp.int32, (H, Wp, CP), 1)
        interior = ((col >= P) & (col < P + W)).astype(jnp.float32).reshape(M, CP)

        src_ref = ctx_ref
        for l, (_, _, d) in enumerate(_LAYERS):
            # Load the whole flattened padded activation slab once per layer (bf16 in VMEM).
            src = src_ref[...].astype(jnp.float32)                    # (N, CP)

            # kx shift of the 3x3 taps as a flat sublane rotation of the whole slab (XLU);
            # any wrap-around / row-spill garbage only reaches masked W-halo output rows.
            rolled = []
            for kx in range(3):
                sh = (-(kx - 1) * d) % N
                rolled.append(pltpu.roll(src, sh, 0) if sh else src)

            # ky shift = aligned static row offset.  Concatenate the 9 taps along the MXU
            # contraction axis so the whole dilated conv is ONE matmul (K = 9*128) and the
            # tap accumulation stays inside the MXU result path (no VMEM accumulator).
            pieces = []
            for ky in range(3):
                r0 = (P + (ky - 1) * d) * Wp
                for kx in range(3):
                    pieces.append(rolled[kx][r0:r0 + M, :].astype(jnp.bfloat16))
            lhs = jnp.concatenate(pieces, axis=1)                     # (M, 9*CP) bf16

            y = jnp.dot(lhs, w_ref[l], preferred_element_type=jnp.float32)  # (M, CP) f32
            y = y + b_ref[l]                                          # folded-BN bias
            y = jnp.where(y >= 0.0, y, 0.1 * y)                       # LeakyReLU(0.1)

            if l < L - 1:
                # Zero the W-halo columns and store this layer's output (bf16, aligned).
                buf_ref[pl.ds(HALO, M), :] = (y * interior).astype(jnp.bfloat16)
                src_ref = buf_ref
            else:
                # Last layer: only output channel 0 is real (weight/bias columns 1..127 are
                # exact zeros), so the lane reduction equals channel 0 exactly.
                s = jnp.sum(y.reshape(H, Wp, CP), axis=-1)            # (H, Wp)
                s = s[:, P:P + W]                                     # drop W halo -> (H, W)
                o_ref[...] = pl.reciprocal(1.0 + jnp.exp(-s), approx=True)   # Sigmoid

    return kernel


def _vmem_limit_bytes(H, W):
    """Scoped-VMEM request derived from the actual block / scratch / temporary sizes."""
    P, CP, L = _PAD, _CP, len(_LAYERS)
    Hp, Wp = H + 2 * P, W + 2 * P
    N, M = Hp * Wp, H * Wp
    blocks = (2 * N * CP * 2            # context block (bf16, double-buffered)
              + 2 * L * 9 * CP * CP * 2  # resident weight stack (bf16)
              + 2 * L * CP * 4           # biases
              + 2 * H * W * 4)           # output block
    scratch = N * CP * 2                 # bf16 activation slab
    temps = (3 * N * CP * 4              # f32 src + rolled copies
             + 2 * M * 9 * CP * 2        # concatenated LHS (bf16) + slack
             + 3 * M * CP * 4)           # f32 matmul result / epilogue temporaries
    est = blocks + scratch + temps
    return int(min(max(2 * est, 32 * 1024 * 1024), 56 * 1024 * 1024))


def _mest_net_pallas(context_nchw, w_stack, b_stack):
    """Run the fused M-estimator net. context: (B, 4, H, W) -> weights (B, 1, H, W)."""
    B, D, H, W = context_nchw.shape
    P, CP, L = _PAD, _CP, len(_LAYERS)
    Hp, Wp = H + 2 * P, W + 2 * P
    N = Hp * Wp

    # NCHW -> NHWC, zero spatial halo of P, zero-pad channels, flatten spatial dims, bf16.
    x = jnp.transpose(context_nchw, (0, 2, 3, 1))
    xp = jnp.pad(x, ((0, 0), (P, P), (P, P), (0, CP - D))).astype(jnp.bfloat16)
    xf = xp.reshape(B, N, CP)

    out = pl.pallas_call(
        _make_mest_kernel(H, W),
        out_shape=jax.ShapeDtypeStruct((B, H, W), jnp.float32),
        grid=(B,),
        in_specs=[
            pl.BlockSpec((None, N, CP), lambda b: (b, 0, 0)),        # padded context (bf16)
            pl.BlockSpec((L, 9 * CP, CP), lambda b: (0, 0, 0)),      # resident weights
            pl.BlockSpec((L, 1, CP), lambda b: (0, 0, 0)),           # resident biases
        ],
        out_specs=pl.BlockSpec((None, H, W), lambda b: (b, 0, 0)),   # compact 1-channel map
        scratch_shapes=[
            pltpu.VMEM((N, CP), jnp.bfloat16),                       # activation slab
        ],
        compiler_params=pltpu.CompilerParams(
            dimension_semantics=("parallel",),
            vmem_limit_bytes=_vmem_limit_bytes(H, W)),
    )(xf, w_stack, b_stack)

    return out[:, None, :, :]                                        # (B, 1, H, W)


# --------------------------- params / host-side packing -----------------------

def init_params(key):
    """Synthetic conv + BatchNorm(inference) params for the 4 conv blocks."""
    params = []
    for (cin, cout, d) in _LAYERS:
        key, kw, kg, kb, km, kv = jax.random.split(key, 6)
        w = jax.random.normal(kw, (cout, cin, 3, 3), jnp.float32) * jnp.sqrt(2.0 / (cin * 9))
        gamma = 1.0 + 0.2 * jax.random.normal(kg, (cout,), jnp.float32)
        beta = 0.1 * jax.random.normal(kb, (cout,), jnp.float32)
        rmean = 0.1 * jax.random.normal(km, (cout,), jnp.float32)
        rvar = 1.0 + 0.2 * jax.random.uniform(kv, (cout,), jnp.float32)
        scale = gamma / jnp.sqrt(rvar + 1e-5)          # folded BN (inference mode)
        bias = beta - rmean * scale
        params.append((w, scale, bias, d))
    return params


def pack_params(params):
    """Fold BN scale into the weights, K-stack the 9 taps, pad channels to 128, cast bf16."""
    w_blocks, b_rows = [], []
    for (w, scale, bias, _) in params:
        cout, cin = w.shape[0], w.shape[1]
        wf = w * scale[:, None, None, None]                          # fold BN scale
        wm = jnp.transpose(wf, (2, 3, 1, 0)).reshape(9, cin, cout)   # (tap, cin, cout)
        wm = jnp.pad(wm, ((0, 0), (0, _CP - cin), (0, _CP - cout)))
        w_blocks.append(wm.reshape(9 * _CP, _CP))                    # K-stacked taps
        b_rows.append(jnp.pad(bias, (0, _CP - cout)))
    w_stack = jnp.stack(w_blocks, axis=0).astype(jnp.bfloat16)       # (4, 1152, 128)
    b_stack = jnp.stack(b_rows, axis=0)[:, None, :].astype(jnp.float32)  # (4, 1, 128)
    return w_stack, b_stack


# ------------------------------- module forward -------------------------------

def _interp_matrix(out_size, in_size):
    if in_size == 1:
        return jnp.ones((out_size, 1), jnp.float32)
    if out_size == 1:
        src = jnp.zeros((1,), jnp.float32)
    else:
        src = jnp.arange(out_size, dtype=jnp.float32) * ((in_size - 1.0) / (out_size - 1.0))
    i0 = jnp.clip(jnp.floor(src).astype(jnp.int32), 0, in_size - 2)
    frac = src - i0.astype(jnp.float32)
    return (jax.nn.one_hot(i0, in_size, dtype=jnp.float32) * (1.0 - frac)[:, None]
            + jax.nn.one_hot(i0 + 1, in_size, dtype=jnp.float32) * frac[:, None])


def _bilinear_align_corners(x, H, W):
    """F.interpolate(x, (H, W), mode='bilinear', align_corners=True) for (B, C, h, w)."""
    Ly = _interp_matrix(H, x.shape[2])
    Lx = _interp_matrix(W, x.shape[3])
    return jnp.einsum('yi,bcij,xj->bcyx', Ly, x, Lx, precision=lax.Precision.HIGHEST)


def constant_weight(residual):
    """estimator_type='None' branch: constant (least-squares) weighting."""
    return jnp.ones_like(residual)


def deep_robust_estimator_forward(residual, x0, x1, ws, w_stack, b_stack):
    """'MultiScale2w' (D=4) branch of DeepRobustEstimator.forward."""
    _, _, H, W = residual.shape
    wl = _bilinear_align_corners(ws, H, W)
    context = jnp.concatenate([jnp.abs(residual), x0, x1, wl], axis=1)   # (B, 4, H, W)
    return _mest_net_pallas(context, w_stack, b_stack)


# ------------------------------ pure-JAX reference ----------------------------

def _ref_forward(residual, x0, x1, ws, params):
    _, _, H, W = residual.shape
    wl = _bilinear_align_corners(ws, H, W)
    x = jnp.concatenate([jnp.abs(residual), x0, x1, wl], axis=1)
    for (w, scale, bias, d) in params:
        y = lax.conv_general_dilated(
            x, w, window_strides=(1, 1), padding=((d, d), (d, d)),
            rhs_dilation=(d, d), dimension_numbers=("NCHW", "OIHW", "NCHW"),
            precision=lax.Precision.HIGHEST)
        y = y * scale[None, :, None, None] + bias[None, :, None, None]
        x = jnp.where(y >= 0.0, y, 0.1 * y)
    return 1.0 / (1.0 + jnp.exp(-x))


# ----------------------------------- main --------------------------------------

if __name__ == "__main__":
    B, H, W = 2, 16, 16
    hs, wsw = 8, 8
    key = jax.random.PRNGKey(0)
    k1, k2, k3, k4, kp = jax.random.split(key, 5)
    residual = jax.random.normal(k1, (B, 1, H, W), jnp.float32)
    x0 = jax.random.normal(k2, (B, 1, H, W), jnp.float32)
    x1 = jax.random.normal(k3, (B, 1, H, W), jnp.float32)
    ws = jax.random.normal(k4, (B, 1, hs, wsw), jnp.float32)
    params = init_params(kp)

    # weight packing hoisted out of the jitted forward (done once).
    w_stack, b_stack = pack_params(params)
    w_stack = jax.block_until_ready(w_stack)

    fwd = jax.jit(deep_robust_estimator_forward)
    out = jax.block_until_ready(fwd(residual, x0, x1, ws, w_stack, b_stack))

    ref = _ref_forward(residual, x0, x1, ws, params)
    assert out.shape == (B, 1, H, W), out.shape
    assert bool(jnp.all(jnp.isfinite(out)))
    err = float(jnp.max(jnp.abs(out - ref)))
    # tolerance covers bf16 MXU operands + approx reciprocal vs HIGHEST-precision XLA reference
    assert err < 5e-2, err

    print("KERNEL_OK")
</pallas_src>

<mosaic_0001>
module attributes {stable_mosaic.version = 11 : i64} {
  func.func @kernel(%arg0: i32, %arg1: memref<1x576x128xbf16, #tpu.memory_space<vmem>>, %arg2: memref<4x1152x128xbf16, #tpu.memory_space<vmem>>, %arg3: memref<4x1x128xf32, #tpu.memory_space<vmem>>, %arg4: memref<1x16x16xf32, #tpu.memory_space<vmem>>, %arg5: memref<576x128xbf16, #tpu.memory_space<vmem>>) attributes {dimension_semantics = [#tpu.dimension_semantics<parallel>], iteration_bounds = array<i64: 2>, scalar_prefetch = 0 : i64, scratch_operands = 1 : i64, tpu.core_type = #tpu.core_type<tc>, window_params = [{transform_indices = @transform_0, window_bounds = array<i64: 1, 576, 128>}, {pipeline_mode = #tpu.pipeline_mode<synchronous>, transform_indices = @transform_1, window_bounds = array<i64: 4, 1152, 128>}, {pipeline_mode = #tpu.pipeline_mode<synchronous>, transform_indices = @transform_2, window_bounds = array<i64: 4, 1, 128>}, {transform_indices = @transform_3, window_bounds = array<i64: 1, 16, 16>}]} {
    %cst = arith.constant 0.000000e+00 : bf16
    %0 = vector.broadcast %cst : bf16 to vector<96x128xbf16>
    %c0 = arith.constant 0 : index
    %c0_0 = arith.constant 0 : index
    %1 = vector.load %arg5[%c0, %c0_0] : memref<576x128xbf16, #tpu.memory_space<vmem>>, vector<96x128xbf16>
    tpu.vector_store %arg5[%c0, %c0_0], %0 {strides = array<i32>} : memref<576x128xbf16, #tpu.memory_space<vmem>>, vector<96x128xbf16>,
    %c480 = arith.constant 480 : index
    %c0_1 = arith.constant 0 : index
    %2 = vector.load %arg5[%c480, %c0_1] : memref<576x128xbf16, #tpu.memory_space<vmem>>, vector<96x128xbf16>
    tpu.vector_store %arg5[%c480, %c0_1], %0 {strides = array<i32>} : memref<576x128xbf16, #tpu.memory_space<vmem>>, vector<96x128xbf16>,
    %3 = tpu.iota {dimensions = array<i32: 1>} : vector<16x24x128xi32>
    %c4_i32 = arith.constant 4 : i32
    %4 = vector.broadcast %c4_i32 : i32 to vector<16x24x128xi32>
    %5 = arith.cmpi sge, %3, %4 : vector<16x24x128xi32>
    %c20_i32 = arith.constant 20 : i32
    %6 = vector.broadcast %c20_i32 : i32 to vector<16x24x128xi32>
    %7 = arith.cmpi slt, %3, %6 : vector<16x24x128xi32>
    %8 = arith.andi %5, %7 : vector<16x24x128xi1>
    %9 = arith.extui %8 : vector<16x24x128xi1> to vector<16x24x128xi32>
    %10 = arith.sitofp %9 : vector<16x24x128xi32> to vector<16x24x128xf32>
    %11 = vector.shape_cast %10 : vector<16x24x128xf32> to vector<384x128xf32>
    %c0_2 = arith.constant 0 : index
    %c0_3 = arith.constant 0 : index
    %c0_4 = arith.constant 0 : index
    %12 = vector.load %arg1[%c0_2, %c0_3, %c0_4] : memref<1x576x128xbf16, #tpu.memory_space<vmem>>, vector<1x576x128xbf16>
    %13 = vector.shape_cast %12 : vector<1x576x128xbf16> to vector<576x128xbf16>
    %14 = arith.extf %13 : vector<576x128xbf16> to vector<576x128xf32>
    %c1_i32 = arith.constant 1 : i32
    %15 = tpu.dynamic_rotate %14 by %c1_i32 dim 0 : vector<576x128xf32>, i32 -> vector<576x128xf32>
    %c575_i32 = arith.constant 575 : i32
    %16 = tpu.dynamic_rotate %14 by %c575_i32 dim 0 : vector<576x128xf32>, i32 -> vector<576x128xf32>
    %17 = vector.extract_strided_slice %15 {offsets = [72, 0], sizes = [384, 128], strides = [1, 1]} : vector<576x128xf32> to vector<384x128xf32>
    %18 = arith.truncf %17 : vector<384x128xf32> to vector<384x128xbf16>
    %19 = vector.extract_strided_slice %14 {offsets = [72, 0], sizes = [384, 128], strides = [1, 1]} : vector<576x128xf32> to vector<384x128xf32>
    %20 = arith.truncf %19 : vector<384x128xf32> to vector<384x128xbf16>
    %21 = vector.extract_strided_slice %16 {offsets = [72, 0], sizes = [384, 128], strides = [1, 1]} : vector<576x128xf32> to vector<384x128xf32>
    %22 = arith.truncf %21 : vector<384x128xf32> to vector<384x128xbf16>
    %23 = vector.extract_strided_slice %15 {offsets = [96, 0], sizes = [384, 128], strides = [1, 1]} : vector<576x128xf32> to vector<384x128xf32>
    %24 = arith.truncf %23 : vector<384x128xf32> to vector<384x128xbf16>
    %25 = vector.extract_strided_slice %14 {offsets = [96, 0], sizes = [384, 128], strides = [1, 1]} : vector<576x128xf32> to vector<384x128xf32>
    %26 = arith.truncf %25 : vector<384x128xf32> to vector<384x128xbf16>
    %27 = vector.extract_strided_slice %16 {offsets = [96, 0], sizes = [384, 128], strides = [1, 1]} : vector<576x128xf32> to vector<384x128xf32>
    %28 = arith.truncf %27 : vector<384x128xf32> to vector<384x128xbf16>
    %29 = vector.extract_strided_slice %15 {offsets = [120, 0], sizes = [384, 128], strides = [1, 1]} : vector<576x128xf32> to vector<384x128xf32>
    %30 = arith.truncf %29 : vector<384x128xf32> to vector<384x128xbf16>
    %31 = vector.extract_strided_slice %14 {offsets = [120, 0], sizes = [384, 128], strides = [1, 1]} : vector<576x128xf32> to vector<384x128xf32>
    %32 = arith.truncf %31 : vector<384x128xf32> to vector<384x128xbf16>
    %33 = vector.extract_strided_slice %16 {offsets = [120, 0], sizes = [384, 128], strides = [1, 1]} : vector<576x128xf32> to vector<384x128xf32>
    %34 = arith.truncf %33 : vector<384x128xf32> to vector<384x128xbf16>
    %35 = tpu.concatenate %18, %20, %22, %24, %26, %28, %30, %32, %34 in 1 : vector<384x128xbf16>, vector<384x128xbf16>, vector<384x128xbf16>, vector<384x128xbf16>, vector<384x128xbf16>, vector<384x128xbf16>, vector<384x128xbf16>, vector<384x128xbf16>, vector<384x128xbf16> -> vector<384x1152xbf16>
    %c0_5 = arith.constant 0 : index
    %c0_6 = arith.constant 0 : index
    %c0_7 = arith.constant 0 : index
    %36 = vector.load %arg2[%c0_5, %c0_6, %c0_7] : memref<4x1152x128xbf16, #tpu.memory_space<vmem>>, vector<1x1152x128xbf16>
    %37 = vector.shape_cast %36 : vector<1x1152x128xbf16> to vector<1152x128xbf16>
    %cst_8 = arith.constant dense<0.000000e+00> : vector<384x128xf32>
    %38 = tpu.matmul %35, %37, %cst_8 {dimension_numbers = #tpu.dot_dimension_numbers<[1], [0], [0], [1], [0, 0, 1, 1], [], []>} : vector<384x1152xbf16>, vector<1152x128xbf16>, vector<384x128xf32> -> vector<384x128xf32>
    %c0_9 = arith.constant 0 : index
    %c0_10 = arith.constant 0 : index
    %c0_11 = arith.constant 0 : index
    %39 = vector.load %arg3[%c0_9, %c0_10, %c0_11] : memref<4x1x128xf32, #tpu.memory_space<vmem>>, vector<1x1x128xf32>
    %40 = vector.shape_cast %39 : vector<1x1x128xf32> to vector<1x128xf32>
    %41 = vector.broadcast %40 : vector<1x128xf32> to vector<384x128xf32>
    %42 = arith.addf %38, %41 : vector<384x128xf32>
    %cst_12 = arith.constant 0.000000e+00 : f32
    %43 = vector.broadcast %cst_12 : f32 to vector<384x128xf32>
    %44 = arith.cmpf oge, %42, %43 : vector<384x128xf32>
    %cst_13 = arith.constant 1.000000e-01 : f32
    %45 = vector.broadcast %cst_13 : f32 to vector<384x128xf32>
    %46 = arith.mulf %45, %42 : vector<384x128xf32>
    %47 = arith.select %44, %42, %46 : vector<384x128xi1>, vector<384x128xf32>
    %48 = arith.mulf %47, %11 : vector<384x128xf32>
    %49 = arith.truncf %48 : vector<384x128xf32> to vector<384x128xbf16>
    %c96 = arith.constant 96 : index
    %c0_14 = arith.constant 0 : index
    %50 = vector.load %arg5[%c96, %c0_14] : memref<576x128xbf16, #tpu.memory_space<vmem>>, vector<384x128xbf16>
    tpu.vector_store %arg5[%c96, %c0_14], %49 {strides = array<i32>} : memref<576x128xbf16, #tpu.memory_space<vmem>>, vector<384x128xbf16>,
    %c0_15 = arith.constant 0 : index
    %c0_16 = arith.constant 0 : index
    %51 = vector.load %arg5[%c0_15, %c0_16] : memref<576x128xbf16, #tpu.memory_space<vmem>>, vector<576x128xbf16>
    %52 = arith.extf %51 : vector<576x128xbf16> to vector<576x128xf32>
    %c2_i32 = arith.constant 2 : i32
    %53 = tpu.dynamic_rotate %52 by %c2_i32 dim 0 : vector<576x128xf32>, i32 -> vector<576x128xf32>
    %c574_i32 = arith.constant 574 : i32
    %54 = tpu.dynamic_rotate %52 by %c574_i32 dim 0 : vector<576x128xf32>, i32 -> vector<576x128xf32>
    %55 = vector.extract_strided_slice %53 {offsets = [48, 0], sizes = [384, 128], strides = [1, 1]} : vector<576x128xf32> to vector<384x128xf32>
    %56 = arith.truncf %55 : vector<384x128xf32> to vector<384x128xbf16>
    %57 = vector.extract_strided_slice %52 {offsets = [48, 0], sizes = [384, 128], strides = [1, 1]} : vector<576x128xf32> to vector<384x128xf32>
    %58 = arith.truncf %57 : vector<384x128xf32> to vector<384x128xbf16>
    %59 = vector.extract_strided_slice %54 {offsets = [48, 0], sizes = [384, 128], strides = [1, 1]} : vector<576x128xf32> to vector<384x128xf32>
    %60 = arith.truncf %59 : vector<384x128xf32> to vector<384x128xbf16>
    %61 = vector.extract_strided_slice %53 {offsets = [96, 0], sizes = [384, 128], strides = [1, 1]} : vector<576x128xf32> to vector<384x128xf32>
    %62 = arith.truncf %61 : vector<384x128xf32> to vector<384x128xbf16>
    %63 = vector.extract_strided_slice %52 {offsets = [96, 0], sizes = [384, 128], strides = [1, 1]} : vector<576x128xf32> to vector<384x128xf32>
    %64 = arith.truncf %63 : vector<384x128xf32> to vector<384x128xbf16>
    %65 = vector.extract_strided_slice %54 {offsets = [96, 0], sizes = [384, 128], strides = [1, 1]} : vector<576x128xf32> to vector<384x128xf32>
    %66 = arith.truncf %65 : vector<384x128xf32> to vector<384x128xbf16>
    %67 = vector.extract_strided_slice %53 {offsets = [144, 0], sizes = [384, 128], strides = [1, 1]} : vector<576x128xf32> to vector<384x128xf32>
    %68 = arith.truncf %67 : vector<384x128xf32> to vector<384x128xbf16>
    %69 = vector.extract_strided_slice %52 {offsets = [144, 0], sizes = [384, 128], strides = [1, 1]} : vector<576x128xf32> to vector<384x128xf32>
    %70 = arith.truncf %69 : vector<384x128xf32> to vector<384x128xbf16>
    %71 = vector.extract_strided_slice %54 {offsets = [144, 0], sizes = [384, 128], strides = [1, 1]} : vector<576x128xf32> to vector<384x128xf32>
    %72 = arith.truncf %71 : vector<384x128xf32> to vector<384x128xbf16>
    %73 = tpu.concatenate %56, %58, %60, %62, %64, %66, %68, %70, %72 in 1 : vector<384x128xbf16>, vector<384x128xbf16>, vector<384x128xbf16>, vector<384x128xbf16>, vector<384x128xbf16>, vector<384x128xbf16>, vector<384x128xbf16>, vector<384x128xbf16>, vector<384x128xbf16> -> vector<384x1152xbf16>
    %c1 = arith.constant 1 : index
    %c0_17 = arith.constant 0 : index
    %c0_18 = arith.constant 0 : index
    %74 = vector.load %arg2[%c1, %c0_17, %c0_18] : memref<4x1152x128xbf16, #tpu.memory_space<vmem>>, vector<1x1152x128xbf16>
    %75 = vector.shape_cast %74 : vector<1x1152x128xbf16> to vector<1152x128xbf16>
    %cst_19 = arith.constant dense<0.000000e+00> : vector<384x128xf32>
    %76 = tpu.matmul %73, %75, %cst_19 {dimension_numbers = #tpu.dot_dimension_numbers<[1], [0], [0], [1], [0, 0, 1, 1], [], []>} : vector<384x1152xbf16>, vector<1152x128xbf16>, vector<384x128xf32> -> vector<384x128xf32>
    %c1_20 = arith.constant 1 : index
    %c0_21 = arith.constant 0 : index
    %c0_22 = arith.constant 0 : index
    %77 = vector.load %arg3[%c1_20, %c0_21, %c0_22] : memref<4x1x128xf32, #tpu.memory_space<vmem>>, vector<1x1x128xf32>
    %78 = vector.shape_cast %77 : vector<1x1x128xf32> to vector<1x128xf32>
    %79 = vector.broadcast %78 : vector<1x128xf32> to vector<384x128xf32>
    %80 = arith.addf %76, %79 : vector<384x128xf32>
    %cst_23 = arith.constant 0.000000e+00 : f32
    %81 = vector.broadcast %cst_23 : f32 to vector<384x128xf32>
    %82 = arith.cmpf oge, %80, %81 : vector<384x128xf32>
    %cst_24 = arith.constant 1.000000e-01 : f32
    %83 = vector.broadcast %cst_24 : f32 to vector<384x128xf32>
    %84 = arith.mulf %83, %80 : vector<384x128xf32>
    %85 = arith.select %82, %80, %84 : vector<384x128xi1>, vector<384x128xf32>
    %86 = arith.mulf %85, %11 : vector<384x128xf32>
    %87 = arith.truncf %86 : vector<384x128xf32> to vector<384x128xbf16>
    %c96_25 = arith.constant 96 : index
    %c0_26 = arith.constant 0 : index
    %88 = vector.load %arg5[%c96_25, %c0_26] : memref<576x128xbf16, #tpu.memory_space<vmem>>, vector<384x128xbf16>
    tpu.vector_store %arg5[%c96_25, %c0_26], %87 {strides = array<i32>} : memref<576x128xbf16, #tpu.memory_space<vmem>>, vector<384x128xbf16>,
    %c0_27 = arith.constant 0 : index
    %c0_28 = arith.constant 0 : index
    %89 = vector.load %arg5[%c0_27, %c0_28] : memref<576x128xbf16, #tpu.memory_space<vmem>>, vector<576x128xbf16>
    %90 = arith.extf %89 : vector<576x128xbf16> to vector<576x128xf32>
    %c4_i32_29 = arith.constant 4 : i32
    %91 = tpu.dynamic_rotate %90 by %c4_i32_29 dim 0 : vector<576x128xf32>, i32 -> vector<576x128xf32>
    %c572_i32 = arith.constant 572 : i32
    %92 = tpu.dynamic_rotate %90 by %c572_i32 dim 0 : vector<576x128xf32>, i32 -> vector<576x128xf32>
    %93 = vector.extract_strided_slice %91 {offsets = [0, 0], sizes = [384, 128], strides = [1, 1]} : vector<576x128xf32> to vector<384x128xf32>
    %94 = arith.truncf %93 : vector<384x128xf32> to vector<384x128xbf16>
    %95 = vector.extract_strided_slice %90 {offsets = [0, 0], sizes = [384, 128], strides = [1, 1]} : vector<576x128xf32> to vector<384x128xf32>
    %96 = arith.truncf %95 : vector<384x128xf32> to vector<384x128xbf16>
    %97 = vector.extract_strided_slice %92 {offsets = [0, 0], sizes = [384, 128], strides = [1, 1]} : vector<576x128xf32> to vector<384x128xf32>
    %98 = arith.truncf %97 : vector<384x128xf32> to vector<384x128xbf16>
    %99 = vector.extract_strided_slice %91 {offsets = [96, 0], sizes = [384, 128], strides = [1, 1]} : vector<576x128xf32> to vector<384x128xf32>
    %100 = arith.truncf %99 : vector<384x128xf32> to vector<384x128xbf16>
    %101 = vector.extract_strided_slice %90 {offsets = [96, 0], sizes = [384, 128], strides = [1, 1]} : vector<576x128xf32> to vector<384x128xf32>
    %102 = arith.truncf %101 : vector<384x128xf32> to vector<384x128xbf16>
    %103 = vector.extract_strided_slice %92 {offsets = [96, 0], sizes = [384, 128], strides = [1, 1]} : vector<576x128xf32> to vector<384x128xf32>
    %104 = arith.truncf %103 : vector<384x128xf32> to vector<384x128xbf16>
    %105 = vector.extract_strided_slice %91 {offsets = [192, 0], sizes = [384, 128], strides = [1, 1]} : vector<576x128xf32> to vector<384x128xf32>
    %106 = arith.truncf %105 : vector<384x128xf32> to vector<384x128xbf16>
    %107 = vector.extract_strided_slice %90 {offsets = [192, 0], sizes = [384, 128], strides = [1, 1]} : vector<576x128xf32> to vector<384x128xf32>
    %108 = arith.truncf %107 : vector<384x128xf32> to vector<384x128xbf16>
    %109 = vector.extract_strided_slice %92 {offsets = [192, 0], sizes = [384, 128], strides = [1, 1]} : vector<576x128xf32> to vector<384x128xf32>
    %110 = arith.truncf %109 : vector<384x128xf32> to vector<384x128xbf16>
    %111 = tpu.concatenate %94, %96, %98, %100, %102, %104, %106, %108, %110 in 1 : vector<384x128xbf16>, vector<384x128xbf16>, vector<384x128xbf16>, vector<384x128xbf16>, vector<384x128xbf16>, vector<384x128xbf16>, vector<384x128xbf16>, vector<384x128xbf16>, vector<384x128xbf16> -> vector<384x1152xbf16>
    %c2 = arith.constant 2 : index
    %c0_30 = arith.constant 0 : index
    %c0_31 = arith.constant 0 : index
    %112 = vector.load %arg2[%c2, %c0_30, %c0_31] : memref<4x1152x128xbf16, #tpu.memory_space<vmem>>, vector<1x1152x128xbf16>
    %113 = vector.shape_cast %112 : vector<1x1152x128xbf16> to vector<1152x128xbf16>
    %cst_32 = arith.constant dense<0.000000e+00> : vector<384x128xf32>
    %114 = tpu.matmul %111, %113, %cst_32 {dimension_numbers = #tpu.dot_dimension_numbers<[1], [0], [0], [1], [0, 0, 1, 1], [], []>} : vector<384x1152xbf16>, vector<1152x128xbf16>, vector<384x128xf32> -> vector<384x128xf32>
    %c2_33 = arith.constant 2 : index
    %c0_34 = arith.constant 0 : index
    %c0_35 = arith.constant 0 : index
    %115 = vector.load %arg3[%c2_33, %c0_34, %c0_35] : memref<4x1x128xf32, #tpu.memory_space<vmem>>, vector<1x1x128xf32>
    %116 = vector.shape_cast %115 : vector<1x1x128xf32> to vector<1x128xf32>
    %117 = vector.broadcast %116 : vector<1x128xf32> to vector<384x128xf32>
    %118 = arith.addf %114, %117 : vector<384x128xf32>
    %cst_36 = arith.constant 0.000000e+00 : f32
    %119 = vector.broadcast %cst_36 : f32 to vector<384x128xf32>
    %120 = arith.cmpf oge, %118, %119 : vector<384x128xf32>
    %cst_37 = arith.constant 1.000000e-01 : f32
    %121 = vector.broadcast %cst_37 : f32 to vector<384x128xf32>
    %122 = arith.mulf %121, %118 : vector<384x128xf32>
    %123 = arith.select %120, %118, %122 : vector<384x128xi1>, vector<384x128xf32>
    %124 = arith.mulf %123, %11 : vector<384x128xf32>
    %125 = arith.truncf %124 : vector<384x128xf32> to vector<384x128xbf16>
    %c96_38 = arith.constant 96 : index
    %c0_39 = arith.constant 0 : index
    %126 = vector.load %arg5[%c96_38, %c0_39] : memref<576x128xbf16, #tpu.memory_space<vmem>>, vector<384x128xbf16>
    tpu.vector_store %arg5[%c96_38, %c0_39], %125 {strides = array<i32>} : memref<576x128xbf16, #tpu.memory_space<vmem>>, vector<384x128xbf16>,
    %c0_40 = arith.constant 0 : index
    %c0_41 = arith.constant 0 : index
    %127 = vector.load %arg5[%c0_40, %c0_41] : memref<576x128xbf16, #tpu.memory_space<vmem>>, vector<576x128xbf16>
    %128 = arith.extf %127 : vector<576x128xbf16> to vector<576x128xf32>
    %c1_i32_42 = arith.constant 1 : i32
    %129 = tpu.dynamic_rotate %128 by %c1_i32_42 dim 0 : vector<576x128xf32>, i32 -> vector<576x128xf32>
    %c575_i32_43 = arith.constant 575 : i32
    %130 = tpu.dynamic_rotate %128 by %c575_i32_43 dim 0 : vector<576x128xf32>, i32 -> vector<576x128xf32>
    %131 = vector.extract_strided_slice %129 {offsets = [72, 0], sizes = [384, 128], strides = [1, 1]} : vector<576x128xf32> to vector<384x128xf32>
    %132 = arith.truncf %131 : vector<384x128xf32> to vector<384x128xbf16>
    %133 = vector.extract_strided_slice %128 {offsets = [72, 0], sizes = [384, 128], strides = [1, 1]} : vector<576x128xf32> to vector<384x128xf32>
    %134 = arith.truncf %133 : vector<384x128xf32> to vector<384x128xbf16>
    %135 = vector.extract_strided_slice %130 {offsets = [72, 0], sizes = [384, 128], strides = [1, 1]} : vector<576x128xf32> to vector<384x128xf32>
    %136 = arith.truncf %135 : vector<384x128xf32> to vector<384x128xbf16>
    %137 = vector.extract_strided_slice %129 {offsets = [96, 0], sizes = [384, 128], strides = [1, 1]} : vector<576x128xf32> to vector<384x128xf32>
    %138 = arith.truncf %137 : vector<384x128xf32> to vector<384x128xbf16>
    %139 = vector.extract_strided_slice %128 {offsets = [96, 0], sizes = [384, 128], strides = [1, 1]} : vector<576x128xf32> to vector<384x128xf32>
    %140 = arith.truncf %139 : vector<384x128xf32> to vector<384x128xbf16>
    %141 = vector.extract_strided_slice %130 {offsets = [96, 0], sizes = [384, 128], strides = [1, 1]} : vector<576x128xf32> to vector<384x128xf32>
    %142 = arith.truncf %141 : vector<384x128xf32> to vector<384x128xbf16>
    %143 = vector.extract_strided_slice %129 {offsets = [120, 0], sizes = [384, 128], strides = [1, 1]} : vector<576x128xf32> to vector<384x128xf32>
    %144 = arith.truncf %143 : vector<384x128xf32> to vector<384x128xbf16>
    %145 = vector.extract_strided_slice %128 {offsets = [120, 0], sizes = [384, 128], strides = [1, 1]} : vector<576x128xf32> to vector<384x128xf32>
    %146 = arith.truncf %145 : vector<384x128xf32> to vector<384x128xbf16>
    %147 = vector.extract_strided_slice %130 {offsets = [120, 0], sizes = [384, 128], strides = [1, 1]} : vector<576x128xf32> to vector<384x128xf32>
    %148 = arith.truncf %147 : vector<384x128xf32> to vector<384x128xbf16>
    %149 = tpu.concatenate %132, %134, %136, %138, %140, %142, %144, %146, %148 in 1 : vector<384x128xbf16>, vector<384x128xbf16>, vector<384x128xbf16>, vector<384x128xbf16>, vector<384x128xbf16>, vector<384x128xbf16>, vector<384x128xbf16>, vector<384x128xbf16>, vector<384x128xbf16> -> vector<384x1152xbf16>
    %c3 = arith.constant 3 : index
    %c0_44 = arith.constant 0 : index
    %c0_45 = arith.constant 0 : index
    %150 = vector.load %arg2[%c3, %c0_44, %c0_45] : memref<4x1152x128xbf16, #tpu.memory_space<vmem>>, vector<1x1152x128xbf16>
    %151 = vector.shape_cast %150 : vector<1x1152x128xbf16> to vector<1152x128xbf16>
    %cst_46 = arith.constant dense<0.000000e+00> : vector<384x128xf32>
    %152 = tpu.matmul %149, %151, %cst_46 {dimension_numbers = #tpu.dot_dimension_numbers<[1], [0], [0], [1], [0, 0, 1, 1], [], []>} : vector<384x1152xbf16>, vector<1152x128xbf16>, vector<384x128xf32> -> vector<384x128xf32>
    %c3_47 = arith.constant 3 : index
    %c0_48 = arith.constant 0 : index
    %c0_49 = arith.constant 0 : index
    %153 = vector.load %arg3[%c3_47, %c0_48, %c0_49] : memref<4x1x128xf32, #tpu.memory_space<vmem>>, vector<1x1x128xf32>
    %154 = vector.shape_cast %153 : vector<1x1x128xf32> to vector<1x128xf32>
    %155 = vector.broadcast %154 : vector<1x128xf32> to vector<384x128xf32>
    %156 = arith.addf %152, %155 : vector<384x128xf32>
    %cst_50 = arith.constant 0.000000e+00 : f32
    %157 = vector.broadcast %cst_50 : f32 to vector<384x128xf32>
    %158 = arith.cmpf oge, %156, %157 : vector<384x128xf32>
    %cst_51 = arith.constant 1.000000e-01 : f32
    %159 = vector.broadcast %cst_51 : f32 to vector<384x128xf32>
    %160 = arith.mulf %159, %156 : vector<384x128xf32>
    %161 = arith.select %158, %156, %160 : vector<384x128xi1>, vector<384x128xf32>
    %162 = vector.shape_cast %161 : vector<384x128xf32> to vector<16x24x128xf32>
    %cst_52 = arith.constant dense<0.000000e+00> : vector<16x24xf32>
    %163 = vector.multi_reduction <add>, %162, %cst_52 [2] : vector<16x24x128xf32> to vector<16x24xf32>
    %164 = vector.extract_strided_slice %163 {offsets = [0, 4], sizes = [16, 16], strides = [1, 1]} : vector<16x24xf32> to vector<16x16xf32>
    %cst_53 = arith.constant 0.000000e+00 : f32
    %165 = vector.broadcast %cst_53 : f32 to vector<16x16xf32>
    %166 = arith.subf %165, %164 : vector<16x16xf32>
    %167 = math.exp %166 : vector<16x16xf32>
    %cst_54 = arith.constant 1.000000e+00 : f32
    %168 = vector.broadcast %cst_54 : f32 to vector<16x16xf32>
    %169 = arith.addf %168, %167 : vector<16x16xf32>
    %170 = tpu.reciprocal %169 {approx = true} : vector<16x16xf32> -> vector<16x16xf32>
    %c0_55 = arith.constant 0 : index
    %c0_56 = arith.constant 0 : index
    %c0_57 = arith.constant 0 : index
    %171 = vector.load %arg4[%c0_55, %c0_56, %c0_57] : memref<1x16x16xf32, #tpu.memory_space<vmem>>, vector<1x16x16xf32>
    %172 = vector.shape_cast %171 : vector<1x16x16xf32> to vector<16x16xf32>
    %173 = vector.shape_cast %170 : vector<16x16xf32> to vector<1x16x16xf32>
    tpu.vector_store %arg4[%c0_55, %c0_56, %c0_57], %173 {strides = array<i32>} : memref<1x16x16xf32, #tpu.memory_space<vmem>>, vector<1x16x16xf32>,
    return
  }
  func.func @transform_0(%arg0: i32) -> (i32, i32, i32) {
    %c0_i32 = arith.constant 0 : i32
    %c0_i32_0 = arith.constant 0 : i32
    %c0_i32_1 = arith.constant 0 : i32
    return %arg0, %c0_i32, %c0_i32_0 : i32, i32, i32
  }
  func.func @transform_1(%arg0: i32) -> (i32, i32, i32) {
    %c0_i32 = arith.constant 0 : i32
    %c0_i32_0 = arith.constant 0 : i32
    %c0_i32_1 = arith.constant 0 : i32
    %c0_i32_2 = arith.constant 0 : i32
    return %c0_i32, %c0_i32_0, %c0_i32_1 : i32, i32, i32
  }
  func.func @transform_2(%arg0: i32) -> (i32, i32, i32) {
    %c0_i32 = arith.constant 0 : i32
    %c0_i32_0 = arith.constant 0 : i32
    %c0_i32_1 = arith.constant 0 : i32
    %c0_i32_2 = arith.constant 0 : i32
    return %c0_i32, %c0_i32_0, %c0_i32_1 : i32, i32, i32
  }
  func.func @transform_3(%arg0: i32) -> (i32, i32, i32) {
    %c0_i32 = arith.constant 0 : i32
    %c0_i32_0 = arith.constant 0 : i32
    %c0_i32_1 = arith.constant 0 : i32
    return %arg0, %c0_i32, %c0_i32_0 : i32, i32, i32
  }
}

</mosaic_0001>

<llo_original>
// kernel: deep_robust_estimator_forward.1
$region0: #{deep_robust_estimator_forward.1}
  #allocation0 [shape = 'u32[]', space=smem, size = 0x4, offset = 0x4, fixed_abs, tag = 'smem constant byte address 0x4 - core index']
  #allocation1 [shape = 'u32[144,128]{1,0:T(1,128)}', space=vmem, size = 0x12000, scoped, tag = 'internal scratch']
  #allocation2 [shape = 'bf16[576,128]{1,0:T(16,128)(2,1)}', space=vmem, size = 0x24000, scoped, tag = 'scratch operand']
  %s0 = inlined_call_operand.vmem [shape: bf16[2,576,128], index: 0, kind: input, shape index: {}]
  %s1 = inlined_call_operand.hbm [shape: bf16[4,1152,128], index: 1, kind: input, shape index: {}]
  %s2 = inlined_call_operand.hbm [shape: f32[4,1,128], index: 2, kind: input, shape index: {}]
  %s3 = inlined_call_operand.hbm [shape: f32[2,16,16], index: 3, kind: output, shape index: {}]
  %s4 = sld [smem:[#allocation0]]
  $region53: #{deep_robust_estimator_forward.1} parent=0
    _
  %s6 = ssub.s32 1, %s4
  %s7 = scalar_select 0, %s6, %s4
  $region1: #{deep_robust_estimator_forward.1} parent=0
    #allocation3 [shape = 'u8[1179648]{0}', space=vmem, size = 0x120000, scoped, tag = 'input window, operand 1, single buffered']
    #allocation4 [shape = 's32[2]{0}', space=sflag, size = 0x8, scoped, tag = 'scoped memory for deep_robust_estimator_forward.1']
    #allocation5 [shape = 's32[2]{0}', space=sflag, size = 0x8, scoped, tag = 'scoped memory for deep_robust_estimator_forward.1']
    #allocation6 [shape = 'u8[2048]{0}', space=vmem, size = 0x800, scoped, tag = 'input window, operand 2, single buffered']
    #allocation7 [shape = 's32[1]{0}', space=sflag, size = 0x4, scoped, tag = 'scoped memory for deep_robust_estimator_forward.1']
    #allocation8 [shape = 'u8[16384]{0}', space=vmem, size = 0x4000, scoped, tag = 'output window, operand 0']
    %8 = vsyncpa [#allocation4], 0
    %9 = vsyncpa [#allocation7], 0
    %10 = vsyncpa [#allocation5], 0
    %s11 = scalar_lea.sflag [#allocation5], 1
    %12 = vsyncpa %s11, 0
    loop: start=0, step=1, limit=4
    $region2: #{deep_robust_estimator_forward.1} parent=1 // loop_pre_header
      _
    $region3: #{deep_robust_estimator_forward.1} parent=1 // loop_header
      %s14 = sphi 0, %s18
      %p15 = scmp.ge.s32.totalorder %s14, 4
      %s24 = sphi 0, %s26
      %s27 = sphi 0, %s24
      %s28 = sphi 0, %s27
      %s44 = sphi 0, %s28
      %s48 = sphi 0, %s48
      %s50 = sphi 0, %s48
      %s51 = sphi 0, %s50
      %s65 = sphi 0, %s51
      %s69 = sphi 0, %s69
      %s71 = sphi 0, %s69
      %s72 = sphi 0, %s71
      %s86 = sphi 0, %s72
      %s92 = sphi 0, %s94
      %s95 = sphi 0, %s92
      %s96 = sphi 0, %s95
      %s112 = sphi 0, %s96
    $region4: #{deep_robust_estimator_forward.1} parent=1 // loop_header_branch
      %17 = sbr.rel (%p15) target = $region8
    $region5: #{deep_robust_estimator_forward.1} parent=1 // loop_body
      %s19 = ssub.s32 %s14, 1
      %s20 = ssub.s32 %s14, 2
      %s21 = sadd.s32 %s14, 1
      %s22 = ssub.s32 %s14, %s21
      %p23 = scmp.eq.s32.totalorder %s22, 0
      %s25 = sadd.s32 %s24, 1
      %s26 = scalar_select %p23, %s24, %s25
      %p29 = pneg %p23
      %p30 = scmp.eq.s32.totalorder %s14, 1
      %p31 = por %p29, %p30
      %p32 = scmp.ne.s32.totalorder %s24, %s27
      %p33 = scmp.eq.s32.totalorder %s14, 0
      %p34 = por %p32, %p33
      %p35 = scmp.ne.s32.totalorder %s24, %s27
      %p36 = scmp.eq.s32.totalorder %s19, 1
      %p37 = por %p35, %p36
      %p38 = scmp.ne.s32.totalorder %s27, %s28
      %p39 = scmp.eq.s32.totalorder %s19, 0
      %p40 = por %p38, %p39
      %p41 = scmp.ne.s32.totalorder %s27, %s28
      %p42 = scmp.eq.s32.totalorder %s20, 1
      %p43 = por %p41, %p42
      %p45 = scmp.ne.s32.totalorder %s28, %s44
      %p46 = scmp.eq.s32.totalorder %s20, 0
      %p47 = por %p45, %p46
      %s49 = sadd.s32 %s48, 1
      %p52 = scmp.eq.s32.totalorder %s14, 1
      %p53 = scmp.ne.s32.totalorder %s48, %s50
      %p54 = scmp.eq.s32.totalorder %s14, 0
      %p55 = por %p53, %p54
      %p56 = scmp.ne.s32.totalorder %s48, %s50
      %p57 = scmp.eq.s32.totalorder %s19, 1
      %p58 = por %p56, %p57
      %p59 = scmp.ne.s32.totalorder %s50, %s51
      %p60 = scmp.eq.s32.totalorder %s19, 0
      %p61 = por %p59, %p60
      %p62 = scmp.ne.s32.totalorder %s50, %s51
      %p63 = scmp.eq.s32.totalorder %s20, 1
      %p64 = por %p62, %p63
      %p66 = scmp.ne.s32.totalorder %s51, %s65
      %p67 = scmp.eq.s32.totalorder %s20, 0
      %p68 = por %p66, %p67
      %s70 = sadd.s32 %s69, 1
      %p73 = scmp.eq.s32.totalorder %s14, 1
      %p74 = scmp.ne.s32.totalorder %s69, %s71
      %p75 = scmp.eq.s32.totalorder %s14, 0
      %p76 = por %p74, %p75
      %p77 = scmp.ne.s32.totalorder %s69, %s71
      %p78 = scmp.eq.s32.totalorder %s19, 1
      %p79 = por %p77, %p78
      %p80 = scmp.ne.s32.totalorder %s71, %s72
      %p81 = scmp.eq.s32.totalorder %s19, 0
      %p82 = por %p80, %p81
      %p83 = scmp.ne.s32.totalorder %s71, %s72
      %p84 = scmp.eq.s32.totalorder %s20, 1
      %p85 = por %p83, %p84
      %p87 = scmp.ne.s32.totalorder %s72, %s86
      %p88 = scmp.eq.s32.totalorder %s20, 0
      %p89 = por %p87, %p88
      %s90 = ssub.s32 %s14, %s21
      %p91 = scmp.eq.s32.totalorder %s90, 0
      %s93 = sadd.s32 %s92, 1
      %s94 = scalar_select %p91, %s92, %s93
      %p97 = pneg %p91
      %p98 = scmp.eq.s32.totalorder %s14, 1
      %p99 = por %p97, %p98
      %p100 = scmp.ne.s32.totalorder %s92, %s95
      %p101 = scmp.eq.s32.totalorder %s14, 0
      %p102 = por %p100, %p101
      %p103 = scmp.ne.s32.totalorder %s92, %s95
      %p104 = scmp.eq.s32.totalorder %s19, 1
      %p105 = por %p103, %p104
      %p106 = scmp.ne.s32.totalorder %s95, %s96
      %p107 = scmp.eq.s32.totalorder %s19, 0
      %p108 = por %p106, %p107
      %p109 = scmp.ne.s32.totalorder %s95, %s96
      %p110 = scmp.eq.s32.totalorder %s20, 1
      %p111 = por %p109, %p110
      %p113 = scmp.ne.s32.totalorder %s96, %s112
      %p114 = scmp.eq.s32.totalorder %s20, 0
      %p115 = por %p113, %p114
      %p116 = scmp.le.s32.totalorder 1, %s14
      %p117 = scmp.lt.s32.totalorder %s14, 3
      %p118 = pnand %p116, %p117
      %p119 = pneg %p118
      // Predicated region
      $region9: #{deep_robust_estimator_forward.1} parent=5 // pred_check
        _
      $region10: #{deep_robust_estimator_forward.1} parent=5 // pred_check_branch
        %121 = sbr.rel (%p118) target = $region12
      $region11: #{deep_robust_estimator_forward.1} parent=5 // pred_region
        %s122 = ssub.s32 %s14, 1
        // Predicated region
        $region13: #{deep_robust_estimator_forward.1} parent=11 // pred_check
          %p123 = pneg %p61
        $region14: #{deep_robust_estimator_forward.1} parent=11 // pred_check_branch
          %125 = sbr.rel (%p123) target = $region16
        $region15: #{deep_robust_estimator_forward.1} parent=11 // pred_region
          %s127 = ssub.s32 36864, 36864
          %128 = vsyncadd [#allocation4], %s127
          %s129 = sshll.u32 [#allocation3], 4
          %s130 = int_to_ptr.vmem [resolvable:$true] %s129
          %135 = dma.hbm_to_vmem [thread:$0]  %s1, 36864, %s130, [#allocation4], 64, 64, 4
        $region16: #{deep_robust_estimator_forward.1} parent=11 // pred_fallthru
          _
        // Predicated region
        $region17: #{deep_robust_estimator_forward.1} parent=11 // pred_check
          %p136 = pneg %p82
        $region18: #{deep_robust_estimator_forward.1} parent=11 // pred_check_branch
          %138 = sbr.rel (%p136) target = $region20
        $region19: #{deep_robust_estimator_forward.1} parent=11 // pred_region
          %s140 = ssub.s32 64, 64
          %141 = vsyncadd [#allocation7], %s140
          %s142 = sshll.u32 [#allocation6], 4
          %s143 = int_to_ptr.vmem [resolvable:$true] %s142
          %148 = dma.hbm_to_vmem [thread:$0]  %s2, 64, %s143, [#allocation7], 16, 16, 1
        $region20: #{deep_robust_estimator_forward.1} parent=11 // pred_fallthru
          _
      $region12: #{deep_robust_estimator_forward.1} parent=5 // pred_fallthru
        _
      %p149 = scmp.lt.s32.totalorder %s14, 2
      // Predicated region
      $region21: #{deep_robust_estimator_forward.1} parent=5 // pred_check
        %p150 = pneg %p149
      $region22: #{deep_robust_estimator_forward.1} parent=5 // pred_check_branch
        %152 = sbr.rel (%p150) target = $region24
      $region23: #{deep_robust_estimator_forward.1} parent=5 // pred_region
        // Predicated region
        $region25: #{deep_robust_estimator_forward.1} parent=23 // pred_check
          %p153 = pneg %p34
        $region26: #{deep_robust_estimator_forward.1} parent=23 // pred_check_branch
          %155 = sbr.rel (%p153) target = $region28
        $region27: #{deep_robust_estimator_forward.1} parent=23 // pred_region
          %p156 = scmp.lt.s32.totalorder %s14, 1
          %s157 = scalar_select %p156, %s14, 1
          %s158 = smul.addr %s157, 72
          %s159 = smul.addr %s158, 4
          %s160 = scalar_lea.vmem %s0, %s159
        $region28: #{deep_robust_estimator_forward.1} parent=23 // pred_fallthru
          _
      $region24: #{deep_robust_estimator_forward.1} parent=5 // pred_fallthru
        _
      %p161 = scmp.le.s32.totalorder 1, %s14
      %p162 = scmp.lt.s32.totalorder %s14, 3
      %p163 = pnand %p161, %p162
      %p164 = pneg %p163
      // Predicated region
      $region29: #{deep_robust_estimator_forward.1} parent=5 // pred_check
        _
      $region30: #{deep_robust_estimator_forward.1} parent=5 // pred_check_branch
        %166 = sbr.rel (%p163) target = $region32
      $region31: #{deep_robust_estimator_forward.1} parent=5 // pred_region
        %s167 = ssub.s32 %s14, 1
        // Predicated region
        $region33: #{deep_robust_estimator_forward.1} parent=31 // pred_check
          %p168 = pneg %p61
        $region34: #{deep_robust_estimator_forward.1} parent=31 // pred_check_branch
          %170 = sbr.rel (%p168) target = $region36
        $region35: #{deep_robust_estimator_forward.1} parent=31 // pred_region
          %171 = dma.done [#allocation4], 36864
        $region36: #{deep_robust_estimator_forward.1} parent=31 // pred_fallthru
          _
        // Predicated region
        $region37: #{deep_robust_estimator_forward.1} parent=31 // pred_check
          %p172 = pneg %p82
        $region38: #{deep_robust_estimator_forward.1} parent=31 // pred_check_branch
          %174 = sbr.rel (%p172) target = $region40
        $region39: #{deep_robust_estimator_forward.1} parent=31 // pred_region
          %175 = dma.done [#allocation7], 64
        $region40: #{deep_robust_estimator_forward.1} parent=31 // pred_fallthru
          _
        %p176 = scmp.lt.s32.totalorder %s19, 1
        %s177 = scalar_select %p176, %s19, 1
        %s178 = smul.addr %s177, 72
        %s179 = smul.addr %s178, 4
        %s180 = scalar_lea.vmem %s0, %s179
        %p181 = pneg %p40
        %p182 = pneg %p37
        %p183 = pneg %p61
        %p184 = pneg %p58
        %p185 = pneg %p82
        %p186 = pneg %p79
        %p187 = pneg %p108
        %p188 = pneg %p105
        %s189 = sand.u32 %s95, 1
        %s190 = scalar_lea.sflag [#allocation5], %s189
        %s191 = sand.u32 %s95, 1
        %s192 = smul.addr %s191, 16
        %s193 = scalar_lea.vmem [#allocation8], %s192
        %p194 = scmp.lt.s32.totalorder %s19, 1
        %s195 = scalar_select %p194, %s19, 1
        %s196 = smul.addr %s195, 72
        %s197 = smul.addr %s196, 4
        %s198 = scalar_lea.vmem %s0, %s197
        %200 = vst [vmem:[#allocation2] sm:$0xff] 0
        %201 = vst [vmem:[#allocation2 + $0x8] sm:$0xff] 0
        %202 = vst [vmem:[#allocation2 + $0x10] sm:$0xff] 0
        %203 = vst [vmem:[#allocation2 + $0x18] sm:$0xff] 0
        %204 = vst [vmem:[#allocation2 + $0x20] sm:$0xff] 0
        %205 = vst [vmem:[#allocation2 + $0x28] sm:$0xff] 0
        %206 = vst [vmem:[#allocation2 + $0xf0] sm:$0xff] 0
        %207 = vst [vmem:[#allocation2 + $0xf8] sm:$0xff] 0
        %208 = vst [vmem:[#allocation2 + $0x100] sm:$0xff] 0
        %209 = vst [vmem:[#allocation2 + $0x108] sm:$0xff] 0
        %210 = vst [vmem:[#allocation2 + $0x110] sm:$0xff] 0
        %211 = vst [vmem:[#allocation2 + $0x118] sm:$0xff] 0
        %v212 = vlaneseq
        %v213 = vshrl.u32 %v212, 7
        %v214 = vadd.s32 %v213, 8
        %v215 = vadd.s32 %v213, 16
        %vm216 = vcmp.ge.s32.totalorder %v213, 4
        %vm217 = vcmp.ge.s32.totalorder %v214, 4
        %vm218 = vcmp.ge.s32.totalorder %v215, 4
        %vm219 = vcmp.lt.s32.totalorder %v213, 20
        %vm220 = vcmp.lt.s32.totalorder %v214, 20
        %vm221 = vcmp.lt.s32.totalorder %v215, 20
        %vm222 = vmand %vm216, %vm219
        %vm223 = vmand %vm217, %vm220
        %vm224 = vmand %vm218, %vm221
        %v225 = vsel %vm222, 1, 0
        %v226 = vsel %vm223, 1, 0
        %v227 = vsel %vm224, 1, 0
        %v228 = vcvt.s32.f32 %v225
        %v229 = vcvt.s32.f32 %v226
        %v230 = vcvt.s32.f32 %v227
        %v231 = vld [vmem:[%s198 + $0x20] sm:$0xf]
        %v232 = vld [vmem:[%s198 + $0x24] sm:$0xf]
        %v233 = vld [vmem:[%s198 + $0x28] sm:$0xf]
        %v234 = vld [vmem:[%s198 + $0x2c] sm:$0xf]
        %v235 = vld [vmem:[%s198 + $0x30] sm:$0xf]
        %v236 = vld [vmem:[%s198 + $0x34] sm:$0xf]
        %v237 = vld [vmem:[%s198 + $0x38] sm:$0xf]
        %v238 = vld [vmem:[%s198 + $0x3c] sm:$0xf]
        %v239 = vld [vmem:[%s198 + $0x40] sm:$0xf]
        %v240 = vld [vmem:[%s198 + $0x44] sm:$0xf]
        %v241 = vld [vmem:[%s198 + $0x48] sm:$0xf]
        %v242 = vld [vmem:[%s198 + $0x4c] sm:$0xf]
        %v243 = vld [vmem:[%s198 + $0x50] sm:$0xf]
        %v244 = vld [vmem:[%s198 + $0x54] sm:$0xf]
        %v245 = vld [vmem:[%s198 + $0x58] sm:$0xf]
        %v246 = vld [vmem:[%s198 + $0x5c] sm:$0xf]
        %v247 = vld [vmem:[%s198 + $0x60] sm:$0xf]
        %v248 = vld [vmem:[%s198 + $0x64] sm:$0xf]
        %v249 = vld [vmem:[%s198 + $0x68] sm:$0xf]
        %v250 = vld [vmem:[%s198 + $0x6c] sm:$0xf]
        %v251 = vld [vmem:[%s198 + $0x70] sm:$0xf]
        %v252 = vld [vmem:[%s198 + $0x74] sm:$0xf]
        %v253 = vld [vmem:[%s198 + $0x78] sm:$0xf]
        %v254 = vld [vmem:[%s198 + $0x7c] sm:$0xf]
        %v255 = vld [vmem:[%s198 + $0x80] sm:$0xf]
        %v256 = vld [vmem:[%s198 + $0x84] sm:$0xf]
        %v257 = vld [vmem:[%s198 + $0x88] sm:$0xf]
        %v258 = vld [vmem:[%s198 + $0x8c] sm:$0xf]
        %v259 = vld [vmem:[%s198 + $0x90] sm:$0xf]
        %v260 = vld [vmem:[%s198 + $0x94] sm:$0xf]
        %v261 = vld [vmem:[%s198 + $0x98] sm:$0xf]
        %v262 = vld [vmem:[%s198 + $0x9c] sm:$0xf]
        %v263 = vld [vmem:[%s198 + $0xa0] sm:$0xf]
        %v264 = vld [vmem:[%s198 + $0xa4] sm:$0xf]
        %v265 = vld [vmem:[%s198 + $0xa8] sm:$0xf]
        %v266 = vld [vmem:[%s198 + $0xac] sm:$0xf]
        %v267 = vld [vmem:[%s198 + $0xb0] sm:$0xf]
        %v268 = vld [vmem:[%s198 + $0xb4] sm:$0xf]
        %v269 = vld [vmem:[%s198 + $0xb8] sm:$0xf]
        %v270 = vld [vmem:[%s198 + $0xbc] sm:$0xf]
        %v271 = vld [vmem:[%s198 + $0xc0] sm:$0xf]
        %v272 = vld [vmem:[%s198 + $0xc4] sm:$0xf]
        %v273 = vld [vmem:[%s198 + $0xc8] sm:$0xf]
        %v274 = vld [vmem:[%s198 + $0xcc] sm:$0xf]
        %v275 = vld [vmem:[%s198 + $0xd0] sm:$0xf]
        %v276 = vld [vmem:[%s198 + $0xd4] sm:$0xf]
        %v277 = vld [vmem:[%s198 + $0xd8] sm:$0xf]
        %v278 = vld [vmem:[%s198 + $0xdc] sm:$0xf]
        %v279 = vld [vmem:[%s198 + $0xe0] sm:$0xf]
        %v280 = vld [vmem:[%s198 + $0xe4] sm:$0xf]
        %v281 = vld [vmem:[%s198 + $0xe8] sm:$0xf]
        %v282 = vld [vmem:[%s198 + $0xec] sm:$0xf]
        %v283 = vld [vmem:[%s198 + $0xf0] sm:$0xf]
        %v284 = vld [vmem:[%s198 + $0xf4] sm:$0xf]
        %v285 = vld [vmem:[%s198 + $0xf8] sm:$0xf]
        %v286 = vld [vmem:[%s198 + $0xfc] sm:$0xf]
        %v287 = vunpack.c.l.bf16 %v231
        %v288 = vunpack.c.l.bf16 %v232
        %v289 = vunpack.c.l.bf16 %v233
        %v290 = vunpack.c.l.bf16 %v234
        %v291 = vunpack.c.l.bf16 %v235
        %v292 = vunpack.c.l.bf16 %v236
        %v293 = vunpack.c.l.bf16 %v237
        %v294 = vunpack.c.l.bf16 %v238
        %v295 = vunpack.c.l.bf16 %v239
        %v296 = vunpack.c.l.bf16 %v240
        %v297 = vunpack.c.l.bf16 %v241
        %v298 = vunpack.c.l.bf16 %v242
        %v299 = vunpack.c.l.bf16 %v243
        %v300 = vunpack.c.l.bf16 %v244
        %v301 = vunpack.c.l.bf16 %v245
        %v302 = vunpack.c.l.bf16 %v246
        %v303 = vunpack.c.l.bf16 %v247
        %v304 = vunpack.c.l.bf16 %v248
        %v305 = vunpack.c.l.bf16 %v249
        %v306 = vunpack.c.l.bf16 %v250
        %v307 = vunpack.c.l.bf16 %v251
        %v308 = vunpack.c.l.bf16 %v252
        %v309 = vunpack.c.l.bf16 %v253
        %v310 = vunpack.c.l.bf16 %v254
        %v311 = vunpack.c.l.bf16 %v255
        %v312 = vunpack.c.l.bf16 %v256
        %v313 = vunpack.c.l.bf16 %v257
        %v314 = vunpack.c.l.bf16 %v258
        %v315 = vunpack.c.l.bf16 %v259
        %v316 = vunpack.c.l.bf16 %v260
        %v317 = vunpack.c.l.bf16 %v261
        %v318 = vunpack.c.l.bf16 %v262
        %v319 = vunpack.c.l.bf16 %v263
        %v320 = vunpack.c.l.bf16 %v264
        %v321 = vunpack.c.l.bf16 %v265
        %v322 = vunpack.c.l.bf16 %v266
        %v323 = vunpack.c.l.bf16 %v267
        %v324 = vunpack.c.l.bf16 %v268
        %v325 = vunpack.c.l.bf16 %v269
        %v326 = vunpack.c.l.bf16 %v270
        %v327 = vunpack.c.l.bf16 %v271
        %v328 = vunpack.c.l.bf16 %v272
        %v329 = vunpack.c.l.bf16 %v273
        %v330 = vunpack.c.l.bf16 %v274
        %v331 = vunpack.c.l.bf16 %v275
        %v332 = vunpack.c.l.bf16 %v276
        %v333 = vunpack.c.l.bf16 %v277
        %v334 = vunpack.c.l.bf16 %v278
        %v335 = vunpack.c.l.bf16 %v279
        %v336 = vunpack.c.l.bf16 %v280
        %v337 = vunpack.c.l.bf16 %v281
        %v338 = vunpack.c.l.bf16 %v282
        %v339 = vunpack.c.l.bf16 %v283
        %v340 = vunpack.c.l.bf16 %v284
        %v341 = vunpack.c.l.bf16 %v285
        %v342 = vunpack.c.l.bf16 %v286
        %v343 = vrot.slane %v287, 7
        %v344 = vrot.slane %v288, 7
        %v345 = vrot.slane %v289, 7
        %v346 = vrot.slane %v290, 7
        %v347 = vrot.slane %v291, 7
        %v348 = vrot.slane %v292, 7
        %v349 = vrot.slane %v293, 7
        %v350 = vrot.slane %v294, 7
        %v351 = vrot.slane %v295, 7
        %v352 = vrot.slane %v296, 7
        %v353 = vrot.slane %v297, 7
        %v354 = vrot.slane %v298, 7
        %v355 = vrot.slane %v299, 7
        %v356 = vrot.slane %v300, 7
        %v357 = vrot.slane %v301, 7
        %v358 = vrot.slane %v302, 7
        %v359 = vrot.slane %v303, 7
        %v360 = vrot.slane %v304, 7
        %v361 = vrot.slane %v305, 7
        %v362 = vrot.slane %v306, 7
        %v363 = vrot.slane %v307, 7
        %v364 = vrot.slane %v308, 7
        %v365 = vrot.slane %v309, 7
        %v366 = vrot.slane %v310, 7
        %v367 = vrot.slane %v311, 7
        %v368 = vrot.slane %v312, 7
        %v369 = vrot.slane %v313, 7
        %v370 = vrot.slane %v314, 7
        %v371 = vrot.slane %v315, 7
        %v372 = vrot.slane %v316, 7
        %v373 = vrot.slane %v317, 7
        %v374 = vrot.slane %v318, 7
        %v375 = vrot.slane %v319, 7
        %v376 = vrot.slane %v320, 7
        %v377 = vrot.slane %v321, 7
        %v378 = vrot.slane %v322, 7
        %v379 = vrot.slane %v323, 7
        %v380 = vrot.slane %v324, 7
        %v381 = vrot.slane %v325, 7
        %v382 = vrot.slane %v326, 7
        %v383 = vrot.slane %v327, 7
        %v384 = vrot.slane %v328, 7
        %v385 = vrot.slane %v329, 7
        %v386 = vrot.slane %v330, 7
        %v387 = vrot.slane %v331, 7
        %v388 = vrot.slane %v332, 7
        %v389 = vrot.slane %v333, 7
        %v390 = vrot.slane %v334, 7
        %v391 = vrot.slane %v335, 7
        %v392 = vrot.slane %v336, 7
        %v393 = vrot.slane %v337, 7
        %v394 = vrot.slane %v338, 7
        %v395 = vrot.slane %v339, 7
        %v396 = vrot.slane %v340, 7
        %v397 = vrot.slane %v341, 7
        %vm398 = vcmp.lt.s32.totalorder %v213, 1
        %v399 = vsel %vm398, %v396, %v397
        %v400 = vsel %vm398, %v395, %v396
        %v401 = vsel %vm398, %v394, %v395
        %v402 = vsel %vm398, %v393, %v394
        %v403 = vsel %vm398, %v392, %v393
        %v404 = vsel %vm398, %v391, %v392
        %v405 = vsel %vm398, %v390, %v391
        %v406 = vsel %vm398, %v389, %v390
        %v407 = vsel %vm398, %v388, %v389
        %v408 = vsel %vm398, %v387, %v388
        %v409 = vsel %vm398, %v386, %v387
        %v410 = vsel %vm398, %v385, %v386
        %v411 = vsel %vm398, %v384, %v385
        %v412 = vsel %vm398, %v383, %v384
        %v413 = vsel %vm398, %v382, %v383
        %v414 = vsel %vm398, %v381, %v382
        %v415 = vsel %vm398, %v380, %v381
        %v416 = vsel %vm398, %v379, %v380
        %v417 = vsel %vm398, %v378, %v379
        %v418 = vsel %vm398, %v377, %v378
        %v419 = vsel %vm398, %v376, %v377
        %v420 = vsel %vm398, %v375, %v376
        %v421 = vsel %vm398, %v374, %v375
        %v422 = vsel %vm398, %v373, %v374
        %v423 = vsel %vm398, %v372, %v373
        %v424 = vsel %vm398, %v371, %v372
        %v425 = vsel %vm398, %v370, %v371
        %v426 = vsel %vm398, %v369, %v370
        %v427 = vsel %vm398, %v368, %v369
        %v428 = vsel %vm398, %v367, %v368
        %v429 = vsel %vm398, %v366, %v367
        %v430 = vsel %vm398, %v365, %v366
        %v431 = vsel %vm398, %v364, %v365
        %v432 = vsel %vm398, %v363, %v364
        %v433 = vsel %vm398, %v362, %v363
        %v434 = vsel %vm398, %v361, %v362
        %v435 = vsel %vm398, %v360, %v361
        %v436 = vsel %vm398, %v359, %v360
        %v437 = vsel %vm398, %v358, %v359
        %v438 = vsel %vm398, %v357, %v358
        %v439 = vsel %vm398, %v356, %v357
        %v440 = vsel %vm398, %v355, %v356
        %v441 = vsel %vm398, %v354, %v355
        %v442 = vsel %vm398, %v353, %v354
        %v443 = vsel %vm398, %v352, %v353
        %v444 = vsel %vm398, %v351, %v352
        %v445 = vsel %vm398, %v350, %v351
        %v446 = vsel %vm398, %v349, %v350
        %v447 = vsel %vm398, %v348, %v349
        %v448 = vsel %vm398, %v347, %v348
        %v449 = vsel %vm398, %v346, %v347
        %v450 = vsel %vm398, %v345, %v346
        %v451 = vsel %vm398, %v344, %v345
        %v452 = vsel %vm398, %v343, %v344
        %v453 = vrot.slane %v288, 1
        %v454 = vrot.slane %v289, 1
        %v455 = vrot.slane %v290, 1
        %v456 = vrot.slane %v291, 1
        %v457 = vrot.slane %v292, 1
        %v458 = vrot.slane %v293, 1
        %v459 = vrot.slane %v294, 1
        %v460 = vrot.slane %v295, 1
        %v461 = vrot.slane %v296, 1
        %v462 = vrot.slane %v297, 1
        %v463 = vrot.slane %v298, 1
        %v464 = vrot.slane %v299, 1
        %v465 = vrot.slane %v300, 1
        %v466 = vrot.slane %v301, 1
        %v467 = vrot.slane %v302, 1
        %v468 = vrot.slane %v303, 1
        %v469 = vrot.slane %v304, 1
        %v470 = vrot.slane %v305, 1
        %v471 = vrot.slane %v306, 1
        %v472 = vrot.slane %v307, 1
        %v473 = vrot.slane %v308, 1
        %v474 = vrot.slane %v309, 1
        %v475 = vrot.slane %v310, 1
        %v476 = vrot.slane %v311, 1
        %v477 = vrot.slane %v312, 1
        %v478 = vrot.slane %v313, 1
        %v479 = vrot.slane %v314, 1
        %v480 = vrot.slane %v315, 1
        %v481 = vrot.slane %v316, 1
        %v482 = vrot.slane %v317, 1
        %v483 = vrot.slane %v318, 1
        %v484 = vrot.slane %v319, 1
        %v485 = vrot.slane %v320, 1
        %v486 = vrot.slane %v321, 1
        %v487 = vrot.slane %v322, 1
        %v488 = vrot.slane %v323, 1
        %v489 = vrot.slane %v324, 1
        %v490 = vrot.slane %v325, 1
        %v491 = vrot.slane %v326, 1
        %v492 = vrot.slane %v327, 1
        %v493 = vrot.slane %v328, 1
        %v494 = vrot.slane %v329, 1
        %v495 = vrot.slane %v330, 1
        %v496 = vrot.slane %v331, 1
        %v497 = vrot.slane %v332, 1
        %v498 = vrot.slane %v333, 1
        %v499 = vrot.slane %v334, 1
        %v500 = vrot.slane %v335, 1
        %v501 = vrot.slane %v336, 1
        %v502 = vrot.slane %v337, 1
        %v503 = vrot.slane %v338, 1
        %v504 = vrot.slane %v339, 1
        %v505 = vrot.slane %v340, 1
        %v506 = vrot.slane %v341, 1
        %v507 = vrot.slane %v342, 1
        %vm508 = vcmp.lt.s32.totalorder %v213, 7
        %v509 = vsel %vm508, %v506, %v507
        %v510 = vsel %vm508, %v505, %v506
        %v511 = vsel %vm508, %v504, %v505
        %v512 = vsel %vm508, %v503, %v504
        %v513 = vsel %vm508, %v502, %v503
        %v514 = vsel %vm508, %v501, %v502
        %v515 = vsel %vm508, %v500, %v501
        %v516 = vsel %vm508, %v499, %v500
        %v517 = vsel %vm508, %v498, %v499
        %v518 = vsel %vm508, %v497, %v498
        %v519 = vsel %vm508, %v496, %v497
        %v520 = vsel %vm508, %v495, %v496
        %v521 = vsel %vm508, %v494, %v495
        %v522 = vsel %vm508, %v493, %v494
        %v523 = vsel %vm508, %v492, %v493
        %v524 = vsel %vm508, %v491, %v492
        %v525 = vsel %vm508, %v490, %v491
        %v526 = vsel %vm508, %v489, %v490
        %v527 = vsel %vm508, %v488, %v489
        %v528 = vsel %vm508, %v487, %v488
        %v529 = vsel %vm508, %v486, %v487
        %v530 = vsel %vm508, %v485, %v486
        %v531 = vsel %vm508, %v484, %v485
        %v532 = vsel %vm508, %v483, %v484
        %v533 = vsel %vm508, %v482, %v483
        %v534 = vsel %vm508, %v481, %v482
        %v535 = vsel %vm508, %v480, %v481
        %v536 = vsel %vm508, %v479, %v480
        %v537 = vsel %vm508, %v478, %v479
        %v538 = vsel %vm508, %v477, %v478
        %v539 = vsel %vm508, %v476, %v477
        %v540 = vsel %vm508, %v475, %v476
        %v541 = vsel %vm508, %v474, %v475
        %v542 = vsel %vm508, %v473, %v474
        %v543 = vsel %vm508, %v472, %v473
        %v544 = vsel %vm508, %v471, %v472
        %v545 = vsel %vm508, %v470, %v471
        %v546 = vsel %vm508, %v469, %v470
        %v547 = vsel %vm508, %v468, %v469
        %v548 = vsel %vm508, %v467, %v468
        %v549 = vsel %vm508, %v466, %v467
        %v550 = vsel %vm508, %v465, %v466
        %v551 = vsel %vm508, %v464, %v465
        %v552 = vsel %vm508, %v463, %v464
        %v553 = vsel %vm508, %v462, %v463
        %v554 = vsel %vm508, %v461, %v462
        %v555 = vsel %vm508, %v460, %v461
        %v556 = vsel %vm508, %v459, %v460
        %v557 = vsel %vm508, %v458, %v459
        %v558 = vsel %vm508, %v457, %v458
        %v559 = vsel %vm508, %v456, %v457
        %v560 = vsel %vm508, %v455, %v456
        %v561 = vsel %vm508, %v454, %v455
        %v562 = vsel %vm508, %v453, %v454
        %v563 = vpack.c.bf16 %v451, %v452
        %v564 = vpack.c.bf16 %v449, %v450
        %v565 = vpack.c.bf16 %v447, %v448
        %v566 = vpack.c.bf16 %v445, %v446
        %v567 = vpack.c.bf16 %v443, %v444
        %v568 = vpack.c.bf16 %v441, %v442
        %v569 = vpack.c.bf16 %v439, %v440
        %v570 = vpack.c.bf16 %v437, %v438
        %v571 = vpack.c.bf16 %v435, %v436
        %v572 = vpack.c.bf16 %v433, %v434
        %v573 = vpack.c.bf16 %v431, %v432
        %v574 = vpack.c.bf16 %v429, %v430
        %v575 = vpack.c.bf16 %v427, %v428
        %v576 = vpack.c.bf16 %v425, %v426
        %v577 = vpack.c.bf16 %v423, %v424
        %v578 = vpack.c.bf16 %v421, %v422
        %v579 = vpack.c.bf16 %v419, %v420
        %v580 = vpack.c.bf16 %v417, %v418
        %v581 = vpack.c.bf16 %v415, %v416
        %v582 = vpack.c.bf16 %v413, %v414
        %v583 = vpack.c.bf16 %v411, %v412
        %v584 = vpack.c.bf16 %v409, %v410
        %v585 = vpack.c.bf16 %v407, %v408
        %v586 = vpack.c.bf16 %v405, %v406
        %v587 = vpack.c.bf16 %v289, %v288
        %v588 = vpack.c.bf16 %v291, %v290
        %v589 = vpack.c.bf16 %v293, %v292
        %v590 = vpack.c.bf16 %v295, %v294
        %v591 = vpack.c.bf16 %v297, %v296
        %v592 = vpack.c.bf16 %v299, %v298
        %v593 = vpack.c.bf16 %v301, %v300
        %v594 = vpack.c.bf16 %v303, %v302
        %v595 = vpack.c.bf16 %v305, %v304
        %v596 = vpack.c.bf16 %v307, %v306
        %v597 = vpack.c.bf16 %v309, %v308
        %v598 = vpack.c.bf16 %v311, %v310
        %v599 = vpack.c.bf16 %v313, %v312
        %v600 = vpack.c.bf16 %v315, %v314
        %v601 = vpack.c.bf16 %v317, %v316
        %v602 = vpack.c.bf16 %v319, %v318
        %v603 = vpack.c.bf16 %v321, %v320
        %v604 = vpack.c.bf16 %v323, %v322
        %v605 = vpack.c.bf16 %v325, %v324
        %v606 = vpack.c.bf16 %v327, %v326
        %v607 = vpack.c.bf16 %v329, %v328
        %v608 = vpack.c.bf16 %v331, %v330
        %v609 = vpack.c.bf16 %v333, %v332
        %v610 = vpack.c.bf16 %v335, %v334
        %v611 = vpack.c.bf16 %v561, %v562
        %v612 = vpack.c.bf16 %v559, %v560
        %v613 = vpack.c.bf16 %v557, %v558
        %v614 = vpack.c.bf16 %v555, %v556
        %v615 = vpack.c.bf16 %v553, %v554
        %v616 = vpack.c.bf16 %v551, %v552
        %v617 = vpack.c.bf16 %v549, %v550
        %v618 = vpack.c.bf16 %v547, %v548
        %v619 = vpack.c.bf16 %v545, %v546
        %v620 = vpack.c.bf16 %v543, %v544
        %v621 = vpack.c.bf16 %v541, %v542
        %v622 = vpack.c.bf16 %v539, %v540
        %v623 = vpack.c.bf16 %v537, %v538
        %v624 = vpack.c.bf16 %v535, %v536
        %v625 = vpack.c.bf16 %v533, %v534
        %v626 = vpack.c.bf16 %v531, %v532
        %v627 = vpack.c.bf16 %v529, %v530
        %v628 = vpack.c.bf16 %v527, %v528
        %v629 = vpack.c.bf16 %v525, %v526
        %v630 = vpack.c.bf16 %v523, %v524
        %v631 = vpack.c.bf16 %v521, %v522
        %v632 = vpack.c.bf16 %v519, %v520
        %v633 = vpack.c.bf16 %v517, %v518
        %v634 = vpack.c.bf16 %v515, %v516
        %v635 = vpack.c.bf16 %v448, %v449
        %v636 = vpack.c.bf16 %v446, %v447
        %v637 = vpack.c.bf16 %v444, %v445
        %v638 = vpack.c.bf16 %v442, %v443
        %v639 = vpack.c.bf16 %v440, %v441
        %v640 = vpack.c.bf16 %v438, %v439
        %v641 = vpack.c.bf16 %v436, %v437
        %v642 = vpack.c.bf16 %v434, %v435
        %v643 = vpack.c.bf16 %v432, %v433
        %v644 = vpack.c.bf16 %v430, %v431
        %v645 = vpack.c.bf16 %v428, %v429
        %v646 = vpack.c.bf16 %v426, %v427
        %v647 = vpack.c.bf16 %v424, %v425
        %v648 = vpack.c.bf16 %v422, %v423
        %v649 = vpack.c.bf16 %v420, %v421
        %v650 = vpack.c.bf16 %v418, %v419
        %v651 = vpack.c.bf16 %v416, %v417
        %v652 = vpack.c.bf16 %v414, %v415
        %v653 = vpack.c.bf16 %v412, %v413
        %v654 = vpack.c.bf16 %v410, %v411
        %v655 = vpack.c.bf16 %v408, %v409
        %v656 = vpack.c.bf16 %v406, %v407
        %v657 = vpack.c.bf16 %v404, %v405
        %v658 = vpack.c.bf16 %v402, %v403
        %v659 = vpack.c.bf16 %v292, %v291
        %v660 = vpack.c.bf16 %v294, %v293
        %v661 = vpack.c.bf16 %v296, %v295
        %v662 = vpack.c.bf16 %v298, %v297
        %v663 = vpack.c.bf16 %v300, %v299
        %v664 = vpack.c.bf16 %v302, %v301
        %v665 = vpack.c.bf16 %v304, %v303
        %v666 = vpack.c.bf16 %v306, %v305
        %v667 = vpack.c.bf16 %v308, %v307
        %v668 = vpack.c.bf16 %v310, %v309
        %v669 = vpack.c.bf16 %v312, %v311
        %v670 = vpack.c.bf16 %v314, %v313
        %v671 = vpack.c.bf16 %v316, %v315
        %v672 = vpack.c.bf16 %v318, %v317
        %v673 = vpack.c.bf16 %v320, %v319
        %v674 = vpack.c.bf16 %v322, %v321
        %v675 = vpack.c.bf16 %v324, %v323
        %v676 = vpack.c.bf16 %v326, %v325
        %v677 = vpack.c.bf16 %v328, %v327
        %v678 = vpack.c.bf16 %v330, %v329
        %v679 = vpack.c.bf16 %v332, %v331
        %v680 = vpack.c.bf16 %v334, %v333
        %v681 = vpack.c.bf16 %v336, %v335
        %v682 = vpack.c.bf16 %v338, %v337
        %v683 = vpack.c.bf16 %v558, %v559
        %v684 = vpack.c.bf16 %v556, %v557
        %v685 = vpack.c.bf16 %v554, %v555
        %v686 = vpack.c.bf16 %v552, %v553
        %v687 = vpack.c.bf16 %v550, %v551
        %v688 = vpack.c.bf16 %v548, %v549
        %v689 = vpack.c.bf16 %v546, %v547
        %v690 = vpack.c.bf16 %v544, %v545
        %v691 = vpack.c.bf16 %v542, %v543
        %v692 = vpack.c.bf16 %v540, %v541
        %v693 = vpack.c.bf16 %v538, %v539
        %v694 = vpack.c.bf16 %v536, %v537
        %v695 = vpack.c.bf16 %v534, %v535
        %v696 = vpack.c.bf16 %v532, %v533
        %v697 = vpack.c.bf16 %v530, %v531
        %v698 = vpack.c.bf16 %v528, %v529
        %v699 = vpack.c.bf16 %v526, %v527
        %v700 = vpack.c.bf16 %v524, %v525
        %v701 = vpack.c.bf16 %v522, %v523
        %v702 = vpack.c.bf16 %v520, %v521
        %v703 = vpack.c.bf16 %v518, %v519
        %v704 = vpack.c.bf16 %v516, %v517
        %v705 = vpack.c.bf16 %v514, %v515
        %v706 = vpack.c.bf16 %v512, %v513
        %v707 = vpack.c.bf16 %v403, %v404
        %v708 = vpack.c.bf16 %v401, %v402
        %v709 = vpack.c.bf16 %v399, %v400
        %v710 = vpack.c.bf16 %v337, %v336
        %v711 = vpack.c.bf16 %v339, %v338
        %v712 = vpack.c.bf16 %v341, %v340
        %v713 = vpack.c.bf16 %v513, %v514
        %v714 = vpack.c.bf16 %v511, %v512
        %v715 = vpack.c.bf16 %v509, %v510
        %v716 = vld [vmem:[#allocation3] sm:$0xf]
        %v717 = vld [vmem:[#allocation3 + $0x4] sm:$0xf]
        %v718 = vld [vmem:[#allocation3 + $0x8] sm:$0xf]
        %v719 = vld [vmem:[#allocation3 + $0xc] sm:$0xf]
        %v720 = vld [vmem:[#allocation3 + $0x10] sm:$0xf]
        %v721 = vld [vmem:[#allocation3 + $0x14] sm:$0xf]
        %v722 = vld [vmem:[#allocation3 + $0x18] sm:$0xf]
        %v723 = vld [vmem:[#allocation3 + $0x1c] sm:$0xf]
        %v724 = vld [vmem:[#allocation3 + $0x20] sm:$0xf]
        %v725 = vld [vmem:[#allocation3 + $0x24] sm:$0xf]
        %v726 = vld [vmem:[#allocation3 + $0x28] sm:$0xf]
        %v727 = vld [vmem:[#allocation3 + $0x2c] sm:$0xf]
        %v728 = vld [vmem:[#allocation3 + $0x30] sm:$0xf]
        %v729 = vld [vmem:[#allocation3 + $0x34] sm:$0xf]
        %v730 = vld [vmem:[#allocation3 + $0x38] sm:$0xf]
        %v731 = vld [vmem:[#allocation3 + $0x3c] sm:$0xf]
        %v732 = vld [vmem:[#allocation3 + $0x40] sm:$0xf]
        %v733 = vld [vmem:[#allocation3 + $0x44] sm:$0xf]
        %v734 = vld [vmem:[#allocation3 + $0x48] sm:$0xf]
        %v735 = vld [vmem:[#allocation3 + $0x4c] sm:$0xf]
        %v736 = vld [vmem:[#allocation3 + $0x50] sm:$0xf]
        %v737 = vld [vmem:[#allocation3 + $0x54] sm:$0xf]
        %v738 = vld [vmem:[#allocation3 + $0x58] sm:$0xf]
        %v739 = vld [vmem:[#allocation3 + $0x5c] sm:$0xf]
        %v740 = vld [vmem:[#allocation3 + $0x60] sm:$0xf]
        %v741 = vld [vmem:[#allocation3 + $0x64] sm:$0xf]
        %v742 = vld [vmem:[#allocation3 + $0x68] sm:$0xf]
        %v743 = vld [vmem:[#allocation3 + $0x6c] sm:$0xf]
        %v744 = vld [vmem:[#allocation3 + $0x70] sm:$0xf]
        %v745 = vld [vmem:[#allocation3 + $0x74] sm:$0xf]
        %v746 = vld [vmem:[#allocation3 + $0x78] sm:$0xf]
        %v747 = vld [vmem:[#allocation3 + $0x7c] sm:$0xf]
        %v748 = vld [vmem:[#allocation3 + $0x80] sm:$0xf]
        %v749 = vld [vmem:[#allocation3 + $0x84] sm:$0xf]
        %v750 = vld [vmem:[#allocation3 + $0x88] sm:$0xf]
        %v751 = vld [vmem:[#allocation3 + $0x8c] sm:$0xf]
        %v752 = vld [vmem:[#allocation3 + $0x90] sm:$0xf]
        %v753 = vld [vmem:[#allocation3 + $0x94] sm:$0xf]
        %v754 = vld [vmem:[#allocation3 + $0x98] sm:$0xf]
        %v755 = vld [vmem:[#allocation3 + $0x9c] sm:$0xf]
        %v756 = vld [vmem:[#allocation3 + $0xa0] sm:$0xf]
        %v757 = vld [vmem:[#allocation3 + $0xa4] sm:$0xf]
        %v758 = vld [vmem:[#allocation3 + $0xa8] sm:$0xf]
        %v759 = vld [vmem:[#allocation3 + $0xac] sm:$0xf]
        %v760 = vld [vmem:[#allocation3 + $0xb0] sm:$0xf]
        %v761 = vld [vmem:[#allocation3 + $0xb4] sm:$0xf]
        %v762 = vld [vmem:[#allocation3 + $0xb8] sm:$0xf]
        %v763 = vld [vmem:[#allocation3 + $0xbc] sm:$0xf]
        %v764 = vld [vmem:[#allocation3 + $0xc0] sm:$0xf]
        %v765 = vld [vmem:[#allocation3 + $0xc4] sm:$0xf]
        %v766 = vld [vmem:[#allocation3 + $0xc8] sm:$0xf]
        %v767 = vld [vmem:[#allocation3 + $0xcc] sm:$0xf]
        %v768 = vld [vmem:[#allocation3 + $0xd0] sm:$0xf]
        %v769 = vld [vmem:[#allocation3 + $0xd4] sm:$0xf]
        %v770 = vld [vmem:[#allocation3 + $0xd8] sm:$0xf]
        %v771 = vld [vmem:[#allocation3 + $0xdc] sm:$0xf]
        %v772 = vld [vmem:[#allocation3 + $0xe0] sm:$0xf]
        %v773 = vld [vmem:[#allocation3 + $0xe4] sm:$0xf]
        %v774 = vld [vmem:[#allocation3 + $0xe8] sm:$0xf]
        %v775 = vld [vmem:[#allocation3 + $0xec] sm:$0xf]
        %v776 = vld [vmem:[#allocation3 + $0xf0] sm:$0xf]
        %v777 = vld [vmem:[#allocation3 + $0xf4] sm:$0xf]
        %v778 = vld [vmem:[#allocation3 + $0xf8] sm:$0xf]
        %v779 = vld [vmem:[#allocation3 + $0xfc] sm:$0xf]
        %v780 = vld [vmem:[#allocation3 + $0x100] sm:$0xf]
        %v781 = vld [vmem:[#allocation3 + $0x104] sm:$0xf]
        %v782 = vld [vmem:[#allocation3 + $0x108] sm:$0xf]
        %v783 = vld [vmem:[#allocation3 + $0x10c] sm:$0xf]
        %v784 = vld [vmem:[#allocation3 + $0x110] sm:$0xf]
        %v785 = vld [vmem:[#allocation3 + $0x114] sm:$0xf]
        %v786 = vld [vmem:[#allocation3 + $0x118] sm:$0xf]
        %v787 = vld [vmem:[#allocation3 + $0x11c] sm:$0xf]
        %v788 = vld [vmem:[#allocation3 + $0x120] sm:$0xf]
        %v789 = vld [vmem:[#allocation3 + $0x124] sm:$0xf]
        %v790 = vld [vmem:[#allocation3 + $0x128] sm:$0xf]
        %v791 = vld [vmem:[#allocation3 + $0x12c] sm:$0xf]
        %v792 = vld [vmem:[#allocation3 + $0x130] sm:$0xf]
        %v793 = vld [vmem:[#allocation3 + $0x134] sm:$0xf]
        %v794 = vld [vmem:[#allocation3 + $0x138] sm:$0xf]
        %v795 = vld [vmem:[#allocation3 + $0x13c] sm:$0xf]
        %v796 = vld [vmem:[#allocation3 + $0x140] sm:$0xf]
        %v797 = vld [vmem:[#allocation3 + $0x144] sm:$0xf]
        %v798 = vld [vmem:[#allocation3 + $0x148] sm:$0xf]
        %v799 = vld [vmem:[#allocation3 + $0x14c] sm:$0xf]
        %v800 = vld [vmem:[#allocation3 + $0x150] sm:$0xf]
        %v801 = vld [vmem:[#allocation3 + $0x154] sm:$0xf]
        %v802 = vld [vmem:[#allocation3 + $0x158] sm:$0xf]
        %v803 = vld [vmem:[#allocation3 + $0x15c] sm:$0xf]
        %v804 = vld [vmem:[#allocation3 + $0x160] sm:$0xf]
        %v805 = vld [vmem:[#allocation3 + $0x164] sm:$0xf]
        %v806 = vld [vmem:[#allocation3 + $0x168] sm:$0xf]
        %v807 = vld [vmem:[#allocation3 + $0x16c] sm:$0xf]
        %v808 = vld [vmem:[#allocation3 + $0x170] sm:$0xf]
        %v809 = vld [vmem:[#allocation3 + $0x174] sm:$0xf]
        %v810 = vld [vmem:[#allocation3 + $0x178] sm:$0xf]
        %v811 = vld [vmem:[#allocation3 + $0x17c] sm:$0xf]
        %v812 = vld [vmem:[#allocation3 + $0x180] sm:$0xf]
        %v813 = vld [vmem:[#allocation3 + $0x184] sm:$0xf]
        %v814 = vld [vmem:[#allocation3 + $0x188] sm:$0xf]
        %v815 = vld [vmem:[#allocation3 + $0x18c] sm:$0xf]
        %v816 = vld [vmem:[#allocation3 + $0x190] sm:$0xf]
        %v817 = vld [vmem:[#allocation3 + $0x194] sm:$0xf]
        %v818 = vld [vmem:[#allocation3 + $0x198] sm:$0xf]
        %v819 = vld [vmem:[#allocation3 + $0x19c] sm:$0xf]
        %v820 = vld [vmem:[#allocation3 + $0x1a0] sm:$0xf]
        %v821 = vld [vmem:[#allocation3 + $0x1a4] sm:$0xf]
        %v822 = vld [vmem:[#allocation3 + $0x1a8] sm:$0xf]
        %v823 = vld [vmem:[#allocation3 + $0x1ac] sm:$0xf]
        %v824 = vld [vmem:[#allocation3 + $0x1b0] sm:$0xf]
        %v825 = vld [vmem:[#allocation3 + $0x1b4] sm:$0xf]
        %v826 = vld [vmem:[#allocation3 + $0x1b8] sm:$0xf]
        %v827 = vld [vmem:[#allocation3 + $0x1bc] sm:$0xf]
        %v828 = vld [vmem:[#allocation3 + $0x1c0] sm:$0xf]
        %v829 = vld [vmem:[#allocation3 + $0x1c4] sm:$0xf]
        %v830 = vld [vmem:[#allocation3 + $0x1c8] sm:$0xf]
        %v831 = vld [vmem:[#allocation3 + $0x1cc] sm:$0xf]
        %v832 = vld [vmem:[#allocation3 + $0x1d0] sm:$0xf]
        %v833 = vld [vmem:[#allocation3 + $0x1d4] sm:$0xf]
        %v834 = vld [vmem:[#allocation3 + $0x1d8] sm:$0xf]
        %v835 = vld [vmem:[#allocation3 + $0x1dc] sm:$0xf]
        %v836 = vld [vmem:[#allocation3 + $0x1e0] sm:$0xf]
        %v837 = vld [vmem:[#allocation3 + $0x1e4] sm:$0xf]
        %v838 = vld [vmem:[#allocation3 + $0x1e8] sm:$0xf]
        %v839 = vld [vmem:[#allocation3 + $0x1ec] sm:$0xf]
        %v840 = vld [vmem:[#allocation3 + $0x1f0] sm:$0xf]
        %v841 = vld [vmem:[#allocation3 + $0x1f4] sm:$0xf]
        %v842 = vld [vmem:[#allocation3 + $0x1f8] sm:$0xf]
        %v843 = vld [vmem:[#allocation3 + $0x1fc] sm:$0xf]
        %v844 = vld [vmem:[#allocation3 + $0x200] sm:$0xf]
        %v845 = vld [vmem:[#allocation3 + $0x204] sm:$0xf]
        %v846 = vld [vmem:[#allocation3 + $0x208] sm:$0xf]
        %v847 = vld [vmem:[#allocation3 + $0x20c] sm:$0xf]
        %v848 = vld [vmem:[#allocation3 + $0x210] sm:$0xf]
        %v849 = vld [vmem:[#allocation3 + $0x214] sm:$0xf]
        %v850 = vld [vmem:[#allocation3 + $0x218] sm:$0xf]
        %v851 = vld [vmem:[#allocation3 + $0x21c] sm:$0xf]
        %v852 = vld [vmem:[#allocation3 + $0x220] sm:$0xf]
        %v853 = vld [vmem:[#allocation3 + $0x224] sm:$0xf]
        %v854 = vld [vmem:[#allocation3 + $0x228] sm:$0xf]
        %v855 = vld [vmem:[#allocation3 + $0x22c] sm:$0xf]
        %v856 = vld [vmem:[#allocation3 + $0x230] sm:$0xf]
        %v857 = vld [vmem:[#allocation3 + $0x234] sm:$0xf]
        %v858 = vld [vmem:[#allocation3 + $0x238] sm:$0xf]
        %v859 = vld [vmem:[#allocation3 + $0x23c] sm:$0xf]
        %v860 = vld [vmem:[#allocation6] sm:$0x1]
        %v862 = vlaneseq
        %v863 = vshrl.u32 %v862, 7
        %v864 = vsub.s32 0, %v863
        %v865 = vrot.slane %v860, %v864
        %v1011 = vunpack.c.l.b16 %v716
        %v1012 = vunpack.c.l.b16 %v717
        %v1013 = vunpack.c.l.b16 %v718
        %v1014 = vunpack.c.l.b16 %v719
        %v1015 = vunpack.c.l.b16 %v720
        %v1016 = vunpack.c.l.b16 %v721
        %v1017 = vunpack.c.l.b16 %v722
        %v1018 = vunpack.c.l.b16 %v723
        %v1019 = vunpack.c.l.b16 %v724
        %v1020 = vunpack.c.l.b16 %v725
        %v1021 = vunpack.c.l.b16 %v726
        %v1022 = vunpack.c.l.b16 %v727
        %v1023 = vunpack.c.l.b16 %v728
        %v1024 = vunpack.c.l.b16 %v729
        %v1025 = vunpack.c.l.b16 %v730
        %v1026 = vunpack.c.l.b16 %v731
        %v1027 = vunpack.c.l.b16 %v732
        %v1028 = vunpack.c.l.b16 %v733
        %v1029 = vunpack.c.l.b16 %v734
        %v1030 = vunpack.c.l.b16 %v735
        %v1031 = vunpack.c.l.b16 %v736
        %v1032 = vunpack.c.l.b16 %v737
        %v1033 = vunpack.c.l.b16 %v738
        %v1034 = vunpack.c.l.b16 %v739
        %v1035 = vunpack.c.l.b16 %v740
        %v1036 = vunpack.c.l.b16 %v741
        %v1037 = vunpack.c.l.b16 %v742
        %v1038 = vunpack.c.l.b16 %v743
        %v1039 = vunpack.c.l.b16 %v744
        %v1040 = vunpack.c.l.b16 %v745
        %v1041 = vunpack.c.l.b16 %v746
        %v1042 = vunpack.c.l.b16 %v747
        %v1043 = vunpack.c.l.b16 %v748
        %v1044 = vunpack.c.l.b16 %v749
        %v1045 = vunpack.c.l.b16 %v750
        %v1046 = vunpack.c.l.b16 %v751
        %v1047 = vunpack.c.l.b16 %v752
        %v1048 = vunpack.c.l.b16 %v753
        %v1049 = vunpack.c.l.b16 %v754
        %v1050 = vunpack.c.l.b16 %v755
        %v1051 = vunpack.c.l.b16 %v756
        %v1052 = vunpack.c.l.b16 %v757
        %v1053 = vunpack.c.l.b16 %v758
        %v1054 = vunpack.c.l.b16 %v759
        %v1055 = vunpack.c.l.b16 %v760
        %v1056 = vunpack.c.l.b16 %v761
        %v1057 = vunpack.c.l.b16 %v762
        %v1058 = vunpack.c.l.b16 %v763
        %v1059 = vunpack.c.l.b16 %v764
        %v1060 = vunpack.c.l.b16 %v765
        %v1061 = vunpack.c.l.b16 %v766
        %v1062 = vunpack.c.l.b16 %v767
        %v1063 = vunpack.c.l.b16 %v768
        %v1064 = vunpack.c.l.b16 %v769
        %v1065 = vunpack.c.l.b16 %v770
        %v1066 = vunpack.c.l.b16 %v771
        %v1067 = vunpack.c.l.b16 %v772
        %v1068 = vunpack.c.l.b16 %v773
        %v1069 = vunpack.c.l.b16 %v774
        %v1070 = vunpack.c.l.b16 %v775
        %v1071 = vunpack.c.l.b16 %v776
        %v1072 = vunpack.c.l.b16 %v777
        %v1073 = vunpack.c.l.b16 %v778
        %v1074 = vunpack.c.l.b16 %v779
        %v1075 = vunpack.c.l.b16 %v780
        %v1076 = vunpack.c.l.b16 %v781
        %v1077 = vunpack.c.l.b16 %v782
        %v1078 = vunpack.c.l.b16 %v783
        %v1079 = vunpack.c.l.b16 %v784
        %v1080 = vunpack.c.l.b16 %v785
        %v1081 = vunpack.c.l.b16 %v786
        %v1082 = vunpack.c.l.b16 %v787
        %v1083 = vunpack.c.l.b16 %v788
        %v1084 = vunpack.c.l.b16 %v789
        %v1085 = vunpack.c.l.b16 %v790
        %v1086 = vunpack.c.l.b16 %v791
        %v1087 = vunpack.c.l.b16 %v792
        %v1088 = vunpack.c.l.b16 %v793
        %v1089 = vunpack.c.l.b16 %v794
        %v1090 = vunpack.c.l.b16 %v795
        %v1091 = vunpack.c.l.b16 %v796
        %v1092 = vunpack.c.l.b16 %v797
        %v1093 = vunpack.c.l.b16 %v798
        %v1094 = vunpack.c.l.b16 %v799
        %v1095 = vunpack.c.l.b16 %v800
        %v1096 = vunpack.c.l.b16 %v801
        %v1097 = vunpack.c.l.b16 %v802
        %v1098 = vunpack.c.l.b16 %v803
        %v1099 = vunpack.c.l.b16 %v804
        %v1100 = vunpack.c.l.b16 %v805
        %v1101 = vunpack.c.l.b16 %v806
        %v1102 = vunpack.c.l.b16 %v807
        %v1103 = vunpack.c.l.b16 %v808
        %v1104 = vunpack.c.l.b16 %v809
        %v1105 = vunpack.c.l.b16 %v810
        %v1106 = vunpack.c.l.b16 %v811
        %v1107 = vunpack.c.l.b16 %v812
        %v1108 = vunpack.c.l.b16 %v813
        %v1109 = vunpack.c.l.b16 %v814
        %v1110 = vunpack.c.l.b16 %v815
        %v1111 = vunpack.c.l.b16 %v816
        %v1112 = vunpack.c.l.b16 %v817
        %v1113 = vunpack.c.l.b16 %v818
        %v1114 = vunpack.c.l.b16 %v819
        %v1115 = vunpack.c.l.b16 %v820
        %v1116 = vunpack.c.l.b16 %v821
        %v1117 = vunpack.c.l.b16 %v822
        %v1118 = vunpack.c.l.b16 %v823
        %v1119 = vunpack.c.l.b16 %v824
        %v1120 = vunpack.c.l.b16 %v825
        %v1121 = vunpack.c.l.b16 %v826
        %v1122 = vunpack.c.l.b16 %v827
        %v1123 = vunpack.c.l.b16 %v828
        %v1124 = vunpack.c.l.b16 %v829
        %v1125 = vunpack.c.l.b16 %v830
        %v1126 = vunpack.c.l.b16 %v831
        %v1127 = vunpack.c.l.b16 %v832
        %v1128 = vunpack.c.l.b16 %v833
        %v1129 = vunpack.c.l.b16 %v834
        %v1130 = vunpack.c.l.b16 %v835
        %v1131 = vunpack.c.l.b16 %v836
        %v1132 = vunpack.c.l.b16 %v837
        %v1133 = vunpack.c.l.b16 %v838
        %v1134 = vunpack.c.l.b16 %v839
        %v1135 = vunpack.c.l.b16 %v840
        %v1136 = vunpack.c.l.b16 %v841
        %v1137 = vunpack.c.l.b16 %v842
        %v1138 = vunpack.c.l.b16 %v843
        %v1139 = vunpack.c.l.b16 %v844
        %v1140 = vunpack.c.l.b16 %v845
        %v1141 = vunpack.c.l.b16 %v846
        %v1142 = vunpack.c.l.b16 %v847
        %v1143 = vunpack.c.l.b16 %v848
        %v1144 = vunpack.c.l.b16 %v849
        %v1145 = vunpack.c.l.b16 %v850
        %v1146 = vunpack.c.l.b16 %v851
        %v1147 = vunpack.c.l.b16 %v852
        %v1148 = vunpack.c.l.b16 %v853
        %v1149 = vunpack.c.l.b16 %v854
        %v1150 = vunpack.c.l.b16 %v855
        %v1151 = vunpack.c.l.b16 %v856
        %v1152 = vunpack.c.l.b16 %v857
        %v1153 = vunpack.c.l.b16 %v858
        %v1154 = vunpack.c.l.b16 %v859
        %v1155 = vpack.c.b16 %v1012, %v1011
        %v1156 = vpack.c.b16 %v1014, %v1013
        %v1157 = vpack.c.b16 %v1016, %v1015
        %v1158 = vpack.c.b16 %v1018, %v1017
        %v1159 = vpack.c.b16 %v1020, %v1019
        %v1160 = vpack.c.b16 %v1022, %v1021
        %v1161 = vpack.c.b16 %v1024, %v1023
        %v1162 = vpack.c.b16 %v1026, %v1025
        %v1163 = vpack.c.b16 %v1028, %v1027
        %v1164 = vpack.c.b16 %v1030, %v1029
        %v1165 = vpack.c.b16 %v1032, %v1031
        %v1166 = vpack.c.b16 %v1034, %v1033
        %v1167 = vpack.c.b16 %v1036, %v1035
        %v1168 = vpack.c.b16 %v1038, %v1037
        %v1169 = vpack.c.b16 %v1040, %v1039
        %v1170 = vpack.c.b16 %v1042, %v1041
        %v1171 = vpack.c.b16 %v1044, %v1043
        %v1172 = vpack.c.b16 %v1046, %v1045
        %v1173 = vpack.c.b16 %v1048, %v1047
        %v1174 = vpack.c.b16 %v1050, %v1049
        %v1175 = vpack.c.b16 %v1052, %v1051
        %v1176 = vpack.c.b16 %v1054, %v1053
        %v1177 = vpack.c.b16 %v1056, %v1055
        %v1178 = vpack.c.b16 %v1058, %v1057
        %v1179 = vpack.c.b16 %v1060, %v1059
        %v1180 = vpack.c.b16 %v1062, %v1061
        %v1181 = vpack.c.b16 %v1064, %v1063
        %v1182 = vpack.c.b16 %v1066, %v1065
        %v1183 = vpack.c.b16 %v1068, %v1067
        %v1184 = vpack.c.b16 %v1070, %v1069
        %v1185 = vpack.c.b16 %v1072, %v1071
        %v1186 = vpack.c.b16 %v1074, %v1073
        %v1187 = vpack.c.b16 %v1076, %v1075
        %v1188 = vpack.c.b16 %v1078, %v1077
        %v1189 = vpack.c.b16 %v1080, %v1079
        %v1190 = vpack.c.b16 %v1082, %v1081
        %v1191 = vpack.c.b16 %v1084, %v1083
        %v1192 = vpack.c.b16 %v1086, %v1085
        %v1193 = vpack.c.b16 %v1088, %v1087
        %v1194 = vpack.c.b16 %v1090, %v1089
        %v1195 = vpack.c.b16 %v1092, %v1091
        %v1196 = vpack.c.b16 %v1094, %v1093
        %v1197 = vpack.c.b16 %v1096, %v1095
        %v1198 = vpack.c.b16 %v1098, %v1097
        %v1199 = vpack.c.b16 %v1100, %v1099
        %v1200 = vpack.c.b16 %v1102, %v1101
        %v1201 = vpack.c.b16 %v1104, %v1103
        %v1202 = vpack.c.b16 %v1106, %v1105
        %v1203 = vpack.c.b16 %v1108, %v1107
        %v1204 = vpack.c.b16 %v1110, %v1109
        %v1205 = vpack.c.b16 %v1112, %v1111
        %v1206 = vpack.c.b16 %v1114, %v1113
        %v1207 = vpack.c.b16 %v1116, %v1115
        %v1208 = vpack.c.b16 %v1118, %v1117
        %v1209 = vpack.c.b16 %v1120, %v1119
        %v1210 = vpack.c.b16 %v1122, %v1121
        %v1211 = vpack.c.b16 %v1124, %v1123
        %v1212 = vpack.c.b16 %v1126, %v1125
        %v1213 = vpack.c.b16 %v1128, %v1127
        %v1214 = vpack.c.b16 %v1130, %v1129
        %v1215 = vpack.c.b16 %v1132, %v1131
        %v1216 = vpack.c.b16 %v1134, %v1133
        %v1217 = vpack.c.b16 %v1136, %v1135
        %v1218 = vpack.c.b16 %v1138, %v1137
        %v1219 = vpack.c.b16 %v1140, %v1139
        %v1220 = vpack.c.b16 %v1142, %v1141
        %v1221 = vpack.c.b16 %v1144, %v1143
        %v1222 = vpack.c.b16 %v1146, %v1145
        %v1223 = vpack.c.b16 %v1148, %v1147
        %v1224 = vpack.c.b16 %v1150, %v1149
        %v1225 = vpack.c.b16 %v1152, %v1151
        %v1226 = vpack.c.b16 %v1154, %v1153
        %1299 = vmatprep.subr.bf16.mxu0 0
        %1300 = vmatpush1.bf16.msra.mxu0 %v1155
        %1301 = vmatprep.subr.bf16.mxu0 0
        %1302 = vmatpush1.bf16.msra.mxu0 %v1156
        %1303 = vmatprep.subr.bf16.mxu0 0
        %1304 = vmatpush1.bf16.msra.mxu0 %v1157
        %1305 = vmatprep.subr.bf16.mxu0 0
        %1306 = vmatpush1.bf16.msra.mxu0 %v1158
        %1307 = vmatprep.subr.bf16.mxu0 0
        %1308 = vmatpush1.bf16.msra.mxu0 %v1159
        %1309 = vmatprep.subr.bf16.mxu0 0
        %1310 = vmatpush1.bf16.msra.mxu0 %v1160
        %1311 = vmatprep.subr.bf16.mxu0 0
        %1312 = vmatpush1.bf16.msra.mxu0 %v1161
        %1313 = vmatprep.subr.bf16.mxu0 0
        %1314 = vmatpush1.bf16.msra.mxu0 %v1162
        %1315 = vmatprep.subr.bf16.mxu0 0
        %1316 = vmatpush1.bf16.msra.mxu0 %v1163
        %1317 = vmatprep.subr.bf16.mxu0 0
        %1318 = vmatpush1.bf16.msra.mxu0 %v1164
        %1319 = vmatprep.subr.bf16.mxu0 0
        %1320 = vmatpush1.bf16.msra.mxu0 %v1165
        %1321 = vmatprep.subr.bf16.mxu0 0
        %1322 = vmatpush1.bf16.msra.mxu0 %v1166
        %1323 = vmatprep.subr.bf16.mxu0 0
        %1324 = vmatpush1.bf16.msra.mxu0 %v1167
        %1325 = vmatprep.subr.bf16.mxu0 0
        %1326 = vmatpush1.bf16.msra.mxu0 %v1168
        %1327 = vmatprep.subr.bf16.mxu0 0
        %1328 = vmatpush1.bf16.msra.mxu0 %v1169
        %1329 = vmatprep.subr.bf16.mxu0 0
        %1330 = vmatpush1.bf16.msra.mxu0 %v1170
        %1331 = vmatprep.mubr.bf16.mxu0 %v587
        %1332 = vmatmul.mubr.bf16.gmra.mrb[0].mxu0 %v563
        %v1333 = vpop.f32.mrb[0].mxu0
        %v1334 = vadd.f32 %v865, %v1333
        %v1335 = vpop.f32.mrb[0].mxu0
        %v1336 = vpop.f32.mrb[0].mxu0
        %v1337 = vadd.f32 %v865, %v1336
        %v1338 = vpop.f32.mrb[0].mxu0
        %1339 = vmatprep.mubr.bf16.mxu0 %v588
        %1340 = vmatmul.mubr.bf16.gmra.mrb[0].mxu0 %v564
        %v1341 = vpop.f32.mrb[0].mxu0
        %v1342 = vadd.f32 %v865, %v1341
        %v1343 = vpop.f32.mrb[0].mxu0
        %v1344 = vpop.f32.mrb[0].mxu0
        %v1345 = vadd.f32 %v865, %v1344
        %v1346 = vpop.f32.mrb[0].mxu0
        %1347 = vmatprep.mubr.bf16.mxu0 %v589
        %1348 = vmatmul.mubr.bf16.gmra.mrb[0].mxu0 %v565
        %v1349 = vpop.f32.mrb[0].mxu0
        %v1350 = vadd.f32 %v865, %v1349
        %v1351 = vpop.f32.mrb[0].mxu0
        %v1352 = vpop.f32.mrb[0].mxu0
        %v1353 = vadd.f32 %v865, %v1352
        %v1354 = vpop.f32.mrb[0].mxu0
        %1355 = vmatprep.mubr.bf16.mxu0 %v590
        %1356 = vmatmul.mubr.bf16.gmra.mrb[0].mxu0 %v566
        %v1357 = vpop.f32.mrb[0].mxu0
        %v1358 = vadd.f32 %v865, %v1357
        %v1359 = vpop.f32.mrb[0].mxu0
        %v1360 = vpop.f32.mrb[0].mxu0
        %v1361 = vadd.f32 %v865, %v1360
        %v1362 = vpop.f32.mrb[0].mxu0
        %1363 = vmatprep.mubr.bf16.mxu0 %v591
        %1364 = vmatmul.mubr.bf16.gmra.mrb[0].mxu0 %v567
        %v1365 = vpop.f32.mrb[0].mxu0
        %v1366 = vadd.f32 %v865, %v1365
        %v1367 = vpop.f32.mrb[0].mxu0
        %v1368 = vpop.f32.mrb[0].mxu0
        %v1369 = vadd.f32 %v865, %v1368
        %v1370 = vpop.f32.mrb[0].mxu0
        %1371 = vmatprep.mubr.bf16.mxu0 %v592
        %1372 = vmatmul.mubr.bf16.gmra.mrb[0].mxu0 %v568
        %v1373 = vpop.f32.mrb[0].mxu0
        %v1374 = vadd.f32 %v865, %v1373
        %v1375 = vpop.f32.mrb[0].mxu0
        %v1376 = vpop.f32.mrb[0].mxu0
        %v1377 = vadd.f32 %v865, %v1376
        %v1378 = vpop.f32.mrb[0].mxu0
        %1379 = vmatprep.mubr.bf16.mxu0 %v593
        %1380 = vmatmul.mubr.bf16.gmra.mrb[0].mxu0 %v569
        %v1381 = vpop.f32.mrb[0].mxu0
        %v1382 = vadd.f32 %v865, %v1381
        %v1383 = vpop.f32.mrb[0].mxu0
        %v1384 = vpop.f32.mrb[0].mxu0
        %v1385 = vadd.f32 %v865, %v1384
        %v1386 = vpop.f32.mrb[0].mxu0
        %1387 = vmatprep.mubr.bf16.mxu0 %v594
        %1388 = vmatmul.mubr.bf16.gmra.mrb[0].mxu0 %v570
        %v1389 = vpop.f32.mrb[0].mxu0
        %v1390 = vadd.f32 %v865, %v1389
        %v1391 = vpop.f32.mrb[0].mxu0
        %v1392 = vpop.f32.mrb[0].mxu0
        %v1393 = vadd.f32 %v865, %v1392
        %v1394 = vpop.f32.mrb[0].mxu0
        %1395 = vmatprep.mubr.bf16.mxu0 %v595
        %1396 = vmatmul.mubr.bf16.gmra.mrb[0].mxu0 %v571
        %v1397 = vpop.f32.mrb[0].mxu0
        %v1398 = vadd.f32 %v865, %v1397
        %v1399 = vpop.f32.mrb[0].mxu0
        %v1400 = vpop.f32.mrb[0].mxu0
        %v1401 = vadd.f32 %v865, %v1400
        %v1402 = vpop.f32.mrb[0].mxu0
        %1403 = vmatprep.mubr.bf16.mxu0 %v596
        %1404 = vmatmul.mubr.bf16.gmra.mrb[0].mxu0 %v572
        %v1405 = vpop.f32.mrb[0].mxu0
        %v1406 = vadd.f32 %v865, %v1405
        %v1407 = vpop.f32.mrb[0].mxu0
        %v1408 = vpop.f32.mrb[0].mxu0
        %v1409 = vadd.f32 %v865, %v1408
        %v1410 = vpop.f32.mrb[0].mxu0
        %1411 = vmatprep.mubr.bf16.mxu0 %v597
        %1412 = vmatmul.mubr.bf16.gmra.mrb[0].mxu0 %v573
        %v1413 = vpop.f32.mrb[0].mxu0
        %v1414 = vadd.f32 %v865, %v1413
        %v1415 = vpop.f32.mrb[0].mxu0
        %v1416 = vpop.f32.mrb[0].mxu0
        %v1417 = vadd.f32 %v865, %v1416
        %v1418 = vpop.f32.mrb[0].mxu0
        %1419 = vmatprep.mubr.bf16.mxu0 %v598
        %1420 = vmatmul.mubr.bf16.gmra.mrb[0].mxu0 %v574
        %v1421 = vpop.f32.mrb[0].mxu0
        %v1422 = vadd.f32 %v865, %v1421
        %v1423 = vpop.f32.mrb[0].mxu0
        %v1424 = vpop.f32.mrb[0].mxu0
        %v1425 = vadd.f32 %v865, %v1424
        %v1426 = vpop.f32.mrb[0].mxu0
        %1427 = vmatprep.mubr.bf16.mxu0 %v599
        %1428 = vmatmul.mubr.bf16.gmra.mrb[0].mxu0 %v575
        %v1429 = vpop.f32.mrb[0].mxu0
        %v1430 = vadd.f32 %v865, %v1429
        %v1431 = vpop.f32.mrb[0].mxu0
        %v1432 = vpop.f32.mrb[0].mxu0
        %v1433 = vadd.f32 %v865, %v1432
        %v1434 = vpop.f32.mrb[0].mxu0
        %1435 = vmatprep.mubr.bf16.mxu0 %v600
        %1436 = vmatmul.mubr.bf16.gmra.mrb[0].mxu0 %v576
        %v1437 = vpop.f32.mrb[0].mxu0
        %v1438 = vadd.f32 %v865, %v1437
        %v1439 = vpop.f32.mrb[0].mxu0
        %v1440 = vpop.f32.mrb[0].mxu0
        %v1441 = vadd.f32 %v865, %v1440
        %v1442 = vpop.f32.mrb[0].mxu0
        %1443 = vmatprep.mubr.bf16.mxu0 %v601
        %1444 = vmatmul.mubr.bf16.gmra.mrb[0].mxu0 %v577
        %v1445 = vpop.f32.mrb[0].mxu0
        %v1446 = vadd.f32 %v865, %v1445
        %v1447 = vpop.f32.mrb[0].mxu0
        %v1448 = vpop.f32.mrb[0].mxu0
        %v1449 = vadd.f32 %v865, %v1448
        %v1450 = vpop.f32.mrb[0].mxu0
        %1451 = vmatprep.mubr.bf16.mxu0 %v602
        %1452 = vmatmul.mubr.bf16.gmra.mrb[0].mxu0 %v578
        %v1453 = vpop.f32.mrb[0].mxu0
        %v1454 = vadd.f32 %v865, %v1453
        %v1455 = vpop.f32.mrb[0].mxu0
        %v1456 = vpop.f32.mrb[0].mxu0
        %v1457 = vadd.f32 %v865, %v1456
        %v1458 = vpop.f32.mrb[0].mxu0
        %1459 = vmatprep.mubr.bf16.mxu0 %v603
        %1460 = vmatmul.mubr.bf16.gmra.mrb[0].mxu0 %v579
        %v1461 = vpop.f32.mrb[0].mxu0
        %v1462 = vadd.f32 %v865, %v1461
        %v1463 = vpop.f32.mrb[0].mxu0
        %v1464 = vpop.f32.mrb[0].mxu0
        %v1465 = vadd.f32 %v865, %v1464
        %v1466 = vpop.f32.mrb[0].mxu0
        %1467 = vmatprep.mubr.bf16.mxu0 %v604
        %1468 = vmatmul.mubr.bf16.gmra.mrb[0].mxu0 %v580
        %v1469 = vpop.f32.mrb[0].mxu0
        %v1470 = vadd.f32 %v865, %v1469
        %v1471 = vpop.f32.mrb[0].mxu0
        %v1472 = vpop.f32.mrb[0].mxu0
        %v1473 = vadd.f32 %v865, %v1472
        %v1474 = vpop.f32.mrb[0].mxu0
        %1475 = vmatprep.mubr.bf16.mxu0 %v605
        %1476 = vmatmul.mubr.bf16.gmra.mrb[0].mxu0 %v581
        %v1477 = vpop.f32.mrb[0].mxu0
        %v1478 = vadd.f32 %v865, %v1477
        %v1479 = vpop.f32.mrb[0].mxu0
        %v1480 = vpop.f32.mrb[0].mxu0
        %v1481 = vadd.f32 %v865, %v1480
        %v1482 = vpop.f32.mrb[0].mxu0
        %1483 = vmatprep.mubr.bf16.mxu0 %v606
        %1484 = vmatmul.mubr.bf16.gmra.mrb[0].mxu0 %v582
        %v1485 = vpop.f32.mrb[0].mxu0
        %v1486 = vadd.f32 %v865, %v1485
        %v1487 = vpop.f32.mrb[0].mxu0
        %v1488 = vpop.f32.mrb[0].mxu0
        %v1489 = vadd.f32 %v865, %v1488
        %v1490 = vpop.f32.mrb[0].mxu0
        %1491 = vmatprep.mubr.bf16.mxu0 %v607
        %1492 = vmatmul.mubr.bf16.gmra.mrb[0].mxu0 %v583
        %v1493 = vpop.f32.mrb[0].mxu0
        %v1494 = vadd.f32 %v865, %v1493
        %v1495 = vpop.f32.mrb[0].mxu0
        %v1496 = vpop.f32.mrb[0].mxu0
        %v1497 = vadd.f32 %v865, %v1496
        %v1498 = vpop.f32.mrb[0].mxu0
        %1499 = vmatprep.mubr.bf16.mxu0 %v608
        %1500 = vmatmul.mubr.bf16.gmra.mrb[0].mxu0 %v584
        %v1501 = vpop.f32.mrb[0].mxu0
        %v1502 = vadd.f32 %v865, %v1501
        %v1503 = vpop.f32.mrb[0].mxu0
        %v1504 = vpop.f32.mrb[0].mxu0
        %v1505 = vadd.f32 %v865, %v1504
        %v1506 = vpop.f32.mrb[0].mxu0
        %1507 = vmatprep.mubr.bf16.mxu0 %v609
        %1508 = vmatmul.mubr.bf16.gmra.mrb[0].mxu0 %v585
        %v1509 = vpop.f32.mrb[0].mxu0
        %v1510 = vadd.f32 %v865, %v1509
        %v1511 = vpop.f32.mrb[0].mxu0
        %v1512 = vpop.f32.mrb[0].mxu0
        %v1513 = vadd.f32 %v865, %v1512
        %v1514 = vpop.f32.mrb[0].mxu0
        %1515 = vmatprep.mubr.bf16.mxu0 %v610
        %1516 = vmatmul.mubr.bf16.gmra.mrb[0].mxu0 %v586
        %v1517 = vpop.f32.mrb[0].mxu0
        %v1518 = vadd.f32 %v865, %v1517
        %v1519 = vpop.f32.mrb[0].mxu0
        %v1520 = vpop.f32.mrb[0].mxu0
        %v1521 = vadd.f32 %v865, %v1520
        %v1522 = vpop.f32.mrb[0].mxu0
        %1523 = vdwg.mxu0
        %1524 = vmatprep.subr.bf16.mxu0 0
        %1525 = vmatpush1.bf16.msra.mxu0 %v1171
        %1526 = vmatprep.subr.bf16.mxu0 0
        %1527 = vmatpush1.bf16.msra.mxu0 %v1172
        %1528 = vmatprep.subr.bf16.mxu0 0
        %1529 = vmatpush1.bf16.msra.mxu0 %v1173
        %1530 = vmatprep.subr.bf16.mxu0 0
        %1531 = vmatpush1.bf16.msra.mxu0 %v1174
        %1532 = vmatprep.subr.bf16.mxu0 0
        %1533 = vmatpush1.bf16.msra.mxu0 %v1175
        %1534 = vmatprep.subr.bf16.mxu0 0
        %1535 = vmatpush1.bf16.msra.mxu0 %v1176
        %1536 = vmatprep.subr.bf16.mxu0 0
        %1537 = vmatpush1.bf16.msra.mxu0 %v1177
        %1538 = vmatprep.subr.bf16.mxu0 0
        %1539 = vmatpush1.bf16.msra.mxu0 %v1178
        %1540 = vmatprep.subr.bf16.mxu0 0
        %1541 = vmatpush1.bf16.msra.mxu0 %v1179
        %1542 = vmatprep.subr.bf16.mxu0 0
        %1543 = vmatpush1.bf16.msra.mxu0 %v1180
        %1544 = vmatprep.subr.bf16.mxu0 0
        %1545 = vmatpush1.bf16.msra.mxu0 %v1181
        %1546 = vmatprep.subr.bf16.mxu0 0
        %1547 = vmatpush1.bf16.msra.mxu0 %v1182
        %1548 = vmatprep.subr.bf16.mxu0 0
        %1549 = vmatpush1.bf16.msra.mxu0 %v1183
        %1550 = vmatprep.subr.bf16.mxu0 0
        %1551 = vmatpush1.bf16.msra.mxu0 %v1184
        %1552 = vmatprep.subr.bf16.mxu0 0
        %1553 = vmatpush1.bf16.msra.mxu0 %v1185
        %1554 = vmatprep.subr.bf16.mxu0 0
        %1555 = vmatpush1.bf16.msra.mxu0 %v1186
        %1556 = vmatprep.mubr.bf16.mxu0 %v635
        %1557 = vmatmul.mubr.bf16.gmra.mrb[0].mxu0 %v611
        %v1558 = vpop.f32.mrb[0].mxu0
        %v1559 = vadd.f32 %v1334, %v1558
        %v1560 = vpop.f32.mrb[0].mxu0
        %v1561 = vpop.f32.mrb[0].mxu0
        %v1562 = vadd.f32 %v1337, %v1561
        %v1563 = vpop.f32.mrb[0].mxu0
        %1564 = vmatprep.mubr.bf16.mxu0 %v636
        %1565 = vmatmul.mubr.bf16.gmra.mrb[0].mxu0 %v612
        %v1566 = vpop.f32.mrb[0].mxu0
        %v1567 = vadd.f32 %v1342, %v1566
        %v1568 = vpop.f32.mrb[0].mxu0
        %v1569 = vpop.f32.mrb[0].mxu0
        %v1570 = vadd.f32 %v1345, %v1569
        %v1571 = vpop.f32.mrb[0].mxu0
        %1572 = vmatprep.mubr.bf16.mxu0 %v637
        %1573 = vmatmul.mubr.bf16.gmra.mrb[0].mxu0 %v613
        %v1574 = vpop.f32.mrb[0].mxu0
        %v1575 = vadd.f32 %v1350, %v1574
        %v1576 = vpop.f32.mrb[0].mxu0
        %v1577 = vpop.f32.mrb[0].mxu0
        %v1578 = vadd.f32 %v1353, %v1577
        %v1579 = vpop.f32.mrb[0].mxu0
        %1580 = vmatprep.mubr.bf16.mxu0 %v638
        %1581 = vmatmul.mubr.bf16.gmra.mrb[0].mxu0 %v614
        %v1582 = vpop.f32.mrb[0].mxu0
        %v1583 = vadd.f32 %v1358, %v1582
        %v1584 = vpop.f32.mrb[0].mxu0
        %v1585 = vpop.f32.mrb[0].mxu0
        %v1586 = vadd.f32 %v1361, %v1585
        %v1587 = vpop.f32.mrb[0].mxu0
        %1588 = vmatprep.mubr.bf16.mxu0 %v639
        %1589 = vmatmul.mubr.bf16.gmra.mrb[0].mxu0 %v615
        %v1590 = vpop.f32.mrb[0].mxu0
        %v1591 = vadd.f32 %v1366, %v1590
        %v1592 = vpop.f32.mrb[0].mxu0
        %v1593 = vpop.f32.mrb[0].mxu0
        %v1594 = vadd.f32 %v1369, %v1593
        %v1595 = vpop.f32.mrb[0].mxu0
        %1596 = vmatprep.mubr.bf16.mxu0 %v640
        %1597 = vmatmul.mubr.bf16.gmra.mrb[0].mxu0 %v616
        %v1598 = vpop.f32.mrb[0].mxu0
        %v1599 = vadd.f32 %v1374, %v1598
        %v1600 = vpop.f32.mrb[0].mxu0
        %v1601 = vpop.f32.mrb[0].mxu0
        %v1602 = vadd.f32 %v1377, %v1601
        %v1603 = vpop.f32.mrb[0].mxu0
        %1604 = vmatprep.mubr.bf16.mxu0 %v641
        %1605 = vmatmul.mubr.bf16.gmra.mrb[0].mxu0 %v617
        %v1606 = vpop.f32.mrb[0].mxu0
        %v1607 = vadd.f32 %v1382, %v1606
        %v1608 = vpop.f32.mrb[0].mxu0
        %v1609 = vpop.f32.mrb[0].mxu0
        %v1610 = vadd.f32 %v1385, %v1609
        %v1611 = vpop.f32.mrb[0].mxu0
        %1612 = vmatprep.mubr.bf16.mxu0 %v642
        %1613 = vmatmul.mubr.bf16.gmra.mrb[0].mxu0 %v618
        %v1614 = vpop.f32.mrb[0].mxu0
        %v1615 = vadd.f32 %v1390, %v1614
        %v1616 = vpop.f32.mrb[0].mxu0
        %v1617 = vpop.f32.mrb[0].mxu0
        %v1618 = vadd.f32 %v1393, %v1617
        %v1619 = vpop.f32.mrb[0].mxu0
        %1620 = vmatprep.mubr.bf16.mxu0 %v643
        %1621 = vmatmul.mubr.bf16.gmra.mrb[0].mxu0 %v619
        %v1622 = vpop.f32.mrb[0].mxu0
        %v1623 = vadd.f32 %v1398, %v1622
        %v1624 = vpop.f32.mrb[0].mxu0
        %v1625 = vpop.f32.mrb[0].mxu0
        %v1626 = vadd.f32 %v1401, %v1625
        %v1627 = vpop.f32.mrb[0].mxu0
        %1628 = vmatprep.mubr.bf16.mxu0 %v644
        %1629 = vmatmul.mubr.bf16.gmra.mrb[0].mxu0 %v620
        %v1630 = vpop.f32.mrb[0].mxu0
        %v1631 = vadd.f32 %v1406, %v1630
        %v1632 = vpop.f32.mrb[0].mxu0
        %v1633 = vpop.f32.mrb[0].mxu0
        %v1634 = vadd.f32 %v1409, %v1633
        %v1635 = vpop.f32.mrb[0].mxu0
        %1636 = vmatprep.mubr.bf16.mxu0 %v645
        %1637 = vmatmul.mubr.bf16.gmra.mrb[0].mxu0 %v621
        %v1638 = vpop.f32.mrb[0].mxu0
        %v1639 = vadd.f32 %v1414, %v1638
        %v1640 = vpop.f32.mrb[0].mxu0
        %v1641 = vpop.f32.mrb[0].mxu0
        %v1642 = vadd.f32 %v1417, %v1641
        %v1643 = vpop.f32.mrb[0].mxu0
        %1644 = vmatprep.mubr.bf16.mxu0 %v646
        %1645 = vmatmul.mubr.bf16.gmra.mrb[0].mxu0 %v622
        %v1646 = vpop.f32.mrb[0].mxu0
        %v1647 = vadd.f32 %v1422, %v1646
        %v1648 = vpop.f32.mrb[0].mxu0
        %v1649 = vpop.f32.mrb[0].mxu0
        %v1650 = vadd.f32 %v1425, %v1649
        %v1651 = vpop.f32.mrb[0].mxu0
        %1652 = vmatprep.mubr.bf16.mxu0 %v647
        %1653 = vmatmul.mubr.bf16.gmra.mrb[0].mxu0 %v623
        %v1654 = vpop.f32.mrb[0].mxu0
        %v1655 = vadd.f32 %v1430, %v1654
        %v1656 = vpop.f32.mrb[0].mxu0
        %v1657 = vpop.f32.mrb[0].mxu0
        %v1658 = vadd.f32 %v1433, %v1657
        %v1659 = vpop.f32.mrb[0].mxu0
        %1660 = vmatprep.mubr.bf16.mxu0 %v648
        %1661 = vmatmul.mubr.bf16.gmra.mrb[0].mxu0 %v624
        %v1662 = vpop.f32.mrb[0].mxu0
        %v1663 = vadd.f32 %v1438, %v1662
        %v1664 = vpop.f32.mrb[0].mxu0
        %v1665 = vpop.f32.mrb[0].mxu0
        %v1666 = vadd.f32 %v1441, %v1665
        %v1667 = vpop.f32.mrb[0].mxu0
        %1668 = vmatprep.mubr.bf16.mxu0 %v649
        %1669 = vmatmul.mubr.bf16.gmra.mrb[0].mxu0 %v625
        %v1670 = vpop.f32.mrb[0].mxu0
        %v1671 = vadd.f32 %v1446, %v1670
        %v1672 = vpop.f32.mrb[0].mxu0
        %v1673 = vpop.f32.mrb[0].mxu0
        %v1674 = vadd.f32 %v1449, %v1673
        %v1675 = vpop.f32.mrb[0].mxu0
        %1676 = vmatprep.mubr.bf16.mxu0 %v650
        %1677 = vmatmul.mubr.bf16.gmra.mrb[0].mxu0 %v626
        %v1678 = vpop.f32.mrb[0].mxu0
        %v1679 = vadd.f32 %v1454, %v1678
        %v1680 = vpop.f32.mrb[0].mxu0
        %v1681 = vpop.f32.mrb[0].mxu0
        %v1682 = vadd.f32 %v1457, %v1681
        %v1683 = vpop.f32.mrb[0].mxu0
        %1684 = vmatprep.mubr.bf16.mxu0 %v651
        %1685 = vmatmul.mubr.bf16.gmra.mrb[0].mxu0 %v627
        %v1686 = vpop.f32.mrb[0].mxu0
        %v1687 = vadd.f32 %v1462, %v1686
        %v1688 = vpop.f32.mrb[0].mxu0
        %v1689 = vpop.f32.mrb[0].mxu0
        %v1690 = vadd.f32 %v1465, %v1689
        %v1691 = vpop.f32.mrb[0].mxu0
        %1692 = vmatprep.mubr.bf16.mxu0 %v652
        %1693 = vmatmul.mubr.bf16.gmra.mrb[0].mxu0 %v628
        %v1694 = vpop.f32.mrb[0].mxu0
        %v1695 = vadd.f32 %v1470, %v1694
        %v1696 = vpop.f32.mrb[0].mxu0
        %v1697 = vpop.f32.mrb[0].mxu0
        %v1698 = vadd.f32 %v1473, %v1697
        %v1699 = vpop.f32.mrb[0].mxu0
        %1700 = vmatprep.mubr.bf16.mxu0 %v653
        %1701 = vmatmul.mubr.bf16.gmra.mrb[0].mxu0 %v629
        %v1702 = vpop.f32.mrb[0].mxu0
        %v1703 = vadd.f32 %v1478, %v1702
        %v1704 = vpop.f32.mrb[0].mxu0
        %v1705 = vpop.f32.mrb[0].mxu0
        %v1706 = vadd.f32 %v1481, %v1705
        %v1707 = vpop.f32.mrb[0].mxu0
        %1708 = vmatprep.mubr.bf16.mxu0 %v654
        %1709 = vmatmul.mubr.bf16.gmra.mrb[0].mxu0 %v630
        %v1710 = vpop.f32.mrb[0].mxu0
        %v1711 = vadd.f32 %v1486, %v1710
        %v1712 = vpop.f32.mrb[0].mxu0
        %v1713 = vpop.f32.mrb[0].mxu0
        %v1714 = vadd.f32 %v1489, %v1713
        %v1715 = vpop.f32.mrb[0].mxu0
        %1716 = vmatprep.mubr.bf16.mxu0 %v655
        %1717 = vmatmul.mubr.bf16.gmra.mrb[0].mxu0 %v631
        %v1718 = vpop.f32.mrb[0].mxu0
        %v1719 = vadd.f32 %v1494, %v1718
        %v1720 = vpop.f32.mrb[0].mxu0
        %v1721 = vpop.f32.mrb[0].mxu0
        %v1722 = vadd.f32 %v1497, %v1721
        %v1723 = vpop.f32.mrb[0].mxu0
        %1724 = vmatprep.mubr.bf16.mxu0 %v656
        %1725 = vmatmul.mubr.bf16.gmra.mrb[0].mxu0 %v632
        %v1726 = vpop.f32.mrb[0].mxu0
        %v1727 = vadd.f32 %v1502, %v1726
        %v1728 = vpop.f32.mrb[0].mxu0
        %v1729 = vpop.f32.mrb[0].mxu0
        %v1730 = vadd.f32 %v1505, %v1729
        %v1731 = vpop.f32.mrb[0].mxu0
        %1732 = vmatprep.mubr.bf16.mxu0 %v657
        %1733 = vmatmul.mubr.bf16.gmra.mrb[0].mxu0 %v633
        %v1734 = vpop.f32.mrb[0].mxu0
        %v1735 = vadd.f32 %v1510, %v1734
        %v1736 = vpop.f32.mrb[0].mxu0
        %v1737 = vpop.f32.mrb[0].mxu0
        %v1738 = vadd.f32 %v1513, %v1737
        %v1739 = vpop.f32.mrb[0].mxu0
        %1740 = vmatprep.mubr.bf16.mxu0 %v658
        %1741 = vmatmul.mubr.bf16.gmra.mrb[0].mxu0 %v634
        %v1742 = vpop.f32.mrb[0].mxu0
        %v1743 = vadd.f32 %v1518, %v1742
        %v1744 = vpop.f32.mrb[0].mxu0
        %v1745 = vpop.f32.mrb[0].mxu0
        %v1746 = vadd.f32 %v1521, %v1745
        %v1747 = vpop.f32.mrb[0].mxu0
        %1748 = vdwg.mxu0
        %1749 = vmatprep.subr.bf16.mxu0 0
        %1750 = vmatpush1.bf16.msra.mxu0 %v1187
        %1751 = vmatprep.subr.bf16.mxu0 0
        %1752 = vmatpush1.bf16.msra.mxu0 %v1188
        %1753 = vmatprep.subr.bf16.mxu0 0
        %1754 = vmatpush1.bf16.msra.mxu0 %v1189
        %1755 = vmatprep.subr.bf16.mxu0 0
        %1756 = vmatpush1.bf16.msra.mxu0 %v1190
        %1757 = vmatprep.subr.bf16.mxu0 0
        %1758 = vmatpush1.bf16.msra.mxu0 %v1191
        %1759 = vmatprep.subr.bf16.mxu0 0
        %1760 = vmatpush1.bf16.msra.mxu0 %v1192
        %1761 = vmatprep.subr.bf16.mxu0 0
        %1762 = vmatpush1.bf16.msra.mxu0 %v1193
        %1763 = vmatprep.subr.bf16.mxu0 0
        %1764 = vmatpush1.bf16.msra.mxu0 %v1194
        %1765 = vmatprep.subr.bf16.mxu0 0
        %1766 = vmatpush1.bf16.msra.mxu0 %v1195
        %1767 = vmatprep.subr.bf16.mxu0 0
        %1768 = vmatpush1.bf16.msra.mxu0 %v1196
        %1769 = vmatprep.subr.bf16.mxu0 0
        %1770 = vmatpush1.bf16.msra.mxu0 %v1197
        %1771 = vmatprep.subr.bf16.mxu0 0
        %1772 = vmatpush1.bf16.msra.mxu0 %v1198
        %1773 = vmatprep.subr.bf16.mxu0 0
        %1774 = vmatpush1.bf16.msra.mxu0 %v1199
        %1775 = vmatprep.subr.bf16.mxu0 0
        %1776 = vmatpush1.bf16.msra.mxu0 %v1200
        %1777 = vmatprep.subr.bf16.mxu0 0
        %1778 = vmatpush1.bf16.msra.mxu0 %v1201
        %1779 = vmatprep.subr.bf16.mxu0 0
        %1780 = vmatpush1.bf16.msra.mxu0 %v1202
        %1781 = vmatprep.mubr.bf16.mxu0 %v683
        %1782 = vmatmul.mubr.bf16.gmra.mrb[0].mxu0 %v659
        %v1783 = vpop.f32.mrb[0].mxu0
        %v1784 = vadd.f32 %v1559, %v1783
        %v1785 = vpop.f32.mrb[0].mxu0
        %v1786 = vpop.f32.mrb[0].mxu0
        %v1787 = vadd.f32 %v1562, %v1786
        %v1788 = vpop.f32.mrb[0].mxu0
        %1789 = vmatprep.mubr.bf16.mxu0 %v684
        %1790 = vmatmul.mubr.bf16.gmra.mrb[0].mxu0 %v660
        %v1791 = vpop.f32.mrb[0].mxu0
        %v1792 = vadd.f32 %v1567, %v1791
        %v1793 = vpop.f32.mrb[0].mxu0
        %v1794 = vpop.f32.mrb[0].mxu0
        %v1795 = vadd.f32 %v1570, %v1794
        %v1796 = vpop.f32.mrb[0].mxu0
        %1797 = vmatprep.mubr.bf16.mxu0 %v685
        %1798 = vmatmul.mubr.bf16.gmra.mrb[0].mxu0 %v661
        %v1799 = vpop.f32.mrb[0].mxu0
        %v1800 = vadd.f32 %v1575, %v1799
        %v1801 = vpop.f32.mrb[0].mxu0
        %v1802 = vpop.f32.mrb[0].mxu0
        %v1803 = vadd.f32 %v1578, %v1802
        %v1804 = vpop.f32.mrb[0].mxu0
        %1805 = vmatprep.mubr.bf16.mxu0 %v686
        %1806 = vmatmul.mubr.bf16.gmra.mrb[0].mxu0 %v662
        %v1807 = vpop.f32.mrb[0].mxu0
        %v1808 = vadd.f32 %v1583, %v1807
        %v1809 = vpop.f32.mrb[0].mxu0
        %v1810 = vpop.f32.mrb[0].mxu0
        %v1811 = vadd.f32 %v1586, %v1810
        %v1812 = vpop.f32.mrb[0].mxu0
        %1813 = vmatprep.mubr.bf16.mxu0 %v687
        %1814 = vmatmul.mubr.bf16.gmra.mrb[0].mxu0 %v663
        %v1815 = vpop.f32.mrb[0].mxu0
        %v1816 = vadd.f32 %v1591, %v1815
        %v1817 = vpop.f32.mrb[0].mxu0
        %v1818 = vpop.f32.mrb[0].mxu0
        %v1819 = vadd.f32 %v1594, %v1818
        %v1820 = vpop.f32.mrb[0].mxu0
        %1821 = vmatprep.mubr.bf16.mxu0 %v688
        %1822 = vmatmul.mubr.bf16.gmra.mrb[0].mxu0 %v664
        %v1823 = vpop.f32.mrb[0].mxu0
        %v1824 = vadd.f32 %v1599, %v1823
        %v1825 = vpop.f32.mrb[0].mxu0
        %v1826 = vpop.f32.mrb[0].mxu0
        %v1827 = vadd.f32 %v1602, %v1826
        %v1828 = vpop.f32.mrb[0].mxu0
        %1829 = vmatprep.mubr.bf16.mxu0 %v689
        %1830 = vmatmul.mubr.bf16.gmra.mrb[0].mxu0 %v665
        %v1831 = vpop.f32.mrb[0].mxu0
        %v1832 = vadd.f32 %v1607, %v1831
        %v1833 = vpop.f32.mrb[0].mxu0
        %v1834 = vpop.f32.mrb[0].mxu0
        %v1835 = vadd.f32 %v1610, %v1834
        %v1836 = vpop.f32.mrb[0].mxu0
        %1837 = vmatprep.mubr.bf16.mxu0 %v690
        %1838 = vmatmul.mubr.bf16.gmra.mrb[0].mxu0 %v666
        %v1839 = vpop.f32.mrb[0].mxu0
        %v1840 = vadd.f32 %v1615, %v1839
        %v1841 = vpop.f32.mrb[0].mxu0
        %v1842 = vpop.f32.mrb[0].mxu0
        %v1843 = vadd.f32 %v1618, %v1842
        %v1844 = vpop.f32.mrb[0].mxu0
        %1845 = vmatprep.mubr.bf16.mxu0 %v691
        %1846 = vmatmul.mubr.bf16.gmra.mrb[0].mxu0 %v667
        %v1847 = vpop.f32.mrb[0].mxu0
        %v1848 = vadd.f32 %v1623, %v1847
        %v1849 = vpop.f32.mrb[0].mxu0
        %v1850 = vpop.f32.mrb[0].mxu0
        %v1851 = vadd.f32 %v1626, %v1850
        %v1852 = vpop.f32.mrb[0].mxu0
        %1853 = vmatprep.mubr.bf16.mxu0 %v692
        %1854 = vmatmul.mubr.bf16.gmra.mrb[0].mxu0 %v668
        %v1855 = vpop.f32.mrb[0].mxu0
        %v1856 = vadd.f32 %v1631, %v1855
        %v1857 = vpop.f32.mrb[0].mxu0
        %v1858 = vpop.f32.mrb[0].mxu0
        %v1859 = vadd.f32 %v1634, %v1858
        %v1860 = vpop.f32.mrb[0].mxu0
        %1861 = vmatprep.mubr.bf16.mxu0 %v693
        %1862 = vmatmul.mubr.bf16.gmra.mrb[0].mxu0 %v669
        %v1863 = vpop.f32.mrb[0].mxu0
        %v1864 = vadd.f32 %v1639, %v1863
        %v1865 = vpop.f32.mrb[0].mxu0
        %v1866 = vpop.f32.mrb[0].mxu0
        %v1867 = vadd.f32 %v1642, %v1866
        %v1868 = vpop.f32.mrb[0].mxu0
        %1869 = vmatprep.mubr.bf16.mxu0 %v694
        %1870 = vmatmul.mubr.bf16.gmra.mrb[0].mxu0 %v670
        %v1871 = vpop.f32.mrb[0].mxu0
        %v1872 = vadd.f32 %v1647, %v1871
        %v1873 = vpop.f32.mrb[0].mxu0
        %v1874 = vpop.f32.mrb[0].mxu0
        %v1875 = vadd.f32 %v1650, %v1874
        %v1876 = vpop.f32.mrb[0].mxu0
        %1877 = vmatprep.mubr.bf16.mxu0 %v695
        %1878 = vmatmul.mubr.bf16.gmra.mrb[0].mxu0 %v671
        %v1879 = vpop.f32.mrb[0].mxu0
        %v1880 = vadd.f32 %v1655, %v1879
        %v1881 = vpop.f32.mrb[0].mxu0
        %v1882 = vpop.f32.mrb[0].mxu0
        %v1883 = vadd.f32 %v1658, %v1882
        %v1884 = vpop.f32.mrb[0].mxu0
        %1885 = vmatprep.mubr.bf16.mxu0 %v696
        %1886 = vmatmul.mubr.bf16.gmra.mrb[0].mxu0 %v672
        %v1887 = vpop.f32.mrb[0].mxu0
        %v1888 = vadd.f32 %v1663, %v1887
        %v1889 = vpop.f32.mrb[0].mxu0
        %v1890 = vpop.f32.mrb[0].mxu0
        %v1891 = vadd.f32 %v1666, %v1890
        %v1892 = vpop.f32.mrb[0].mxu0
        %1893 = vmatprep.mubr.bf16.mxu0 %v697
        %1894 = vmatmul.mubr.bf16.gmra.mrb[0].mxu0 %v673
        %v1895 = vpop.f32.mrb[0].mxu0
        %v1896 = vadd.f32 %v1671, %v1895
        %v1897 = vpop.f32.mrb[0].mxu0
        %v1898 = vpop.f32.mrb[0].mxu0
        %v1899 = vadd.f32 %v1674, %v1898
        %v1900 = vpop.f32.mrb[0].mxu0
        %1901 = vmatprep.mubr.bf16.mxu0 %v698
        %1902 = vmatmul.mubr.bf16.gmra.mrb[0].mxu0 %v674
        %v1903 = vpop.f32.mrb[0].mxu0
        %v1904 = vadd.f32 %v1679, %v1903
        %v1905 = vpop.f32.mrb[0].mxu0
        %v1906 = vpop.f32.mrb[0].mxu0
        %v1907 = vadd.f32 %v1682, %v1906
        %v1908 = vpop.f32.mrb[0].mxu0
        %1909 = vmatprep.mubr.bf16.mxu0 %v699
        %1910 = vmatmul.mubr.bf16.gmra.mrb[0].mxu0 %v675
        %v1911 = vpop.f32.mrb[0].mxu0
        %v1912 = vadd.f32 %v1687, %v1911
        %v1913 = vpop.f32.mrb[0].mxu0
        %v1914 = vpop.f32.mrb[0].mxu0
        %v1915 = vadd.f32 %v1690, %v1914
        %v1916 = vpop.f32.mrb[0].mxu0
        %1917 = vmatprep.mubr.bf16.mxu0 %v700
        %1918 = vmatmul.mubr.bf16.gmra.mrb[0].mxu0 %v676
        %v1919 = vpop.f32.mrb[0].mxu0
        %v1920 = vadd.f32 %v1695, %v1919
        %v1921 = vpop.f32.mrb[0].mxu0
        %v1922 = vpop.f32.mrb[0].mxu0
        %v1923 = vadd.f32 %v1698, %v1922
        %v1924 = vpop.f32.mrb[0].mxu0
        %1925 = vmatprep.mubr.bf16.mxu0 %v701
        %1926 = vmatmul.mubr.bf16.gmra.mrb[0].mxu0 %v677
        %v1927 = vpop.f32.mrb[0].mxu0
        %v1928 = vadd.f32 %v1703, %v1927
        %v1929 = vpop.f32.mrb[0].mxu0
        %v1930 = vpop.f32.mrb[0].mxu0
        %v1931 = vadd.f32 %v1706, %v1930
        %v1932 = vpop.f32.mrb[0].mxu0
        %1933 = vmatprep.mubr.bf16.mxu0 %v702
        %1934 = vmatmul.mubr.bf16.gmra.mrb[0].mxu0 %v678
        %v1935 = vpop.f32.mrb[0].mxu0
        %v1936 = vadd.f32 %v1711, %v1935
        %v1937 = vpop.f32.mrb[0].mxu0
        %v1938 = vpop.f32.mrb[0].mxu0
        %v1939 = vadd.f32 %v1714, %v1938
        %v1940 = vpop.f32.mrb[0].mxu0
        %1941 = vmatprep.mubr.bf16.mxu0 %v703
        %1942 = vmatmul.mubr.bf16.gmra.mrb[0].mxu0 %v679
        %v1943 = vpop.f32.mrb[0].mxu0
        %v1944 = vadd.f32 %v1719, %v1943
        %v1945 = vpop.f32.mrb[0].mxu0
        %v1946 = vpop.f32.mrb[0].mxu0
        %v1947 = vadd.f32 %v1722, %v1946
        %v1948 = vpop.f32.mrb[0].mxu0
        %1949 = vmatprep.mubr.bf16.mxu0 %v704
        %1950 = vmatmul.mubr.bf16.gmra.mrb[0].mxu0 %v680
        %v1951 = vpop.f32.mrb[0].mxu0
        %v1952 = vadd.f32 %v1727, %v1951
        %v1953 = vpop.f32.mrb[0].mxu0
        %v1954 = vpop.f32.mrb[0].mxu0
        %v1955 = vadd.f32 %v1730, %v1954
        %v1956 = vpop.f32.mrb[0].mxu0
        %1957 = vmatprep.mubr.bf16.mxu0 %v705
        %1958 = vmatmul.mubr.bf16.gmra.mrb[0].mxu0 %v681
        %v1959 = vpop.f32.mrb[0].mxu0
        %v1960 = vadd.f32 %v1735, %v1959
        %v1961 = vpop.f32.mrb[0].mxu0
        %v1962 = vpop.f32.mrb[0].mxu0
        %v1963 = vadd.f32 %v1738, %v1962
        %v1964 = vpop.f32.mrb[0].mxu0
        %1965 = vmatprep.mubr.bf16.mxu0 %v706
        %1966 = vmatmul.mubr.bf16.gmra.mrb[0].mxu0 %v682
        %v1967 = vpop.f32.mrb[0].mxu0
        %v1968 = vadd.f32 %v1743, %v1967
        %v1969 = vpop.f32.mrb[0].mxu0
        %v1970 = vpop.f32.mrb[0].mxu0
        %v1971 = vadd.f32 %v1746, %v1970
        %v1972 = vpop.f32.mrb[0].mxu0
        %1973 = vdwg.mxu0
        %1974 = vmatprep.subr.bf16.mxu0 0
        %1975 = vmatpush1.bf16.msra.mxu0 %v1203
        %1976 = vmatprep.subr.bf16.mxu0 0
        %1977 = vmatpush1.bf16.msra.mxu0 %v1204
        %1978 = vmatprep.subr.bf16.mxu0 0
        %1979 = vmatpush1.bf16.msra.mxu0 %v1205
        %1980 = vmatprep.subr.bf16.mxu0 0
        %1981 = vmatpush1.bf16.msra.mxu0 %v1206
        %1982 = vmatprep.subr.bf16.mxu0 0
        %1983 = vmatpush1.bf16.msra.mxu0 %v1207
        %1984 = vmatprep.subr.bf16.mxu0 0
        %1985 = vmatpush1.bf16.msra.mxu0 %v1208
        %1986 = vmatprep.subr.bf16.mxu0 0
        %1987 = vmatpush1.bf16.msra.mxu0 %v1209
        %1988 = vmatprep.subr.bf16.mxu0 0
        %1989 = vmatpush1.bf16.msra.mxu0 %v1210
        %1990 = vmatprep.subr.bf16.mxu0 0
        %1991 = vmatpush1.bf16.msra.mxu0 %v1211
        %1992 = vmatprep.subr.bf16.mxu0 0
        %1993 = vmatpush1.bf16.msra.mxu0 %v1212
        %1994 = vmatprep.subr.bf16.mxu0 0
        %1995 = vmatpush1.bf16.msra.mxu0 %v1213
        %1996 = vmatprep.subr.bf16.mxu0 0
        %1997 = vmatpush1.bf16.msra.mxu0 %v1214
        %1998 = vmatprep.subr.bf16.mxu0 0
        %1999 = vmatpush1.bf16.msra.mxu0 %v1215
        %2000 = vmatprep.subr.bf16.mxu0 0
        %2001 = vmatpush1.bf16.msra.mxu0 %v1216
        %2002 = vmatprep.subr.bf16.mxu0 0
        %2003 = vmatpush1.bf16.msra.mxu0 %v1217
        %2004 = vmatprep.subr.bf16.mxu0 0
        %2005 = vmatpush1.bf16.msra.mxu0 %v1218
        %2006 = vmatprep.mubr.bf16.mxu0 %v590
        %2007 = vmatmul.mubr.bf16.gmra.mrb[0].mxu0 %v566
        %v2008 = vpop.f32.mrb[0].mxu0
        %v2009 = vadd.f32 %v1784, %v2008
        %v2010 = vpop.f32.mrb[0].mxu0
        %v2011 = vpop.f32.mrb[0].mxu0
        %v2012 = vadd.f32 %v1787, %v2011
        %v2013 = vpop.f32.mrb[0].mxu0
        %2014 = vmatprep.mubr.bf16.mxu0 %v591
        %2015 = vmatmul.mubr.bf16.gmra.mrb[0].mxu0 %v567
        %v2016 = vpop.f32.mrb[0].mxu0
        %v2017 = vadd.f32 %v1792, %v2016
        %v2018 = vpop.f32.mrb[0].mxu0
        %v2019 = vpop.f32.mrb[0].mxu0
        %v2020 = vadd.f32 %v1795, %v2019
        %v2021 = vpop.f32.mrb[0].mxu0
        %2022 = vmatprep.mubr.bf16.mxu0 %v592
        %2023 = vmatmul.mubr.bf16.gmra.mrb[0].mxu0 %v568
        %v2024 = vpop.f32.mrb[0].mxu0
        %v2025 = vadd.f32 %v1800, %v2024
        %v2026 = vpop.f32.mrb[0].mxu0
        %v2027 = vpop.f32.mrb[0].mxu0
        %v2028 = vadd.f32 %v1803, %v2027
        %v2029 = vpop.f32.mrb[0].mxu0
        %2030 = vmatprep.mubr.bf16.mxu0 %v593
        %2031 = vmatmul.mubr.bf16.gmra.mrb[0].mxu0 %v569
        %v2032 = vpop.f32.mrb[0].mxu0
        %v2033 = vadd.f32 %v1808, %v2032
        %v2034 = vpop.f32.mrb[0].mxu0
        %v2035 = vpop.f32.mrb[0].mxu0
        %v2036 = vadd.f32 %v1811, %v2035
        %v2037 = vpop.f32.mrb[0].mxu0
        %2038 = vmatprep.mubr.bf16.mxu0 %v594
        %2039 = vmatmul.mubr.bf16.gmra.mrb[0].mxu0 %v570
        %v2040 = vpop.f32.mrb[0].mxu0
        %v2041 = vadd.f32 %v1816, %v2040
        %v2042 = vpop.f32.mrb[0].mxu0
        %v2043 = vpop.f32.mrb[0].mxu0
        %v2044 = vadd.f32 %v1819, %v2043
        %v2045 = vpop.f32.mrb[0].mxu0
        %2046 = vmatprep.mubr.bf16.mxu0 %v595
        %2047 = vmatmul.mubr.bf16.gmra.mrb[0].mxu0 %v571
        %v2048 = vpop.f32.mrb[0].mxu0
        %v2049 = vadd.f32 %v1824, %v2048
        %v2050 = vpop.f32.mrb[0].mxu0
        %v2051 = vpop.f32.mrb[0].mxu0
        %v2052 = vadd.f32 %v1827, %v2051
        %v2053 = vpop.f32.mrb[0].mxu0
        %2054 = vmatprep.mubr.bf16.mxu0 %v596
        %2055 = vmatmul.mubr.bf16.gmra.mrb[0].mxu0 %v572
        %v2056 = vpop.f32.mrb[0].mxu0
        %v2057 = vadd.f32 %v1832, %v2056
        %v2058 = vpop.f32.mrb[0].mxu0
        %v2059 = vpop.f32.mrb[0].mxu0
        %v2060 = vadd.f32 %v1835, %v2059
        %v2061 = vpop.f32.mrb[0].mxu0
        %2062 = vmatprep.mubr.bf16.mxu0 %v597
        %2063 = vmatmul.mubr.bf16.gmra.mrb[0].mxu0 %v573
        %v2064 = vpop.f32.mrb[0].mxu0
        %v2065 = vadd.f32 %v1840, %v2064
        %v2066 = vpop.f32.mrb[0].mxu0
        %v2067 = vpop.f32.mrb[0].mxu0
        %v2068 = vadd.f32 %v1843, %v2067
        %v2069 = vpop.f32.mrb[0].mxu0
        %2070 = vmatprep.mubr.bf16.mxu0 %v598
        %2071 = vmatmul.mubr.bf16.gmra.mrb[0].mxu0 %v574
        %v2072 = vpop.f32.mrb[0].mxu0
        %v2073 = vadd.f32 %v1848, %v2072
        %v2074 = vpop.f32.mrb[0].mxu0
        %v2075 = vpop.f32.mrb[0].mxu0
        %v2076 = vadd.f32 %v1851, %v2075
        %v2077 = vpop.f32.mrb[0].mxu0
        %2078 = vmatprep.mubr.bf16.mxu0 %v599
        %2079 = vmatmul.mubr.bf16.gmra.mrb[0].mxu0 %v575
        %v2080 = vpop.f32.mrb[0].mxu0
        %v2081 = vadd.f32 %v1856, %v2080
        %v2082 = vpop.f32.mrb[0].mxu0
        %v2083 = vpop.f32.mrb[0].mxu0
        %v2084 = vadd.f32 %v1859, %v2083
        %v2085 = vpop.f32.mrb[0].mxu0
        %2086 = vmatprep.mubr.bf16.mxu0 %v600
        %2087 = vmatmul.mubr.bf16.gmra.mrb[0].mxu0 %v576
        %v2088 = vpop.f32.mrb[0].mxu0
        %v2089 = vadd.f32 %v1864, %v2088
        %v2090 = vpop.f32.mrb[0].mxu0
        %v2091 = vpop.f32.mrb[0].mxu0
        %v2092 = vadd.f32 %v1867, %v2091
        %v2093 = vpop.f32.mrb[0].mxu0
        %2094 = vmatprep.mubr.bf16.mxu0 %v601
        %2095 = vmatmul.mubr.bf16.gmra.mrb[0].mxu0 %v577
        %v2096 = vpop.f32.mrb[0].mxu0
        %v2097 = vadd.f32 %v1872, %v2096
        %v2098 = vpop.f32.mrb[0].mxu0
        %v2099 = vpop.f32.mrb[0].mxu0
        %v2100 = vadd.f32 %v1875, %v2099
        %v2101 = vpop.f32.mrb[0].mxu0
        %2102 = vmatprep.mubr.bf16.mxu0 %v602
        %2103 = vmatmul.mubr.bf16.gmra.mrb[0].mxu0 %v578
        %v2104 = vpop.f32.mrb[0].mxu0
        %v2105 = vadd.f32 %v1880, %v2104
        %v2106 = vpop.f32.mrb[0].mxu0
        %v2107 = vpop.f32.mrb[0].mxu0
        %v2108 = vadd.f32 %v1883, %v2107
        %v2109 = vpop.f32.mrb[0].mxu0
        %2110 = vmatprep.mubr.bf16.mxu0 %v603
        %2111 = vmatmul.mubr.bf16.gmra.mrb[0].mxu0 %v579
        %v2112 = vpop.f32.mrb[0].mxu0
        %v2113 = vadd.f32 %v1888, %v2112
        %v2114 = vpop.f32.mrb[0].mxu0
        %v2115 = vpop.f32.mrb[0].mxu0
        %v2116 = vadd.f32 %v1891, %v2115
        %v2117 = vpop.f32.mrb[0].mxu0
        %2118 = vmatprep.mubr.bf16.mxu0 %v604
        %2119 = vmatmul.mubr.bf16.gmra.mrb[0].mxu0 %v580
        %v2120 = vpop.f32.mrb[0].mxu0
        %v2121 = vadd.f32 %v1896, %v2120
        %v2122 = vpop.f32.mrb[0].mxu0
        %v2123 = vpop.f32.mrb[0].mxu0
        %v2124 = vadd.f32 %v1899, %v2123
        %v2125 = vpop.f32.mrb[0].mxu0
        %2126 = vmatprep.mubr.bf16.mxu0 %v605
        %2127 = vmatmul.mubr.bf16.gmra.mrb[0].mxu0 %v581
        %v2128 = vpop.f32.mrb[0].mxu0
        %v2129 = vadd.f32 %v1904, %v2128
        %v2130 = vpop.f32.mrb[0].mxu0
        %v2131 = vpop.f32.mrb[0].mxu0
        %v2132 = vadd.f32 %v1907, %v2131
        %v2133 = vpop.f32.mrb[0].mxu0
        %2134 = vmatprep.mubr.bf16.mxu0 %v606
        %2135 = vmatmul.mubr.bf16.gmra.mrb[0].mxu0 %v582
        %v2136 = vpop.f32.mrb[0].mxu0
        %v2137 = vadd.f32 %v1912, %v2136
        %v2138 = vpop.f32.mrb[0].mxu0
        %v2139 = vpop.f32.mrb[0].mxu0
        %v2140 = vadd.f32 %v1915, %v2139
        %v2141 = vpop.f32.mrb[0].mxu0
        %2142 = vmatprep.mubr.bf16.mxu0 %v607
        %2143 = vmatmul.mubr.bf16.gmra.mrb[0].mxu0 %v583
        %v2144 = vpop.f32.mrb[0].mxu0
        %v2145 = vadd.f32 %v1920, %v2144
        %v2146 = vpop.f32.mrb[0].mxu0
        %v2147 = vpop.f32.mrb[0].mxu0
        %v2148 = vadd.f32 %v1923, %v2147
        %v2149 = vpop.f32.mrb[0].mxu0
        %2150 = vmatprep.mubr.bf16.mxu0 %v608
        %2151 = vmatmul.mubr.bf16.gmra.mrb[0].mxu0 %v584
        %v2152 = vpop.f32.mrb[0].mxu0
        %v2153 = vadd.f32 %v1928, %v2152
        %v2154 = vpop.f32.mrb[0].mxu0
        %v2155 = vpop.f32.mrb[0].mxu0
        %v2156 = vadd.f32 %v1931, %v2155
        %v2157 = vpop.f32.mrb[0].mxu0
        %2158 = vmatprep.mubr.bf16.mxu0 %v609
        %2159 = vmatmul.mubr.bf16.gmra.mrb[0].mxu0 %v585
        %v2160 = vpop.f32.mrb[0].mxu0
        %v2161 = vadd.f32 %v1936, %v2160
        %v2162 = vpop.f32.mrb[0].mxu0
        %v2163 = vpop.f32.mrb[0].mxu0
        %v2164 = vadd.f32 %v1939, %v2163
        %v2165 = vpop.f32.mrb[0].mxu0
        %2166 = vmatprep.mubr.bf16.mxu0 %v610
        %2167 = vmatmul.mubr.bf16.gmra.mrb[0].mxu0 %v586
        %v2168 = vpop.f32.mrb[0].mxu0
        %v2169 = vadd.f32 %v1944, %v2168
        %v2170 = vpop.f32.mrb[0].mxu0
        %v2171 = vpop.f32.mrb[0].mxu0
        %v2172 = vadd.f32 %v1947, %v2171
        %v2173 = vpop.f32.mrb[0].mxu0
        %2174 = vmatprep.mubr.bf16.mxu0 %v710
        %2175 = vmatmul.mubr.bf16.gmra.mrb[0].mxu0 %v707
        %v2176 = vpop.f32.mrb[0].mxu0
        %v2177 = vadd.f32 %v1952, %v2176
        %v2178 = vpop.f32.mrb[0].mxu0
        %v2179 = vpop.f32.mrb[0].mxu0
        %v2180 = vadd.f32 %v1955, %v2179
        %v2181 = vpop.f32.mrb[0].mxu0
        %2182 = vmatprep.mubr.bf16.mxu0 %v711
        %2183 = vmatmul.mubr.bf16.gmra.mrb[0].mxu0 %v708
        %v2184 = vpop.f32.mrb[0].mxu0
        %v2185 = vadd.f32 %v1960, %v2184
        %v2186 = vpop.f32.mrb[0].mxu0
        %v2187 = vpop.f32.mrb[0].mxu0
        %v2188 = vadd.f32 %v1963, %v2187
        %v2189 = vpop.f32.mrb[0].mxu0
        %2190 = vmatprep.mubr.bf16.mxu0 %v712
        %2191 = vmatmul.mubr.bf16.gmra.mrb[0].mxu0 %v709
        %v2192 = vpop.f32.mrb[0].mxu0
        %v2193 = vadd.f32 %v1968, %v2192
        %v2194 = vpop.f32.mrb[0].mxu0
        %v2195 = vpop.f32.mrb[0].mxu0
        %v2196 = vadd.f32 %v1971, %v2195
        %v2197 = vpop.f32.mrb[0].mxu0
        %2198 = vdwg.mxu0
        %2199 = vmatprep.subr.bf16.mxu0 0
        %2200 = vmatpush1.bf16.msra.mxu0 %v1219
        %2201 = vmatprep.subr.bf16.mxu0 0
        %2202 = vmatpush1.bf16.msra.mxu0 %v1220
        %2203 = vmatprep.subr.bf16.mxu0 0
        %2204 = vmatpush1.bf16.msra.mxu0 %v1221
        %2205 = vmatprep.subr.bf16.mxu0 0
        %2206 = vmatpush1.bf16.msra.mxu0 %v1222
        %2207 = vmatprep.subr.bf16.mxu0 0
        %2208 = vmatpush1.bf16.msra.mxu0 %v1223
        %2209 = vmatprep.subr.bf16.mxu0 0
        %2210 = vmatpush1.bf16.msra.mxu0 %v1224
        %2211 = vmatprep.subr.bf16.mxu0 0
        %2212 = vmatpush1.bf16.msra.mxu0 %v1225
        %2213 = vmatprep.subr.bf16.mxu0 0
        %2214 = vmatpush1.bf16.msra.mxu0 %v1226
        %2215 = vmatprep.subr.bf16.mxu0 0
        %2216 = vmatpush1.bf16.msra.mxu0 0
        %2217 = vmatprep.subr.bf16.mxu0 0
        %2218 = vmatpush1.bf16.msra.mxu0 0
        %2219 = vmatprep.subr.bf16.mxu0 0
        %2220 = vmatpush1.bf16.msra.mxu0 0
        %2221 = vmatprep.subr.bf16.mxu0 0
        %2222 = vmatpush1.bf16.msra.mxu0 0
        %2223 = vmatprep.subr.bf16.mxu0 0
        %2224 = vmatpush1.bf16.msra.mxu0 0
        %2225 = vmatprep.subr.bf16.mxu0 0
        %2226 = vmatpush1.bf16.msra.mxu0 0
        %2227 = vmatprep.subr.bf16.mxu0 0
        %2228 = vmatpush1.bf16.msra.mxu0 0
        %2229 = vmatprep.subr.bf16.mxu0 0
        %2230 = vmatpush1.bf16.msra.mxu0 0
        %2231 = vmatprep.mubr.bf16.mxu0 0
        %2232 = vmatmul.mubr.bf16.gmra.mrb[0].mxu0 %v614
        %v2233 = vpop.f32.mrb[0].mxu0
        %v2234 = vadd.f32 %v2009, %v2233
        %v2235 = vpop.f32.mrb[0].mxu0
        %v2236 = vpop.f32.mrb[0].mxu0
        %v2237 = vadd.f32 %v2012, %v2236
        %v2238 = vpop.f32.mrb[0].mxu0
        %2239 = vmatprep.mubr.bf16.mxu0 0
        %2240 = vmatmul.mubr.bf16.gmra.mrb[0].mxu0 %v615
        %v2241 = vpop.f32.mrb[0].mxu0
        %v2242 = vadd.f32 %v2017, %v2241
        %v2243 = vpop.f32.mrb[0].mxu0
        %v2244 = vpop.f32.mrb[0].mxu0
        %v2245 = vadd.f32 %v2020, %v2244
        %v2246 = vpop.f32.mrb[0].mxu0
        %2247 = vmatprep.mubr.bf16.mxu0 0
        %2248 = vmatmul.mubr.bf16.gmra.mrb[0].mxu0 %v616
        %v2249 = vpop.f32.mrb[0].mxu0
        %v2250 = vadd.f32 %v2025, %v2249
        %v2251 = vpop.f32.mrb[0].mxu0
        %v2252 = vpop.f32.mrb[0].mxu0
        %v2253 = vadd.f32 %v2028, %v2252
        %v2254 = vpop.f32.mrb[0].mxu0
        %2255 = vmatprep.mubr.bf16.mxu0 0
        %2256 = vmatmul.mubr.bf16.gmra.mrb[0].mxu0 %v617
        %v2257 = vpop.f32.mrb[0].mxu0
        %v2258 = vadd.f32 %v2033, %v2257
        %v2259 = vpop.f32.mrb[0].mxu0
        %v2260 = vpop.f32.mrb[0].mxu0
        %v2261 = vadd.f32 %v2036, %v2260
        %v2262 = vpop.f32.mrb[0].mxu0
        %2263 = vmatprep.mubr.bf16.mxu0 0
        %2264 = vmatmul.mubr.bf16.gmra.mrb[0].mxu0 %v618
        %v2265 = vpop.f32.mrb[0].mxu0
        %v2266 = vadd.f32 %v2041, %v2265
        %v2267 = vpop.f32.mrb[0].mxu0
        %v2268 = vpop.f32.mrb[0].mxu0
        %v2269 = vadd.f32 %v2044, %v2268
        %v2270 = vpop.f32.mrb[0].mxu0
        %2271 = vmatprep.mubr.bf16.mxu0 0
        %2272 = vmatmul.mubr.bf16.gmra.mrb[0].mxu0 %v619
        %v2273 = vpop.f32.mrb[0].mxu0
        %v2274 = vadd.f32 %v2049, %v2273
        %v2275 = vpop.f32.mrb[0].mxu0
        %v2276 = vpop.f32.mrb[0].mxu0
        %v2277 = vadd.f32 %v2052, %v2276
        %v2278 = vpop.f32.mrb[0].mxu0
        %2279 = vmatprep.mubr.bf16.mxu0 0
        %2280 = vmatmul.mubr.bf16.gmra.mrb[0].mxu0 %v620
        %v2281 = vpop.f32.mrb[0].mxu0
        %v2282 = vadd.f32 %v2057, %v2281
        %v2283 = vpop.f32.mrb[0].mxu0
        %v2284 = vpop.f32.mrb[0].mxu0
        %v2285 = vadd.f32 %v2060, %v2284
        %v2286 = vpop.f32.mrb[0].mxu0
        %2287 = vmatprep.mubr.bf16.mxu0 0
        %2288 = vmatmul.mubr.bf16.gmra.mrb[0].mxu0 %v621
        %v2289 = vpop.f32.mrb[0].mxu0
        %v2290 = vadd.f32 %v2065, %v2289
        %v2291 = vpop.f32.mrb[0].mxu0
        %v2292 = vpop.f32.mrb[0].mxu0
        %v2293 = vadd.f32 %v2068, %v2292
        %v2294 = vpop.f32.mrb[0].mxu0
        %2295 = vmatprep.mubr.bf16.mxu0 0
        %2296 = vmatmul.mubr.bf16.gmra.mrb[0].mxu0 %v622
        %v2297 = vpop.f32.mrb[0].mxu0
        %v2298 = vadd.f32 %v2073, %v2297
        %v2299 = vpop.f32.mrb[0].mxu0
        %v2300 = vpop.f32.mrb[0].mxu0
        %v2301 = vadd.f32 %v2076, %v2300
        %v2302 = vpop.f32.mrb[0].mxu0
        %2303 = vmatprep.mubr.bf16.mxu0 0
        %2304 = vmatmul.mubr.bf16.gmra.mrb[0].mxu0 %v623
        %v2305 = vpop.f32.mrb[0].mxu0
        %v2306 = vadd.f32 %v2081, %v2305
        %v2307 = vpop.f32.mrb[0].mxu0
        %v2308 = vpop.f32.mrb[0].mxu0
        %v2309 = vadd.f32 %v2084, %v2308
        %v2310 = vpop.f32.mrb[0].mxu0
        %2311 = vmatprep.mubr.bf16.mxu0 0
        %2312 = vmatmul.mubr.bf16.gmra.mrb[0].mxu0 %v624
        %v2313 = vpop.f32.mrb[0].mxu0
        %v2314 = vadd.f32 %v2089, %v2313
        %v2315 = vpop.f32.mrb[0].mxu0
        %v2316 = vpop.f32.mrb[0].mxu0
        %v2317 = vadd.f32 %v2092, %v2316
        %v2318 = vpop.f32.mrb[0].mxu0
        %2319 = vmatprep.mubr.bf16.mxu0 0
        %2320 = vmatmul.mubr.bf16.gmra.mrb[0].mxu0 %v625
        %v2321 = vpop.f32.mrb[0].mxu0
        %v2322 = vadd.f32 %v2097, %v2321
        %v2323 = vpop.f32.mrb[0].mxu0
        %v2324 = vpop.f32.mrb[0].mxu0
        %v2325 = vadd.f32 %v2100, %v2324
        %v2326 = vpop.f32.mrb[0].mxu0
        %2327 = vmatprep.mubr.bf16.mxu0 0
        %2328 = vmatmul.mubr.bf16.gmra.mrb[0].mxu0 %v626
        %v2329 = vpop.f32.mrb[0].mxu0
        %v2330 = vadd.f32 %v2105, %v2329
        %v2331 = vpop.f32.mrb[0].mxu0
        %v2332 = vpop.f32.mrb[0].mxu0
        %v2333 = vadd.f32 %v2108, %v2332
        %v2334 = vpop.f32.mrb[0].mxu0
        %2335 = vmatprep.mubr.bf16.mxu0 0
        %2336 = vmatmul.mubr.bf16.gmra.mrb[0].mxu0 %v627
        %v2337 = vpop.f32.mrb[0].mxu0
        %v2338 = vadd.f32 %v2113, %v2337
        %v2339 = vpop.f32.mrb[0].mxu0
        %v2340 = vpop.f32.mrb[0].mxu0
        %v2341 = vadd.f32 %v2116, %v2340
        %v2342 = vpop.f32.mrb[0].mxu0
        %2343 = vmatprep.mubr.bf16.mxu0 0
        %2344 = vmatmul.mubr.bf16.gmra.mrb[0].mxu0 %v628
        %v2345 = vpop.f32.mrb[0].mxu0
        %v2346 = vadd.f32 %v2121, %v2345
        %v2347 = vpop.f32.mrb[0].mxu0
        %v2348 = vpop.f32.mrb[0].mxu0
        %v2349 = vadd.f32 %v2124, %v2348
        %v2350 = vpop.f32.mrb[0].mxu0
        %2351 = vmatprep.mubr.bf16.mxu0 0
        %2352 = vmatmul.mubr.bf16.gmra.mrb[0].mxu0 %v629
        %v2353 = vpop.f32.mrb[0].mxu0
        %v2354 = vadd.f32 %v2129, %v2353
        %v2355 = vpop.f32.mrb[0].mxu0
        %v2356 = vpop.f32.mrb[0].mxu0
        %v2357 = vadd.f32 %v2132, %v2356
        %v2358 = vpop.f32.mrb[0].mxu0
        %2359 = vmatprep.mubr.bf16.mxu0 0
        %2360 = vmatmul.mubr.bf16.gmra.mrb[0].mxu0 %v630
        %v2361 = vpop.f32.mrb[0].mxu0
        %v2362 = vadd.f32 %v2137, %v2361
        %v2363 = vpop.f32.mrb[0].mxu0
        %v2364 = vpop.f32.mrb[0].mxu0
        %v2365 = vadd.f32 %v2140, %v2364
        %v2366 = vpop.f32.mrb[0].mxu0
        %2367 = vmatprep.mubr.bf16.mxu0 0
        %2368 = vmatmul.mubr.bf16.gmra.mrb[0].mxu0 %v631
        %v2369 = vpop.f32.mrb[0].mxu0
        %v2370 = vadd.f32 %v2145, %v2369
        %v2371 = vpop.f32.mrb[0].mxu0
        %v2372 = vpop.f32.mrb[0].mxu0
        %v2373 = vadd.f32 %v2148, %v2372
        %v2374 = vpop.f32.mrb[0].mxu0
        %2375 = vmatprep.mubr.bf16.mxu0 0
        %2376 = vmatmul.mubr.bf16.gmra.mrb[0].mxu0 %v632
        %v2377 = vpop.f32.mrb[0].mxu0
        %v2378 = vadd.f32 %v2153, %v2377
        %v2379 = vpop.f32.mrb[0].mxu0
        %v2380 = vpop.f32.mrb[0].mxu0
        %v2381 = vadd.f32 %v2156, %v2380
        %v2382 = vpop.f32.mrb[0].mxu0
        %2383 = vmatprep.mubr.bf16.mxu0 0
        %2384 = vmatmul.mubr.bf16.gmra.mrb[0].mxu0 %v633
        %v2385 = vpop.f32.mrb[0].mxu0
        %v2386 = vadd.f32 %v2161, %v2385
        %v2387 = vpop.f32.mrb[0].mxu0
        %v2388 = vpop.f32.mrb[0].mxu0
        %v2389 = vadd.f32 %v2164, %v2388
        %v2390 = vpop.f32.mrb[0].mxu0
        %2391 = vmatprep.mubr.bf16.mxu0 0
        %2392 = vmatmul.mubr.bf16.gmra.mrb[0].mxu0 %v634
        %v2393 = vpop.f32.mrb[0].mxu0
        %v2394 = vadd.f32 %v2169, %v2393
        %v2395 = vpop.f32.mrb[0].mxu0
        %v2396 = vpop.f32.mrb[0].mxu0
        %v2397 = vadd.f32 %v2172, %v2396
        %v2398 = vpop.f32.mrb[0].mxu0
        %2399 = vmatprep.mubr.bf16.mxu0 0
        %2400 = vmatmul.mubr.bf16.gmra.mrb[0].mxu0 %v713
        %v2401 = vpop.f32.mrb[0].mxu0
        %v2402 = vadd.f32 %v2177, %v2401
        %v2403 = vpop.f32.mrb[0].mxu0
        %v2404 = vpop.f32.mrb[0].mxu0
        %v2405 = vadd.f32 %v2180, %v2404
        %v2406 = vpop.f32.mrb[0].mxu0
        %2407 = vmatprep.mubr.bf16.mxu0 0
        %2408 = vmatmul.mubr.bf16.gmra.mrb[0].mxu0 %v714
        %v2409 = vpop.f32.mrb[0].mxu0
        %v2410 = vadd.f32 %v2185, %v2409
        %v2411 = vpop.f32.mrb[0].mxu0
        %v2412 = vpop.f32.mrb[0].mxu0
        %v2413 = vadd.f32 %v2188, %v2412
        %v2414 = vpop.f32.mrb[0].mxu0
        %2415 = vmatprep.mubr.bf16.mxu0 0
        %2416 = vmatmul.mubr.bf16.gmra.mrb[0].mxu0 %v715
        %v2417 = vpop.f32.mrb[0].mxu0
        %v2418 = vadd.f32 %v2193, %v2417
        %v2419 = vpop.f32.mrb[0].mxu0
        %v2420 = vpop.f32.mrb[0].mxu0
        %v2421 = vadd.f32 %v2196, %v2420
        %v2422 = vpop.f32.mrb[0].mxu0
        %2423 = vdwg.mxu0
        %vm2424 = vcmp.ge.f32.partialorder %v2234, 0.0
        %vm2425 = vcmp.ge.f32.partialorder %v2237, 0.0
        %vm2426 = vcmp.ge.f32.partialorder %v2242, 0.0
        %vm2427 = vcmp.ge.f32.partialorder %v2245, 0.0
        %vm2428 = vcmp.ge.f32.partialorder %v2250, 0.0
        %vm2429 = vcmp.ge.f32.partialorder %v2253, 0.0
        %vm2430 = vcmp.ge.f32.partialorder %v2258, 0.0
        %vm2431 = vcmp.ge.f32.partialorder %v2261, 0.0
        %vm2432 = vcmp.ge.f32.partialorder %v2266, 0.0
        %vm2433 = vcmp.ge.f32.partialorder %v2269, 0.0
        %vm2434 = vcmp.ge.f32.partialorder %v2274, 0.0
        %vm2435 = vcmp.ge.f32.partialorder %v2277, 0.0
        %vm2436 = vcmp.ge.f32.partialorder %v2282, 0.0
        %vm2437 = vcmp.ge.f32.partialorder %v2285, 0.0
        %vm2438 = vcmp.ge.f32.partialorder %v2290, 0.0
        %vm2439 = vcmp.ge.f32.partialorder %v2293, 0.0
        %vm2440 = vcmp.ge.f32.partialorder %v2298, 0.0
        %vm2441 = vcmp.ge.f32.partialorder %v2301, 0.0
        %vm2442 = vcmp.ge.f32.partialorder %v2306, 0.0
        %vm2443 = vcmp.ge.f32.partialorder %v2309, 0.0
        %vm2444 = vcmp.ge.f32.partialorder %v2314, 0.0
        %vm2445 = vcmp.ge.f32.partialorder %v2317, 0.0
        %vm2446 = vcmp.ge.f32.partialorder %v2322, 0.0
        %vm2447 = vcmp.ge.f32.partialorder %v2325, 0.0
        %vm2448 = vcmp.ge.f32.partialorder %v2330, 0.0
        %vm2449 = vcmp.ge.f32.partialorder %v2333, 0.0
        %vm2450 = vcmp.ge.f32.partialorder %v2338, 0.0
        %vm2451 = vcmp.ge.f32.partialorder %v2341, 0.0
        %vm2452 = vcmp.ge.f32.partialorder %v2346, 0.0
        %vm2453 = vcmp.ge.f32.partialorder %v2349, 0.0
        %vm2454 = vcmp.ge.f32.partialorder %v2354, 0.0
        %vm2455 = vcmp.ge.f32.partialorder %v2357, 0.0
        %vm2456 = vcmp.ge.f32.partialorder %v2362, 0.0
        %vm2457 = vcmp.ge.f32.partialorder %v2365, 0.0
        %vm2458 = vcmp.ge.f32.partialorder %v2370, 0.0
        %vm2459 = vcmp.ge.f32.partialorder %v2373, 0.0
        %vm2460 = vcmp.ge.f32.partialorder %v2378, 0.0
        %vm2461 = vcmp.ge.f32.partialorder %v2381, 0.0
        %vm2462 = vcmp.ge.f32.partialorder %v2386, 0.0
        %vm2463 = vcmp.ge.f32.partialorder %v2389, 0.0
        %vm2464 = vcmp.ge.f32.partialorder %v2394, 0.0
        %vm2465 = vcmp.ge.f32.partialorder %v2397, 0.0
        %vm2466 = vcmp.ge.f32.partialorder %v2402, 0.0
        %vm2467 = vcmp.ge.f32.partialorder %v2405, 0.0
        %vm2468 = vcmp.ge.f32.partialorder %v2410, 0.0
        %vm2469 = vcmp.ge.f32.partialorder %v2413, 0.0
        %vm2470 = vcmp.ge.f32.partialorder %v2418, 0.0
        %vm2471 = vcmp.ge.f32.partialorder %v2421, 0.0
        %v2472 = vmul.f32 %v2234, 0.1
        %v2473 = vmul.f32 %v2237, 0.1
        %v2474 = vmul.f32 %v2242, 0.1
        %v2475 = vmul.f32 %v2245, 0.1
        %v2476 = vmul.f32 %v2250, 0.1
        %v2477 = vmul.f32 %v2253, 0.1
        %v2478 = vmul.f32 %v2258, 0.1
        %v2479 = vmul.f32 %v2261, 0.1
        %v2480 = vmul.f32 %v2266, 0.1
        %v2481 = vmul.f32 %v2269, 0.1
        %v2482 = vmul.f32 %v2274, 0.1
        %v2483 = vmul.f32 %v2277, 0.1
        %v2484 = vmul.f32 %v2282, 0.1
        %v2485 = vmul.f32 %v2285, 0.1
        %v2486 = vmul.f32 %v2290, 0.1
        %v2487 = vmul.f32 %v2293, 0.1
        %v2488 = vmul.f32 %v2298, 0.1
        %v2489 = vmul.f32 %v2301, 0.1
        %v2490 = vmul.f32 %v2306, 0.1
        %v2491 = vmul.f32 %v2309, 0.1
        %v2492 = vmul.f32 %v2314, 0.1
        %v2493 = vmul.f32 %v2317, 0.1
        %v2494 = vmul.f32 %v2322, 0.1
        %v2495 = vmul.f32 %v2325, 0.1
        %v2496 = vmul.f32 %v2330, 0.1
        %v2497 = vmul.f32 %v2333, 0.1
        %v2498 = vmul.f32 %v2338, 0.1
        %v2499 = vmul.f32 %v2341, 0.1
        %v2500 = vmul.f32 %v2346, 0.1
        %v2501 = vmul.f32 %v2349, 0.1
        %v2502 = vmul.f32 %v2354, 0.1
        %v2503 = vmul.f32 %v2357, 0.1
        %v2504 = vmul.f32 %v2362, 0.1
        %v2505 = vmul.f32 %v2365, 0.1
        %v2506 = vmul.f32 %v2370, 0.1
        %v2507 = vmul.f32 %v2373, 0.1
        %v2508 = vmul.f32 %v2378, 0.1
        %v2509 = vmul.f32 %v2381, 0.1
        %v2510 = vmul.f32 %v2386, 0.1
        %v2511 = vmul.f32 %v2389, 0.1
        %v2512 = vmul.f32 %v2394, 0.1
        %v2513 = vmul.f32 %v2397, 0.1
        %v2514 = vmul.f32 %v2402, 0.1
        %v2515 = vmul.f32 %v2405, 0.1
        %v2516 = vmul.f32 %v2410, 0.1
        %v2517 = vmul.f32 %v2413, 0.1
        %v2518 = vmul.f32 %v2418, 0.1
        %v2519 = vmul.f32 %v2421, 0.1
        %v2520 = vsel %vm2424, %v2234, %v2472
        %v2521 = vsel %vm2425, %v2237, %v2473
        %v2522 = vsel %vm2426, %v2242, %v2474
        %v2523 = vsel %vm2427, %v2245, %v2475
        %v2524 = vsel %vm2428, %v2250, %v2476
        %v2525 = vsel %vm2429, %v2253, %v2477
        %v2526 = vsel %vm2430, %v2258, %v2478
        %v2527 = vsel %vm2431, %v2261, %v2479
        %v2528 = vsel %vm2432, %v2266, %v2480
        %v2529 = vsel %vm2433, %v2269, %v2481
        %v2530 = vsel %vm2434, %v2274, %v2482
        %v2531 = vsel %vm2435, %v2277, %v2483
        %v2532 = vsel %vm2436, %v2282, %v2484
        %v2533 = vsel %vm2437, %v2285, %v2485
        %v2534 = vsel %vm2438, %v2290, %v2486
        %v2535 = vsel %vm2439, %v2293, %v2487
        %v2536 = vsel %vm2440, %v2298, %v2488
        %v2537 = vsel %vm2441, %v2301, %v2489
        %v2538 = vsel %vm2442, %v2306, %v2490
        %v2539 = vsel %vm2443, %v2309, %v2491
        %v2540 = vsel %vm2444, %v2314, %v2492
        %v2541 = vsel %vm2445, %v2317, %v2493
        %v2542 = vsel %vm2446, %v2322, %v2494
        %v2543 = vsel %vm2447, %v2325, %v2495
        %v2544 = vsel %vm2448, %v2330, %v2496
        %v2545 = vsel %vm2449, %v2333, %v2497
        %v2546 = vsel %vm2450, %v2338, %v2498
        %v2547 = vsel %vm2451, %v2341, %v2499
        %v2548 = vsel %vm2452, %v2346, %v2500
        %v2549 = vsel %vm2453, %v2349, %v2501
        %v2550 = vsel %vm2454, %v2354, %v2502
        %v2551 = vsel %vm2455, %v2357, %v2503
        %v2552 = vsel %vm2456, %v2362, %v2504
        %v2553 = vsel %vm2457, %v2365, %v2505
        %v2554 = vsel %vm2458, %v2370, %v2506
        %v2555 = vsel %vm2459, %v2373, %v2507
        %v2556 = vsel %vm2460, %v2378, %v2508
        %v2557 = vsel %vm2461, %v2381, %v2509
        %v2558 = vsel %vm2462, %v2386, %v2510
        %v2559 = vsel %vm2463, %v2389, %v2511
        %v2560 = vsel %vm2464, %v2394, %v2512
        %v2561 = vsel %vm2465, %v2397, %v2513
        %v2562 = vsel %vm2466, %v2402, %v2514
        %v2563 = vsel %vm2467, %v2405, %v2515
        %v2564 = vsel %vm2468, %v2410, %v2516
        %v2565 = vsel %vm2469, %v2413, %v2517
        %v2566 = vsel %vm2470, %v2418, %v2518
        %v2567 = vsel %vm2471, %v2421, %v2519
        %v2568 = vmul.f32 %v2520, %v228
        %v2569 = vmul.f32 %v2521, %v229
        %v2570 = vmul.f32 %v2522, %v230
        %v2571 = vmul.f32 %v2523, %v228
        %v2572 = vmul.f32 %v2524, %v229
        %v2573 = vmul.f32 %v2525, %v230
        %v2574 = vmul.f32 %v2526, %v228
        %v2575 = vmul.f32 %v2527, %v229
        %v2576 = vmul.f32 %v2528, %v230
        %v2577 = vmul.f32 %v2529, %v228
        %v2578 = vmul.f32 %v2530, %v229
        %v2579 = vmul.f32 %v2531, %v230
        %v2580 = vmul.f32 %v2532, %v228
        %v2581 = vmul.f32 %v2533, %v229
        %v2582 = vmul.f32 %v2534, %v230
        %v2583 = vmul.f32 %v2535, %v228
        %v2584 = vmul.f32 %v2536, %v229
        %v2585 = vmul.f32 %v2537, %v230
        %v2586 = vmul.f32 %v2538, %v228
        %v2587 = vmul.f32 %v2539, %v229
        %v2588 = vmul.f32 %v2540, %v230
        %v2589 = vmul.f32 %v2541, %v228
        %v2590 = vmul.f32 %v2542, %v229
        %v2591 = vmul.f32 %v2543, %v230
        %v2592 = vmul.f32 %v2544, %v228
        %v2593 = vmul.f32 %v2545, %v229
        %v2594 = vmul.f32 %v2546, %v230
        %v2595 = vmul.f32 %v2547, %v228
        %v2596 = vmul.f32 %v2548, %v229
        %v2597 = vmul.f32 %v2549, %v230
        %v2598 = vmul.f32 %v2550, %v228
        %v2599 = vmul.f32 %v2551, %v229
        %v2600 = vmul.f32 %v2552, %v230
        %v2601 = vmul.f32 %v2553, %v228
        %v2602 = vmul.f32 %v2554, %v229
        %v2603 = vmul.f32 %v2555, %v230
        %v2604 = vmul.f32 %v2556, %v228
        %v2605 = vmul.f32 %v2557, %v229
        %v2606 = vmul.f32 %v2558, %v230
        %v2607 = vmul.f32 %v2559, %v228
        %v2608 = vmul.f32 %v2560, %v229
        %v2609 = vmul.f32 %v2561, %v230
        %v2610 = vmul.f32 %v2562, %v228
        %v2611 = vmul.f32 %v2563, %v229
        %v2612 = vmul.f32 %v2564, %v230
        %v2613 = vmul.f32 %v2565, %v228
        %v2614 = vmul.f32 %v2566, %v229
        %v2615 = vmul.f32 %v2567, %v230
        %v2616 = vpack.c.bf16 %v2569, %v2568
        %v2617 = vpack.c.bf16 %v2571, %v2570
        %v2618 = vpack.c.bf16 %v2573, %v2572
        %v2619 = vpack.c.bf16 %v2575, %v2574
        %v2620 = vpack.c.bf16 %v2577, %v2576
        %v2621 = vpack.c.bf16 %v2579, %v2578
        %v2622 = vpack.c.bf16 %v2581, %v2580
        %v2623 = vpack.c.bf16 %v2583, %v2582
        %v2624 = vpack.c.bf16 %v2585, %v2584
        %v2625 = vpack.c.bf16 %v2587, %v2586
        %v2626 = vpack.c.bf16 %v2589, %v2588
        %v2627 = vpack.c.bf16 %v2591, %v2590
        %v2628 = vpack.c.bf16 %v2593, %v2592
        %v2629 = vpack.c.bf16 %v2595, %v2594
        %v2630 = vpack.c.bf16 %v2597, %v2596
        %v2631 = vpack.c.bf16 %v2599, %v2598
        %v2632 = vpack.c.bf16 %v2601, %v2600
        %v2633 = vpack.c.bf16 %v2603, %v2602
        %v2634 = vpack.c.bf16 %v2605, %v2604
        %v2635 = vpack.c.bf16 %v2607, %v2606
        %v2636 = vpack.c.bf16 %v2609, %v2608
        %v2637 = vpack.c.bf16 %v2611, %v2610
        %v2638 = vpack.c.bf16 %v2613, %v2612
        %v2639 = vpack.c.bf16 %v2615, %v2614
        %2640 = vst [vmem:[#allocation2 + $0x30] sm:$0xff] %v2616
        %2641 = vst [vmem:[#allocation2 + $0x38] sm:$0xff] %v2617
        %2642 = vst [vmem:[#allocation2 + $0x40] sm:$0xff] %v2618
        %2643 = vst [vmem:[#allocation2 + $0x48] sm:$0xff] %v2619
        %2644 = vst [vmem:[#allocation2 + $0x50] sm:$0xff] %v2620
        %2645 = vst [vmem:[#allocation2 + $0x58] sm:$0xff] %v2621
        %2646 = vst [vmem:[#allocation2 + $0x60] sm:$0xff] %v2622
        %2647 = vst [vmem:[#allocation2 + $0x68] sm:$0xff] %v2623
        %2648 = vst [vmem:[#allocation2 + $0x70] sm:$0xff] %v2624
        %2649 = vst [vmem:[#allocation2 + $0x78] sm:$0xff] %v2625
        %2650 = vst [vmem:[#allocation2 + $0x80] sm:$0xff] %v2626
        %2651 = vst [vmem:[#allocation2 + $0x88] sm:$0xff] %v2627
        %2652 = vst [vmem:[#allocation2 + $0x90] sm:$0xff] %v2628
        %2653 = vst [vmem:[#allocation2 + $0x98] sm:$0xff] %v2629
        %2654 = vst [vmem:[#allocation2 + $0xa0] sm:$0xff] %v2630
        %2655 = vst [vmem:[#allocation2 + $0xa8] sm:$0xff] %v2631
        %2656 = vst [vmem:[#allocation2 + $0xb0] sm:$0xff] %v2632
        %2657 = vst [vmem:[#allocation2 + $0xb8] sm:$0xff] %v2633
        %2658 = vst [vmem:[#allocation2 + $0xc0] sm:$0xff] %v2634
        %2659 = vst [vmem:[#allocation2 + $0xc8] sm:$0xff] %v2635
        %2660 = vst [vmem:[#allocation2 + $0xd0] sm:$0xff] %v2636
        %2661 = vst [vmem:[#allocation2 + $0xd8] sm:$0xff] %v2637
        %2662 = vst [vmem:[#allocation2 + $0xe0] sm:$0xff] %v2638
        %2663 = vst [vmem:[#allocation2 + $0xe8] sm:$0xff] %v2639
        %v2664 = vld [vmem:[#allocation2 + $0x10] sm:$0xff]
        %v2665 = vld [vmem:[#allocation2 + $0x18] sm:$0xff]
        %v2666 = vld [vmem:[#allocation2 + $0x20] sm:$0xff]
        %v2667 = vld [vmem:[#allocation2 + $0x28] sm:$0xff]
        %v2668 = vld [vmem:[#allocation2 + $0x30] sm:$0xff]
        %v2669 = vld [vmem:[#allocation2 + $0x38] sm:$0xff]
        %v2670 = vld [vmem:[#allocation2 + $0x40] sm:$0xff]
        %v2671 = vld [vmem:[#allocation2 + $0x48] sm:$0xff]
        %v2672 = vld [vmem:[#allocation2 + $0x50] sm:$0xff]
        %v2673 = vld [vmem:[#allocation2 + $0x58] sm:$0xff]
        %v2674 = vld [vmem:[#allocation2 + $0x60] sm:$0xff]
        %v2675 = vld [vmem:[#allocation2 + $0x68] sm:$0xff]
        %v2676 = vld [vmem:[#allocation2 + $0x70] sm:$0xff]
        %v2677 = vld [vmem:[#allocation2 + $0x78] sm:$0xff]
        %v2678 = vld [vmem:[#allocation2 + $0x80] sm:$0xff]
        %v2679 = vld [vmem:[#allocation2 + $0x88] sm:$0xff]
        %v2680 = vld [vmem:[#allocation2 + $0x90] sm:$0xff]
        %v2681 = vld [vmem:[#allocation2 + $0x98] sm:$0xff]
        %v2682 = vld [vmem:[#allocation2 + $0xa0] sm:$0xff]
        %v2683 = vld [vmem:[#allocation2 + $0xa8] sm:$0xff]
        %v2684 = vld [vmem:[#allocation2 + $0xb0] sm:$0xff]
        %v2685 = vld [vmem:[#allocation2 + $0xb8] sm:$0xff]
        %v2686 = vld [vmem:[#allocation2 + $0xc0] sm:$0xff]
        %v2687 = vld [vmem:[#allocation2 + $0xc8] sm:$0xff]
        %v2688 = vld [vmem:[#allocation2 + $0xd0] sm:$0xff]
        %v2689 = vld [vmem:[#allocation2 + $0xd8] sm:$0xff]
        %v2690 = vld [vmem:[#allocation2 + $0xe0] sm:$0xff]
        %v2691 = vld [vmem:[#allocation2 + $0xe8] sm:$0xff]
        %v2692 = vld [vmem:[#allocation2 + $0xf0] sm:$0xff]
        %v2693 = vld [vmem:[#allocation2 + $0xf8] sm:$0xff]
        %v2694 = vld [vmem:[#allocation2 + $0x100] sm:$0xff]
        %v2695 = vld [vmem:[#allocation2 + $0x108] sm:$0xff]
        %v2696 = vunpack.c.h.bf16 %v2664
        %v2697 = vunpack.c.l.bf16 %v2665
        %v2698 = vunpack.c.h.bf16 %v2665
        %v2699 = vunpack.c.l.bf16 %v2666
        %v2700 = vunpack.c.h.bf16 %v2666
        %v2701 = vunpack.c.l.bf16 %v2667
        %v2702 = vunpack.c.h.bf16 %v2667
        %v2703 = vunpack.c.l.bf16 %v2668
        %v2704 = vunpack.c.h.bf16 %v2668
        %v2705 = vunpack.c.l.bf16 %v2669
        %v2706 = vunpack.c.h.bf16 %v2669
        %v2707 = vunpack.c.l.bf16 %v2670
        %v2708 = vunpack.c.h.bf16 %v2670
        %v2709 = vunpack.c.l.bf16 %v2671
        %v2710 = vunpack.c.h.bf16 %v2671
        %v2711 = vunpack.c.l.bf16 %v2672
        %v2712 = vunpack.c.h.bf16 %v2672
        %v2713 = vunpack.c.l.bf16 %v2673
        %v2714 = vunpack.c.h.bf16 %v2673
        %v2715 = vunpack.c.l.bf16 %v2674
        %v2716 = vunpack.c.h.bf16 %v2674
        %v2717 = vunpack.c.l.bf16 %v2675
        %v2718 = vunpack.c.h.bf16 %v2675
        %v2719 = vunpack.c.l.bf16 %v2676
        %v2720 = vunpack.c.h.bf16 %v2676
        %v2721 = vunpack.c.l.bf16 %v2677
        %v2722 = vunpack.c.h.bf16 %v2677
        %v2723 = vunpack.c.l.bf16 %v2678
        %v2724 = vunpack.c.h.bf16 %v2678
        %v2725 = vunpack.c.l.bf16 %v2679
        %v2726 = vunpack.c.h.bf16 %v2679
        %v2727 = vunpack.c.l.bf16 %v2680
        %v2728 = vunpack.c.h.bf16 %v2680
        %v2729 = vunpack.c.l.bf16 %v2681
        %v2730 = vunpack.c.h.bf16 %v2681
        %v2731 = vunpack.c.l.bf16 %v2682
        %v2732 = vunpack.c.h.bf16 %v2682
        %v2733 = vunpack.c.l.bf16 %v2683
        %v2734 = vunpack.c.h.bf16 %v2683
        %v2735 = vunpack.c.l.bf16 %v2684
        %v2736 = vunpack.c.h.bf16 %v2684
        %v2737 = vunpack.c.l.bf16 %v2685
        %v2738 = vunpack.c.h.bf16 %v2685
        %v2739 = vunpack.c.l.bf16 %v2686
        %v2740 = vunpack.c.h.bf16 %v2686
        %v2741 = vunpack.c.l.bf16 %v2687
        %v2742 = vunpack.c.h.bf16 %v2687
        %v2743 = vunpack.c.l.bf16 %v2688
        %v2744 = vunpack.c.h.bf16 %v2688
        %v2745 = vunpack.c.l.bf16 %v2689
        %v2746 = vunpack.c.h.bf16 %v2689
        %v2747 = vunpack.c.l.bf16 %v2690
        %v2748 = vunpack.c.h.bf16 %v2690
        %v2749 = vunpack.c.l.bf16 %v2691
        %v2750 = vunpack.c.h.bf16 %v2691
        %v2751 = vunpack.c.l.bf16 %v2692
        %v2752 = vunpack.c.h.bf16 %v2692
        %v2753 = vunpack.c.l.bf16 %v2693
        %v2754 = vunpack.c.h.bf16 %v2693
        %v2755 = vunpack.c.l.bf16 %v2694
        %v2756 = vunpack.c.h.bf16 %v2694
        %v2757 = vunpack.c.l.bf16 %v2695
        %v2758 = vrot.slane %v2696, 6
        %v2759 = vrot.slane %v2697, 6
        %v2760 = vrot.slane %v2698, 6
        %v2761 = vrot.slane %v2699, 6
        %v2762 = vrot.slane %v2700, 6
        %v2763 = vrot.slane %v2701, 6
        %v2764 = vrot.slane %v2702, 6
        %v2765 = vrot.slane %v2703, 6
        %v2766 = vrot.slane %v2704, 6
        %v2767 = vrot.slane %v2705, 6
        %v2768 = vrot.slane %v2706, 6
        %v2769 = vrot.slane %v2707, 6
        %v2770 = vrot.slane %v2708, 6
        %v2771 = vrot.slane %v2709, 6
        %v2772 = vrot.slane %v2710, 6
        %v2773 = vrot.slane %v2711, 6
        %v2774 = vrot.slane %v2712, 6
        %v2775 = vrot.slane %v2713, 6
        %v2776 = vrot.slane %v2714, 6
        %v2777 = vrot.slane %v2715, 6
        %v2778 = vrot.slane %v2716, 6
        %v2779 = vrot.slane %v2717, 6
        %v2780 = vrot.slane %v2718, 6
        %v2781 = vrot.slane %v2719, 6
        %v2782 = vrot.slane %v2720, 6
        %v2783 = vrot.slane %v2721, 6
        %v2784 = vrot.slane %v2722, 6
        %v2785 = vrot.slane %v2723, 6
        %v2786 = vrot.slane %v2724, 6
        %v2787 = vrot.slane %v2725, 6
        %v2788 = vrot.slane %v2726, 6
        %v2789 = vrot.slane %v2727, 6
        %v2790 = vrot.slane %v2728, 6
        %v2791 = vrot.slane %v2729, 6
        %v2792 = vrot.slane %v2730, 6
        %v2793 = vrot.slane %v2731, 6
        %v2794 = vrot.slane %v2732, 6
        %v2795 = vrot.slane %v2733, 6
        %v2796 = vrot.slane %v2734, 6
        %v2797 = vrot.slane %v2735, 6
        %v2798 = vrot.slane %v2736, 6
        %v2799 = vrot.slane %v2737, 6
        %v2800 = vrot.slane %v2738, 6
        %v2801 = vrot.slane %v2739, 6
        %v2802 = vrot.slane %v2740, 6
        %v2803 = vrot.slane %v2741, 6
        %v2804 = vrot.slane %v2742, 6
        %v2805 = vrot.slane %v2743, 6
        %v2806 = vrot.slane %v2744, 6
        %v2807 = vrot.slane %v2745, 6
        %v2808 = vrot.slane %v2746, 6
        %v2809 = vrot.slane %v2747, 6
        %v2810 = vrot.slane %v2748, 6
        %v2811 = vrot.slane %v2749, 6
        %v2812 = vrot.slane %v2750, 6
        %v2813 = vrot.slane %v2751, 6
        %v2814 = vrot.slane %v2752, 6
        %v2815 = vrot.slane %v2753, 6
        %v2816 = vrot.slane %v2754, 6
        %v2817 = vrot.slane %v2755, 6
        %v2818 = vrot.slane %v2756, 6
        %vm2819 = vcmp.lt.s32.totalorder %v213, 2
        %v2820 = vsel %vm2819, %v2817, %v2818
        %v2821 = vsel %vm2819, %v2816, %v2817
        %v2822 = vsel %vm2819, %v2815, %v2816
        %v2823 = vsel %vm2819, %v2814, %v2815
        %v2824 = vsel %vm2819, %v2813, %v2814
        %v2825 = vsel %vm2819, %v2812, %v2813
        %v2826 = vsel %vm2819, %v2811, %v2812
        %v2827 = vsel %vm2819, %v2810, %v2811
        %v2828 = vsel %vm2819, %v2809, %v2810
        %v2829 = vsel %vm2819, %v2808, %v2809
        %v2830 = vsel %vm2819, %v2807, %v2808
        %v2831 = vsel %vm2819, %v2806, %v2807
        %v2832 = vsel %vm2819, %v2805, %v2806
        %v2833 = vsel %vm2819, %v2804, %v2805
        %v2834 = vsel %vm2819, %v2803, %v2804
        %v2835 = vsel %vm2819, %v2802, %v2803
        %v2836 = vsel %vm2819, %v2801, %v2802
        %v2837 = vsel %vm2819, %v2800, %v2801
        %v2838 = vsel %vm2819, %v2799, %v2800
        %v2839 = vsel %vm2819, %v2798, %v2799
        %v2840 = vsel %vm2819, %v2797, %v2798
        %v2841 = vsel %vm2819, %v2796, %v2797
        %v2842 = vsel %vm2819, %v2795, %v2796
        %v2843 = vsel %vm2819, %v2794, %v2795
        %v2844 = vsel %vm2819, %v2793, %v2794
        %v2845 = vsel %vm2819, %v2792, %v2793
        %v2846 = vsel %vm2819, %v2791, %v2792
        %v2847 = vsel %vm2819, %v2790, %v2791
        %v2848 = vsel %vm2819, %v2789, %v2790
        %v2849 = vsel %vm2819, %v2788, %v2789
        %v2850 = vsel %vm2819, %v2787, %v2788
        %v2851 = vsel %vm2819, %v2786, %v2787
        %v2852 = vsel %vm2819, %v2785, %v2786
        %v2853 = vsel %vm2819, %v2784, %v2785
        %v2854 = vsel %vm2819, %v2783, %v2784
        %v2855 = vsel %vm2819, %v2782, %v2783
        %v2856 = vsel %vm2819, %v2781, %v2782
        %v2857 = vsel %vm2819, %v2780, %v2781
        %v2858 = vsel %vm2819, %v2779, %v2780
        %v2859 = vsel %vm2819, %v2778, %v2779
        %v2860 = vsel %vm2819, %v2777, %v2778
        %v2861 = vsel %vm2819, %v2776, %v2777
        %v2862 = vsel %vm2819, %v2775, %v2776
        %v2863 = vsel %vm2819, %v2774, %v2775
        %v2864 = vsel %vm2819, %v2773, %v2774
        %v2865 = vsel %vm2819, %v2772, %v2773
        %v2866 = vsel %vm2819, %v2771, %v2772
        %v2867 = vsel %vm2819, %v2770, %v2771
        %v2868 = vsel %vm2819, %v2769, %v2770
        %v2869 = vsel %vm2819, %v2768, %v2769
        %v2870 = vsel %vm2819, %v2767, %v2768
        %v2871 = vsel %vm2819, %v2766, %v2767
        %v2872 = vsel %vm2819, %v2765, %v2766
        %v2873 = vsel %vm2819, %v2764, %v2765
        %v2874 = vsel %vm2819, %v2763, %v2764
        %v2875 = vsel %vm2819, %v2762, %v2763
        %v2876 = vsel %vm2819, %v2761, %v2762
        %v2877 = vsel %vm2819, %v2760, %v2761
        %v2878 = vsel %vm2819, %v2759, %v2760
        %v2879 = vsel %vm2819, %v2758, %v2759
        %v2880 = vrot.slane %v2697, 2
        %v2881 = vrot.slane %v2698, 2
        %v2882 = vrot.slane %v2699, 2
        %v2883 = vrot.slane %v2700, 2
        %v2884 = vrot.slane %v2701, 2
        %v2885 = vrot.slane %v2702, 2
        %v2886 = vrot.slane %v2703, 2
        %v2887 = vrot.slane %v2704, 2
        %v2888 = vrot.slane %v2705, 2
        %v2889 = vrot.slane %v2706, 2
        %v2890 = vrot.slane %v2707, 2
        %v2891 = vrot.slane %v2708, 2
        %v2892 = vrot.slane %v2709, 2
        %v2893 = vrot.slane %v2710, 2
        %v2894 = vrot.slane %v2711, 2
        %v2895 = vrot.slane %v2712, 2
        %v2896 = vrot.slane %v2713, 2
        %v2897 = vrot.slane %v2714, 2
        %v2898 = vrot.slane %v2715, 2
        %v2899 = vrot.slane %v2716, 2
        %v2900 = vrot.slane %v2717, 2
        %v2901 = vrot.slane %v2718, 2
        %v2902 = vrot.slane %v2719, 2
        %v2903 = vrot.slane %v2720, 2
        %v2904 = vrot.slane %v2721, 2
        %v2905 = vrot.slane %v2722, 2
        %v2906 = vrot.slane %v2723, 2
        %v2907 = vrot.slane %v2724, 2
        %v2908 = vrot.slane %v2725, 2
        %v2909 = vrot.slane %v2726, 2
        %v2910 = vrot.slane %v2727, 2
        %v2911 = vrot.slane %v2728, 2
        %v2912 = vrot.slane %v2729, 2
        %v2913 = vrot.slane %v2730, 2
        %v2914 = vrot.slane %v2731, 2
        %v2915 = vrot.slane %v2732, 2
        %v2916 = vrot.slane %v2733, 2
        %v2917 = vrot.slane %v2734, 2
        %v2918 = vrot.slane %v2735, 2
        %v2919 = vrot.slane %v2736, 2
        %v2920 = vrot.slane %v2737, 2
        %v2921 = vrot.slane %v2738, 2
        %v2922 = vrot.slane %v2739, 2
        %v2923 = vrot.slane %v2740, 2
        %v2924 = vrot.slane %v2741, 2
        %v2925 = vrot.slane %v2742, 2
        %v2926 = vrot.slane %v2743, 2
        %v2927 = vrot.slane %v2744, 2
        %v2928 = vrot.slane %v2745, 2
        %v2929 = vrot.slane %v2746, 2
        %v2930 = vrot.slane %v2747, 2
        %v2931 = vrot.slane %v2748, 2
        %v2932 = vrot.slane %v2749, 2
        %v2933 = vrot.slane %v2750, 2
        %v2934 = vrot.slane %v2751, 2
        %v2935 = vrot.slane %v2752, 2
        %v2936 = vrot.slane %v2753, 2
        %v2937 = vrot.slane %v2754, 2
        %v2938 = vrot.slane %v2755, 2
        %v2939 = vrot.slane %v2756, 2
        %v2940 = vrot.slane %v2757, 2
        %vm2941 = vcmp.lt.s32.totalorder %v213, 6
        %v2942 = vsel %vm2941, %v2939, %v2940
        %v2943 = vsel %vm2941, %v2938, %v2939
        %v2944 = vsel %vm2941, %v2937, %v2938
        %v2945 = vsel %vm2941, %v2936, %v2937
        %v2946 = vsel %vm2941, %v2935, %v2936
        %v2947 = vsel %vm2941, %v2934, %v2935
        %v2948 = vsel %vm2941, %v2933, %v2934
        %v2949 = vsel %vm2941, %v2932, %v2933
        %v2950 = vsel %vm2941, %v2931, %v2932
        %v2951 = vsel %vm2941, %v2930, %v2931
        %v2952 = vsel %vm2941, %v2929, %v2930
        %v2953 = vsel %vm2941, %v2928, %v2929
        %v2954 = vsel %vm2941, %v2927, %v2928
        %v2955 = vsel %vm2941, %v2926, %v2927
        %v2956 = vsel %vm2941, %v2925, %v2926
        %v2957 = vsel %vm2941, %v2924, %v2925
        %v2958 = vsel %vm2941, %v2923, %v2924
        %v2959 = vsel %vm2941, %v2922, %v2923
        %v2960 = vsel %vm2941, %v2921, %v2922
        %v2961 = vsel %vm2941, %v2920, %v2921
        %v2962 = vsel %vm2941, %v2919, %v2920
        %v2963 = vsel %vm2941, %v2918, %v2919
        %v2964 = vsel %vm2941, %v2917, %v2918
        %v2965 = vsel %vm2941, %v2916, %v2917
        %v2966 = vsel %vm2941, %v2915, %v2916
        %v2967 = vsel %vm2941, %v2914, %v2915
        %v2968 = vsel %vm2941, %v2913, %v2914
        %v2969 = vsel %vm2941, %v2912, %v2913
        %v2970 = vsel %vm2941, %v2911, %v2912
        %v2971 = vsel %vm2941, %v2910, %v2911
        %v2972 = vsel %vm2941, %v2909, %v2910
        %v2973 = vsel %vm2941, %v2908, %v2909
        %v2974 = vsel %vm2941, %v2907, %v2908
        %v2975 = vsel %vm2941, %v2906, %v2907
        %v2976 = vsel %vm2941, %v2905, %v2906
        %v2977 = vsel %vm2941, %v2904, %v2905
        %v2978 = vsel %vm2941, %v2903, %v2904
        %v2979 = vsel %vm2941, %v2902, %v2903
        %v2980 = vsel %vm2941, %v2901, %v2902
        %v2981 = vsel %vm2941, %v2900, %v2901
        %v2982 = vsel %vm2941, %v2899, %v2900
        %v2983 = vsel %vm2941, %v2898, %v2899
        %v2984 = vsel %vm2941, %v2897, %v2898
        %v2985 = vsel %vm2941, %v2896, %v2897
        %v2986 = vsel %vm2941, %v2895, %v2896
        %v2987 = vsel %vm2941, %v2894, %v2895
        %v2988 = vsel %vm2941, %v2893, %v2894
        %v2989 = vsel %vm2941, %v2892, %v2893
        %v2990 = vsel %vm2941, %v2891, %v2892
        %v2991 = vsel %vm2941, %v2890, %v2891
        %v2992 = vsel %vm2941, %v2889, %v2890
        %v2993 = vsel %vm2941, %v2888, %v2889
        %v2994 = vsel %vm2941, %v2887, %v2888
        %v2995 = vsel %vm2941, %v2886, %v2887
        %v2996 = vsel %vm2941, %v2885, %v2886
        %v2997 = vsel %vm2941, %v2884, %v2885
        %v2998 = vsel %vm2941, %v2883, %v2884
        %v2999 = vsel %vm2941, %v2882, %v2883
        %v3000 = vsel %vm2941, %v2881, %v2882
        %v3001 = vsel %vm2941, %v2880, %v2881
        %v3002 = vpack.c.bf16 %v2878, %v2879
        %v3003 = vpack.c.bf16 %v2876, %v2877
        %v3004 = vpack.c.bf16 %v2874, %v2875
        %v3005 = vpack.c.bf16 %v2872, %v2873
        %v3006 = vpack.c.bf16 %v2870, %v2871
        %v3007 = vpack.c.bf16 %v2868, %v2869
        %v3008 = vpack.c.bf16 %v2866, %v2867
        %v3009 = vpack.c.bf16 %v2864, %v2865
        %v3010 = vpack.c.bf16 %v2862, %v2863
        %v3011 = vpack.c.bf16 %v2860, %v2861
        %v3012 = vpack.c.bf16 %v2858, %v2859
        %v3013 = vpack.c.bf16 %v2856, %v2857
        %v3014 = vpack.c.bf16 %v2854, %v2855
        %v3015 = vpack.c.bf16 %v2852, %v2853
        %v3016 = vpack.c.bf16 %v2850, %v2851
        %v3017 = vpack.c.bf16 %v2848, %v2849
        %v3018 = vpack.c.bf16 %v2846, %v2847
        %v3019 = vpack.c.bf16 %v2844, %v2845
        %v3020 = vpack.c.bf16 %v2842, %v2843
        %v3021 = vpack.c.bf16 %v2840, %v2841
        %v3022 = vpack.c.bf16 %v2838, %v2839
        %v3023 = vpack.c.bf16 %v2836, %v2837
        %v3024 = vpack.c.bf16 %v2834, %v2835
        %v3025 = vpack.c.bf16 %v2832, %v2833
        %v3026 = vpack.c.bf16 %v2698, %v2697
        %v3027 = vpack.c.bf16 %v2700, %v2699
        %v3028 = vpack.c.bf16 %v2702, %v2701
        %v3029 = vpack.c.bf16 %v2704, %v2703
        %v3030 = vpack.c.bf16 %v2706, %v2705
        %v3031 = vpack.c.bf16 %v2708, %v2707
        %v3032 = vpack.c.bf16 %v2710, %v2709
        %v3033 = vpack.c.bf16 %v2712, %v2711
        %v3034 = vpack.c.bf16 %v2714, %v2713
        %v3035 = vpack.c.bf16 %v2716, %v2715
        %v3036 = vpack.c.bf16 %v2718, %v2717
        %v3037 = vpack.c.bf16 %v2720, %v2719
        %v3038 = vpack.c.bf16 %v2722, %v2721
        %v3039 = vpack.c.bf16 %v2724, %v2723
        %v3040 = vpack.c.bf16 %v2726, %v2725
        %v3041 = vpack.c.bf16 %v2728, %v2727
        %v3042 = vpack.c.bf16 %v2730, %v2729
        %v3043 = vpack.c.bf16 %v2732, %v2731
        %v3044 = vpack.c.bf16 %v2734, %v2733
        %v3045 = vpack.c.bf16 %v2736, %v2735
        %v3046 = vpack.c.bf16 %v2738, %v2737
        %v3047 = vpack.c.bf16 %v2740, %v2739
        %v3048 = vpack.c.bf16 %v2742, %v2741
        %v3049 = vpack.c.bf16 %v2744, %v2743
        %v3050 = vpack.c.bf16 %v3000, %v3001
        %v3051 = vpack.c.bf16 %v2998, %v2999
        %v3052 = vpack.c.bf16 %v2996, %v2997
        %v3053 = vpack.c.bf16 %v2994, %v2995
        %v3054 = vpack.c.bf16 %v2992, %v2993
        %v3055 = vpack.c.bf16 %v2990, %v2991
        %v3056 = vpack.c.bf16 %v2988, %v2989
        %v3057 = vpack.c.bf16 %v2986, %v2987
        %v3058 = vpack.c.bf16 %v2984, %v2985
        %v3059 = vpack.c.bf16 %v2982, %v2983
        %v3060 = vpack.c.bf16 %v2980, %v2981
        %v3061 = vpack.c.bf16 %v2978, %v2979
        %v3062 = vpack.c.bf16 %v2976, %v2977
        %v3063 = vpack.c.bf16 %v2974, %v2975
        %v3064 = vpack.c.bf16 %v2972, %v2973
        %v3065 = vpack.c.bf16 %v2970, %v2971
        %v3066 = vpack.c.bf16 %v2968, %v2969
        %v3067 = vpack.c.bf16 %v2966, %v2967
        %v3068 = vpack.c.bf16 %v2964, %v2965
        %v3069 = vpack.c.bf16 %v2962, %v2963
        %v3070 = vpack.c.bf16 %v2960, %v2961
        %v3071 = vpack.c.bf16 %v2958, %v2959
        %v3072 = vpack.c.bf16 %v2956, %v2957
        %v3073 = vpack.c.bf16 %v2954, %v2955
        %v3074 = vpack.c.bf16 %v2830, %v2831
        %v3075 = vpack.c.bf16 %v2828, %v2829
        %v3076 = vpack.c.bf16 %v2826, %v2827
        %v3077 = vpack.c.bf16 %v2746, %v2745
        %v3078 = vpack.c.bf16 %v2748, %v2747
        %v3079 = vpack.c.bf16 %v2750, %v2749
        %v3080 = vpack.c.bf16 %v2952, %v2953
        %v3081 = vpack.c.bf16 %v2950, %v2951
        %v3082 = vpack.c.bf16 %v2948, %v2949
        %v3083 = vpack.c.bf16 %v2824, %v2825
        %v3084 = vpack.c.bf16 %v2822, %v2823
        %v3085 = vpack.c.bf16 %v2820, %v2821
        %v3086 = vpack.c.bf16 %v2752, %v2751
        %v3087 = vpack.c.bf16 %v2754, %v2753
        %v3088 = vpack.c.bf16 %v2756, %v2755
        %v3089 = vpack.c.bf16 %v2946, %v2947
        %v3090 = vpack.c.bf16 %v2944, %v2945
        %v3091 = vpack.c.bf16 %v2942, %v2943
        %s3092 = scalar_lea.vmem [#allocation3], 576
        %v3093 = vld [vmem:[%s3092] sm:$0xf]
        %v3094 = vld [vmem:[%s3092 + $0x4] sm:$0xf]
        %v3095 = vld [vmem:[%s3092 + $0x8] sm:$0xf]
        %v3096 = vld [vmem:[%s3092 + $0xc] sm:$0xf]
        %v3097 = vld [vmem:[%s3092 + $0x10] sm:$0xf]
        %v3098 = vld [vmem:[%s3092 + $0x14] sm:$0xf]
        %v3099 = vld [vmem:[%s3092 + $0x18] sm:$0xf]
        %v3100 = vld [vmem:[%s3092 + $0x1c] sm:$0xf]
        %v3101 = vld [vmem:[%s3092 + $0x20] sm:$0xf]
        %v3102 = vld [vmem:[%s3092 + $0x24] sm:$0xf]
        %v3103 = vld [vmem:[%s3092 + $0x28] sm:$0xf]
        %v3104 = vld [vmem:[%s3092 + $0x2c] sm:$0xf]
        %v3105 = vld [vmem:[%s3092 + $0x30] sm:$0xf]
        %v3106 = vld [vmem:[%s3092 + $0x34] sm:$0xf]
        %v3107 = vld [vmem:[%s3092 + $0x38] sm:$0xf]
        %v3108 = vld [vmem:[%s3092 + $0x3c] sm:$0xf]
        %v3109 = vld [vmem:[%s3092 + $0x40] sm:$0xf]
        %v3110 = vld [vmem:[%s3092 + $0x44] sm:$0xf]
        %v3111 = vld [vmem:[%s3092 + $0x48] sm:$0xf]
        %v3112 = vld [vmem:[%s3092 + $0x4c] sm:$0xf]
        %v3113 = vld [vmem:[%s3092 + $0x50] sm:$0xf]
        %v3114 = vld [vmem:[%s3092 + $0x54] sm:$0xf]
        %v3115 = vld [vmem:[%s3092 + $0x58] sm:$0xf]
        %v3116 = vld [vmem:[%s3092 + $0x5c] sm:$0xf]
        %v3117 = vld [vmem:[%s3092 + $0x60] sm:$0xf]
        %v3118 = vld [vmem:[%s3092 + $0x64] sm:$0xf]
        %v3119 = vld [vmem:[%s3092 + $0x68] sm:$0xf]
        %v3120 = vld [vmem:[%s3092 + $0x6c] sm:$0xf]
        %v3121 = vld [vmem:[%s3092 + $0x70] sm:$0xf]
        %v3122 = vld [vmem:[%s3092 + $0x74] sm:$0xf]
        %v3123 = vld [vmem:[%s3092 + $0x78] sm:$0xf]
        %v3124 = vld [vmem:[%s3092 + $0x7c] sm:$0xf]
        %v3125 = vld [vmem:[%s3092 + $0x80] sm:$0xf]
        %v3126 = vld [vmem:[%s3092 + $0x84] sm:$0xf]
        %v3127 = vld [vmem:[%s3092 + $0x88] sm:$0xf]
        %v3128 = vld [vmem:[%s3092 + $0x8c] sm:$0xf]
        %v3129 = vld [vmem:[%s3092 + $0x90] sm:$0xf]
        %v3130 = vld [vmem:[%s3092 + $0x94] sm:$0xf]
        %v3131 = vld [vmem:[%s3092 + $0x98] sm:$0xf]
        %v3132 = vld [vmem:[%s3092 + $0x9c] sm:$0xf]
        %v3133 = vld [vmem:[%s3092 + $0xa0] sm:$0xf]
        %v3134 = vld [vmem:[%s3092 + $0xa4] sm:$0xf]
        %v3135 = vld [vmem:[%s3092 + $0xa8] sm:$0xf]
        %v3136 = vld [vmem:[%s3092 + $0xac] sm:$0xf]
        %v3137 = vld [vmem:[%s3092 + $0xb0] sm:$0xf]
        %v3138 = vld [vmem:[%s3092 + $0xb4] sm:$0xf]
        %v3139 = vld [vmem:[%s3092 + $0xb8] sm:$0xf]
        %v3140 = vld [vmem:[%s3092 + $0xbc] sm:$0xf]
        %v3141 = vld [vmem:[%s3092 + $0xc0] sm:$0xf]
        %v3142 = vld [vmem:[%s3092 + $0xc4] sm:$0xf]
        %v3143 = vld [vmem:[%s3092 + $0xc8] sm:$0xf]
        %v3144 = vld [vmem:[%s3092 + $0xcc] sm:$0xf]
        %v3145 = vld [vmem:[%s3092 + $0xd0] sm:$0xf]
        %v3146 = vld [vmem:[%s3092 + $0xd4] sm:$0xf]
        %v3147 = vld [vmem:[%s3092 + $0xd8] sm:$0xf]
        %v3148 = vld [vmem:[%s3092 + $0xdc] sm:$0xf]
        %v3149 = vld [vmem:[%s3092 + $0xe0] sm:$0xf]
        %v3150 = vld [vmem:[%s3092 + $0xe4] sm:$0xf]
        %v3151 = vld [vmem:[%s3092 + $0xe8] sm:$0xf]
        %v3152 = vld [vmem:[%s3092 + $0xec] sm:$0xf]
        %v3153 = vld [vmem:[%s3092 + $0xf0] sm:$0xf]
        %v3154 = vld [vmem:[%s3092 + $0xf4] sm:$0xf]
        %v3155 = vld [vmem:[%s3092 + $0xf8] sm:$0xf]
        %v3156 = vld [vmem:[%s3092 + $0xfc] sm:$0xf]
        %v3157 = vld [vmem:[%s3092 + $0x100] sm:$0xf]
        %v3158 = vld [vmem:[%s3092 + $0x104] sm:$0xf]
        %v3159 = vld [vmem:[%s3092 + $0x108] sm:$0xf]
        %v3160 = vld [vmem:[%s3092 + $0x10c] sm:$0xf]
        %v3161 = vld [vmem:[%s3092 + $0x110] sm:$0xf]
        %v3162 = vld [vmem:[%s3092 + $0x114] sm:$0xf]
        %v3163 = vld [vmem:[%s3092 + $0x118] sm:$0xf]
        %v3164 = vld [vmem:[%s3092 + $0x11c] sm:$0xf]
        %v3165 = vld [vmem:[%s3092 + $0x120] sm:$0xf]
        %v3166 = vld [vmem:[%s3092 + $0x124] sm:$0xf]
        %v3167 = vld [vmem:[%s3092 + $0x128] sm:$0xf]
        %v3168 = vld [vmem:[%s3092 + $0x12c] sm:$0xf]
        %v3169 = vld [vmem:[%s3092 + $0x130] sm:$0xf]
        %v3170 = vld [vmem:[%s3092 + $0x134] sm:$0xf]
        %v3171 = vld [vmem:[%s3092 + $0x138] sm:$0xf]
        %v3172 = vld [vmem:[%s3092 + $0x13c] sm:$0xf]
        %v3173 = vld [vmem:[%s3092 + $0x140] sm:$0xf]
        %v3174 = vld [vmem:[%s3092 + $0x144] sm:$0xf]
        %v3175 = vld [vmem:[%s3092 + $0x148] sm:$0xf]
        %v3176 = vld [vmem:[%s3092 + $0x14c] sm:$0xf]
        %v3177 = vld [vmem:[%s3092 + $0x150] sm:$0xf]
        %v3178 = vld [vmem:[%s3092 + $0x154] sm:$0xf]
        %v3179 = vld [vmem:[%s3092 + $0x158] sm:$0xf]
        %v3180 = vld [vmem:[%s3092 + $0x15c] sm:$0xf]
        %v3181 = vld [vmem:[%s3092 + $0x160] sm:$0xf]
        %v3182 = vld [vmem:[%s3092 + $0x164] sm:$0xf]
        %v3183 = vld [vmem:[%s3092 + $0x168] sm:$0xf]
        %v3184 = vld [vmem:[%s3092 + $0x16c] sm:$0xf]
        %v3185 = vld [vmem:[%s3092 + $0x170] sm:$0xf]
        %v3186 = vld [vmem:[%s3092 + $0x174] sm:$0xf]
        %v3187 = vld [vmem:[%s3092 + $0x178] sm:$0xf]
        %v3188 = vld [vmem:[%s3092 + $0x17c] sm:$0xf]
        %v3189 = vld [vmem:[%s3092 + $0x180] sm:$0xf]
        %v3190 = vld [vmem:[%s3092 + $0x184] sm:$0xf]
        %v3191 = vld [vmem:[%s3092 + $0x188] sm:$0xf]
        %v3192 = vld [vmem:[%s3092 + $0x18c] sm:$0xf]
        %v3193 = vld [vmem:[%s3092 + $0x190] sm:$0xf]
        %v3194 = vld [vmem:[%s3092 + $0x194] sm:$0xf]
        %v3195 = vld [vmem:[%s3092 + $0x198] sm:$0xf]
        %v3196 = vld [vmem:[%s3092 + $0x19c] sm:$0xf]
        %v3197 = vld [vmem:[%s3092 + $0x1a0] sm:$0xf]
        %v3198 = vld [vmem:[%s3092 + $0x1a4] sm:$0xf]
        %v3199 = vld [vmem:[%s3092 + $0x1a8] sm:$0xf]
        %v3200 = vld [vmem:[%s3092 + $0x1ac] sm:$0xf]
        %v3201 = vld [vmem:[%s3092 + $0x1b0] sm:$0xf]
        %v3202 = vld [vmem:[%s3092 + $0x1b4] sm:$0xf]
        %v3203 = vld [vmem:[%s3092 + $0x1b8] sm:$0xf]
        %v3204 = vld [vmem:[%s3092 + $0x1bc] sm:$0xf]
        %v3205 = vld [vmem:[%s3092 + $0x1c0] sm:$0xf]
        %v3206 = vld [vmem:[%s3092 + $0x1c4] sm:$0xf]
        %v3207 = vld [vmem:[%s3092 + $0x1c8] sm:$0xf]
        %v3208 = vld [vmem:[%s3092 + $0x1cc] sm:$0xf]
        %v3209 = vld [vmem:[%s3092 + $0x1d0] sm:$0xf]
        %v3210 = vld [vmem:[%s3092 + $0x1d4] sm:$0xf]
        %v3211 = vld [vmem:[%s3092 + $0x1d8] sm:$0xf]
        %v3212 = vld [vmem:[%s3092 + $0x1dc] sm:$0xf]
        %v3213 = vld [vmem:[%s3092 + $0x1e0] sm:$0xf]
        %v3214 = vld [vmem:[%s3092 + $0x1e4] sm:$0xf]
        %v3215 = vld [vmem:[%s3092 + $0x1e8] sm:$0xf]
        %v3216 = vld [vmem:[%s3092 + $0x1ec] sm:$0xf]
        %v3217 = vld [vmem:[%s3092 + $0x1f0] sm:$0xf]
        %v3218 = vld [vmem:[%s3092 + $0x1f4] sm:$0xf]
        %v3219 = vld [vmem:[%s3092 + $0x1f8] sm:$0xf]
        %v3220 = vld [vmem:[%s3092 + $0x1fc] sm:$0xf]
        %v3221 = vld [vmem:[%s3092 + $0x200] sm:$0xf]
        %v3222 = vld [vmem:[%s3092 + $0x204] sm:$0xf]
        %v3223 = vld [vmem:[%s3092 + $0x208] sm:$0xf]
        %v3224 = vld [vmem:[%s3092 + $0x20c] sm:$0xf]
        %v3225 = vld [vmem:[%s3092 + $0x210] sm:$0xf]
        %v3226 = vld [vmem:[%s3092 + $0x214] sm:$0xf]
        %v3227 = vld [vmem:[%s3092 + $0x218] sm:$0xf]
        %v3228 = vld [vmem:[%s3092 + $0x21c] sm:$0xf]
        %v3229 = vld [vmem:[%s3092 + $0x220] sm:$0xf]
        %v3230 = vld [vmem:[%s3092 + $0x224] sm:$0xf]
        %v3231 = vld [vmem:[%s3092 + $0x228] sm:$0xf]
        %v3232 = vld [vmem:[%s3092 + $0x22c] sm:$0xf]
        %v3233 = vld [vmem:[%s3092 + $0x230] sm:$0xf]
        %v3234 = vld [vmem:[%s3092 + $0x234] sm:$0xf]
        %v3235 = vld [vmem:[%s3092 + $0x238] sm:$0xf]
        %v3236 = vld [vmem:[%s3092 + $0x23c] sm:$0xf]
        %s3237 = scalar_lea.vmem [#allocation6], 1
        %v3238 = vld [vmem:[%s3237] sm:$0x1]
        %v3240 = vlaneseq
        %v3241 = vshrl.u32 %v3240, 7
        %v3242 = vsub.s32 0, %v3241
        %v3243 = vrot.slane %v3238, %v3242
        %v3389 = vunpack.c.l.b16 %v3093
        %v3390 = vunpack.c.l.b16 %v3094
        %v3391 = vunpack.c.l.b16 %v3095
        %v3392 = vunpack.c.l.b16 %v3096
        %v3393 = vunpack.c.l.b16 %v3097
        %v3394 = vunpack.c.l.b16 %v3098
        %v3395 = vunpack.c.l.b16 %v3099
        %v3396 = vunpack.c.l.b16 %v3100
        %v3397 = vunpack.c.l.b16 %v3101
        %v3398 = vunpack.c.l.b16 %v3102
        %v3399 = vunpack.c.l.b16 %v3103
        %v3400 = vunpack.c.l.b16 %v3104
        %v3401 = vunpack.c.l.b16 %v3105
        %v3402 = vunpack.c.l.b16 %v3106
        %v3403 = vunpack.c.l.b16 %v3107
        %v3404 = vunpack.c.l.b16 %v3108
        %v3405 = vunpack.c.l.b16 %v3109
        %v3406 = vunpack.c.l.b16 %v3110
        %v3407 = vunpack.c.l.b16 %v3111
        %v3408 = vunpack.c.l.b16 %v3112
        %v3409 = vunpack.c.l.b16 %v3113
        %v3410 = vunpack.c.l.b16 %v3114
        %v3411 = vunpack.c.l.b16 %v3115
        %v3412 = vunpack.c.l.b16 %v3116
        %v3413 = vunpack.c.l.b16 %v3117
        %v3414 = vunpack.c.l.b16 %v3118
        %v3415 = vunpack.c.l.b16 %v3119
        %v3416 = vunpack.c.l.b16 %v3120
        %v3417 = vunpack.c.l.b16 %v3121
        %v3418 = vunpack.c.l.b16 %v3122
        %v3419 = vunpack.c.l.b16 %v3123
        %v3420 = vunpack.c.l.b16 %v3124
        %v3421 = vunpack.c.l.b16 %v3125
        %v3422 = vunpack.c.l.b16 %v3126
        %v3423 = vunpack.c.l.b16 %v3127
        %v3424 = vunpack.c.l.b16 %v3128
        %v3425 = vunpack.c.l.b16 %v3129
        %v3426 = vunpack.c.l.b16 %v3130
        %v3427 = vunpack.c.l.b16 %v3131
        %v3428 = vunpack.c.l.b16 %v3132
        %v3429 = vunpack.c.l.b16 %v3133
        %v3430 = vunpack.c.l.b16 %v3134
        %v3431 = vunpack.c.l.b16 %v3135
        %v3432 = vunpack.c.l.b16 %v3136
        %v3433 = vunpack.c.l.b16 %v3137
        %v3434 = vunpack.c.l.b16 %v3138
        %v3435 = vunpack.c.l.b16 %v3139
        %v3436 = vunpack.c.l.b16 %v3140
        %v3437 = vunpack.c.l.b16 %v3141
        %v3438 = vunpack.c.l.b16 %v3142
        %v3439 = vunpack.c.l.b16 %v3143
        %v3440 = vunpack.c.l.b16 %v3144
        %v3441 = vunpack.c.l.b16 %v3145
        %v3442 = vunpack.c.l.b16 %v3146
        %v3443 = vunpack.c.l.b16 %v3147
        %v3444 = vunpack.c.l.b16 %v3148
        %v3445 = vunpack.c.l.b16 %v3149
        %v3446 = vunpack.c.l.b16 %v3150
        %v3447 = vunpack.c.l.b16 %v3151
        %v3448 = vunpack.c.l.b16 %v3152
        %v3449 = vunpack.c.l.b16 %v3153
        %v3450 = vunpack.c.l.b16 %v3154
        %v3451 = vunpack.c.l.b16 %v3155
        %v3452 = vunpack.c.l.b16 %v3156
        %v3453 = vunpack.c.l.b16 %v3157
        %v3454 = vunpack.c.l.b16 %v3158
        %v3455 = vunpack.c.l.b16 %v3159
        %v3456 = vunpack.c.l.b16 %v3160
        %v3457 = vunpack.c.l.b16 %v3161
        %v3458 = vunpack.c.l.b16 %v3162
        %v3459 = vunpack.c.l.b16 %v3163
        %v3460 = vunpack.c.l.b16 %v3164
        %v3461 = vunpack.c.l.b16 %v3165
        %v3462 = vunpack.c.l.b16 %v3166
        %v3463 = vunpack.c.l.b16 %v3167
        %v3464 = vunpack.c.l.b16 %v3168
        %v3465 = vunpack.c.l.b16 %v3169
        %v3466 = vunpack.c.l.b16 %v3170
        %v3467 = vunpack.c.l.b16 %v3171
        %v3468 = vunpack.c.l.b16 %v3172
        %v3469 = vunpack.c.l.b16 %v3173
        %v3470 = vunpack.c.l.b16 %v3174
        %v3471 = vunpack.c.l.b16 %v3175
        %v3472 = vunpack.c.l.b16 %v3176
        %v3473 = vunpack.c.l.b16 %v3177
        %v3474 = vunpack.c.l.b16 %v3178
        %v3475 = vunpack.c.l.b16 %v3179
        %v3476 = vunpack.c.l.b16 %v3180
        %v3477 = vunpack.c.l.b16 %v3181
        %v3478 = vunpack.c.l.b16 %v3182
        %v3479 = vunpack.c.l.b16 %v3183
        %v3480 = vunpack.c.l.b16 %v3184
        %v3481 = vunpack.c.l.b16 %v3185
        %v3482 = vunpack.c.l.b16 %v3186
        %v3483 = vunpack.c.l.b16 %v3187
        %v3484 = vunpack.c.l.b16 %v3188
        %v3485 = vunpack.c.l.b16 %v3189
        %v3486 = vunpack.c.l.b16 %v3190
        %v3487 = vunpack.c.l.b16 %v3191
        %v3488 = vunpack.c.l.b16 %v3192
        %v3489 = vunpack.c.l.b16 %v3193
        %v3490 = vunpack.c.l.b16 %v3194
        %v3491 = vunpack.c.l.b16 %v3195
        %v3492 = vunpack.c.l.b16 %v3196
        %v3493 = vunpack.c.l.b16 %v3197
        %v3494 = vunpack.c.l.b16 %v3198
        %v3495 = vunpack.c.l.b16 %v3199
        %v3496 = vunpack.c.l.b16 %v3200
        %v3497 = vunpack.c.l.b16 %v3201
        %v3498 = vunpack.c.l.b16 %v3202
        %v3499 = vunpack.c.l.b16 %v3203
        %v3500 = vunpack.c.l.b16 %v3204
        %v3501 = vunpack.c.l.b16 %v3205
        %v3502 = vunpack.c.l.b16 %v3206
        %v3503 = vunpack.c.l.b16 %v3207
        %v3504 = vunpack.c.l.b16 %v3208
        %v3505 = vunpack.c.l.b16 %v3209
        %v3506 = vunpack.c.l.b16 %v3210
        %v3507 = vunpack.c.l.b16 %v3211
        %v3508 = vunpack.c.l.b16 %v3212
        %v3509 = vunpack.c.l.b16 %v3213
        %v3510 = vunpack.c.l.b16 %v3214
        %v3511 = vunpack.c.l.b16 %v3215
        %v3512 = vunpack.c.l.b16 %v3216
        %v3513 = vunpack.c.l.b16 %v3217
        %v3514 = vunpack.c.l.b16 %v3218
        %v3515 = vunpack.c.l.b16 %v3219
        %v3516 = vunpack.c.l.b16 %v3220
        %v3517 = vunpack.c.l.b16 %v3221
        %v3518 = vunpack.c.l.b16 %v3222
        %v3519 = vunpack.c.l.b16 %v3223
        %v3520 = vunpack.c.l.b16 %v3224
        %v3521 = vunpack.c.l.b16 %v3225
        %v3522 = vunpack.c.l.b16 %v3226
        %v3523 = vunpack.c.l.b16 %v3227
        %v3524 = vunpack.c.l.b16 %v3228
        %v3525 = vunpack.c.l.b16 %v3229
        %v3526 = vunpack.c.l.b16 %v3230
        %v3527 = vunpack.c.l.b16 %v3231
        %v3528 = vunpack.c.l.b16 %v3232
        %v3529 = vunpack.c.l.b16 %v3233
        %v3530 = vunpack.c.l.b16 %v3234
        %v3531 = vunpack.c.l.b16 %v3235
        %v3532 = vunpack.c.l.b16 %v3236
        %v3533 = vpack.c.b16 %v3390, %v3389
        %v3534 = vpack.c.b16 %v3392, %v3391
        %v3535 = vpack.c.b16 %v3394, %v3393
        %v3536 = vpack.c.b16 %v3396, %v3395
        %v3537 = vpack.c.b16 %v3398, %v3397
        %v3538 = vpack.c.b16 %v3400, %v3399
        %v3539 = vpack.c.b16 %v3402, %v3401
        %v3540 = vpack.c.b16 %v3404, %v3403
        %v3541 = vpack.c.b16 %v3406, %v3405
        %v3542 = vpack.c.b16 %v3408, %v3407
        %v3543 = vpack.c.b16 %v3410, %v3409
        %v3544 = vpack.c.b16 %v3412, %v3411
        %v3545 = vpack.c.b16 %v3414, %v3413
        %v3546 = vpack.c.b16 %v3416, %v3415
        %v3547 = vpack.c.b16 %v3418, %v3417
        %v3548 = vpack.c.b16 %v3420, %v3419
        %v3549 = vpack.c.b16 %v3422, %v3421
        %v3550 = vpack.c.b16 %v3424, %v3423
        %v3551 = vpack.c.b16 %v3426, %v3425
        %v3552 = vpack.c.b16 %v3428, %v3427
        %v3553 = vpack.c.b16 %v3430, %v3429
        %v3554 = vpack.c.b16 %v3432, %v3431
        %v3555 = vpack.c.b16 %v3434, %v3433
        %v3556 = vpack.c.b16 %v3436, %v3435
        %v3557 = vpack.c.b16 %v3438, %v3437
        %v3558 = vpack.c.b16 %v3440, %v3439
        %v3559 = vpack.c.b16 %v3442, %v3441
        %v3560 = vpack.c.b16 %v3444, %v3443
        %v3561 = vpack.c.b16 %v3446, %v3445
        %v3562 = vpack.c.b16 %v3448, %v3447
        %v3563 = vpack.c.b16 %v3450, %v3449
        %v3564 = vpack.c.b16 %v3452, %v3451
        %v3565 = vpack.c.b16 %v3454, %v3453
        %v3566 = vpack.c.b16 %v3456, %v3455
        %v3567 = vpack.c.b16 %v3458, %v3457
        %v3568 = vpack.c.b16 %v3460, %v3459
        %v3569 = vpack.c.b16 %v3462, %v3461
        %v3570 = vpack.c.b16 %v3464, %v3463
        %v3571 = vpack.c.b16 %v3466, %v3465
        %v3572 = vpack.c.b16 %v3468, %v3467
        %v3573 = vpack.c.b16 %v3470, %v3469
        %v3574 = vpack.c.b16 %v3472, %v3471
        %v3575 = vpack.c.b16 %v3474, %v3473
        %v3576 = vpack.c.b16 %v3476, %v3475
        %v3577 = vpack.c.b16 %v3478, %v3477
        %v3578 = vpack.c.b16 %v3480, %v3479
        %v3579 = vpack.c.b16 %v3482, %v3481
        %v3580 = vpack.c.b16 %v3484, %v3483
        %v3581 = vpack.c.b16 %v3486, %v3485
        %v3582 = vpack.c.b16 %v3488, %v3487
        %v3583 = vpack.c.b16 %v3490, %v3489
        %v3584 = vpack.c.b16 %v3492, %v3491
        %v3585 = vpack.c.b16 %v3494, %v3493
        %v3586 = vpack.c.b16 %v3496, %v3495
        %v3587 = vpack.c.b16 %v3498, %v3497
        %v3588 = vpack.c.b16 %v3500, %v3499
        %v3589 = vpack.c.b16 %v3502, %v3501
        %v3590 = vpack.c.b16 %v3504, %v3503
        %v3591 = vpack.c.b16 %v3506, %v3505
        %v3592 = vpack.c.b16 %v3508, %v3507
        %v3593 = vpack.c.b16 %v3510, %v3509
        %v3594 = vpack.c.b16 %v3512, %v3511
        %v3595 = vpack.c.b16 %v3514, %v3513
        %v3596 = vpack.c.b16 %v3516, %v3515
        %v3597 = vpack.c.b16 %v3518, %v3517
        %v3598 = vpack.c.b16 %v3520, %v3519
        %v3599 = vpack.c.b16 %v3522, %v3521
        %v3600 = vpack.c.b16 %v3524, %v3523
        %v3601 = vpack.c.b16 %v3526, %v3525
        %v3602 = vpack.c.b16 %v3528, %v3527
        %v3603 = vpack.c.b16 %v3530, %v3529
        %v3604 = vpack.c.b16 %v3532, %v3531
        %3677 = vmatprep.subr.bf16.mxu0 0
        %3678 = vmatpush1.bf16.msra.mxu0 %v3533
        %3679 = vmatprep.subr.bf16.mxu0 0
        %3680 = vmatpush1.bf16.msra.mxu0 %v3534
        %3681 = vmatprep.subr.bf16.mxu0 0
        %3682 = vmatpush1.bf16.msra.mxu0 %v3535
        %3683 = vmatprep.subr.bf16.mxu0 0
        %3684 = vmatpush1.bf16.msra.mxu0 %v3536
        %3685 = vmatprep.subr.bf16.mxu0 0
        %3686 = vmatpush1.bf16.msra.mxu0 %v3537
        %3687 = vmatprep.subr.bf16.mxu0 0
        %3688 = vmatpush1.bf16.msra.mxu0 %v3538
        %3689 = vmatprep.subr.bf16.mxu0 0
        %3690 = vmatpush1.bf16.msra.mxu0 %v3539
        %3691 = vmatprep.subr.bf16.mxu0 0
        %3692 = vmatpush1.bf16.msra.mxu0 %v3540
        %3693 = vmatprep.subr.bf16.mxu0 0
        %3694 = vmatpush1.bf16.msra.mxu0 %v3541
        %3695 = vmatprep.subr.bf16.mxu0 0
        %3696 = vmatpush1.bf16.msra.mxu0 %v3542
        %3697 = vmatprep.subr.bf16.mxu0 0
        %3698 = vmatpush1.bf16.msra.mxu0 %v3543
        %3699 = vmatprep.subr.bf16.mxu0 0
        %3700 = vmatpush1.bf16.msra.mxu0 %v3544
        %3701 = vmatprep.subr.bf16.mxu0 0
        %3702 = vmatpush1.bf16.msra.mxu0 %v3545
        %3703 = vmatprep.subr.bf16.mxu0 0
        %3704 = vmatpush1.bf16.msra.mxu0 %v3546
        %3705 = vmatprep.subr.bf16.mxu0 0
        %3706 = vmatpush1.bf16.msra.mxu0 %v3547
        %3707 = vmatprep.subr.bf16.mxu0 0
        %3708 = vmatpush1.bf16.msra.mxu0 %v3548
        %3709 = vmatprep.mubr.bf16.mxu0 %v3026
        %3710 = vmatmul.mubr.bf16.gmra.mrb[0].mxu0 %v3002
        %v3711 = vpop.f32.mrb[0].mxu0
        %v3712 = vadd.f32 %v3243, %v3711
        %v3713 = vpop.f32.mrb[0].mxu0
        %v3714 = vpop.f32.mrb[0].mxu0
        %v3715 = vadd.f32 %v3243, %v3714
        %v3716 = vpop.f32.mrb[0].mxu0
        %3717 = vmatprep.mubr.bf16.mxu0 %v3027
        %3718 = vmatmul.mubr.bf16.gmra.mrb[0].mxu0 %v3003
        %v3719 = vpop.f32.mrb[0].mxu0
        %v3720 = vadd.f32 %v3243, %v3719
        %v3721 = vpop.f32.mrb[0].mxu0
        %v3722 = vpop.f32.mrb[0].mxu0
        %v3723 = vadd.f32 %v3243, %v3722
        %v3724 = vpop.f32.mrb[0].mxu0
        %3725 = vmatprep.mubr.bf16.mxu0 %v3028
        %3726 = vmatmul.mubr.bf16.gmra.mrb[0].mxu0 %v3004
        %v3727 = vpop.f32.mrb[0].mxu0
        %v3728 = vadd.f32 %v3243, %v3727
        %v3729 = vpop.f32.mrb[0].mxu0
        %v3730 = vpop.f32.mrb[0].mxu0
        %v3731 = vadd.f32 %v3243, %v3730
        %v3732 = vpop.f32.mrb[0].mxu0
        %3733 = vmatprep.mubr.bf16.mxu0 %v3029
        %3734 = vmatmul.mubr.bf16.gmra.mrb[0].mxu0 %v3005
        %v3735 = vpop.f32.mrb[0].mxu0
        %v3736 = vadd.f32 %v3243, %v3735
        %v3737 = vpop.f32.mrb[0].mxu0
        %v3738 = vpop.f32.mrb[0].mxu0
        %v3739 = vadd.f32 %v3243, %v3738
        %v3740 = vpop.f32.mrb[0].mxu0
        %3741 = vmatprep.mubr.bf16.mxu0 %v3030
        %3742 = vmatmul.mubr.bf16.gmra.mrb[0].mxu0 %v3006
        %v3743 = vpop.f32.mrb[0].mxu0
        %v3744 = vadd.f32 %v3243, %v3743
        %v3745 = vpop.f32.mrb[0].mxu0
        %v3746 = vpop.f32.mrb[0].mxu0
        %v3747 = vadd.f32 %v3243, %v3746
        %v3748 = vpop.f32.mrb[0].mxu0
        %3749 = vmatprep.mubr.bf16.mxu0 %v3031
        %3750 = vmatmul.mubr.bf16.gmra.mrb[0].mxu0 %v3007
        %v3751 = vpop.f32.mrb[0].mxu0
        %v3752 = vadd.f32 %v3243, %v3751
        %v3753 = vpop.f32.mrb[0].mxu0
        %v3754 = vpop.f32.mrb[0].mxu0
        %v3755 = vadd.f32 %v3243, %v3754
        %v3756 = vpop.f32.mrb[0].mxu0
        %3757 = vmatprep.mubr.bf16.mxu0 %v3032
        %3758 = vmatmul.mubr.bf16.gmra.mrb[0].mxu0 %v3008
        %v3759 = vpop.f32.mrb[0].mxu0
        %v3760 = vadd.f32 %v3243, %v3759
        %v3761 = vpop.f32.mrb[0].mxu0
        %v3762 = vpop.f32.mrb[0].mxu0
        %v3763 = vadd.f32 %v3243, %v3762
        %v3764 = vpop.f32.mrb[0].mxu0
        %3765 = vmatprep.mubr.bf16.mxu0 %v3033
        %3766 = vmatmul.mubr.bf16.gmra.mrb[0].mxu0 %v3009
        %v3767 = vpop.f32.mrb[0].mxu0
        %v3768 = vadd.f32 %v3243, %v3767
        %v3769 = vpop.f32.mrb[0].mxu0
        %v3770 = vpop.f32.mrb[0].mxu0
        %v3771 = vadd.f32 %v3243, %v3770
        %v3772 = vpop.f32.mrb[0].mxu0
        %3773 = vmatprep.mubr.bf16.mxu0 %v3034
        %3774 = vmatmul.mubr.bf16.gmra.mrb[0].mxu0 %v3010
        %v3775 = vpop.f32.mrb[0].mxu0
        %v3776 = vadd.f32 %v3243, %v3775
        %v3777 = vpop.f32.mrb[0].mxu0
        %v3778 = vpop.f32.mrb[0].mxu0
        %v3779 = vadd.f32 %v3243, %v3778
        %v3780 = vpop.f32.mrb[0].mxu0
        %3781 = vmatprep.mubr.bf16.mxu0 %v3035
        %3782 = vmatmul.mubr.bf16.gmra.mrb[0].mxu0 %v3011
        %v3783 = vpop.f32.mrb[0].mxu0
        %v3784 = vadd.f32 %v3243, %v3783
        %v3785 = vpop.f32.mrb[0].mxu0
        %v3786 = vpop.f32.mrb[0].mxu0
        %v3787 = vadd.f32 %v3243, %v3786
        %v3788 = vpop.f32.mrb[0].mxu0
        %3789 = vmatprep.mubr.bf16.mxu0 %v3036
        %3790 = vmatmul.mubr.bf16.gmra.mrb[0].mxu0 %v3012
        %v3791 = vpop.f32.mrb[0].mxu0
        %v3792 = vadd.f32 %v3243, %v3791
        %v3793 = vpop.f32.mrb[0].mxu0
        %v3794 = vpop.f32.mrb[0].mxu0
        %v3795 = vadd.f32 %v3243, %v3794
        %v3796 = vpop.f32.mrb[0].mxu0
        %3797 = vmatprep.mubr.bf16.mxu0 %v3037
        %3798 = vmatmul.mubr.bf16.gmra.mrb[0].mxu0 %v3013
        %v3799 = vpop.f32.mrb[0].mxu0
        %v3800 = vadd.f32 %v3243, %v3799
        %v3801 = vpop.f32.mrb[0].mxu0
        %v3802 = vpop.f32.mrb[0].mxu0
        %v3803 = vadd.f32 %v3243, %v3802
        %v3804 = vpop.f32.mrb[0].mxu0
        %3805 = vmatprep.mubr.bf16.mxu0 %v3038
        %3806 = vmatmul.mubr.bf16.gmra.mrb[0].mxu0 %v3014
        %v3807 = vpop.f32.mrb[0].mxu0
        %v3808 = vadd.f32 %v3243, %v3807
        %v3809 = vpop.f32.mrb[0].mxu0
        %v3810 = vpop.f32.mrb[0].mxu0
        %v3811 = vadd.f32 %v3243, %v3810
        %v3812 = vpop.f32.mrb[0].mxu0
        %3813 = vmatprep.mubr.bf16.mxu0 %v3039
        %3814 = vmatmul.mubr.bf16.gmra.mrb[0].mxu0 %v3015
        %v3815 = vpop.f32.mrb[0].mxu0
        %v3816 = vadd.f32 %v3243, %v3815
        %v3817 = vpop.f32.mrb[0].mxu0
        %v3818 = vpop.f32.mrb[0].mxu0
        %v3819 = vadd.f32 %v3243, %v3818
        %v3820 = vpop.f32.mrb[0].mxu0
        %3821 = vmatprep.mubr.bf16.mxu0 %v3040
        %3822 = vmatmul.mubr.bf16.gmra.mrb[0].mxu0 %v3016
        %v3823 = vpop.f32.mrb[0].mxu0
        %v3824 = vadd.f32 %v3243, %v3823
        %v3825 = vpop.f32.mrb[0].mxu0
        %v3826 = vpop.f32.mrb[0].mxu0
        %v3827 = vadd.f32 %v3243, %v3826
        %v3828 = vpop.f32.mrb[0].mxu0
        %3829 = vmatprep.mubr.bf16.mxu0 %v3041
        %3830 = vmatmul.mubr.bf16.gmra.mrb[0].mxu0 %v3017
        %v3831 = vpop.f32.mrb[0].mxu0
        %v3832 = vadd.f32 %v3243, %v3831
        %v3833 = vpop.f32.mrb[0].mxu0
        %v3834 = vpop.f32.mrb[0].mxu0
        %v3835 = vadd.f32 %v3243, %v3834
        %v3836 = vpop.f32.mrb[0].mxu0
        %3837 = vmatprep.mubr.bf16.mxu0 %v3042
        %3838 = vmatmul.mubr.bf16.gmra.mrb[0].mxu0 %v3018
        %v3839 = vpop.f32.mrb[0].mxu0
        %v3840 = vadd.f32 %v3243, %v3839
        %v3841 = vpop.f32.mrb[0].mxu0
        %v3842 = vpop.f32.mrb[0].mxu0
        %v3843 = vadd.f32 %v3243, %v3842
        %v3844 = vpop.f32.mrb[0].mxu0
        %3845 = vmatprep.mubr.bf16.mxu0 %v3043
        %3846 = vmatmul.mubr.bf16.gmra.mrb[0].mxu0 %v3019
        %v3847 = vpop.f32.mrb[0].mxu0
        %v3848 = vadd.f32 %v3243, %v3847
        %v3849 = vpop.f32.mrb[0].mxu0
        %v3850 = vpop.f32.mrb[0].mxu0
        %v3851 = vadd.f32 %v3243, %v3850
        %v3852 = vpop.f32.mrb[0].mxu0
        %3853 = vmatprep.mubr.bf16.mxu0 %v3044
        %3854 = vmatmul.mubr.bf16.gmra.mrb[0].mxu0 %v3020
        %v3855 = vpop.f32.mrb[0].mxu0
        %v3856 = vadd.f32 %v3243, %v3855
        %v3857 = vpop.f32.mrb[0].mxu0
        %v3858 = vpop.f32.mrb[0].mxu0
        %v3859 = vadd.f32 %v3243, %v3858
        %v3860 = vpop.f32.mrb[0].mxu0
        %3861 = vmatprep.mubr.bf16.mxu0 %v3045
        %3862 = vmatmul.mubr.bf16.gmra.mrb[0].mxu0 %v3021
        %v3863 = vpop.f32.mrb[0].mxu0
        %v3864 = vadd.f32 %v3243, %v3863
        %v3865 = vpop.f32.mrb[0].mxu0
        %v3866 = vpop.f32.mrb[0].mxu0
        %v3867 = vadd.f32 %v3243, %v3866
        %v3868 = vpop.f32.mrb[0].mxu0
        %3869 = vmatprep.mubr.bf16.mxu0 %v3046
        %3870 = vmatmul.mubr.bf16.gmra.mrb[0].mxu0 %v3022
        %v3871 = vpop.f32.mrb[0].mxu0
        %v3872 = vadd.f32 %v3243, %v3871
        %v3873 = vpop.f32.mrb[0].mxu0
        %v3874 = vpop.f32.mrb[0].mxu0
        %v3875 = vadd.f32 %v3243, %v3874
        %v3876 = vpop.f32.mrb[0].mxu0
        %3877 = vmatprep.mubr.bf16.mxu0 %v3047
        %3878 = vmatmul.mubr.bf16.gmra.mrb[0].mxu0 %v3023
        %v3879 = vpop.f32.mrb[0].mxu0
        %v3880 = vadd.f32 %v3243, %v3879
        %v3881 = vpop.f32.mrb[0].mxu0
        %v3882 = vpop.f32.mrb[0].mxu0
        %v3883 = vadd.f32 %v3243, %v3882
        %v3884 = vpop.f32.mrb[0].mxu0
        %3885 = vmatprep.mubr.bf16.mxu0 %v3048
        %3886 = vmatmul.mubr.bf16.gmra.mrb[0].mxu0 %v3024
        %v3887 = vpop.f32.mrb[0].mxu0
        %v3888 = vadd.f32 %v3243, %v3887
        %v3889 = vpop.f32.mrb[0].mxu0
        %v3890 = vpop.f32.mrb[0].mxu0
        %v3891 = vadd.f32 %v3243, %v3890
        %v3892 = vpop.f32.mrb[0].mxu0
        %3893 = vmatprep.mubr.bf16.mxu0 %v3049
        %3894 = vmatmul.mubr.bf16.gmra.mrb[0].mxu0 %v3025
        %v3895 = vpop.f32.mrb[0].mxu0
        %v3896 = vadd.f32 %v3243, %v3895
        %v3897 = vpop.f32.mrb[0].mxu0
        %v3898 = vpop.f32.mrb[0].mxu0
        %v3899 = vadd.f32 %v3243, %v3898
        %v3900 = vpop.f32.mrb[0].mxu0
        %3901 = vdwg.mxu0
        %3902 = vmatprep.subr.bf16.mxu0 0
        %3903 = vmatpush1.bf16.msra.mxu0 %v3549
        %3904 = vmatprep.subr.bf16.mxu0 0
        %3905 = vmatpush1.bf16.msra.mxu0 %v3550
        %3906 = vmatprep.subr.bf16.mxu0 0
        %3907 = vmatpush1.bf16.msra.mxu0 %v3551
        %3908 = vmatprep.subr.bf16.mxu0 0
        %3909 = vmatpush1.bf16.msra.mxu0 %v3552
        %3910 = vmatprep.subr.bf16.mxu0 0
        %3911 = vmatpush1.bf16.msra.mxu0 %v3553
        %3912 = vmatprep.subr.bf16.mxu0 0
        %3913 = vmatpush1.bf16.msra.mxu0 %v3554
        %3914 = vmatprep.subr.bf16.mxu0 0
        %3915 = vmatpush1.bf16.msra.mxu0 %v3555
        %3916 = vmatprep.subr.bf16.mxu0 0
        %3917 = vmatpush1.bf16.msra.mxu0 %v3556
        %3918 = vmatprep.subr.bf16.mxu0 0
        %3919 = vmatpush1.bf16.msra.mxu0 %v3557
        %3920 = vmatprep.subr.bf16.mxu0 0
        %3921 = vmatpush1.bf16.msra.mxu0 %v3558
        %3922 = vmatprep.subr.bf16.mxu0 0
        %3923 = vmatpush1.bf16.msra.mxu0 %v3559
        %3924 = vmatprep.subr.bf16.mxu0 0
        %3925 = vmatpush1.bf16.msra.mxu0 %v3560
        %3926 = vmatprep.subr.bf16.mxu0 0
        %3927 = vmatpush1.bf16.msra.mxu0 %v3561
        %3928 = vmatprep.subr.bf16.mxu0 0
        %3929 = vmatpush1.bf16.msra.mxu0 %v3562
        %3930 = vmatprep.subr.bf16.mxu0 0
        %3931 = vmatpush1.bf16.msra.mxu0 %v3563
        %3932 = vmatprep.subr.bf16.mxu0 0
        %3933 = vmatpush1.bf16.msra.mxu0 %v3564
        %3934 = vmatprep.mubr.bf16.mxu0 %v3005
        %3935 = vmatmul.mubr.bf16.gmra.mrb[0].mxu0 %v3050
        %v3936 = vpop.f32.mrb[0].mxu0
        %v3937 = vadd.f32 %v3712, %v3936
        %v3938 = vpop.f32.mrb[0].mxu0
        %v3939 = vpop.f32.mrb[0].mxu0
        %v3940 = vadd.f32 %v3715, %v3939
        %v3941 = vpop.f32.mrb[0].mxu0
        %3942 = vmatprep.mubr.bf16.mxu0 %v3006
        %3943 = vmatmul.mubr.bf16.gmra.mrb[0].mxu0 %v3051
        %v3944 = vpop.f32.mrb[0].mxu0
        %v3945 = vadd.f32 %v3720, %v3944
        %v3946 = vpop.f32.mrb[0].mxu0
        %v3947 = vpop.f32.mrb[0].mxu0
        %v3948 = vadd.f32 %v3723, %v3947
        %v3949 = vpop.f32.mrb[0].mxu0
        %3950 = vmatprep.mubr.bf16.mxu0 %v3007
        %3951 = vmatmul.mubr.bf16.gmra.mrb[0].mxu0 %v3052
        %v3952 = vpop.f32.mrb[0].mxu0
        %v3953 = vadd.f32 %v3728, %v3952
        %v3954 = vpop.f32.mrb[0].mxu0
        %v3955 = vpop.f32.mrb[0].mxu0
        %v3956 = vadd.f32 %v3731, %v3955
        %v3957 = vpop.f32.mrb[0].mxu0
        %3958 = vmatprep.mubr.bf16.mxu0 %v3008
        %3959 = vmatmul.mubr.bf16.gmra.mrb[0].mxu0 %v3053
        %v3960 = vpop.f32.mrb[0].mxu0
        %v3961 = vadd.f32 %v3736, %v3960
        %v3962 = vpop.f32.mrb[0].mxu0
        %v3963 = vpop.f32.mrb[0].mxu0
        %v3964 = vadd.f32 %v3739, %v3963
        %v3965 = vpop.f32.mrb[0].mxu0
        %3966 = vmatprep.mubr.bf16.mxu0 %v3009
        %3967 = vmatmul.mubr.bf16.gmra.mrb[0].mxu0 %v3054
        %v3968 = vpop.f32.mrb[0].mxu0
        %v3969 = vadd.f32 %v3744, %v3968
        %v3970 = vpop.f32.mrb[0].mxu0
        %v3971 = vpop.f32.mrb[0].mxu0
        %v3972 = vadd.f32 %v3747, %v3971
        %v3973 = vpop.f32.mrb[0].mxu0
        %3974 = vmatprep.mubr.bf16.mxu0 %v3010
        %3975 = vmatmul.mubr.bf16.gmra.mrb[0].mxu0 %v3055
        %v3976 = vpop.f32.mrb[0].mxu0
        %v3977 = vadd.f32 %v3752, %v3976
        %v3978 = vpop.f32.mrb[0].mxu0
        %v3979 = vpop.f32.mrb[0].mxu0
        %v3980 = vadd.f32 %v3755, %v3979
        %v3981 = vpop.f32.mrb[0].mxu0
        %3982 = vmatprep.mubr.bf16.mxu0 %v3011
        %3983 = vmatmul.mubr.bf16.gmra.mrb[0].mxu0 %v3056
        %v3984 = vpop.f32.mrb[0].mxu0
        %v3985 = vadd.f32 %v3760, %v3984
        %v3986 = vpop.f32.mrb[0].mxu0
        %v3987 = vpop.f32.mrb[0].mxu0
        %v3988 = vadd.f32 %v3763, %v3987
        %v3989 = vpop.f32.mrb[0].mxu0
        %3990 = vmatprep.mubr.bf16.mxu0 %v3012
        %3991 = vmatmul.mubr.bf16.gmra.mrb[0].mxu0 %v3057
        %v3992 = vpop.f32.mrb[0].mxu0
        %v3993 = vadd.f32 %v3768, %v3992
        %v3994 = vpop.f32.mrb[0].mxu0
        %v3995 = vpop.f32.mrb[0].mxu0
        %v3996 = vadd.f32 %v3771, %v3995
        %v3997 = vpop.f32.mrb[0].mxu0
        %3998 = vmatprep.mubr.bf16.mxu0 %v3013
        %3999 = vmatmul.mubr.bf16.gmra.mrb[0].mxu0 %v3058
        %v4000 = vpop.f32.mrb[0].mxu0
        %v4001 = vadd.f32 %v3776, %v4000
        %v4002 = vpop.f32.mrb[0].mxu0
        %v4003 = vpop.f32.mrb[0].mxu0
        %v4004 = vadd.f32 %v3779, %v4003
        %v4005 = vpop.f32.mrb[0].mxu0
        %4006 = vmatprep.mubr.bf16.mxu0 %v3014
        %4007 = vmatmul.mubr.bf16.gmra.mrb[0].mxu0 %v3059
        %v4008 = vpop.f32.mrb[0].mxu0
        %v4009 = vadd.f32 %v3784, %v4008
        %v4010 = vpop.f32.mrb[0].mxu0
        %v4011 = vpop.f32.mrb[0].mxu0
        %v4012 = vadd.f32 %v3787, %v4011
        %v4013 = vpop.f32.mrb[0].mxu0
        %4014 = vmatprep.mubr.bf16.mxu0 %v3015
        %4015 = vmatmul.mubr.bf16.gmra.mrb[0].mxu0 %v3060
        %v4016 = vpop.f32.mrb[0].mxu0
        %v4017 = vadd.f32 %v3792, %v4016
        %v4018 = vpop.f32.mrb[0].mxu0
        %v4019 = vpop.f32.mrb[0].mxu0
        %v4020 = vadd.f32 %v3795, %v4019
        %v4021 = vpop.f32.mrb[0].mxu0
        %4022 = vmatprep.mubr.bf16.mxu0 %v3016
        %4023 = vmatmul.mubr.bf16.gmra.mrb[0].mxu0 %v3061
        %v4024 = vpop.f32.mrb[0].mxu0
        %v4025 = vadd.f32 %v3800, %v4024
        %v4026 = vpop.f32.mrb[0].mxu0
        %v4027 = vpop.f32.mrb[0].mxu0
        %v4028 = vadd.f32 %v3803, %v4027
        %v4029 = vpop.f32.mrb[0].mxu0
        %4030 = vmatprep.mubr.bf16.mxu0 %v3017
        %4031 = vmatmul.mubr.bf16.gmra.mrb[0].mxu0 %v3062
        %v4032 = vpop.f32.mrb[0].mxu0
        %v4033 = vadd.f32 %v3808, %v4032
        %v4034 = vpop.f32.mrb[0].mxu0
        %v4035 = vpop.f32.mrb[0].mxu0
        %v4036 = vadd.f32 %v3811, %v4035
        %v4037 = vpop.f32.mrb[0].mxu0
        %4038 = vmatprep.mubr.bf16.mxu0 %v3018
        %4039 = vmatmul.mubr.bf16.gmra.mrb[0].mxu0 %v3063
        %v4040 = vpop.f32.mrb[0].mxu0
        %v4041 = vadd.f32 %v3816, %v4040
        %v4042 = vpop.f32.mrb[0].mxu0
        %v4043 = vpop.f32.mrb[0].mxu0
        %v4044 = vadd.f32 %v3819, %v4043
        %v4045 = vpop.f32.mrb[0].mxu0
        %4046 = vmatprep.mubr.bf16.mxu0 %v3019
        %4047 = vmatmul.mubr.bf16.gmra.mrb[0].mxu0 %v3064
        %v4048 = vpop.f32.mrb[0].mxu0
        %v4049 = vadd.f32 %v3824, %v4048
        %v4050 = vpop.f32.mrb[0].mxu0
        %v4051 = vpop.f32.mrb[0].mxu0
        %v4052 = vadd.f32 %v3827, %v4051
        %v4053 = vpop.f32.mrb[0].mxu0
        %4054 = vmatprep.mubr.bf16.mxu0 %v3020
        %4055 = vmatmul.mubr.bf16.gmra.mrb[0].mxu0 %v3065
        %v4056 = vpop.f32.mrb[0].mxu0
        %v4057 = vadd.f32 %v3832, %v4056
        %v4058 = vpop.f32.mrb[0].mxu0
        %v4059 = vpop.f32.mrb[0].mxu0
        %v4060 = vadd.f32 %v3835, %v4059
        %v4061 = vpop.f32.mrb[0].mxu0
        %4062 = vmatprep.mubr.bf16.mxu0 %v3021
        %4063 = vmatmul.mubr.bf16.gmra.mrb[0].mxu0 %v3066
        %v4064 = vpop.f32.mrb[0].mxu0
        %v4065 = vadd.f32 %v3840, %v4064
        %v4066 = vpop.f32.mrb[0].mxu0
        %v4067 = vpop.f32.mrb[0].mxu0
        %v4068 = vadd.f32 %v3843, %v4067
        %v4069 = vpop.f32.mrb[0].mxu0
        %4070 = vmatprep.mubr.bf16.mxu0 %v3022
        %4071 = vmatmul.mubr.bf16.gmra.mrb[0].mxu0 %v3067
        %v4072 = vpop.f32.mrb[0].mxu0
        %v4073 = vadd.f32 %v3848, %v4072
        %v4074 = vpop.f32.mrb[0].mxu0
        %v4075 = vpop.f32.mrb[0].mxu0
        %v4076 = vadd.f32 %v3851, %v4075
        %v4077 = vpop.f32.mrb[0].mxu0
        %4078 = vmatprep.mubr.bf16.mxu0 %v3023
        %4079 = vmatmul.mubr.bf16.gmra.mrb[0].mxu0 %v3068
        %v4080 = vpop.f32.mrb[0].mxu0
        %v4081 = vadd.f32 %v3856, %v4080
        %v4082 = vpop.f32.mrb[0].mxu0
        %v4083 = vpop.f32.mrb[0].mxu0
        %v4084 = vadd.f32 %v3859, %v4083
        %v4085 = vpop.f32.mrb[0].mxu0
        %4086 = vmatprep.mubr.bf16.mxu0 %v3024
        %4087 = vmatmul.mubr.bf16.gmra.mrb[0].mxu0 %v3069
        %v4088 = vpop.f32.mrb[0].mxu0
        %v4089 = vadd.f32 %v3864, %v4088
        %v4090 = vpop.f32.mrb[0].mxu0
        %v4091 = vpop.f32.mrb[0].mxu0
        %v4092 = vadd.f32 %v3867, %v4091
        %v4093 = vpop.f32.mrb[0].mxu0
        %4094 = vmatprep.mubr.bf16.mxu0 %v3025
        %4095 = vmatmul.mubr.bf16.gmra.mrb[0].mxu0 %v3070
        %v4096 = vpop.f32.mrb[0].mxu0
        %v4097 = vadd.f32 %v3872, %v4096
        %v4098 = vpop.f32.mrb[0].mxu0
        %v4099 = vpop.f32.mrb[0].mxu0
        %v4100 = vadd.f32 %v3875, %v4099
        %v4101 = vpop.f32.mrb[0].mxu0
        %4102 = vmatprep.mubr.bf16.mxu0 %v3074
        %4103 = vmatmul.mubr.bf16.gmra.mrb[0].mxu0 %v3071
        %v4104 = vpop.f32.mrb[0].mxu0
        %v4105 = vadd.f32 %v3880, %v4104
        %v4106 = vpop.f32.mrb[0].mxu0
        %v4107 = vpop.f32.mrb[0].mxu0
        %v4108 = vadd.f32 %v3883, %v4107
        %v4109 = vpop.f32.mrb[0].mxu0
        %4110 = vmatprep.mubr.bf16.mxu0 %v3075
        %4111 = vmatmul.mubr.bf16.gmra.mrb[0].mxu0 %v3072
        %v4112 = vpop.f32.mrb[0].mxu0
        %v4113 = vadd.f32 %v3888, %v4112
        %v4114 = vpop.f32.mrb[0].mxu0
        %v4115 = vpop.f32.mrb[0].mxu0
        %v4116 = vadd.f32 %v3891, %v4115
        %v4117 = vpop.f32.mrb[0].mxu0
        %4118 = vmatprep.mubr.bf16.mxu0 %v3076
        %4119 = vmatmul.mubr.bf16.gmra.mrb[0].mxu0 %v3073
        %v4120 = vpop.f32.mrb[0].mxu0
        %v4121 = vadd.f32 %v3896, %v4120
        %v4122 = vpop.f32.mrb[0].mxu0
        %v4123 = vpop.f32.mrb[0].mxu0
        %v4124 = vadd.f32 %v3899, %v4123
        %v4125 = vpop.f32.mrb[0].mxu0
        %4126 = vdwg.mxu0
        %4127 = vmatprep.subr.bf16.mxu0 0
        %4128 = vmatpush1.bf16.msra.mxu0 %v3565
        %4129 = vmatprep.subr.bf16.mxu0 0
        %4130 = vmatpush1.bf16.msra.mxu0 %v3566
        %4131 = vmatprep.subr.bf16.mxu0 0
        %4132 = vmatpush1.bf16.msra.mxu0 %v3567
        %4133 = vmatprep.subr.bf16.mxu0 0
        %4134 = vmatpush1.bf16.msra.mxu0 %v3568
        %4135 = vmatprep.subr.bf16.mxu0 0
        %4136 = vmatpush1.bf16.msra.mxu0 %v3569
        %4137 = vmatprep.subr.bf16.mxu0 0
        %4138 = vmatpush1.bf16.msra.mxu0 %v3570
        %4139 = vmatprep.subr.bf16.mxu0 0
        %4140 = vmatpush1.bf16.msra.mxu0 %v3571
        %4141 = vmatprep.subr.bf16.mxu0 0
        %4142 = vmatpush1.bf16.msra.mxu0 %v3572
        %4143 = vmatprep.subr.bf16.mxu0 0
        %4144 = vmatpush1.bf16.msra.mxu0 %v3573
        %4145 = vmatprep.subr.bf16.mxu0 0
        %4146 = vmatpush1.bf16.msra.mxu0 %v3574
        %4147 = vmatprep.subr.bf16.mxu0 0
        %4148 = vmatpush1.bf16.msra.mxu0 %v3575
        %4149 = vmatprep.subr.bf16.mxu0 0
        %4150 = vmatpush1.bf16.msra.mxu0 %v3576
        %4151 = vmatprep.subr.bf16.mxu0 0
        %4152 = vmatpush1.bf16.msra.mxu0 %v3577
        %4153 = vmatprep.subr.bf16.mxu0 0
        %4154 = vmatpush1.bf16.msra.mxu0 %v3578
        %4155 = vmatprep.subr.bf16.mxu0 0
        %4156 = vmatpush1.bf16.msra.mxu0 %v3579
        %4157 = vmatprep.subr.bf16.mxu0 0
        %4158 = vmatpush1.bf16.msra.mxu0 %v3580
        %4159 = vmatprep.mubr.bf16.mxu0 %v3053
        %4160 = vmatmul.mubr.bf16.gmra.mrb[0].mxu0 %v3029
        %v4161 = vpop.f32.mrb[0].mxu0
        %v4162 = vadd.f32 %v3937, %v4161
        %v4163 = vpop.f32.mrb[0].mxu0
        %v4164 = vpop.f32.mrb[0].mxu0
        %v4165 = vadd.f32 %v3940, %v4164
        %v4166 = vpop.f32.mrb[0].mxu0
        %4167 = vmatprep.mubr.bf16.mxu0 %v3054
        %4168 = vmatmul.mubr.bf16.gmra.mrb[0].mxu0 %v3030
        %v4169 = vpop.f32.mrb[0].mxu0
        %v4170 = vadd.f32 %v3945, %v4169
        %v4171 = vpop.f32.mrb[0].mxu0
        %v4172 = vpop.f32.mrb[0].mxu0
        %v4173 = vadd.f32 %v3948, %v4172
        %v4174 = vpop.f32.mrb[0].mxu0
        %4175 = vmatprep.mubr.bf16.mxu0 %v3055
        %4176 = vmatmul.mubr.bf16.gmra.mrb[0].mxu0 %v3031
        %v4177 = vpop.f32.mrb[0].mxu0
        %v4178 = vadd.f32 %v3953, %v4177
        %v4179 = vpop.f32.mrb[0].mxu0
        %v4180 = vpop.f32.mrb[0].mxu0
        %v4181 = vadd.f32 %v3956, %v4180
        %v4182 = vpop.f32.mrb[0].mxu0
        %4183 = vmatprep.mubr.bf16.mxu0 %v3056
        %4184 = vmatmul.mubr.bf16.gmra.mrb[0].mxu0 %v3032
        %v4185 = vpop.f32.mrb[0].mxu0
        %v4186 = vadd.f32 %v3961, %v4185
        %v4187 = vpop.f32.mrb[0].mxu0
        %v4188 = vpop.f32.mrb[0].mxu0
        %v4189 = vadd.f32 %v3964, %v4188
        %v4190 = vpop.f32.mrb[0].mxu0
        %4191 = vmatprep.mubr.bf16.mxu0 %v3057
        %4192 = vmatmul.mubr.bf16.gmra.mrb[0].mxu0 %v3033
        %v4193 = vpop.f32.mrb[0].mxu0
        %v4194 = vadd.f32 %v3969, %v4193
        %v4195 = vpop.f32.mrb[0].mxu0
        %v4196 = vpop.f32.mrb[0].mxu0
        %v4197 = vadd.f32 %v3972, %v4196
        %v4198 = vpop.f32.mrb[0].mxu0
        %4199 = vmatprep.mubr.bf16.mxu0 %v3058
        %4200 = vmatmul.mubr.bf16.gmra.mrb[0].mxu0 %v3034
        %v4201 = vpop.f32.mrb[0].mxu0
        %v4202 = vadd.f32 %v3977, %v4201
        %v4203 = vpop.f32.mrb[0].mxu0
        %v4204 = vpop.f32.mrb[0].mxu0
        %v4205 = vadd.f32 %v3980, %v4204
        %v4206 = vpop.f32.mrb[0].mxu0
        %4207 = vmatprep.mubr.bf16.mxu0 %v3059
        %4208 = vmatmul.mubr.bf16.gmra.mrb[0].mxu0 %v3035
        %v4209 = vpop.f32.mrb[0].mxu0
        %v4210 = vadd.f32 %v3985, %v4209
        %v4211 = vpop.f32.mrb[0].mxu0
        %v4212 = vpop.f32.mrb[0].mxu0
        %v4213 = vadd.f32 %v3988, %v4212
        %v4214 = vpop.f32.mrb[0].mxu0
        %4215 = vmatprep.mubr.bf16.mxu0 %v3060
        %4216 = vmatmul.mubr.bf16.gmra.mrb[0].mxu0 %v3036
        %v4217 = vpop.f32.mrb[0].mxu0
        %v4218 = vadd.f32 %v3993, %v4217
        %v4219 = vpop.f32.mrb[0].mxu0
        %v4220 = vpop.f32.mrb[0].mxu0
        %v4221 = vadd.f32 %v3996, %v4220
        %v4222 = vpop.f32.mrb[0].mxu0
        %4223 = vmatprep.mubr.bf16.mxu0 %v3061
        %4224 = vmatmul.mubr.bf16.gmra.mrb[0].mxu0 %v3037
        %v4225 = vpop.f32.mrb[0].mxu0
        %v4226 = vadd.f32 %v4001, %v4225
        %v4227 = vpop.f32.mrb[0].mxu0
        %v4228 = vpop.f32.mrb[0].mxu0
        %v4229 = vadd.f32 %v4004, %v4228
        %v4230 = vpop.f32.mrb[0].mxu0
        %4231 = vmatprep.mubr.bf16.mxu0 %v3062
        %4232 = vmatmul.mubr.bf16.gmra.mrb[0].mxu0 %v3038
        %v4233 = vpop.f32.mrb[0].mxu0
        %v4234 = vadd.f32 %v4009, %v4233
        %v4235 = vpop.f32.mrb[0].mxu0
        %v4236 = vpop.f32.mrb[0].mxu0
        %v4237 = vadd.f32 %v4012, %v4236
        %v4238 = vpop.f32.mrb[0].mxu0
        %4239 = vmatprep.mubr.bf16.mxu0 %v3063
        %4240 = vmatmul.mubr.bf16.gmra.mrb[0].mxu0 %v3039
        %v4241 = vpop.f32.mrb[0].mxu0
        %v4242 = vadd.f32 %v4017, %v4241
        %v4243 = vpop.f32.mrb[0].mxu0
        %v4244 = vpop.f32.mrb[0].mxu0
        %v4245 = vadd.f32 %v4020, %v4244
        %v4246 = vpop.f32.mrb[0].mxu0
        %4247 = vmatprep.mubr.bf16.mxu0 %v3064
        %4248 = vmatmul.mubr.bf16.gmra.mrb[0].mxu0 %v3040
        %v4249 = vpop.f32.mrb[0].mxu0
        %v4250 = vadd.f32 %v4025, %v4249
        %v4251 = vpop.f32.mrb[0].mxu0
        %v4252 = vpop.f32.mrb[0].mxu0
        %v4253 = vadd.f32 %v4028, %v4252
        %v4254 = vpop.f32.mrb[0].mxu0
        %4255 = vmatprep.mubr.bf16.mxu0 %v3065
        %4256 = vmatmul.mubr.bf16.gmra.mrb[0].mxu0 %v3041
        %v4257 = vpop.f32.mrb[0].mxu0
        %v4258 = vadd.f32 %v4033, %v4257
        %v4259 = vpop.f32.mrb[0].mxu0
        %v4260 = vpop.f32.mrb[0].mxu0
        %v4261 = vadd.f32 %v4036, %v4260
        %v4262 = vpop.f32.mrb[0].mxu0
        %4263 = vmatprep.mubr.bf16.mxu0 %v3066
        %4264 = vmatmul.mubr.bf16.gmra.mrb[0].mxu0 %v3042
        %v4265 = vpop.f32.mrb[0].mxu0
        %v4266 = vadd.f32 %v4041, %v4265
        %v4267 = vpop.f32.mrb[0].mxu0
        %v4268 = vpop.f32.mrb[0].mxu0
        %v4269 = vadd.f32 %v4044, %v4268
        %v4270 = vpop.f32.mrb[0].mxu0
        %4271 = vmatprep.mubr.bf16.mxu0 %v3067
        %4272 = vmatmul.mubr.bf16.gmra.mrb[0].mxu0 %v3043
        %v4273 = vpop.f32.mrb[0].mxu0
        %v4274 = vadd.f32 %v4049, %v4273
        %v4275 = vpop.f32.mrb[0].mxu0
        %v4276 = vpop.f32.mrb[0].mxu0
        %v4277 = vadd.f32 %v4052, %v4276
        %v4278 = vpop.f32.mrb[0].mxu0
        %4279 = vmatprep.mubr.bf16.mxu0 %v3068
        %4280 = vmatmul.mubr.bf16.gmra.mrb[0].mxu0 %v3044
        %v4281 = vpop.f32.mrb[0].mxu0
        %v4282 = vadd.f32 %v4057, %v4281
        %v4283 = vpop.f32.mrb[0].mxu0
        %v4284 = vpop.f32.mrb[0].mxu0
        %v4285 = vadd.f32 %v4060, %v4284
        %v4286 = vpop.f32.mrb[0].mxu0
        %4287 = vmatprep.mubr.bf16.mxu0 %v3069
        %4288 = vmatmul.mubr.bf16.gmra.mrb[0].mxu0 %v3045
        %v4289 = vpop.f32.mrb[0].mxu0
        %v4290 = vadd.f32 %v4065, %v4289
        %v4291 = vpop.f32.mrb[0].mxu0
        %v4292 = vpop.f32.mrb[0].mxu0
        %v4293 = vadd.f32 %v4068, %v4292
        %v4294 = vpop.f32.mrb[0].mxu0
        %4295 = vmatprep.mubr.bf16.mxu0 %v3070
        %4296 = vmatmul.mubr.bf16.gmra.mrb[0].mxu0 %v3046
        %v4297 = vpop.f32.mrb[0].mxu0
        %v4298 = vadd.f32 %v4073, %v4297
        %v4299 = vpop.f32.mrb[0].mxu0
        %v4300 = vpop.f32.mrb[0].mxu0
        %v4301 = vadd.f32 %v4076, %v4300
        %v4302 = vpop.f32.mrb[0].mxu0
        %4303 = vmatprep.mubr.bf16.mxu0 %v3071
        %4304 = vmatmul.mubr.bf16.gmra.mrb[0].mxu0 %v3047
        %v4305 = vpop.f32.mrb[0].mxu0
        %v4306 = vadd.f32 %v4081, %v4305
        %v4307 = vpop.f32.mrb[0].mxu0
        %v4308 = vpop.f32.mrb[0].mxu0
        %v4309 = vadd.f32 %v4084, %v4308
        %v4310 = vpop.f32.mrb[0].mxu0
        %4311 = vmatprep.mubr.bf16.mxu0 %v3072
        %4312 = vmatmul.mubr.bf16.gmra.mrb[0].mxu0 %v3048
        %v4313 = vpop.f32.mrb[0].mxu0
        %v4314 = vadd.f32 %v4089, %v4313
        %v4315 = vpop.f32.mrb[0].mxu0
        %v4316 = vpop.f32.mrb[0].mxu0
        %v4317 = vadd.f32 %v4092, %v4316
        %v4318 = vpop.f32.mrb[0].mxu0
        %4319 = vmatprep.mubr.bf16.mxu0 %v3073
        %4320 = vmatmul.mubr.bf16.gmra.mrb[0].mxu0 %v3049
        %v4321 = vpop.f32.mrb[0].mxu0
        %v4322 = vadd.f32 %v4097, %v4321
        %v4323 = vpop.f32.mrb[0].mxu0
        %v4324 = vpop.f32.mrb[0].mxu0
        %v4325 = vadd.f32 %v4100, %v4324
        %v4326 = vpop.f32.mrb[0].mxu0
        %4327 = vmatprep.mubr.bf16.mxu0 %v3080
        %4328 = vmatmul.mubr.bf16.gmra.mrb[0].mxu0 %v3077
        %v4329 = vpop.f32.mrb[0].mxu0
        %v4330 = vadd.f32 %v4105, %v4329
        %v4331 = vpop.f32.mrb[0].mxu0
        %v4332 = vpop.f32.mrb[0].mxu0
        %v4333 = vadd.f32 %v4108, %v4332
        %v4334 = vpop.f32.mrb[0].mxu0
        %4335 = vmatprep.mubr.bf16.mxu0 %v3081
        %4336 = vmatmul.mubr.bf16.gmra.mrb[0].mxu0 %v3078
        %v4337 = vpop.f32.mrb[0].mxu0
        %v4338 = vadd.f32 %v4113, %v4337
        %v4339 = vpop.f32.mrb[0].mxu0
        %v4340 = vpop.f32.mrb[0].mxu0
        %v4341 = vadd.f32 %v4116, %v4340
        %v4342 = vpop.f32.mrb[0].mxu0
        %4343 = vmatprep.mubr.bf16.mxu0 %v3082
        %4344 = vmatmul.mubr.bf16.gmra.mrb[0].mxu0 %v3079
        %v4345 = vpop.f32.mrb[0].mxu0
        %v4346 = vadd.f32 %v4121, %v4345
        %v4347 = vpop.f32.mrb[0].mxu0
        %v4348 = vpop.f32.mrb[0].mxu0
        %v4349 = vadd.f32 %v4124, %v4348
        %v4350 = vpop.f32.mrb[0].mxu0
        %4351 = vdwg.mxu0
        %4352 = vmatprep.subr.bf16.mxu0 0
        %4353 = vmatpush1.bf16.msra.mxu0 %v3581
        %4354 = vmatprep.subr.bf16.mxu0 0
        %4355 = vmatpush1.bf16.msra.mxu0 %v3582
        %4356 = vmatprep.subr.bf16.mxu0 0
        %4357 = vmatpush1.bf16.msra.mxu0 %v3583
        %4358 = vmatprep.subr.bf16.mxu0 0
        %4359 = vmatpush1.bf16.msra.mxu0 %v3584
        %4360 = vmatprep.subr.bf16.mxu0 0
        %4361 = vmatpush1.bf16.msra.mxu0 %v3585
        %4362 = vmatprep.subr.bf16.mxu0 0
        %4363 = vmatpush1.bf16.msra.mxu0 %v3586
        %4364 = vmatprep.subr.bf16.mxu0 0
        %4365 = vmatpush1.bf16.msra.mxu0 %v3587
        %4366 = vmatprep.subr.bf16.mxu0 0
        %4367 = vmatpush1.bf16.msra.mxu0 %v3588
        %4368 = vmatprep.subr.bf16.mxu0 0
        %4369 = vmatpush1.bf16.msra.mxu0 %v3589
        %4370 = vmatprep.subr.bf16.mxu0 0
        %4371 = vmatpush1.bf16.msra.mxu0 %v3590
        %4372 = vmatprep.subr.bf16.mxu0 0
        %4373 = vmatpush1.bf16.msra.mxu0 %v3591
        %4374 = vmatprep.subr.bf16.mxu0 0
        %4375 = vmatpush1.bf16.msra.mxu0 %v3592
        %4376 = vmatprep.subr.bf16.mxu0 0
        %4377 = vmatpush1.bf16.msra.mxu0 %v3593
        %4378 = vmatprep.subr.bf16.mxu0 0
        %4379 = vmatpush1.bf16.msra.mxu0 %v3594
        %4380 = vmatprep.subr.bf16.mxu0 0
        %4381 = vmatpush1.bf16.msra.mxu0 %v3595
        %4382 = vmatprep.subr.bf16.mxu0 0
        %4383 = vmatpush1.bf16.msra.mxu0 %v3596
        %4384 = vmatprep.mubr.bf16.mxu0 %v3032
        %4385 = vmatmul.mubr.bf16.gmra.mrb[0].mxu0 %v3008
        %v4386 = vpop.f32.mrb[0].mxu0
        %v4387 = vadd.f32 %v4162, %v4386
        %v4388 = vpop.f32.mrb[0].mxu0
        %v4389 = vpop.f32.mrb[0].mxu0
        %v4390 = vadd.f32 %v4165, %v4389
        %v4391 = vpop.f32.mrb[0].mxu0
        %4392 = vmatprep.mubr.bf16.mxu0 %v3033
        %4393 = vmatmul.mubr.bf16.gmra.mrb[0].mxu0 %v3009
        %v4394 = vpop.f32.mrb[0].mxu0
        %v4395 = vadd.f32 %v4170, %v4394
        %v4396 = vpop.f32.mrb[0].mxu0
        %v4397 = vpop.f32.mrb[0].mxu0
        %v4398 = vadd.f32 %v4173, %v4397
        %v4399 = vpop.f32.mrb[0].mxu0
        %4400 = vmatprep.mubr.bf16.mxu0 %v3034
        %4401 = vmatmul.mubr.bf16.gmra.mrb[0].mxu0 %v3010
        %v4402 = vpop.f32.mrb[0].mxu0
        %v4403 = vadd.f32 %v4178, %v4402
        %v4404 = vpop.f32.mrb[0].mxu0
        %v4405 = vpop.f32.mrb[0].mxu0
        %v4406 = vadd.f32 %v4181, %v4405
        %v4407 = vpop.f32.mrb[0].mxu0
        %4408 = vmatprep.mubr.bf16.mxu0 %v3035
        %4409 = vmatmul.mubr.bf16.gmra.mrb[0].mxu0 %v3011
        %v4410 = vpop.f32.mrb[0].mxu0
        %v4411 = vadd.f32 %v4186, %v4410
        %v4412 = vpop.f32.mrb[0].mxu0
        %v4413 = vpop.f32.mrb[0].mxu0
        %v4414 = vadd.f32 %v4189, %v4413
        %v4415 = vpop.f32.mrb[0].mxu0
        %4416 = vmatprep.mubr.bf16.mxu0 %v3036
        %4417 = vmatmul.mubr.bf16.gmra.mrb[0].mxu0 %v3012
        %v4418 = vpop.f32.mrb[0].mxu0
        %v4419 = vadd.f32 %v4194, %v4418
        %v4420 = vpop.f32.mrb[0].mxu0
        %v4421 = vpop.f32.mrb[0].mxu0
        %v4422 = vadd.f32 %v4197, %v4421
        %v4423 = vpop.f32.mrb[0].mxu0
        %4424 = vmatprep.mubr.bf16.mxu0 %v3037
        %4425 = vmatmul.mubr.bf16.gmra.mrb[0].mxu0 %v3013
        %v4426 = vpop.f32.mrb[0].mxu0
        %v4427 = vadd.f32 %v4202, %v4426
        %v4428 = vpop.f32.mrb[0].mxu0
        %v4429 = vpop.f32.mrb[0].mxu0
        %v4430 = vadd.f32 %v4205, %v4429
        %v4431 = vpop.f32.mrb[0].mxu0
        %4432 = vmatprep.mubr.bf16.mxu0 %v3038
        %4433 = vmatmul.mubr.bf16.gmra.mrb[0].mxu0 %v3014
        %v4434 = vpop.f32.mrb[0].mxu0
        %v4435 = vadd.f32 %v4210, %v4434
        %v4436 = vpop.f32.mrb[0].mxu0
        %v4437 = vpop.f32.mrb[0].mxu0
        %v4438 = vadd.f32 %v4213, %v4437
        %v4439 = vpop.f32.mrb[0].mxu0
        %4440 = vmatprep.mubr.bf16.mxu0 %v3039
        %4441 = vmatmul.mubr.bf16.gmra.mrb[0].mxu0 %v3015
        %v4442 = vpop.f32.mrb[0].mxu0
        %v4443 = vadd.f32 %v4218, %v4442
        %v4444 = vpop.f32.mrb[0].mxu0
        %v4445 = vpop.f32.mrb[0].mxu0
        %v4446 = vadd.f32 %v4221, %v4445
        %v4447 = vpop.f32.mrb[0].mxu0
        %4448 = vmatprep.mubr.bf16.mxu0 %v3040
        %4449 = vmatmul.mubr.bf16.gmra.mrb[0].mxu0 %v3016
        %v4450 = vpop.f32.mrb[0].mxu0
        %v4451 = vadd.f32 %v4226, %v4450
        %v4452 = vpop.f32.mrb[0].mxu0
        %v4453 = vpop.f32.mrb[0].mxu0
        %v4454 = vadd.f32 %v4229, %v4453
        %v4455 = vpop.f32.mrb[0].mxu0
        %4456 = vmatprep.mubr.bf16.mxu0 %v3041
        %4457 = vmatmul.mubr.bf16.gmra.mrb[0].mxu0 %v3017
        %v4458 = vpop.f32.mrb[0].mxu0
        %v4459 = vadd.f32 %v4234, %v4458
        %v4460 = vpop.f32.mrb[0].mxu0
        %v4461 = vpop.f32.mrb[0].mxu0
        %v4462 = vadd.f32 %v4237, %v4461
        %v4463 = vpop.f32.mrb[0].mxu0
        %4464 = vmatprep.mubr.bf16.mxu0 %v3042
        %4465 = vmatmul.mubr.bf16.gmra.mrb[0].mxu0 %v3018
        %v4466 = vpop.f32.mrb[0].mxu0
        %v4467 = vadd.f32 %v4242, %v4466
        %v4468 = vpop.f32.mrb[0].mxu0
        %v4469 = vpop.f32.mrb[0].mxu0
        %v4470 = vadd.f32 %v4245, %v4469
        %v4471 = vpop.f32.mrb[0].mxu0
        %4472 = vmatprep.mubr.bf16.mxu0 %v3043
        %4473 = vmatmul.mubr.bf16.gmra.mrb[0].mxu0 %v3019
        %v4474 = vpop.f32.mrb[0].mxu0
        %v4475 = vadd.f32 %v4250, %v4474
        %v4476 = vpop.f32.mrb[0].mxu0
        %v4477 = vpop.f32.mrb[0].mxu0
        %v4478 = vadd.f32 %v4253, %v4477
        %v4479 = vpop.f32.mrb[0].mxu0
        %4480 = vmatprep.mubr.bf16.mxu0 %v3044
        %4481 = vmatmul.mubr.bf16.gmra.mrb[0].mxu0 %v3020
        %v4482 = vpop.f32.mrb[0].mxu0
        %v4483 = vadd.f32 %v4258, %v4482
        %v4484 = vpop.f32.mrb[0].mxu0
        %v4485 = vpop.f32.mrb[0].mxu0
        %v4486 = vadd.f32 %v4261, %v4485
        %v4487 = vpop.f32.mrb[0].mxu0
        %4488 = vmatprep.mubr.bf16.mxu0 %v3045
        %4489 = vmatmul.mubr.bf16.gmra.mrb[0].mxu0 %v3021
        %v4490 = vpop.f32.mrb[0].mxu0
        %v4491 = vadd.f32 %v4266, %v4490
        %v4492 = vpop.f32.mrb[0].mxu0
        %v4493 = vpop.f32.mrb[0].mxu0
        %v4494 = vadd.f32 %v4269, %v4493
        %v4495 = vpop.f32.mrb[0].mxu0
        %4496 = vmatprep.mubr.bf16.mxu0 %v3046
        %4497 = vmatmul.mubr.bf16.gmra.mrb[0].mxu0 %v3022
        %v4498 = vpop.f32.mrb[0].mxu0
        %v4499 = vadd.f32 %v4274, %v4498
        %v4500 = vpop.f32.mrb[0].mxu0
        %v4501 = vpop.f32.mrb[0].mxu0
        %v4502 = vadd.f32 %v4277, %v4501
        %v4503 = vpop.f32.mrb[0].mxu0
        %4504 = vmatprep.mubr.bf16.mxu0 %v3047
        %4505 = vmatmul.mubr.bf16.gmra.mrb[0].mxu0 %v3023
        %v4506 = vpop.f32.mrb[0].mxu0
        %v4507 = vadd.f32 %v4282, %v4506
        %v4508 = vpop.f32.mrb[0].mxu0
        %v4509 = vpop.f32.mrb[0].mxu0
        %v4510 = vadd.f32 %v4285, %v4509
        %v4511 = vpop.f32.mrb[0].mxu0
        %4512 = vmatprep.mubr.bf16.mxu0 %v3048
        %4513 = vmatmul.mubr.bf16.gmra.mrb[0].mxu0 %v3024
        %v4514 = vpop.f32.mrb[0].mxu0
        %v4515 = vadd.f32 %v4290, %v4514
        %v4516 = vpop.f32.mrb[0].mxu0
        %v4517 = vpop.f32.mrb[0].mxu0
        %v4518 = vadd.f32 %v4293, %v4517
        %v4519 = vpop.f32.mrb[0].mxu0
        %4520 = vmatprep.mubr.bf16.mxu0 %v3049
        %4521 = vmatmul.mubr.bf16.gmra.mrb[0].mxu0 %v3025
        %v4522 = vpop.f32.mrb[0].mxu0
        %v4523 = vadd.f32 %v4298, %v4522
        %v4524 = vpop.f32.mrb[0].mxu0
        %v4525 = vpop.f32.mrb[0].mxu0
        %v4526 = vadd.f32 %v4301, %v4525
        %v4527 = vpop.f32.mrb[0].mxu0
        %4528 = vmatprep.mubr.bf16.mxu0 %v3077
        %4529 = vmatmul.mubr.bf16.gmra.mrb[0].mxu0 %v3074
        %v4530 = vpop.f32.mrb[0].mxu0
        %v4531 = vadd.f32 %v4306, %v4530
        %v4532 = vpop.f32.mrb[0].mxu0
        %v4533 = vpop.f32.mrb[0].mxu0
        %v4534 = vadd.f32 %v4309, %v4533
        %v4535 = vpop.f32.mrb[0].mxu0
        %4536 = vmatprep.mubr.bf16.mxu0 %v3078
        %4537 = vmatmul.mubr.bf16.gmra.mrb[0].mxu0 %v3075
        %v4538 = vpop.f32.mrb[0].mxu0
        %v4539 = vadd.f32 %v4314, %v4538
        %v4540 = vpop.f32.mrb[0].mxu0
        %v4541 = vpop.f32.mrb[0].mxu0
        %v4542 = vadd.f32 %v4317, %v4541
        %v4543 = vpop.f32.mrb[0].mxu0
        %4544 = vmatprep.mubr.bf16.mxu0 %v3079
        %4545 = vmatmul.mubr.bf16.gmra.mrb[0].mxu0 %v3076
        %v4546 = vpop.f32.mrb[0].mxu0
        %v4547 = vadd.f32 %v4322, %v4546
        %v4548 = vpop.f32.mrb[0].mxu0
        %v4549 = vpop.f32.mrb[0].mxu0
        %v4550 = vadd.f32 %v4325, %v4549
        %v4551 = vpop.f32.mrb[0].mxu0
        %4552 = vmatprep.mubr.bf16.mxu0 %v3086
        %4553 = vmatmul.mubr.bf16.gmra.mrb[0].mxu0 %v3083
        %v4554 = vpop.f32.mrb[0].mxu0
        %v4555 = vadd.f32 %v4330, %v4554
        %v4556 = vpop.f32.mrb[0].mxu0
        %v4557 = vpop.f32.mrb[0].mxu0
        %v4558 = vadd.f32 %v4333, %v4557
        %v4559 = vpop.f32.mrb[0].mxu0
        %4560 = vmatprep.mubr.bf16.mxu0 %v3087
        %4561 = vmatmul.mubr.bf16.gmra.mrb[0].mxu0 %v3084
        %v4562 = vpop.f32.mrb[0].mxu0
        %v4563 = vadd.f32 %v4338, %v4562
        %v4564 = vpop.f32.mrb[0].mxu0
        %v4565 = vpop.f32.mrb[0].mxu0
        %v4566 = vadd.f32 %v4341, %v4565
        %v4567 = vpop.f32.mrb[0].mxu0
        %4568 = vmatprep.mubr.bf16.mxu0 %v3088
        %4569 = vmatmul.mubr.bf16.gmra.mrb[0].mxu0 %v3085
        %v4570 = vpop.f32.mrb[0].mxu0
        %v4571 = vadd.f32 %v4346, %v4570
        %v4572 = vpop.f32.mrb[0].mxu0
        %v4573 = vpop.f32.mrb[0].mxu0
        %v4574 = vadd.f32 %v4349, %v4573
        %v4575 = vpop.f32.mrb[0].mxu0
        %4576 = vdwg.mxu0
        %4577 = vmatprep.subr.bf16.mxu0 0
        %4578 = vmatpush1.bf16.msra.mxu0 %v3597
        %4579 = vmatprep.subr.bf16.mxu0 0
        %4580 = vmatpush1.bf16.msra.mxu0 %v3598
        %4581 = vmatprep.subr.bf16.mxu0 0
        %4582 = vmatpush1.bf16.msra.mxu0 %v3599
        %4583 = vmatprep.subr.bf16.mxu0 0
        %4584 = vmatpush1.bf16.msra.mxu0 %v3600
        %4585 = vmatprep.subr.bf16.mxu0 0
        %4586 = vmatpush1.bf16.msra.mxu0 %v3601
        %4587 = vmatprep.subr.bf16.mxu0 0
        %4588 = vmatpush1.bf16.msra.mxu0 %v3602
        %4589 = vmatprep.subr.bf16.mxu0 0
        %4590 = vmatpush1.bf16.msra.mxu0 %v3603
        %4591 = vmatprep.subr.bf16.mxu0 0
        %4592 = vmatpush1.bf16.msra.mxu0 %v3604
        %4593 = vmatprep.subr.bf16.mxu0 0
        %4594 = vmatpush1.bf16.msra.mxu0 0
        %4595 = vmatprep.subr.bf16.mxu0 0
        %4596 = vmatpush1.bf16.msra.mxu0 0
        %4597 = vmatprep.subr.bf16.mxu0 0
        %4598 = vmatpush1.bf16.msra.mxu0 0
        %4599 = vmatprep.subr.bf16.mxu0 0
        %4600 = vmatpush1.bf16.msra.mxu0 0
        %4601 = vmatprep.subr.bf16.mxu0 0
        %4602 = vmatpush1.bf16.msra.mxu0 0
        %4603 = vmatprep.subr.bf16.mxu0 0
        %4604 = vmatpush1.bf16.msra.mxu0 0
        %4605 = vmatprep.subr.bf16.mxu0 0
        %4606 = vmatpush1.bf16.msra.mxu0 0
        %4607 = vmatprep.subr.bf16.mxu0 0
        %4608 = vmatpush1.bf16.msra.mxu0 0
        %4609 = vmatprep.mubr.bf16.mxu0 0
        %4610 = vmatmul.mubr.bf16.gmra.mrb[0].mxu0 %v3056
        %v4611 = vpop.f32.mrb[0].mxu0
        %v4612 = vadd.f32 %v4387, %v4611
        %v4613 = vpop.f32.mrb[0].mxu0
        %v4614 = vpop.f32.mrb[0].mxu0
        %v4615 = vadd.f32 %v4390, %v4614
        %v4616 = vpop.f32.mrb[0].mxu0
        %4617 = vmatprep.mubr.bf16.mxu0 0
        %4618 = vmatmul.mubr.bf16.gmra.mrb[0].mxu0 %v3057
        %v4619 = vpop.f32.mrb[0].mxu0
        %v4620 = vadd.f32 %v4395, %v4619
        %v4621 = vpop.f32.mrb[0].mxu0
        %v4622 = vpop.f32.mrb[0].mxu0
        %v4623 = vadd.f32 %v4398, %v4622
        %v4624 = vpop.f32.mrb[0].mxu0
        %4625 = vmatprep.mubr.bf16.mxu0 0
        %4626 = vmatmul.mubr.bf16.gmra.mrb[0].mxu0 %v3058
        %v4627 = vpop.f32.mrb[0].mxu0
        %v4628 = vadd.f32 %v4403, %v4627
        %v4629 = vpop.f32.mrb[0].mxu0
        %v4630 = vpop.f32.mrb[0].mxu0
        %v4631 = vadd.f32 %v4406, %v4630
        %v4632 = vpop.f32.mrb[0].mxu0
        %4633 = vmatprep.mubr.bf16.mxu0 0
        %4634 = vmatmul.mubr.bf16.gmra.mrb[0].mxu0 %v3059
        %v4635 = vpop.f32.mrb[0].mxu0
        %v4636 = vadd.f32 %v4411, %v4635
        %v4637 = vpop.f32.mrb[0].mxu0
        %v4638 = vpop.f32.mrb[0].mxu0
        %v4639 = vadd.f32 %v4414, %v4638
        %v4640 = vpop.f32.mrb[0].mxu0
        %4641 = vmatprep.mubr.bf16.mxu0 0
        %4642 = vmatmul.mubr.bf16.gmra.mrb[0].mxu0 %v3060
        %v4643 = vpop.f32.mrb[0].mxu0
        %v4644 = vadd.f32 %v4419, %v4643
        %v4645 = vpop.f32.mrb[0].mxu0
        %v4646 = vpop.f32.mrb[0].mxu0
        %v4647 = vadd.f32 %v4422, %v4646
        %v4648 = vpop.f32.mrb[0].mxu0
        %4649 = vmatprep.mubr.bf16.mxu0 0
        %4650 = vmatmul.mubr.bf16.gmra.mrb[0].mxu0 %v3061
        %v4651 = vpop.f32.mrb[0].mxu0
        %v4652 = vadd.f32 %v4427, %v4651
        %v4653 = vpop.f32.mrb[0].mxu0
        %v4654 = vpop.f32.mrb[0].mxu0
        %v4655 = vadd.f32 %v4430, %v4654
        %v4656 = vpop.f32.mrb[0].mxu0
        %4657 = vmatprep.mubr.bf16.mxu0 0
        %4658 = vmatmul.mubr.bf16.gmra.mrb[0].mxu0 %v3062
        %v4659 = vpop.f32.mrb[0].mxu0
        %v4660 = vadd.f32 %v4435, %v4659
        %v4661 = vpop.f32.mrb[0].mxu0
        %v4662 = vpop.f32.mrb[0].mxu0
        %v4663 = vadd.f32 %v4438, %v4662
        %v4664 = vpop.f32.mrb[0].mxu0
        %4665 = vmatprep.mubr.bf16.mxu0 0
        %4666 = vmatmul.mubr.bf16.gmra.mrb[0].mxu0 %v3063
        %v4667 = vpop.f32.mrb[0].mxu0
        %v4668 = vadd.f32 %v4443, %v4667
        %v4669 = vpop.f32.mrb[0].mxu0
        %v4670 = vpop.f32.mrb[0].mxu0
        %v4671 = vadd.f32 %v4446, %v4670
        %v4672 = vpop.f32.mrb[0].mxu0
        %4673 = vmatprep.mubr.bf16.mxu0 0
        %4674 = vmatmul.mubr.bf16.gmra.mrb[0].mxu0 %v3064
        %v4675 = vpop.f32.mrb[0].mxu0
        %v4676 = vadd.f32 %v4451, %v4675
        %v4677 = vpop.f32.mrb[0].mxu0
        %v4678 = vpop.f32.mrb[0].mxu0
        %v4679 = vadd.f32 %v4454, %v4678
        %v4680 = vpop.f32.mrb[0].mxu0
        %4681 = vmatprep.mubr.bf16.mxu0 0
        %4682 = vmatmul.mubr.bf16.gmra.mrb[0].mxu0 %v3065
        %v4683 = vpop.f32.mrb[0].mxu0
        %v4684 = vadd.f32 %v4459, %v4683
        %v4685 = vpop.f32.mrb[0].mxu0
        %v4686 = vpop.f32.mrb[0].mxu0
        %v4687 = vadd.f32 %v4462, %v4686
        %v4688 = vpop.f32.mrb[0].mxu0
        %4689 = vmatprep.mubr.bf16.mxu0 0
        %4690 = vmatmul.mubr.bf16.gmra.mrb[0].mxu0 %v3066
        %v4691 = vpop.f32.mrb[0].mxu0
        %v4692 = vadd.f32 %v4467, %v4691
        %v4693 = vpop.f32.mrb[0].mxu0
        %v4694 = vpop.f32.mrb[0].mxu0
        %v4695 = vadd.f32 %v4470, %v4694
        %v4696 = vpop.f32.mrb[0].mxu0
        %4697 = vmatprep.mubr.bf16.mxu0 0
        %4698 = vmatmul.mubr.bf16.gmra.mrb[0].mxu0 %v3067
        %v4699 = vpop.f32.mrb[0].mxu0
        %v4700 = vadd.f32 %v4475, %v4699
        %v4701 = vpop.f32.mrb[0].mxu0
        %v4702 = vpop.f32.mrb[0].mxu0
        %v4703 = vadd.f32 %v4478, %v4702
        %v4704 = vpop.f32.mrb[0].mxu0
        %4705 = vmatprep.mubr.bf16.mxu0 0
        %4706 = vmatmul.mubr.bf16.gmra.mrb[0].mxu0 %v3068
        %v4707 = vpop.f32.mrb[0].mxu0
        %v4708 = vadd.f32 %v4483, %v4707
        %v4709 = vpop.f32.mrb[0].mxu0
        %v4710 = vpop.f32.mrb[0].mxu0
        %v4711 = vadd.f32 %v4486, %v4710
        %v4712 = vpop.f32.mrb[0].mxu0
        %4713 = vmatprep.mubr.bf16.mxu0 0
        %4714 = vmatmul.mubr.bf16.gmra.mrb[0].mxu0 %v3069
        %v4715 = vpop.f32.mrb[0].mxu0
        %v4716 = vadd.f32 %v4491, %v4715
        %v4717 = vpop.f32.mrb[0].mxu0
        %v4718 = vpop.f32.mrb[0].mxu0
        %v4719 = vadd.f32 %v4494, %v4718
        %v4720 = vpop.f32.mrb[0].mxu0
        %4721 = vmatprep.mubr.bf16.mxu0 0
        %4722 = vmatmul.mubr.bf16.gmra.mrb[0].mxu0 %v3070
        %v4723 = vpop.f32.mrb[0].mxu0
        %v4724 = vadd.f32 %v4499, %v4723
        %v4725 = vpop.f32.mrb[0].mxu0
        %v4726 = vpop.f32.mrb[0].mxu0
        %v4727 = vadd.f32 %v4502, %v4726
        %v4728 = vpop.f32.mrb[0].mxu0
        %4729 = vmatprep.mubr.bf16.mxu0 0
        %4730 = vmatmul.mubr.bf16.gmra.mrb[0].mxu0 %v3071
        %v4731 = vpop.f32.mrb[0].mxu0
        %v4732 = vadd.f32 %v4507, %v4731
        %v4733 = vpop.f32.mrb[0].mxu0
        %v4734 = vpop.f32.mrb[0].mxu0
        %v4735 = vadd.f32 %v4510, %v4734
        %v4736 = vpop.f32.mrb[0].mxu0
        %4737 = vmatprep.mubr.bf16.mxu0 0
        %4738 = vmatmul.mubr.bf16.gmra.mrb[0].mxu0 %v3072
        %v4739 = vpop.f32.mrb[0].mxu0
        %v4740 = vadd.f32 %v4515, %v4739
        %v4741 = vpop.f32.mrb[0].mxu0
        %v4742 = vpop.f32.mrb[0].mxu0
        %v4743 = vadd.f32 %v4518, %v4742
        %v4744 = vpop.f32.mrb[0].mxu0
        %4745 = vmatprep.mubr.bf16.mxu0 0
        %4746 = vmatmul.mubr.bf16.gmra.mrb[0].mxu0 %v3073
        %v4747 = vpop.f32.mrb[0].mxu0
        %v4748 = vadd.f32 %v4523, %v4747
        %v4749 = vpop.f32.mrb[0].mxu0
        %v4750 = vpop.f32.mrb[0].mxu0
        %v4751 = vadd.f32 %v4526, %v4750
        %v4752 = vpop.f32.mrb[0].mxu0
        %4753 = vmatprep.mubr.bf16.mxu0 0
        %4754 = vmatmul.mubr.bf16.gmra.mrb[0].mxu0 %v3080
        %v4755 = vpop.f32.mrb[0].mxu0
        %v4756 = vadd.f32 %v4531, %v4755
        %v4757 = vpop.f32.mrb[0].mxu0
        %v4758 = vpop.f32.mrb[0].mxu0
        %v4759 = vadd.f32 %v4534, %v4758
        %v4760 = vpop.f32.mrb[0].mxu0
        %4761 = vmatprep.mubr.bf16.mxu0 0
        %4762 = vmatmul.mubr.bf16.gmra.mrb[0].mxu0 %v3081
        %v4763 = vpop.f32.mrb[0].mxu0
        %v4764 = vadd.f32 %v4539, %v4763
        %v4765 = vpop.f32.mrb[0].mxu0
        %v4766 = vpop.f32.mrb[0].mxu0
        %v4767 = vadd.f32 %v4542, %v4766
        %v4768 = vpop.f32.mrb[0].mxu0
        %4769 = vmatprep.mubr.bf16.mxu0 0
        %4770 = vmatmul.mubr.bf16.gmra.mrb[0].mxu0 %v3082
        %v4771 = vpop.f32.mrb[0].mxu0
        %v4772 = vadd.f32 %v4547, %v4771
        %v4773 = vpop.f32.mrb[0].mxu0
        %v4774 = vpop.f32.mrb[0].mxu0
        %v4775 = vadd.f32 %v4550, %v4774
        %v4776 = vpop.f32.mrb[0].mxu0
        %4777 = vmatprep.mubr.bf16.mxu0 0
        %4778 = vmatmul.mubr.bf16.gmra.mrb[0].mxu0 %v3089
        %v4779 = vpop.f32.mrb[0].mxu0
        %v4780 = vadd.f32 %v4555, %v4779
        %v4781 = vpop.f32.mrb[0].mxu0
        %v4782 = vpop.f32.mrb[0].mxu0
        %v4783 = vadd.f32 %v4558, %v4782
        %v4784 = vpop.f32.mrb[0].mxu0
        %4785 = vmatprep.mubr.bf16.mxu0 0
        %4786 = vmatmul.mubr.bf16.gmra.mrb[0].mxu0 %v3090
        %v4787 = vpop.f32.mrb[0].mxu0
        %v4788 = vadd.f32 %v4563, %v4787
        %v4789 = vpop.f32.mrb[0].mxu0
        %v4790 = vpop.f32.mrb[0].mxu0
        %v4791 = vadd.f32 %v4566, %v4790
        %v4792 = vpop.f32.mrb[0].mxu0
        %4793 = vmatprep.mubr.bf16.mxu0 0
        %4794 = vmatmul.mubr.bf16.gmra.mrb[0].mxu0 %v3091
        %v4795 = vpop.f32.mrb[0].mxu0
        %v4796 = vadd.f32 %v4571, %v4795
        %v4797 = vpop.f32.mrb[0].mxu0
        %v4798 = vpop.f32.mrb[0].mxu0
        %v4799 = vadd.f32 %v4574, %v4798
        %v4800 = vpop.f32.mrb[0].mxu0
        %4801 = vdwg.mxu0
        %vm4802 = vcmp.ge.f32.partialorder %v4612, 0.0
        %vm4803 = vcmp.ge.f32.partialorder %v4615, 0.0
        %vm4804 = vcmp.ge.f32.partialorder %v4620, 0.0
        %vm4805 = vcmp.ge.f32.partialorder %v4623, 0.0
        %vm4806 = vcmp.ge.f32.partialorder %v4628, 0.0
        %vm4807 = vcmp.ge.f32.partialorder %v4631, 0.0
        %vm4808 = vcmp.ge.f32.partialorder %v4636, 0.0
        %vm4809 = vcmp.ge.f32.partialorder %v4639, 0.0
        %vm4810 = vcmp.ge.f32.partialorder %v4644, 0.0
        %vm4811 = vcmp.ge.f32.partialorder %v4647, 0.0
        %vm4812 = vcmp.ge.f32.partialorder %v4652, 0.0
        %vm4813 = vcmp.ge.f32.partialorder %v4655, 0.0
        %vm4814 = vcmp.ge.f32.partialorder %v4660, 0.0
        %vm4815 = vcmp.ge.f32.partialorder %v4663, 0.0
        %vm4816 = vcmp.ge.f32.partialorder %v4668, 0.0
        %vm4817 = vcmp.ge.f32.partialorder %v4671, 0.0
        %vm4818 = vcmp.ge.f32.partialorder %v4676, 0.0
        %vm4819 = vcmp.ge.f32.partialorder %v4679, 0.0
        %vm4820 = vcmp.ge.f32.partialorder %v4684, 0.0
        %vm4821 = vcmp.ge.f32.partialorder %v4687, 0.0
        %vm4822 = vcmp.ge.f32.partialorder %v4692, 0.0
        %vm4823 = vcmp.ge.f32.partialorder %v4695, 0.0
        %vm4824 = vcmp.ge.f32.partialorder %v4700, 0.0
        %vm4825 = vcmp.ge.f32.partialorder %v4703, 0.0
        %vm4826 = vcmp.ge.f32.partialorder %v4708, 0.0
        %vm4827 = vcmp.ge.f32.partialorder %v4711, 0.0
        %vm4828 = vcmp.ge.f32.partialorder %v4716, 0.0
        %vm4829 = vcmp.ge.f32.partialorder %v4719, 0.0
        %vm4830 = vcmp.ge.f32.partialorder %v4724, 0.0
        %vm4831 = vcmp.ge.f32.partialorder %v4727, 0.0
        %vm4832 = vcmp.ge.f32.partialorder %v4732, 0.0
        %vm4833 = vcmp.ge.f32.partialorder %v4735, 0.0
        %vm4834 = vcmp.ge.f32.partialorder %v4740, 0.0
        %vm4835 = vcmp.ge.f32.partialorder %v4743, 0.0
        %vm4836 = vcmp.ge.f32.partialorder %v4748, 0.0
        %vm4837 = vcmp.ge.f32.partialorder %v4751, 0.0
        %vm4838 = vcmp.ge.f32.partialorder %v4756, 0.0
        %vm4839 = vcmp.ge.f32.partialorder %v4759, 0.0
        %vm4840 = vcmp.ge.f32.partialorder %v4764, 0.0
        %vm4841 = vcmp.ge.f32.partialorder %v4767, 0.0
        %vm4842 = vcmp.ge.f32.partialorder %v4772, 0.0
        %vm4843 = vcmp.ge.f32.partialorder %v4775, 0.0
        %vm4844 = vcmp.ge.f32.partialorder %v4780, 0.0
        %vm4845 = vcmp.ge.f32.partialorder %v4783, 0.0
        %vm4846 = vcmp.ge.f32.partialorder %v4788, 0.0
        %vm4847 = vcmp.ge.f32.partialorder %v4791, 0.0
        %vm4848 = vcmp.ge.f32.partialorder %v4796, 0.0
        %vm4849 = vcmp.ge.f32.partialorder %v4799, 0.0
        %v4850 = vmul.f32 %v4612, 0.1
        %v4851 = vmul.f32 %v4615, 0.1
        %v4852 = vmul.f32 %v4620, 0.1
        %v4853 = vmul.f32 %v4623, 0.1
        %v4854 = vmul.f32 %v4628, 0.1
        %v4855 = vmul.f32 %v4631, 0.1
        %v4856 = vmul.f32 %v4636, 0.1
        %v4857 = vmul.f32 %v4639, 0.1
        %v4858 = vmul.f32 %v4644, 0.1
        %v4859 = vmul.f32 %v4647, 0.1
        %v4860 = vmul.f32 %v4652, 0.1
        %v4861 = vmul.f32 %v4655, 0.1
        %v4862 = vmul.f32 %v4660, 0.1
        %v4863 = vmul.f32 %v4663, 0.1
        %v4864 = vmul.f32 %v4668, 0.1
        %v4865 = vmul.f32 %v4671, 0.1
        %v4866 = vmul.f32 %v4676, 0.1
        %v4867 = vmul.f32 %v4679, 0.1
        %v4868 = vmul.f32 %v4684, 0.1
        %v4869 = vmul.f32 %v4687, 0.1
        %v4870 = vmul.f32 %v4692, 0.1
        %v4871 = vmul.f32 %v4695, 0.1
        %v4872 = vmul.f32 %v4700, 0.1
        %v4873 = vmul.f32 %v4703, 0.1
        %v4874 = vmul.f32 %v4708, 0.1
        %v4875 = vmul.f32 %v4711, 0.1
        %v4876 = vmul.f32 %v4716, 0.1
        %v4877 = vmul.f32 %v4719, 0.1
        %v4878 = vmul.f32 %v4724, 0.1
        %v4879 = vmul.f32 %v4727, 0.1
        %v4880 = vmul.f32 %v4732, 0.1
        %v4881 = vmul.f32 %v4735, 0.1
        %v4882 = vmul.f32 %v4740, 0.1
        %v4883 = vmul.f32 %v4743, 0.1
        %v4884 = vmul.f32 %v4748, 0.1
        %v4885 = vmul.f32 %v4751, 0.1
        %v4886 = vmul.f32 %v4756, 0.1
        %v4887 = vmul.f32 %v4759, 0.1
        %v4888 = vmul.f32 %v4764, 0.1
        %v4889 = vmul.f32 %v4767, 0.1
        %v4890 = vmul.f32 %v4772, 0.1
        %v4891 = vmul.f32 %v4775, 0.1
        %v4892 = vmul.f32 %v4780, 0.1
        %v4893 = vmul.f32 %v4783, 0.1
        %v4894 = vmul.f32 %v4788, 0.1
        %v4895 = vmul.f32 %v4791, 0.1
        %v4896 = vmul.f32 %v4796, 0.1
        %v4897 = vmul.f32 %v4799, 0.1
        %v4898 = vsel %vm4802, %v4612, %v4850
        %v4899 = vsel %vm4803, %v4615, %v4851
        %v4900 = vsel %vm4804, %v4620, %v4852
        %v4901 = vsel %vm4805, %v4623, %v4853
        %v4902 = vsel %vm4806, %v4628, %v4854
        %v4903 = vsel %vm4807, %v4631, %v4855
        %v4904 = vsel %vm4808, %v4636, %v4856
        %v4905 = vsel %vm4809, %v4639, %v4857
        %v4906 = vsel %vm4810, %v4644, %v4858
        %v4907 = vsel %vm4811, %v4647, %v4859
        %v4908 = vsel %vm4812, %v4652, %v4860
        %v4909 = vsel %vm4813, %v4655, %v4861
        %v4910 = vsel %vm4814, %v4660, %v4862
        %v4911 = vsel %vm4815, %v4663, %v4863
        %v4912 = vsel %vm4816, %v4668, %v4864
        %v4913 = vsel %vm4817, %v4671, %v4865
        %v4914 = vsel %vm4818, %v4676, %v4866
        %v4915 = vsel %vm4819, %v4679, %v4867
        %v4916 = vsel %vm4820, %v4684, %v4868
        %v4917 = vsel %vm4821, %v4687, %v4869
        %v4918 = vsel %vm4822, %v4692, %v4870
        %v4919 = vsel %vm4823, %v4695, %v4871
        %v4920 = vsel %vm4824, %v4700, %v4872
        %v4921 = vsel %vm4825, %v4703, %v4873
        %v4922 = vsel %vm4826, %v4708, %v4874
        %v4923 = vsel %vm4827, %v4711, %v4875
        %v4924 = vsel %vm4828, %v4716, %v4876
        %v4925 = vsel %vm4829, %v4719, %v4877
        %v4926 = vsel %vm4830, %v4724, %v4878
        %v4927 = vsel %vm4831, %v4727, %v4879
        %v4928 = vsel %vm4832, %v4732, %v4880
        %v4929 = vsel %vm4833, %v4735, %v4881
        %v4930 = vsel %vm4834, %v4740, %v4882
        %v4931 = vsel %vm4835, %v4743, %v4883
        %v4932 = vsel %vm4836, %v4748, %v4884
        %v4933 = vsel %vm4837, %v4751, %v4885
        %v4934 = vsel %vm4838, %v4756, %v4886
        %v4935 = vsel %vm4839, %v4759, %v4887
        %v4936 = vsel %vm4840, %v4764, %v4888
        %v4937 = vsel %vm4841, %v4767, %v4889
        %v4938 = vsel %vm4842, %v4772, %v4890
        %v4939 = vsel %vm4843, %v4775, %v4891
        %v4940 = vsel %vm4844, %v4780, %v4892
        %v4941 = vsel %vm4845, %v4783, %v4893
        %v4942 = vsel %vm4846, %v4788, %v4894
        %v4943 = vsel %vm4847, %v4791, %v4895
        %v4944 = vsel %vm4848, %v4796, %v4896
        %v4945 = vsel %vm4849, %v4799, %v4897
        %v4946 = vmul.f32 %v4898, %v228
        %v4947 = vmul.f32 %v4899, %v229
        %v4948 = vmul.f32 %v4900, %v230
        %v4949 = vmul.f32 %v4901, %v228
        %v4950 = vmul.f32 %v4902, %v229
        %v4951 = vmul.f32 %v4903, %v230
        %v4952 = vmul.f32 %v4904, %v228
        %v4953 = vmul.f32 %v4905, %v229
        %v4954 = vmul.f32 %v4906, %v230
        %v4955 = vmul.f32 %v4907, %v228
        %v4956 = vmul.f32 %v4908, %v229
        %v4957 = vmul.f32 %v4909, %v230
        %v4958 = vmul.f32 %v4910, %v228
        %v4959 = vmul.f32 %v4911, %v229
        %v4960 = vmul.f32 %v4912, %v230
        %v4961 = vmul.f32 %v4913, %v228
        %v4962 = vmul.f32 %v4914, %v229
        %v4963 = vmul.f32 %v4915, %v230
        %v4964 = vmul.f32 %v4916, %v228
        %v4965 = vmul.f32 %v4917, %v229
        %v4966 = vmul.f32 %v4918, %v230
        %v4967 = vmul.f32 %v4919, %v228
        %v4968 = vmul.f32 %v4920, %v229
        %v4969 = vmul.f32 %v4921, %v230
        %v4970 = vmul.f32 %v4922, %v228
        %v4971 = vmul.f32 %v4923, %v229
        %v4972 = vmul.f32 %v4924, %v230
        %v4973 = vmul.f32 %v4925, %v228
        %v4974 = vmul.f32 %v4926, %v229
        %v4975 = vmul.f32 %v4927, %v230
        %v4976 = vmul.f32 %v4928, %v228
        %v4977 = vmul.f32 %v4929, %v229
        %v4978 = vmul.f32 %v4930, %v230
        %v4979 = vmul.f32 %v4931, %v228
        %v4980 = vmul.f32 %v4932, %v229
        %v4981 = vmul.f32 %v4933, %v230
        %v4982 = vmul.f32 %v4934, %v228
        %v4983 = vmul.f32 %v4935, %v229
        %v4984 = vmul.f32 %v4936, %v230
        %v4985 = vmul.f32 %v4937, %v228
        %v4986 = vmul.f32 %v4938, %v229
        %v4987 = vmul.f32 %v4939, %v230
        %v4988 = vmul.f32 %v4940, %v228
        %v4989 = vmul.f32 %v4941, %v229
        %v4990 = vmul.f32 %v4942, %v230
        %v4991 = vmul.f32 %v4943, %v228
        %v4992 = vmul.f32 %v4944, %v229
        %v4993 = vmul.f32 %v4945, %v230
        %v4994 = vpack.c.bf16 %v4947, %v4946
        %v4995 = vpack.c.bf16 %v4949, %v4948
        %v4996 = vpack.c.bf16 %v4951, %v4950
        %v4997 = vpack.c.bf16 %v4953, %v4952
        %v4998 = vpack.c.bf16 %v4955, %v4954
        %v4999 = vpack.c.bf16 %v4957, %v4956
        %v5000 = vpack.c.bf16 %v4959, %v4958
        %v5001 = vpack.c.bf16 %v4961, %v4960
        %v5002 = vpack.c.bf16 %v4963, %v4962
        %v5003 = vpack.c.bf16 %v4965, %v4964
        %v5004 = vpack.c.bf16 %v4967, %v4966
        %v5005 = vpack.c.bf16 %v4969, %v4968
        %v5006 = vpack.c.bf16 %v4971, %v4970
        %v5007 = vpack.c.bf16 %v4973, %v4972
        %v5008 = vpack.c.bf16 %v4975, %v4974
        %v5009 = vpack.c.bf16 %v4977, %v4976
        %v5010 = vpack.c.bf16 %v4979, %v4978
        %v5011 = vpack.c.bf16 %v4981, %v4980
        %v5012 = vpack.c.bf16 %v4983, %v4982
        %v5013 = vpack.c.bf16 %v4985, %v4984
        %v5014 = vpack.c.bf16 %v4987, %v4986
        %v5015 = vpack.c.bf16 %v4989, %v4988
        %v5016 = vpack.c.bf16 %v4991, %v4990
        %v5017 = vpack.c.bf16 %v4993, %v4992
        %5018 = vst [vmem:[#allocation2 + $0x30] sm:$0xff] %v4994
        %5019 = vst [vmem:[#allocation2 + $0x38] sm:$0xff] %v4995
        %5020 = vst [vmem:[#allocation2 + $0x40] sm:$0xff] %v4996
        %5021 = vst [vmem:[#allocation2 + $0x48] sm:$0xff] %v4997
        %5022 = vst [vmem:[#allocation2 + $0x50] sm:$0xff] %v4998
        %5023 = vst [vmem:[#allocation2 + $0x58] sm:$0xff] %v4999
        %5024 = vst [vmem:[#allocation2 + $0x60] sm:$0xff] %v5000
        %5025 = vst [vmem:[#allocation2 + $0x68] sm:$0xff] %v5001
        %5026 = vst [vmem:[#allocation2 + $0x70] sm:$0xff] %v5002
        %5027 = vst [vmem:[#allocation2 + $0x78] sm:$0xff] %v5003
        %5028 = vst [vmem:[#allocation2 + $0x80] sm:$0xff] %v5004
        %5029 = vst [vmem:[#allocation2 + $0x88] sm:$0xff] %v5005
        %5030 = vst [vmem:[#allocation2 + $0x90] sm:$0xff] %v5006
        %5031 = vst [vmem:[#allocation2 + $0x98] sm:$0xff] %v5007
        %5032 = vst [vmem:[#allocation2 + $0xa0] sm:$0xff] %v5008
        %5033 = vst [vmem:[#allocation2 + $0xa8] sm:$0xff] %v5009
        %5034 = vst [vmem:[#allocation2 + $0xb0] sm:$0xff] %v5010
        %5035 = vst [vmem:[#allocation2 + $0xb8] sm:$0xff] %v5011
        %5036 = vst [vmem:[#allocation2 + $0xc0] sm:$0xff] %v5012
        %5037 = vst [vmem:[#allocation2 + $0xc8] sm:$0xff] %v5013
        %5038 = vst [vmem:[#allocation2 + $0xd0] sm:$0xff] %v5014
        %5039 = vst [vmem:[#allocation2 + $0xd8] sm:$0xff] %v5015
        %5040 = vst [vmem:[#allocation2 + $0xe0] sm:$0xff] %v5016
        %5041 = vst [vmem:[#allocation2 + $0xe8] sm:$0xff] %v5017
        %v5042 = vld [vmem:[#allocation2] sm:$0xff]
        %v5043 = vld [vmem:[#allocation2 + $0x8] sm:$0xff]
        %v5044 = vld [vmem:[#allocation2 + $0x10] sm:$0xff]
        %v5045 = vld [vmem:[#allocation2 + $0x18] sm:$0xff]
        %v5046 = vld [vmem:[#allocation2 + $0x20] sm:$0xff]
        %v5047 = vld [vmem:[#allocation2 + $0x28] sm:$0xff]
        %v5048 = vld [vmem:[#allocation2 + $0x30] sm:$0xff]
        %v5049 = vld [vmem:[#allocation2 + $0x38] sm:$0xff]
        %v5050 = vld [vmem:[#allocation2 + $0x40] sm:$0xff]
        %v5051 = vld [vmem:[#allocation2 + $0x48] sm:$0xff]
        %v5052 = vld [vmem:[#allocation2 + $0x50] sm:$0xff]
        %v5053 = vld [vmem:[#allocation2 + $0x58] sm:$0xff]
        %v5054 = vld [vmem:[#allocation2 + $0x60] sm:$0xff]
        %v5055 = vld [vmem:[#allocation2 + $0x68] sm:$0xff]
        %v5056 = vld [vmem:[#allocation2 + $0x70] sm:$0xff]
        %v5057 = vld [vmem:[#allocation2 + $0x78] sm:$0xff]
        %v5058 = vld [vmem:[#allocation2 + $0x80] sm:$0xff]
        %v5059 = vld [vmem:[#allocation2 + $0x88] sm:$0xff]
        %v5060 = vld [vmem:[#allocation2 + $0x90] sm:$0xff]
        %v5061 = vld [vmem:[#allocation2 + $0x98] sm:$0xff]
        %v5062 = vld [vmem:[#allocation2 + $0xa0] sm:$0xff]
        %v5063 = vld [vmem:[#allocation2 + $0xa8] sm:$0xff]
        %v5064 = vld [vmem:[#allocation2 + $0xb0] sm:$0xff]
        %v5065 = vld [vmem:[#allocation2 + $0xb8] sm:$0xff]
        %v5066 = vld [vmem:[#allocation2 + $0xc0] sm:$0xff]
        %v5067 = vld [vmem:[#allocation2 + $0xc8] sm:$0xff]
        %v5068 = vld [vmem:[#allocation2 + $0xd0] sm:$0xff]
        %v5069 = vld [vmem:[#allocation2 + $0xd8] sm:$0xff]
        %v5070 = vld [vmem:[#allocation2 + $0xe0] sm:$0xff]
        %v5071 = vld [vmem:[#allocation2 + $0xe8] sm:$0xff]
        %v5072 = vld [vmem:[#allocation2 + $0xf0] sm:$0xff]
        %v5073 = vld [vmem:[#allocation2 + $0xf8] sm:$0xff]
        %v5074 = vld [vmem:[#allocation2 + $0x100] sm:$0xff]
        %v5075 = vld [vmem:[#allocation2 + $0x108] sm:$0xff]
        %v5076 = vld [vmem:[#allocation2 + $0x110] sm:$0xff]
        %v5077 = vld [vmem:[#allocation2 + $0x118] sm:$0xff]
        %v5078 = vunpack.c.l.bf16 %v5042
        %v5079 = vunpack.c.h.bf16 %v5042
        %v5080 = vunpack.c.l.bf16 %v5043
        %v5081 = vunpack.c.h.bf16 %v5043
        %v5082 = vunpack.c.l.bf16 %v5044
        %v5083 = vunpack.c.h.bf16 %v5044
        %v5084 = vunpack.c.l.bf16 %v5045
        %v5085 = vunpack.c.h.bf16 %v5045
        %v5086 = vunpack.c.l.bf16 %v5046
        %v5087 = vunpack.c.h.bf16 %v5046
        %v5088 = vunpack.c.l.bf16 %v5047
        %v5089 = vunpack.c.h.bf16 %v5047
        %v5090 = vunpack.c.l.bf16 %v5048
        %v5091 = vunpack.c.h.bf16 %v5048
        %v5092 = vunpack.c.l.bf16 %v5049
        %v5093 = vunpack.c.h.bf16 %v5049
        %v5094 = vunpack.c.l.bf16 %v5050
        %v5095 = vunpack.c.h.bf16 %v5050
        %v5096 = vunpack.c.l.bf16 %v5051
        %v5097 = vunpack.c.h.bf16 %v5051
        %v5098 = vunpack.c.l.bf16 %v5052
        %v5099 = vunpack.c.h.bf16 %v5052
        %v5100 = vunpack.c.l.bf16 %v5053
        %v5101 = vunpack.c.h.bf16 %v5053
        %v5102 = vunpack.c.l.bf16 %v5054
        %v5103 = vunpack.c.h.bf16 %v5054
        %v5104 = vunpack.c.l.bf16 %v5055
        %v5105 = vunpack.c.h.bf16 %v5055
        %v5106 = vunpack.c.l.bf16 %v5056
        %v5107 = vunpack.c.h.bf16 %v5056
        %v5108 = vunpack.c.l.bf16 %v5057
        %v5109 = vunpack.c.h.bf16 %v5057
        %v5110 = vunpack.c.l.bf16 %v5058
        %v5111 = vunpack.c.h.bf16 %v5058
        %v5112 = vunpack.c.l.bf16 %v5059
        %v5113 = vunpack.c.h.bf16 %v5059
        %v5114 = vunpack.c.l.bf16 %v5060
        %v5115 = vunpack.c.h.bf16 %v5060
        %v5116 = vunpack.c.l.bf16 %v5061
        %v5117 = vunpack.c.h.bf16 %v5061
        %v5118 = vunpack.c.l.bf16 %v5062
        %v5119 = vunpack.c.h.bf16 %v5062
        %v5120 = vunpack.c.l.bf16 %v5063
        %v5121 = vunpack.c.h.bf16 %v5063
        %v5122 = vunpack.c.l.bf16 %v5064
        %v5123 = vunpack.c.h.bf16 %v5064
        %v5124 = vunpack.c.l.bf16 %v5065
        %v5125 = vunpack.c.h.bf16 %v5065
        %v5126 = vunpack.c.l.bf16 %v5066
        %v5127 = vunpack.c.h.bf16 %v5066
        %v5128 = vunpack.c.l.bf16 %v5067
        %v5129 = vunpack.c.h.bf16 %v5067
        %v5130 = vunpack.c.l.bf16 %v5068
        %v5131 = vunpack.c.h.bf16 %v5068
        %v5132 = vunpack.c.l.bf16 %v5069
        %v5133 = vunpack.c.h.bf16 %v5069
        %v5134 = vunpack.c.l.bf16 %v5070
        %v5135 = vunpack.c.h.bf16 %v5070
        %v5136 = vunpack.c.l.bf16 %v5071
        %v5137 = vunpack.c.h.bf16 %v5071
        %v5138 = vunpack.c.l.bf16 %v5072
        %v5139 = vunpack.c.h.bf16 %v5072
        %v5140 = vunpack.c.l.bf16 %v5073
        %v5141 = vunpack.c.h.bf16 %v5073
        %v5142 = vunpack.c.l.bf16 %v5074
        %v5143 = vunpack.c.h.bf16 %v5074
        %v5144 = vunpack.c.l.bf16 %v5075
        %v5145 = vunpack.c.h.bf16 %v5075
        %v5146 = vunpack.c.l.bf16 %v5076
        %v5147 = vunpack.c.h.bf16 %v5076
        %v5148 = vunpack.c.l.bf16 %v5077
        %v5149 = vunpack.c.h.bf16 %v5077
        %v5150 = vrot.slane %v5078, 4
        %v5151 = vrot.slane %v5079, 4
        %v5152 = vrot.slane %v5080, 4
        %v5153 = vrot.slane %v5081, 4
        %v5154 = vrot.slane %v5082, 4
        %v5155 = vrot.slane %v5083, 4
        %v5156 = vrot.slane %v5084, 4
        %v5157 = vrot.slane %v5085, 4
        %v5158 = vrot.slane %v5086, 4
        %v5159 = vrot.slane %v5087, 4
        %v5160 = vrot.slane %v5088, 4
        %v5161 = vrot.slane %v5089, 4
        %v5162 = vrot.slane %v5090, 4
        %v5163 = vrot.slane %v5091, 4
        %v5164 = vrot.slane %v5092, 4
        %v5165 = vrot.slane %v5093, 4
        %v5166 = vrot.slane %v5094, 4
        %v5167 = vrot.slane %v5095, 4
        %v5168 = vrot.slane %v5096, 4
        %v5169 = vrot.slane %v5097, 4
        %v5170 = vrot.slane %v5098, 4
        %v5171 = vrot.slane %v5099, 4
        %v5172 = vrot.slane %v5100, 4
        %v5173 = vrot.slane %v5101, 4
        %v5174 = vrot.slane %v5102, 4
        %v5175 = vrot.slane %v5103, 4
        %v5176 = vrot.slane %v5104, 4
        %v5177 = vrot.slane %v5105, 4
        %v5178 = vrot.slane %v5106, 4
        %v5179 = vrot.slane %v5107, 4
        %v5180 = vrot.slane %v5108, 4
        %v5181 = vrot.slane %v5109, 4
        %v5182 = vrot.slane %v5110, 4
        %v5183 = vrot.slane %v5111, 4
        %v5184 = vrot.slane %v5112, 4
        %v5185 = vrot.slane %v5113, 4
        %v5186 = vrot.slane %v5114, 4
        %v5187 = vrot.slane %v5115, 4
        %v5188 = vrot.slane %v5116, 4
        %v5189 = vrot.slane %v5117, 4
        %v5190 = vrot.slane %v5118, 4
        %v5191 = vrot.slane %v5119, 4
        %v5192 = vrot.slane %v5120, 4
        %v5193 = vrot.slane %v5121, 4
        %v5194 = vrot.slane %v5122, 4
        %v5195 = vrot.slane %v5123, 4
        %v5196 = vrot.slane %v5124, 4
        %v5197 = vrot.slane %v5125, 4
        %v5198 = vrot.slane %v5126, 4
        %v5199 = vrot.slane %v5127, 4
        %v5200 = vrot.slane %v5128, 4
        %v5201 = vrot.slane %v5129, 4
        %v5202 = vrot.slane %v5130, 4
        %v5203 = vrot.slane %v5131, 4
        %v5204 = vrot.slane %v5132, 4
        %v5205 = vrot.slane %v5133, 4
        %v5206 = vrot.slane %v5134, 4
        %v5207 = vrot.slane %v5135, 4
        %v5208 = vrot.slane %v5136, 4
        %v5209 = vrot.slane %v5137, 4
        %v5210 = vrot.slane %v5138, 4
        %v5211 = vrot.slane %v5139, 4
        %v5212 = vrot.slane %v5140, 4
        %v5213 = vrot.slane %v5141, 4
        %v5214 = vrot.slane %v5142, 4
        %v5215 = vrot.slane %v5143, 4
        %v5216 = vrot.slane %v5144, 4
        %v5217 = vrot.slane %v5145, 4
        %v5218 = vrot.slane %v5146, 4
        %v5219 = vrot.slane %v5147, 4
        %v5220 = vrot.slane %v5148, 4
        %v5221 = vrot.slane %v5149, 4
        %vm5222 = vcmp.lt.s32.totalorder %v213, 4
        %v5223 = vsel %vm5222, %v5220, %v5221
        %v5224 = vsel %vm5222, %v5219, %v5220
        %v5225 = vsel %vm5222, %v5218, %v5219
        %v5226 = vsel %vm5222, %v5217, %v5218
        %v5227 = vsel %vm5222, %v5216, %v5217
        %v5228 = vsel %vm5222, %v5215, %v5216
        %v5229 = vsel %vm5222, %v5214, %v5215
        %v5230 = vsel %vm5222, %v5213, %v5214
        %v5231 = vsel %vm5222, %v5212, %v5213
        %v5232 = vsel %vm5222, %v5211, %v5212
        %v5233 = vsel %vm5222, %v5210, %v5211
        %v5234 = vsel %vm5222, %v5209, %v5210
        %v5235 = vsel %vm5222, %v5208, %v5209
        %v5236 = vsel %vm5222, %v5207, %v5208
        %v5237 = vsel %vm5222, %v5206, %v5207
        %v5238 = vsel %vm5222, %v5205, %v5206
        %v5239 = vsel %vm5222, %v5204, %v5205
        %v5240 = vsel %vm5222, %v5203, %v5204
        %v5241 = vsel %vm5222, %v5202, %v5203
        %v5242 = vsel %vm5222, %v5201, %v5202
        %v5243 = vsel %vm5222, %v5200, %v5201
        %v5244 = vsel %vm5222, %v5199, %v5200
        %v5245 = vsel %vm5222, %v5198, %v5199
        %v5246 = vsel %vm5222, %v5197, %v5198
        %v5247 = vsel %vm5222, %v5196, %v5197
        %v5248 = vsel %vm5222, %v5195, %v5196
        %v5249 = vsel %vm5222, %v5194, %v5195
        %v5250 = vsel %vm5222, %v5193, %v5194
        %v5251 = vsel %vm5222, %v5192, %v5193
        %v5252 = vsel %vm5222, %v5191, %v5192
        %v5253 = vsel %vm5222, %v5190, %v5191
        %v5254 = vsel %vm5222, %v5189, %v5190
        %v5255 = vsel %vm5222, %v5188, %v5189
        %v5256 = vsel %vm5222, %v5187, %v5188
        %v5257 = vsel %vm5222, %v5186, %v5187
        %v5258 = vsel %vm5222, %v5185, %v5186
        %v5259 = vsel %vm5222, %v5184, %v5185
        %v5260 = vsel %vm5222, %v5183, %v5184
        %v5261 = vsel %vm5222, %v5182, %v5183
        %v5262 = vsel %vm5222, %v5181, %v5182
        %v5263 = vsel %vm5222, %v5180, %v5181
        %v5264 = vsel %vm5222, %v5179, %v5180
        %v5265 = vsel %vm5222, %v5178, %v5179
        %v5266 = vsel %vm5222, %v5177, %v5178
        %v5267 = vsel %vm5222, %v5176, %v5177
        %v5268 = vsel %vm5222, %v5175, %v5176
        %v5269 = vsel %vm5222, %v5174, %v5175
        %v5270 = vsel %vm5222, %v5173, %v5174
        %v5271 = vsel %vm5222, %v5172, %v5173
        %v5272 = vsel %vm5222, %v5171, %v5172
        %v5273 = vsel %vm5222, %v5170, %v5171
        %v5274 = vsel %vm5222, %v5169, %v5170
        %v5275 = vsel %vm5222, %v5168, %v5169
        %v5276 = vsel %vm5222, %v5167, %v5168
        %v5277 = vsel %vm5222, %v5166, %v5167
        %v5278 = vsel %vm5222, %v5165, %v5166
        %v5279 = vsel %vm5222, %v5164, %v5165
        %v5280 = vsel %vm5222, %v5163, %v5164
        %v5281 = vsel %vm5222, %v5162, %v5163
        %v5282 = vsel %vm5222, %v5161, %v5162
        %v5283 = vsel %vm5222, %v5160, %v5161
        %v5284 = vsel %vm5222, %v5159, %v5160
        %v5285 = vsel %vm5222, %v5158, %v5159
        %v5286 = vsel %vm5222, %v5157, %v5158
        %v5287 = vsel %vm5222, %v5156, %v5157
        %v5288 = vsel %vm5222, %v5155, %v5156
        %v5289 = vsel %vm5222, %v5154, %v5155
        %v5290 = vsel %vm5222, %v5153, %v5154
        %v5291 = vsel %vm5222, %v5152, %v5153
        %v5292 = vsel %vm5222, %v5151, %v5152
        %v5293 = vsel %vm5222, %v5150, %v5151
        %v5294 = vsel %vm5222, %v5221, %v5150
        %v5295 = vpack.c.bf16 %v5293, %v5294
        %v5296 = vpack.c.bf16 %v5291, %v5292
        %v5297 = vpack.c.bf16 %v5289, %v5290
        %v5298 = vpack.c.bf16 %v5287, %v5288
        %v5299 = vpack.c.bf16 %v5285, %v5286
        %v5300 = vpack.c.bf16 %v5283, %v5284
        %v5301 = vpack.c.bf16 %v5281, %v5282
        %v5302 = vpack.c.bf16 %v5279, %v5280
        %v5303 = vpack.c.bf16 %v5277, %v5278
        %v5304 = vpack.c.bf16 %v5275, %v5276
        %v5305 = vpack.c.bf16 %v5273, %v5274
        %v5306 = vpack.c.bf16 %v5271, %v5272
        %v5307 = vpack.c.bf16 %v5269, %v5270
        %v5308 = vpack.c.bf16 %v5267, %v5268
        %v5309 = vpack.c.bf16 %v5265, %v5266
        %v5310 = vpack.c.bf16 %v5263, %v5264
        %v5311 = vpack.c.bf16 %v5261, %v5262
        %v5312 = vpack.c.bf16 %v5259, %v5260
        %v5313 = vpack.c.bf16 %v5257, %v5258
        %v5314 = vpack.c.bf16 %v5255, %v5256
        %v5315 = vpack.c.bf16 %v5253, %v5254
        %v5316 = vpack.c.bf16 %v5251, %v5252
        %v5317 = vpack.c.bf16 %v5249, %v5250
        %v5318 = vpack.c.bf16 %v5247, %v5248
        %v5319 = vpack.c.bf16 %v5079, %v5078
        %v5320 = vpack.c.bf16 %v5081, %v5080
        %v5321 = vpack.c.bf16 %v5083, %v5082
        %v5322 = vpack.c.bf16 %v5085, %v5084
        %v5323 = vpack.c.bf16 %v5087, %v5086
        %v5324 = vpack.c.bf16 %v5089, %v5088
        %v5325 = vpack.c.bf16 %v5091, %v5090
        %v5326 = vpack.c.bf16 %v5093, %v5092
        %v5327 = vpack.c.bf16 %v5095, %v5094
        %v5328 = vpack.c.bf16 %v5097, %v5096
        %v5329 = vpack.c.bf16 %v5099, %v5098
        %v5330 = vpack.c.bf16 %v5101, %v5100
        %v5331 = vpack.c.bf16 %v5103, %v5102
        %v5332 = vpack.c.bf16 %v5105, %v5104
        %v5333 = vpack.c.bf16 %v5107, %v5106
        %v5334 = vpack.c.bf16 %v5109, %v5108
        %v5335 = vpack.c.bf16 %v5111, %v5110
        %v5336 = vpack.c.bf16 %v5113, %v5112
        %v5337 = vpack.c.bf16 %v5115, %v5114
        %v5338 = vpack.c.bf16 %v5117, %v5116
        %v5339 = vpack.c.bf16 %v5119, %v5118
        %v5340 = vpack.c.bf16 %v5121, %v5120
        %v5341 = vpack.c.bf16 %v5123, %v5122
        %v5342 = vpack.c.bf16 %v5125, %v5124
        %v5343 = vpack.c.bf16 %v5292, %v5293
        %v5344 = vpack.c.bf16 %v5290, %v5291
        %v5345 = vpack.c.bf16 %v5288, %v5289
        %v5346 = vpack.c.bf16 %v5286, %v5287
        %v5347 = vpack.c.bf16 %v5284, %v5285
        %v5348 = vpack.c.bf16 %v5282, %v5283
        %v5349 = vpack.c.bf16 %v5280, %v5281
        %v5350 = vpack.c.bf16 %v5278, %v5279
        %v5351 = vpack.c.bf16 %v5276, %v5277
        %v5352 = vpack.c.bf16 %v5274, %v5275
        %v5353 = vpack.c.bf16 %v5272, %v5273
        %v5354 = vpack.c.bf16 %v5270, %v5271
        %v5355 = vpack.c.bf16 %v5268, %v5269
        %v5356 = vpack.c.bf16 %v5266, %v5267
        %v5357 = vpack.c.bf16 %v5264, %v5265
        %v5358 = vpack.c.bf16 %v5262, %v5263
        %v5359 = vpack.c.bf16 %v5260, %v5261
        %v5360 = vpack.c.bf16 %v5258, %v5259
        %v5361 = vpack.c.bf16 %v5256, %v5257
        %v5362 = vpack.c.bf16 %v5254, %v5255
        %v5363 = vpack.c.bf16 %v5252, %v5253
        %v5364 = vpack.c.bf16 %v5250, %v5251
        %v5365 = vpack.c.bf16 %v5248, %v5249
        %v5366 = vpack.c.bf16 %v5246, %v5247
        %v5367 = vpack.c.bf16 %v5245, %v5246
        %v5368 = vpack.c.bf16 %v5243, %v5244
        %v5369 = vpack.c.bf16 %v5241, %v5242
        %v5370 = vpack.c.bf16 %v5239, %v5240
        %v5371 = vpack.c.bf16 %v5237, %v5238
        %v5372 = vpack.c.bf16 %v5235, %v5236
        %v5373 = vpack.c.bf16 %v5127, %v5126
        %v5374 = vpack.c.bf16 %v5129, %v5128
        %v5375 = vpack.c.bf16 %v5131, %v5130
        %v5376 = vpack.c.bf16 %v5133, %v5132
        %v5377 = vpack.c.bf16 %v5135, %v5134
        %v5378 = vpack.c.bf16 %v5137, %v5136
        %v5379 = vpack.c.bf16 %v5244, %v5245
        %v5380 = vpack.c.bf16 %v5242, %v5243
        %v5381 = vpack.c.bf16 %v5240, %v5241
        %v5382 = vpack.c.bf16 %v5238, %v5239
        %v5383 = vpack.c.bf16 %v5236, %v5237
        %v5384 = vpack.c.bf16 %v5234, %v5235
        %v5385 = vpack.c.bf16 %v5233, %v5234
        %v5386 = vpack.c.bf16 %v5231, %v5232
        %v5387 = vpack.c.bf16 %v5229, %v5230
        %v5388 = vpack.c.bf16 %v5227, %v5228
        %v5389 = vpack.c.bf16 %v5225, %v5226
        %v5390 = vpack.c.bf16 %v5223, %v5224
        %v5391 = vpack.c.bf16 %v5139, %v5138
        %v5392 = vpack.c.bf16 %v5141, %v5140
        %v5393 = vpack.c.bf16 %v5143, %v5142
        %v5394 = vpack.c.bf16 %v5145, %v5144
        %v5395 = vpack.c.bf16 %v5147, %v5146
        %v5396 = vpack.c.bf16 %v5149, %v5148
        %v5397 = vpack.c.bf16 %v5232, %v5233
        %v5398 = vpack.c.bf16 %v5230, %v5231
        %v5399 = vpack.c.bf16 %v5228, %v5229
        %v5400 = vpack.c.bf16 %v5226, %v5227
        %v5401 = vpack.c.bf16 %v5224, %v5225
        %v5402 = vpack.c.bf16 %v5294, %v5223
        %s5403 = scalar_lea.vmem [#allocation3], 1152
        %v5404 = vld [vmem:[%s5403] sm:$0xf]
        %v5405 = vld [vmem:[%s5403 + $0x4] sm:$0xf]
        %v5406 = vld [vmem:[%s5403 + $0x8] sm:$0xf]
        %v5407 = vld [vmem:[%s5403 + $0xc] sm:$0xf]
        %v5408 = vld [vmem:[%s5403 + $0x10] sm:$0xf]
        %v5409 = vld [vmem:[%s5403 + $0x14] sm:$0xf]
        %v5410 = vld [vmem:[%s5403 + $0x18] sm:$0xf]
        %v5411 = vld [vmem:[%s5403 + $0x1c] sm:$0xf]
        %v5412 = vld [vmem:[%s5403 + $0x20] sm:$0xf]
        %v5413 = vld [vmem:[%s5403 + $0x24] sm:$0xf]
        %v5414 = vld [vmem:[%s5403 + $0x28] sm:$0xf]
        %v5415 = vld [vmem:[%s5403 + $0x2c] sm:$0xf]
        %v5416 = vld [vmem:[%s5403 + $0x30] sm:$0xf]
        %v5417 = vld [vmem:[%s5403 + $0x34] sm:$0xf]
        %v5418 = vld [vmem:[%s5403 + $0x38] sm:$0xf]
        %v5419 = vld [vmem:[%s5403 + $0x3c] sm:$0xf]
        %v5420 = vld [vmem:[%s5403 + $0x40] sm:$0xf]
        %v5421 = vld [vmem:[%s5403 + $0x44] sm:$0xf]
        %v5422 = vld [vmem:[%s5403 + $0x48] sm:$0xf]
        %v5423 = vld [vmem:[%s5403 + $0x4c] sm:$0xf]
        %v5424 = vld [vmem:[%s5403 + $0x50] sm:$0xf]
        %v5425 = vld [vmem:[%s5403 + $0x54] sm:$0xf]
        %v5426 = vld [vmem:[%s5403 + $0x58] sm:$0xf]
        %v5427 = vld [vmem:[%s5403 + $0x5c] sm:$0xf]
        %v5428 = vld [vmem:[%s5403 + $0x60] sm:$0xf]
        %v5429 = vld [vmem:[%s5403 + $0x64] sm:$0xf]
        %v5430 = vld [vmem:[%s5403 + $0x68] sm:$0xf]
        %v5431 = vld [vmem:[%s5403 + $0x6c] sm:$0xf]
        %v5432 = vld [vmem:[%s5403 + $0x70] sm:$0xf]
        %v5433 = vld [vmem:[%s5403 + $0x74] sm:$0xf]
        %v5434 = vld [vmem:[%s5403 + $0x78] sm:$0xf]
        %v5435 = vld [vmem:[%s5403 + $0x7c] sm:$0xf]
        %v5436 = vld [vmem:[%s5403 + $0x80] sm:$0xf]
        %v5437 = vld [vmem:[%s5403 + $0x84] sm:$0xf]
        %v5438 = vld [vmem:[%s5403 + $0x88] sm:$0xf]
        %v5439 = vld [vmem:[%s5403 + $0x8c] sm:$0xf]
        %v5440 = vld [vmem:[%s5403 + $0x90] sm:$0xf]
        %v5441 = vld [vmem:[%s5403 + $0x94] sm:$0xf]
        %v5442 = vld [vmem:[%s5403 + $0x98] sm:$0xf]
        %v5443 = vld [vmem:[%s5403 + $0x9c] sm:$0xf]
        %v5444 = vld [vmem:[%s5403 + $0xa0] sm:$0xf]
        %v5445 = vld [vmem:[%s5403 + $0xa4] sm:$0xf]
        %v5446 = vld [vmem:[%s5403 + $0xa8] sm:$0xf]
        %v5447 = vld [vmem:[%s5403 + $0xac] sm:$0xf]
        %v5448 = vld [vmem:[%s5403 + $0xb0] sm:$0xf]
        %v5449 = vld [vmem:[%s5403 + $0xb4] sm:$0xf]
        %v5450 = vld [vmem:[%s5403 + $0xb8] sm:$0xf]
        %v5451 = vld [vmem:[%s5403 + $0xbc] sm:$0xf]
        %v5452 = vld [vmem:[%s5403 + $0xc0] sm:$0xf]
        %v5453 = vld [vmem:[%s5403 + $0xc4] sm:$0xf]
        %v5454 = vld [vmem:[%s5403 + $0xc8] sm:$0xf]
        %v5455 = vld [vmem:[%s5403 + $0xcc] sm:$0xf]
        %v5456 = vld [vmem:[%s5403 + $0xd0] sm:$0xf]
        %v5457 = vld [vmem:[%s5403 + $0xd4] sm:$0xf]
        %v5458 = vld [vmem:[%s5403 + $0xd8] sm:$0xf]
        %v5459 = vld [vmem:[%s5403 + $0xdc] sm:$0xf]
        %v5460 = vld [vmem:[%s5403 + $0xe0] sm:$0xf]
        %v5461 = vld [vmem:[%s5403 + $0xe4] sm:$0xf]
        %v5462 = vld [vmem:[%s5403 + $0xe8] sm:$0xf]
        %v5463 = vld [vmem:[%s5403 + $0xec] sm:$0xf]
        %v5464 = vld [vmem:[%s5403 + $0xf0] sm:$0xf]
        %v5465 = vld [vmem:[%s5403 + $0xf4] sm:$0xf]
        %v5466 = vld [vmem:[%s5403 + $0xf8] sm:$0xf]
        %v5467 = vld [vmem:[%s5403 + $0xfc] sm:$0xf]
        %v5468 = vld [vmem:[%s5403 + $0x100] sm:$0xf]
        %v5469 = vld [vmem:[%s5403 + $0x104] sm:$0xf]
        %v5470 = vld [vmem:[%s5403 + $0x108] sm:$0xf]
        %v5471 = vld [vmem:[%s5403 + $0x10c] sm:$0xf]
        %v5472 = vld [vmem:[%s5403 + $0x110] sm:$0xf]
        %v5473 = vld [vmem:[%s5403 + $0x114] sm:$0xf]
        %v5474 = vld [vmem:[%s5403 + $0x118] sm:$0xf]
        %v5475 = vld [vmem:[%s5403 + $0x11c] sm:$0xf]
        %v5476 = vld [vmem:[%s5403 + $0x120] sm:$0xf]
        %v5477 = vld [vmem:[%s5403 + $0x124] sm:$0xf]
        %v5478 = vld [vmem:[%s5403 + $0x128] sm:$0xf]
        %v5479 = vld [vmem:[%s5403 + $0x12c] sm:$0xf]
        %v5480 = vld [vmem:[%s5403 + $0x130] sm:$0xf]
        %v5481 = vld [vmem:[%s5403 + $0x134] sm:$0xf]
        %v5482 = vld [vmem:[%s5403 + $0x138] sm:$0xf]
        %v5483 = vld [vmem:[%s5403 + $0x13c] sm:$0xf]
        %v5484 = vld [vmem:[%s5403 + $0x140] sm:$0xf]
        %v5485 = vld [vmem:[%s5403 + $0x144] sm:$0xf]
        %v5486 = vld [vmem:[%s5403 + $0x148] sm:$0xf]
        %v5487 = vld [vmem:[%s5403 + $0x14c] sm:$0xf]
        %v5488 = vld [vmem:[%s5403 + $0x150] sm:$0xf]
        %v5489 = vld [vmem:[%s5403 + $0x154] sm:$0xf]
        %v5490 = vld [vmem:[%s5403 + $0x158] sm:$0xf]
        %v5491 = vld [vmem:[%s5403 + $0x15c] sm:$0xf]
        %v5492 = vld [vmem:[%s5403 + $0x160] sm:$0xf]
        %v5493 = vld [vmem:[%s5403 + $0x164] sm:$0xf]
        %v5494 = vld [vmem:[%s5403 + $0x168] sm:$0xf]
        %v5495 = vld [vmem:[%s5403 + $0x16c] sm:$0xf]
        %v5496 = vld [vmem:[%s5403 + $0x170] sm:$0xf]
        %v5497 = vld [vmem:[%s5403 + $0x174] sm:$0xf]
        %v5498 = vld [vmem:[%s5403 + $0x178] sm:$0xf]
        %v5499 = vld [vmem:[%s5403 + $0x17c] sm:$0xf]
        %v5500 = vld [vmem:[%s5403 + $0x180] sm:$0xf]
        %v5501 = vld [vmem:[%s5403 + $0x184] sm:$0xf]
        %v5502 = vld [vmem:[%s5403 + $0x188] sm:$0xf]
        %v5503 = vld [vmem:[%s5403 + $0x18c] sm:$0xf]
        %v5504 = vld [vmem:[%s5403 + $0x190] sm:$0xf]
        %v5505 = vld [vmem:[%s5403 + $0x194] sm:$0xf]
        %v5506 = vld [vmem:[%s5403 + $0x198] sm:$0xf]
        %v5507 = vld [vmem:[%s5403 + $0x19c] sm:$0xf]
        %v5508 = vld [vmem:[%s5403 + $0x1a0] sm:$0xf]
        %v5509 = vld [vmem:[%s5403 + $0x1a4] sm:$0xf]
        %v5510 = vld [vmem:[%s5403 + $0x1a8] sm:$0xf]
        %v5511 = vld [vmem:[%s5403 + $0x1ac] sm:$0xf]
        %v5512 = vld [vmem:[%s5403 + $0x1b0] sm:$0xf]
        %v5513 = vld [vmem:[%s5403 + $0x1b4] sm:$0xf]
        %v5514 = vld [vmem:[%s5403 + $0x1b8] sm:$0xf]
        %v5515 = vld [vmem:[%s5403 + $0x1bc] sm:$0xf]
        %v5516 = vld [vmem:[%s5403 + $0x1c0] sm:$0xf]
        %v5517 = vld [vmem:[%s5403 + $0x1c4] sm:$0xf]
        %v5518 = vld [vmem:[%s5403 + $0x1c8] sm:$0xf]
        %v5519 = vld [vmem:[%s5403 + $0x1cc] sm:$0xf]
        %v5520 = vld [vmem:[%s5403 + $0x1d0] sm:$0xf]
        %v5521 = vld [vmem:[%s5403 + $0x1d4] sm:$0xf]
        %v5522 = vld [vmem:[%s5403 + $0x1d8] sm:$0xf]
        %v5523 = vld [vmem:[%s5403 + $0x1dc] sm:$0xf]
        %v5524 = vld [vmem:[%s5403 + $0x1e0] sm:$0xf]
        %v5525 = vld [vmem:[%s5403 + $0x1e4] sm:$0xf]
        %v5526 = vld [vmem:[%s5403 + $0x1e8] sm:$0xf]
        %v5527 = vld [vmem:[%s5403 + $0x1ec] sm:$0xf]
        %v5528 = vld [vmem:[%s5403 + $0x1f0] sm:$0xf]
        %v5529 = vld [vmem:[%s5403 + $0x1f4] sm:$0xf]
        %v5530 = vld [vmem:[%s5403 + $0x1f8] sm:$0xf]
        %v5531 = vld [vmem:[%s5403 + $0x1fc] sm:$0xf]
        %v5532 = vld [vmem:[%s5403 + $0x200] sm:$0xf]
        %v5533 = vld [vmem:[%s5403 + $0x204] sm:$0xf]
        %v5534 = vld [vmem:[%s5403 + $0x208] sm:$0xf]
        %v5535 = vld [vmem:[%s5403 + $0x20c] sm:$0xf]
        %v5536 = vld [vmem:[%s5403 + $0x210] sm:$0xf]
        %v5537 = vld [vmem:[%s5403 + $0x214] sm:$0xf]
        %v5538 = vld [vmem:[%s5403 + $0x218] sm:$0xf]
        %v5539 = vld [vmem:[%s5403 + $0x21c] sm:$0xf]
        %v5540 = vld [vmem:[%s5403 + $0x220] sm:$0xf]
        %v5541 = vld [vmem:[%s5403 + $0x224] sm:$0xf]
        %v5542 = vld [vmem:[%s5403 + $0x228] sm:$0xf]
        %v5543 = vld [vmem:[%s5403 + $0x22c] sm:$0xf]
        %v5544 = vld [vmem:[%s5403 + $0x230] sm:$0xf]
        %v5545 = vld [vmem:[%s5403 + $0x234] sm:$0xf]
        %v5546 = vld [vmem:[%s5403 + $0x238] sm:$0xf]
        %v5547 = vld [vmem:[%s5403 + $0x23c] sm:$0xf]
        %s5548 = scalar_lea.vmem [#allocation6], 2
        %v5549 = vld [vmem:[%s5548] sm:$0x1]
        %v5551 = vlaneseq
        %v5552 = vshrl.u32 %v5551, 7
        %v5553 = vsub.s32 0, %v5552
        %v5554 = vrot.slane %v5549, %v5553
        %v5700 = vunpack.c.l.b16 %v5404
        %v5701 = vunpack.c.l.b16 %v5405
        %v5702 = vunpack.c.l.b16 %v5406
        %v5703 = vunpack.c.l.b16 %v5407
        %v5704 = vunpack.c.l.b16 %v5408
        %v5705 = vunpack.c.l.b16 %v5409
        %v5706 = vunpack.c.l.b16 %v5410
        %v5707 = vunpack.c.l.b16 %v5411
        %v5708 = vunpack.c.l.b16 %v5412
        %v5709 = vunpack.c.l.b16 %v5413
        %v5710 = vunpack.c.l.b16 %v5414
        %v5711 = vunpack.c.l.b16 %v5415
        %v5712 = vunpack.c.l.b16 %v5416
        %v5713 = vunpack.c.l.b16 %v5417
        %v5714 = vunpack.c.l.b16 %v5418
        %v5715 = vunpack.c.l.b16 %v5419
        %v5716 = vunpack.c.l.b16 %v5420
        %v5717 = vunpack.c.l.b16 %v5421
        %v5718 = vunpack.c.l.b16 %v5422
        %v5719 = vunpack.c.l.b16 %v5423
        %v5720 = vunpack.c.l.b16 %v5424
        %v5721 = vunpack.c.l.b16 %v5425
        %v5722 = vunpack.c.l.b16 %v5426
        %v5723 = vunpack.c.l.b16 %v5427
        %v5724 = vunpack.c.l.b16 %v5428
        %v5725 = vunpack.c.l.b16 %v5429
        %v5726 = vunpack.c.l.b16 %v5430
        %v5727 = vunpack.c.l.b16 %v5431
        %v5728 = vunpack.c.l.b16 %v5432
        %v5729 = vunpack.c.l.b16 %v5433
        %v5730 = vunpack.c.l.b16 %v5434
        %v5731 = vunpack.c.l.b16 %v5435
        %v5732 = vunpack.c.l.b16 %v5436
        %v5733 = vunpack.c.l.b16 %v5437
        %v5734 = vunpack.c.l.b16 %v5438
        %v5735 = vunpack.c.l.b16 %v5439
        %v5736 = vunpack.c.l.b16 %v5440
        %v5737 = vunpack.c.l.b16 %v5441
        %v5738 = vunpack.c.l.b16 %v5442
        %v5739 = vunpack.c.l.b16 %v5443
        %v5740 = vunpack.c.l.b16 %v5444
        %v5741 = vunpack.c.l.b16 %v5445
        %v5742 = vunpack.c.l.b16 %v5446
        %v5743 = vunpack.c.l.b16 %v5447
        %v5744 = vunpack.c.l.b16 %v5448
        %v5745 = vunpack.c.l.b16 %v5449
        %v5746 = vunpack.c.l.b16 %v5450
        %v5747 = vunpack.c.l.b16 %v5451
        %v5748 = vunpack.c.l.b16 %v5452
        %v5749 = vunpack.c.l.b16 %v5453
        %v5750 = vunpack.c.l.b16 %v5454
        %v5751 = vunpack.c.l.b16 %v5455
        %v5752 = vunpack.c.l.b16 %v5456
        %v5753 = vunpack.c.l.b16 %v5457
        %v5754 = vunpack.c.l.b16 %v5458
        %v5755 = vunpack.c.l.b16 %v5459
        %v5756 = vunpack.c.l.b16 %v5460
        %v5757 = vunpack.c.l.b16 %v5461
        %v5758 = vunpack.c.l.b16 %v5462
        %v5759 = vunpack.c.l.b16 %v5463
        %v5760 = vunpack.c.l.b16 %v5464
        %v5761 = vunpack.c.l.b16 %v5465
        %v5762 = vunpack.c.l.b16 %v5466
        %v5763 = vunpack.c.l.b16 %v5467
        %v5764 = vunpack.c.l.b16 %v5468
        %v5765 = vunpack.c.l.b16 %v5469
        %v5766 = vunpack.c.l.b16 %v5470
        %v5767 = vunpack.c.l.b16 %v5471
        %v5768 = vunpack.c.l.b16 %v5472
        %v5769 = vunpack.c.l.b16 %v5473
        %v5770 = vunpack.c.l.b16 %v5474
        %v5771 = vunpack.c.l.b16 %v5475
        %v5772 = vunpack.c.l.b16 %v5476
        %v5773 = vunpack.c.l.b16 %v5477
        %v5774 = vunpack.c.l.b16 %v5478
        %v5775 = vunpack.c.l.b16 %v5479
        %v5776 = vunpack.c.l.b16 %v5480
        %v5777 = vunpack.c.l.b16 %v5481
        %v5778 = vunpack.c.l.b16 %v5482
        %v5779 = vunpack.c.l.b16 %v5483
        %v5780 = vunpack.c.l.b16 %v5484
        %v5781 = vunpack.c.l.b16 %v5485
        %v5782 = vunpack.c.l.b16 %v5486
        %v5783 = vunpack.c.l.b16 %v5487
        %v5784 = vunpack.c.l.b16 %v5488
        %v5785 = vunpack.c.l.b16 %v5489
        %v5786 = vunpack.c.l.b16 %v5490
        %v5787 = vunpack.c.l.b16 %v5491
        %v5788 = vunpack.c.l.b16 %v5492
        %v5789 = vunpack.c.l.b16 %v5493
        %v5790 = vunpack.c.l.b16 %v5494
        %v5791 = vunpack.c.l.b16 %v5495
        %v5792 = vunpack.c.l.b16 %v5496
        %v5793 = vunpack.c.l.b16 %v5497
        %v5794 = vunpack.c.l.b16 %v5498
        %v5795 = vunpack.c.l.b16 %v5499
        %v5796 = vunpack.c.l.b16 %v5500
        %v5797 = vunpack.c.l.b16 %v5501
        %v5798 = vunpack.c.l.b16 %v5502
        %v5799 = vunpack.c.l.b16 %v5503
        %v5800 = vunpack.c.l.b16 %v5504
        %v5801 = vunpack.c.l.b16 %v5505
        %v5802 = vunpack.c.l.b16 %v5506
        %v5803 = vunpack.c.l.b16 %v5507
        %v5804 = vunpack.c.l.b16 %v5508
        %v5805 = vunpack.c.l.b16 %v5509
        %v5806 = vunpack.c.l.b16 %v5510
        %v5807 = vunpack.c.l.b16 %v5511
        %v5808 = vunpack.c.l.b16 %v5512
        %v5809 = vunpack.c.l.b16 %v5513
        %v5810 = vunpack.c.l.b16 %v5514
        %v5811 = vunpack.c.l.b16 %v5515
        %v5812 = vunpack.c.l.b16 %v5516
        %v5813 = vunpack.c.l.b16 %v5517
        %v5814 = vunpack.c.l.b16 %v5518
        %v5815 = vunpack.c.l.b16 %v5519
        %v5816 = vunpack.c.l.b16 %v5520
        %v5817 = vunpack.c.l.b16 %v5521
        %v5818 = vunpack.c.l.b16 %v5522
        %v5819 = vunpack.c.l.b16 %v5523
        %v5820 = vunpack.c.l.b16 %v5524
        %v5821 = vunpack.c.l.b16 %v5525
        %v5822 = vunpack.c.l.b16 %v5526
        %v5823 = vunpack.c.l.b16 %v5527
        %v5824 = vunpack.c.l.b16 %v5528
        %v5825 = vunpack.c.l.b16 %v5529
        %v5826 = vunpack.c.l.b16 %v5530
        %v5827 = vunpack.c.l.b16 %v5531
        %v5828 = vunpack.c.l.b16 %v5532
        %v5829 = vunpack.c.l.b16 %v5533
        %v5830 = vunpack.c.l.b16 %v5534
        %v5831 = vunpack.c.l.b16 %v5535
        %v5832 = vunpack.c.l.b16 %v5536
        %v5833 = vunpack.c.l.b16 %v5537
        %v5834 = vunpack.c.l.b16 %v5538
        %v5835 = vunpack.c.l.b16 %v5539
        %v5836 = vunpack.c.l.b16 %v5540
        %v5837 = vunpack.c.l.b16 %v5541
        %v5838 = vunpack.c.l.b16 %v5542
        %v5839 = vunpack.c.l.b16 %v5543
        %v5840 = vunpack.c.l.b16 %v5544
        %v5841 = vunpack.c.l.b16 %v5545
        %v5842 = vunpack.c.l.b16 %v5546
        %v5843 = vunpack.c.l.b16 %v5547
        %v5844 = vpack.c.b16 %v5701, %v5700
        %v5845 = vpack.c.b16 %v5703, %v5702
        %v5846 = vpack.c.b16 %v5705, %v5704
        %v5847 = vpack.c.b16 %v5707, %v5706
        %v5848 = vpack.c.b16 %v5709, %v5708
        %v5849 = vpack.c.b16 %v5711, %v5710
        %v5850 = vpack.c.b16 %v5713, %v5712
        %v5851 = vpack.c.b16 %v5715, %v5714
        %v5852 = vpack.c.b16 %v5717, %v5716
        %v5853 = vpack.c.b16 %v5719, %v5718
        %v5854 = vpack.c.b16 %v5721, %v5720
        %v5855 = vpack.c.b16 %v5723, %v5722
        %v5856 = vpack.c.b16 %v5725, %v5724
        %v5857 = vpack.c.b16 %v5727, %v5726
        %v5858 = vpack.c.b16 %v5729, %v5728
        %v5859 = vpack.c.b16 %v5731, %v5730
        %v5860 = vpack.c.b16 %v5733, %v5732
        %v5861 = vpack.c.b16 %v5735, %v5734
        %v5862 = vpack.c.b16 %v5737, %v5736
        %v5863 = vpack.c.b16 %v5739, %v5738
        %v5864 = vpack.c.b16 %v5741, %v5740
        %v5865 = vpack.c.b16 %v5743, %v5742
        %v5866 = vpack.c.b16 %v5745, %v5744
        %v5867 = vpack.c.b16 %v5747, %v5746
        %v5868 = vpack.c.b16 %v5749, %v5748
        %v5869 = vpack.c.b16 %v5751, %v5750
        %v5870 = vpack.c.b16 %v5753, %v5752
        %v5871 = vpack.c.b16 %v5755, %v5754
        %v5872 = vpack.c.b16 %v5757, %v5756
        %v5873 = vpack.c.b16 %v5759, %v5758
        %v5874 = vpack.c.b16 %v5761, %v5760
        %v5875 = vpack.c.b16 %v5763, %v5762
        %v5876 = vpack.c.b16 %v5765, %v5764
        %v5877 = vpack.c.b16 %v5767, %v5766
        %v5878 = vpack.c.b16 %v5769, %v5768
        %v5879 = vpack.c.b16 %v5771, %v5770
        %v5880 = vpack.c.b16 %v5773, %v5772
        %v5881 = vpack.c.b16 %v5775, %v5774
        %v5882 = vpack.c.b16 %v5777, %v5776
        %v5883 = vpack.c.b16 %v5779, %v5778
        %v5884 = vpack.c.b16 %v5781, %v5780
        %v5885 = vpack.c.b16 %v5783, %v5782
        %v5886 = vpack.c.b16 %v5785, %v5784
        %v5887 = vpack.c.b16 %v5787, %v5786
        %v5888 = vpack.c.b16 %v5789, %v5788
        %v5889 = vpack.c.b16 %v5791, %v5790
        %v5890 = vpack.c.b16 %v5793, %v5792
        %v5891 = vpack.c.b16 %v5795, %v5794
        %v5892 = vpack.c.b16 %v5797, %v5796
        %v5893 = vpack.c.b16 %v5799, %v5798
        %v5894 = vpack.c.b16 %v5801, %v5800
        %v5895 = vpack.c.b16 %v5803, %v5802
        %v5896 = vpack.c.b16 %v5805, %v5804
        %v5897 = vpack.c.b16 %v5807, %v5806
        %v5898 = vpack.c.b16 %v5809, %v5808
        %v5899 = vpack.c.b16 %v5811, %v5810
        %v5900 = vpack.c.b16 %v5813, %v5812
        %v5901 = vpack.c.b16 %v5815, %v5814
        %v5902 = vpack.c.b16 %v5817, %v5816
        %v5903 = vpack.c.b16 %v5819, %v5818
        %v5904 = vpack.c.b16 %v5821, %v5820
        %v5905 = vpack.c.b16 %v5823, %v5822
        %v5906 = vpack.c.b16 %v5825, %v5824
        %v5907 = vpack.c.b16 %v5827, %v5826
        %v5908 = vpack.c.b16 %v5829, %v5828
        %v5909 = vpack.c.b16 %v5831, %v5830
        %v5910 = vpack.c.b16 %v5833, %v5832
        %v5911 = vpack.c.b16 %v5835, %v5834
        %v5912 = vpack.c.b16 %v5837, %v5836
        %v5913 = vpack.c.b16 %v5839, %v5838
        %v5914 = vpack.c.b16 %v5841, %v5840
        %v5915 = vpack.c.b16 %v5843, %v5842
        %5988 = vmatprep.subr.bf16.mxu0 0
        %5989 = vmatpush1.bf16.msra.mxu0 %v5844
        %5990 = vmatprep.subr.bf16.mxu0 0
        %5991 = vmatpush1.bf16.msra.mxu0 %v5845
        %5992 = vmatprep.subr.bf16.mxu0 0
        %5993 = vmatpush1.bf16.msra.mxu0 %v5846
        %5994 = vmatprep.subr.bf16.mxu0 0
        %5995 = vmatpush1.bf16.msra.mxu0 %v5847
        %5996 = vmatprep.subr.bf16.mxu0 0
        %5997 = vmatpush1.bf16.msra.mxu0 %v5848
        %5998 = vmatprep.subr.bf16.mxu0 0
        %5999 = vmatpush1.bf16.msra.mxu0 %v5849
        %6000 = vmatprep.subr.bf16.mxu0 0
        %6001 = vmatpush1.bf16.msra.mxu0 %v5850
        %6002 = vmatprep.subr.bf16.mxu0 0
        %6003 = vmatpush1.bf16.msra.mxu0 %v5851
        %6004 = vmatprep.subr.bf16.mxu0 0
        %6005 = vmatpush1.bf16.msra.mxu0 %v5852
        %6006 = vmatprep.subr.bf16.mxu0 0
        %6007 = vmatpush1.bf16.msra.mxu0 %v5853
        %6008 = vmatprep.subr.bf16.mxu0 0
        %6009 = vmatpush1.bf16.msra.mxu0 %v5854
        %6010 = vmatprep.subr.bf16.mxu0 0
        %6011 = vmatpush1.bf16.msra.mxu0 %v5855
        %6012 = vmatprep.subr.bf16.mxu0 0
        %6013 = vmatpush1.bf16.msra.mxu0 %v5856
        %6014 = vmatprep.subr.bf16.mxu0 0
        %6015 = vmatpush1.bf16.msra.mxu0 %v5857
        %6016 = vmatprep.subr.bf16.mxu0 0
        %6017 = vmatpush1.bf16.msra.mxu0 %v5858
        %6018 = vmatprep.subr.bf16.mxu0 0
        %6019 = vmatpush1.bf16.msra.mxu0 %v5859
        %6020 = vmatprep.mubr.bf16.mxu0 %v5319
        %6021 = vmatmul.mubr.bf16.gmra.mrb[0].mxu0 %v5295
        %v6022 = vpop.f32.mrb[0].mxu0
        %v6023 = vadd.f32 %v5554, %v6022
        %v6024 = vpop.f32.mrb[0].mxu0
        %v6025 = vpop.f32.mrb[0].mxu0
        %v6026 = vadd.f32 %v5554, %v6025
        %v6027 = vpop.f32.mrb[0].mxu0
        %6028 = vmatprep.mubr.bf16.mxu0 %v5320
        %6029 = vmatmul.mubr.bf16.gmra.mrb[0].mxu0 %v5296
        %v6030 = vpop.f32.mrb[0].mxu0
        %v6031 = vadd.f32 %v5554, %v6030
        %v6032 = vpop.f32.mrb[0].mxu0
        %v6033 = vpop.f32.mrb[0].mxu0
        %v6034 = vadd.f32 %v5554, %v6033
        %v6035 = vpop.f32.mrb[0].mxu0
        %6036 = vmatprep.mubr.bf16.mxu0 %v5321
        %6037 = vmatmul.mubr.bf16.gmra.mrb[0].mxu0 %v5297
        %v6038 = vpop.f32.mrb[0].mxu0
        %v6039 = vadd.f32 %v5554, %v6038
        %v6040 = vpop.f32.mrb[0].mxu0
        %v6041 = vpop.f32.mrb[0].mxu0
        %v6042 = vadd.f32 %v5554, %v6041
        %v6043 = vpop.f32.mrb[0].mxu0
        %6044 = vmatprep.mubr.bf16.mxu0 %v5322
        %6045 = vmatmul.mubr.bf16.gmra.mrb[0].mxu0 %v5298
        %v6046 = vpop.f32.mrb[0].mxu0
        %v6047 = vadd.f32 %v5554, %v6046
        %v6048 = vpop.f32.mrb[0].mxu0
        %v6049 = vpop.f32.mrb[0].mxu0
        %v6050 = vadd.f32 %v5554, %v6049
        %v6051 = vpop.f32.mrb[0].mxu0
        %6052 = vmatprep.mubr.bf16.mxu0 %v5323
        %6053 = vmatmul.mubr.bf16.gmra.mrb[0].mxu0 %v5299
        %v6054 = vpop.f32.mrb[0].mxu0
        %v6055 = vadd.f32 %v5554, %v6054
        %v6056 = vpop.f32.mrb[0].mxu0
        %v6057 = vpop.f32.mrb[0].mxu0
        %v6058 = vadd.f32 %v5554, %v6057
        %v6059 = vpop.f32.mrb[0].mxu0
        %6060 = vmatprep.mubr.bf16.mxu0 %v5324
        %6061 = vmatmul.mubr.bf16.gmra.mrb[0].mxu0 %v5300
        %v6062 = vpop.f32.mrb[0].mxu0
        %v6063 = vadd.f32 %v5554, %v6062
        %v6064 = vpop.f32.mrb[0].mxu0
        %v6065 = vpop.f32.mrb[0].mxu0
        %v6066 = vadd.f32 %v5554, %v6065
        %v6067 = vpop.f32.mrb[0].mxu0
        %6068 = vmatprep.mubr.bf16.mxu0 %v5325
        %6069 = vmatmul.mubr.bf16.gmra.mrb[0].mxu0 %v5301
        %v6070 = vpop.f32.mrb[0].mxu0
        %v6071 = vadd.f32 %v5554, %v6070
        %v6072 = vpop.f32.mrb[0].mxu0
        %v6073 = vpop.f32.mrb[0].mxu0
        %v6074 = vadd.f32 %v5554, %v6073
        %v6075 = vpop.f32.mrb[0].mxu0
        %6076 = vmatprep.mubr.bf16.mxu0 %v5326
        %6077 = vmatmul.mubr.bf16.gmra.mrb[0].mxu0 %v5302
        %v6078 = vpop.f32.mrb[0].mxu0
        %v6079 = vadd.f32 %v5554, %v6078
        %v6080 = vpop.f32.mrb[0].mxu0
        %v6081 = vpop.f32.mrb[0].mxu0
        %v6082 = vadd.f32 %v5554, %v6081
        %v6083 = vpop.f32.mrb[0].mxu0
        %6084 = vmatprep.mubr.bf16.mxu0 %v5327
        %6085 = vmatmul.mubr.bf16.gmra.mrb[0].mxu0 %v5303
        %v6086 = vpop.f32.mrb[0].mxu0
        %v6087 = vadd.f32 %v5554, %v6086
        %v6088 = vpop.f32.mrb[0].mxu0
        %v6089 = vpop.f32.mrb[0].mxu0
        %v6090 = vadd.f32 %v5554, %v6089
        %v6091 = vpop.f32.mrb[0].mxu0
        %6092 = vmatprep.mubr.bf16.mxu0 %v5328
        %6093 = vmatmul.mubr.bf16.gmra.mrb[0].mxu0 %v5304
        %v6094 = vpop.f32.mrb[0].mxu0
        %v6095 = vadd.f32 %v5554, %v6094
        %v6096 = vpop.f32.mrb[0].mxu0
        %v6097 = vpop.f32.mrb[0].mxu0
        %v6098 = vadd.f32 %v5554, %v6097
        %v6099 = vpop.f32.mrb[0].mxu0
        %6100 = vmatprep.mubr.bf16.mxu0 %v5329
        %6101 = vmatmul.mubr.bf16.gmra.mrb[0].mxu0 %v5305
        %v6102 = vpop.f32.mrb[0].mxu0
        %v6103 = vadd.f32 %v5554, %v6102
        %v6104 = vpop.f32.mrb[0].mxu0
        %v6105 = vpop.f32.mrb[0].mxu0
        %v6106 = vadd.f32 %v5554, %v6105
        %v6107 = vpop.f32.mrb[0].mxu0
        %6108 = vmatprep.mubr.bf16.mxu0 %v5330
        %6109 = vmatmul.mubr.bf16.gmra.mrb[0].mxu0 %v5306
        %v6110 = vpop.f32.mrb[0].mxu0
        %v6111 = vadd.f32 %v5554, %v6110
        %v6112 = vpop.f32.mrb[0].mxu0
        %v6113 = vpop.f32.mrb[0].mxu0
        %v6114 = vadd.f32 %v5554, %v6113
        %v6115 = vpop.f32.mrb[0].mxu0
        %6116 = vmatprep.mubr.bf16.mxu0 %v5331
        %6117 = vmatmul.mubr.bf16.gmra.mrb[0].mxu0 %v5307
        %v6118 = vpop.f32.mrb[0].mxu0
        %v6119 = vadd.f32 %v5554, %v6118
        %v6120 = vpop.f32.mrb[0].mxu0
        %v6121 = vpop.f32.mrb[0].mxu0
        %v6122 = vadd.f32 %v5554, %v6121
        %v6123 = vpop.f32.mrb[0].mxu0
        %6124 = vmatprep.mubr.bf16.mxu0 %v5332
        %6125 = vmatmul.mubr.bf16.gmra.mrb[0].mxu0 %v5308
        %v6126 = vpop.f32.mrb[0].mxu0
        %v6127 = vadd.f32 %v5554, %v6126
        %v6128 = vpop.f32.mrb[0].mxu0
        %v6129 = vpop.f32.mrb[0].mxu0
        %v6130 = vadd.f32 %v5554, %v6129
        %v6131 = vpop.f32.mrb[0].mxu0
        %6132 = vmatprep.mubr.bf16.mxu0 %v5333
        %6133 = vmatmul.mubr.bf16.gmra.mrb[0].mxu0 %v5309
        %v6134 = vpop.f32.mrb[0].mxu0
        %v6135 = vadd.f32 %v5554, %v6134
        %v6136 = vpop.f32.mrb[0].mxu0
        %v6137 = vpop.f32.mrb[0].mxu0
        %v6138 = vadd.f32 %v5554, %v6137
        %v6139 = vpop.f32.mrb[0].mxu0
        %6140 = vmatprep.mubr.bf16.mxu0 %v5334
        %6141 = vmatmul.mubr.bf16.gmra.mrb[0].mxu0 %v5310
        %v6142 = vpop.f32.mrb[0].mxu0
        %v6143 = vadd.f32 %v5554, %v6142
        %v6144 = vpop.f32.mrb[0].mxu0
        %v6145 = vpop.f32.mrb[0].mxu0
        %v6146 = vadd.f32 %v5554, %v6145
        %v6147 = vpop.f32.mrb[0].mxu0
        %6148 = vmatprep.mubr.bf16.mxu0 %v5335
        %6149 = vmatmul.mubr.bf16.gmra.mrb[0].mxu0 %v5311
        %v6150 = vpop.f32.mrb[0].mxu0
        %v6151 = vadd.f32 %v5554, %v6150
        %v6152 = vpop.f32.mrb[0].mxu0
        %v6153 = vpop.f32.mrb[0].mxu0
        %v6154 = vadd.f32 %v5554, %v6153
        %v6155 = vpop.f32.mrb[0].mxu0
        %6156 = vmatprep.mubr.bf16.mxu0 %v5336
        %6157 = vmatmul.mubr.bf16.gmra.mrb[0].mxu0 %v5312
        %v6158 = vpop.f32.mrb[0].mxu0
        %v6159 = vadd.f32 %v5554, %v6158
        %v6160 = vpop.f32.mrb[0].mxu0
        %v6161 = vpop.f32.mrb[0].mxu0
        %v6162 = vadd.f32 %v5554, %v6161
        %v6163 = vpop.f32.mrb[0].mxu0
        %6164 = vmatprep.mubr.bf16.mxu0 %v5337
        %6165 = vmatmul.mubr.bf16.gmra.mrb[0].mxu0 %v5313
        %v6166 = vpop.f32.mrb[0].mxu0
        %v6167 = vadd.f32 %v5554, %v6166
        %v6168 = vpop.f32.mrb[0].mxu0
        %v6169 = vpop.f32.mrb[0].mxu0
        %v6170 = vadd.f32 %v5554, %v6169
        %v6171 = vpop.f32.mrb[0].mxu0
        %6172 = vmatprep.mubr.bf16.mxu0 %v5338
        %6173 = vmatmul.mubr.bf16.gmra.mrb[0].mxu0 %v5314
        %v6174 = vpop.f32.mrb[0].mxu0
        %v6175 = vadd.f32 %v5554, %v6174
        %v6176 = vpop.f32.mrb[0].mxu0
        %v6177 = vpop.f32.mrb[0].mxu0
        %v6178 = vadd.f32 %v5554, %v6177
        %v6179 = vpop.f32.mrb[0].mxu0
        %6180 = vmatprep.mubr.bf16.mxu0 %v5339
        %6181 = vmatmul.mubr.bf16.gmra.mrb[0].mxu0 %v5315
        %v6182 = vpop.f32.mrb[0].mxu0
        %v6183 = vadd.f32 %v5554, %v6182
        %v6184 = vpop.f32.mrb[0].mxu0
        %v6185 = vpop.f32.mrb[0].mxu0
        %v6186 = vadd.f32 %v5554, %v6185
        %v6187 = vpop.f32.mrb[0].mxu0
        %6188 = vmatprep.mubr.bf16.mxu0 %v5340
        %6189 = vmatmul.mubr.bf16.gmra.mrb[0].mxu0 %v5316
        %v6190 = vpop.f32.mrb[0].mxu0
        %v6191 = vadd.f32 %v5554, %v6190
        %v6192 = vpop.f32.mrb[0].mxu0
        %v6193 = vpop.f32.mrb[0].mxu0
        %v6194 = vadd.f32 %v5554, %v6193
        %v6195 = vpop.f32.mrb[0].mxu0
        %6196 = vmatprep.mubr.bf16.mxu0 %v5341
        %6197 = vmatmul.mubr.bf16.gmra.mrb[0].mxu0 %v5317
        %v6198 = vpop.f32.mrb[0].mxu0
        %v6199 = vadd.f32 %v5554, %v6198
        %v6200 = vpop.f32.mrb[0].mxu0
        %v6201 = vpop.f32.mrb[0].mxu0
        %v6202 = vadd.f32 %v5554, %v6201
        %v6203 = vpop.f32.mrb[0].mxu0
        %6204 = vmatprep.mubr.bf16.mxu0 %v5342
        %6205 = vmatmul.mubr.bf16.gmra.mrb[0].mxu0 %v5318
        %v6206 = vpop.f32.mrb[0].mxu0
        %v6207 = vadd.f32 %v5554, %v6206
        %v6208 = vpop.f32.mrb[0].mxu0
        %v6209 = vpop.f32.mrb[0].mxu0
        %v6210 = vadd.f32 %v5554, %v6209
        %v6211 = vpop.f32.mrb[0].mxu0
        %6212 = vdwg.mxu0
        %6213 = vmatprep.subr.bf16.mxu0 0
        %6214 = vmatpush1.bf16.msra.mxu0 %v5860
        %6215 = vmatprep.subr.bf16.mxu0 0
        %6216 = vmatpush1.bf16.msra.mxu0 %v5861
        %6217 = vmatprep.subr.bf16.mxu0 0
        %6218 = vmatpush1.bf16.msra.mxu0 %v5862
        %6219 = vmatprep.subr.bf16.mxu0 0
        %6220 = vmatpush1.bf16.msra.mxu0 %v5863
        %6221 = vmatprep.subr.bf16.mxu0 0
        %6222 = vmatpush1.bf16.msra.mxu0 %v5864
        %6223 = vmatprep.subr.bf16.mxu0 0
        %6224 = vmatpush1.bf16.msra.mxu0 %v5865
        %6225 = vmatprep.subr.bf16.mxu0 0
        %6226 = vmatpush1.bf16.msra.mxu0 %v5866
        %6227 = vmatprep.subr.bf16.mxu0 0
        %6228 = vmatpush1.bf16.msra.mxu0 %v5867
        %6229 = vmatprep.subr.bf16.mxu0 0
        %6230 = vmatpush1.bf16.msra.mxu0 %v5868
        %6231 = vmatprep.subr.bf16.mxu0 0
        %6232 = vmatpush1.bf16.msra.mxu0 %v5869
        %6233 = vmatprep.subr.bf16.mxu0 0
        %6234 = vmatpush1.bf16.msra.mxu0 %v5870
        %6235 = vmatprep.subr.bf16.mxu0 0
        %6236 = vmatpush1.bf16.msra.mxu0 %v5871
        %6237 = vmatprep.subr.bf16.mxu0 0
        %6238 = vmatpush1.bf16.msra.mxu0 %v5872
        %6239 = vmatprep.subr.bf16.mxu0 0
        %6240 = vmatpush1.bf16.msra.mxu0 %v5873
        %6241 = vmatprep.subr.bf16.mxu0 0
        %6242 = vmatpush1.bf16.msra.mxu0 %v5874
        %6243 = vmatprep.subr.bf16.mxu0 0
        %6244 = vmatpush1.bf16.msra.mxu0 %v5875
        %6245 = vmatprep.mubr.bf16.mxu0 %v5301
        %6246 = vmatmul.mubr.bf16.gmra.mrb[0].mxu0 %v5343
        %v6247 = vpop.f32.mrb[0].mxu0
        %v6248 = vadd.f32 %v6023, %v6247
        %v6249 = vpop.f32.mrb[0].mxu0
        %v6250 = vpop.f32.mrb[0].mxu0
        %v6251 = vadd.f32 %v6026, %v6250
        %v6252 = vpop.f32.mrb[0].mxu0
        %6253 = vmatprep.mubr.bf16.mxu0 %v5302
        %6254 = vmatmul.mubr.bf16.gmra.mrb[0].mxu0 %v5344
        %v6255 = vpop.f32.mrb[0].mxu0
        %v6256 = vadd.f32 %v6031, %v6255
        %v6257 = vpop.f32.mrb[0].mxu0
        %v6258 = vpop.f32.mrb[0].mxu0
        %v6259 = vadd.f32 %v6034, %v6258
        %v6260 = vpop.f32.mrb[0].mxu0
        %6261 = vmatprep.mubr.bf16.mxu0 %v5303
        %6262 = vmatmul.mubr.bf16.gmra.mrb[0].mxu0 %v5345
        %v6263 = vpop.f32.mrb[0].mxu0
        %v6264 = vadd.f32 %v6039, %v6263
        %v6265 = vpop.f32.mrb[0].mxu0
        %v6266 = vpop.f32.mrb[0].mxu0
        %v6267 = vadd.f32 %v6042, %v6266
        %v6268 = vpop.f32.mrb[0].mxu0
        %6269 = vmatprep.mubr.bf16.mxu0 %v5304
        %6270 = vmatmul.mubr.bf16.gmra.mrb[0].mxu0 %v5346
        %v6271 = vpop.f32.mrb[0].mxu0
        %v6272 = vadd.f32 %v6047, %v6271
        %v6273 = vpop.f32.mrb[0].mxu0
        %v6274 = vpop.f32.mrb[0].mxu0
        %v6275 = vadd.f32 %v6050, %v6274
        %v6276 = vpop.f32.mrb[0].mxu0
        %6277 = vmatprep.mubr.bf16.mxu0 %v5305
        %6278 = vmatmul.mubr.bf16.gmra.mrb[0].mxu0 %v5347
        %v6279 = vpop.f32.mrb[0].mxu0
        %v6280 = vadd.f32 %v6055, %v6279
        %v6281 = vpop.f32.mrb[0].mxu0
        %v6282 = vpop.f32.mrb[0].mxu0
        %v6283 = vadd.f32 %v6058, %v6282
        %v6284 = vpop.f32.mrb[0].mxu0
        %6285 = vmatprep.mubr.bf16.mxu0 %v5306
        %6286 = vmatmul.mubr.bf16.gmra.mrb[0].mxu0 %v5348
        %v6287 = vpop.f32.mrb[0].mxu0
        %v6288 = vadd.f32 %v6063, %v6287
        %v6289 = vpop.f32.mrb[0].mxu0
        %v6290 = vpop.f32.mrb[0].mxu0
        %v6291 = vadd.f32 %v6066, %v6290
        %v6292 = vpop.f32.mrb[0].mxu0
        %6293 = vmatprep.mubr.bf16.mxu0 %v5307
        %6294 = vmatmul.mubr.bf16.gmra.mrb[0].mxu0 %v5349
        %v6295 = vpop.f32.mrb[0].mxu0
        %v6296 = vadd.f32 %v6071, %v6295
        %v6297 = vpop.f32.mrb[0].mxu0
        %v6298 = vpop.f32.mrb[0].mxu0
        %v6299 = vadd.f32 %v6074, %v6298
        %v6300 = vpop.f32.mrb[0].mxu0
        %6301 = vmatprep.mubr.bf16.mxu0 %v5308
        %6302 = vmatmul.mubr.bf16.gmra.mrb[0].mxu0 %v5350
        %v6303 = vpop.f32.mrb[0].mxu0
        %v6304 = vadd.f32 %v6079, %v6303
        %v6305 = vpop.f32.mrb[0].mxu0
        %v6306 = vpop.f32.mrb[0].mxu0
        %v6307 = vadd.f32 %v6082, %v6306
        %v6308 = vpop.f32.mrb[0].mxu0
        %6309 = vmatprep.mubr.bf16.mxu0 %v5309
        %6310 = vmatmul.mubr.bf16.gmra.mrb[0].mxu0 %v5351
        %v6311 = vpop.f32.mrb[0].mxu0
        %v6312 = vadd.f32 %v6087, %v6311
        %v6313 = vpop.f32.mrb[0].mxu0
        %v6314 = vpop.f32.mrb[0].mxu0
        %v6315 = vadd.f32 %v6090, %v6314
        %v6316 = vpop.f32.mrb[0].mxu0
        %6317 = vmatprep.mubr.bf16.mxu0 %v5310
        %6318 = vmatmul.mubr.bf16.gmra.mrb[0].mxu0 %v5352
        %v6319 = vpop.f32.mrb[0].mxu0
        %v6320 = vadd.f32 %v6095, %v6319
        %v6321 = vpop.f32.mrb[0].mxu0
        %v6322 = vpop.f32.mrb[0].mxu0
        %v6323 = vadd.f32 %v6098, %v6322
        %v6324 = vpop.f32.mrb[0].mxu0
        %6325 = vmatprep.mubr.bf16.mxu0 %v5311
        %6326 = vmatmul.mubr.bf16.gmra.mrb[0].mxu0 %v5353
        %v6327 = vpop.f32.mrb[0].mxu0
        %v6328 = vadd.f32 %v6103, %v6327
        %v6329 = vpop.f32.mrb[0].mxu0
        %v6330 = vpop.f32.mrb[0].mxu0
        %v6331 = vadd.f32 %v6106, %v6330
        %v6332 = vpop.f32.mrb[0].mxu0
        %6333 = vmatprep.mubr.bf16.mxu0 %v5312
        %6334 = vmatmul.mubr.bf16.gmra.mrb[0].mxu0 %v5354
        %v6335 = vpop.f32.mrb[0].mxu0
        %v6336 = vadd.f32 %v6111, %v6335
        %v6337 = vpop.f32.mrb[0].mxu0
        %v6338 = vpop.f32.mrb[0].mxu0
        %v6339 = vadd.f32 %v6114, %v6338
        %v6340 = vpop.f32.mrb[0].mxu0
        %6341 = vmatprep.mubr.bf16.mxu0 %v5313
        %6342 = vmatmul.mubr.bf16.gmra.mrb[0].mxu0 %v5355
        %v6343 = vpop.f32.mrb[0].mxu0
        %v6344 = vadd.f32 %v6119, %v6343
        %v6345 = vpop.f32.mrb[0].mxu0
        %v6346 = vpop.f32.mrb[0].mxu0
        %v6347 = vadd.f32 %v6122, %v6346
        %v6348 = vpop.f32.mrb[0].mxu0
        %6349 = vmatprep.mubr.bf16.mxu0 %v5314
        %6350 = vmatmul.mubr.bf16.gmra.mrb[0].mxu0 %v5356
        %v6351 = vpop.f32.mrb[0].mxu0
        %v6352 = vadd.f32 %v6127, %v6351
        %v6353 = vpop.f32.mrb[0].mxu0
        %v6354 = vpop.f32.mrb[0].mxu0
        %v6355 = vadd.f32 %v6130, %v6354
        %v6356 = vpop.f32.mrb[0].mxu0
        %6357 = vmatprep.mubr.bf16.mxu0 %v5315
        %6358 = vmatmul.mubr.bf16.gmra.mrb[0].mxu0 %v5357
        %v6359 = vpop.f32.mrb[0].mxu0
        %v6360 = vadd.f32 %v6135, %v6359
        %v6361 = vpop.f32.mrb[0].mxu0
        %v6362 = vpop.f32.mrb[0].mxu0
        %v6363 = vadd.f32 %v6138, %v6362
        %v6364 = vpop.f32.mrb[0].mxu0
        %6365 = vmatprep.mubr.bf16.mxu0 %v5316
        %6366 = vmatmul.mubr.bf16.gmra.mrb[0].mxu0 %v5358
        %v6367 = vpop.f32.mrb[0].mxu0
        %v6368 = vadd.f32 %v6143, %v6367
        %v6369 = vpop.f32.mrb[0].mxu0
        %v6370 = vpop.f32.mrb[0].mxu0
        %v6371 = vadd.f32 %v6146, %v6370
        %v6372 = vpop.f32.mrb[0].mxu0
        %6373 = vmatprep.mubr.bf16.mxu0 %v5317
        %6374 = vmatmul.mubr.bf16.gmra.mrb[0].mxu0 %v5359
        %v6375 = vpop.f32.mrb[0].mxu0
        %v6376 = vadd.f32 %v6151, %v6375
        %v6377 = vpop.f32.mrb[0].mxu0
        %v6378 = vpop.f32.mrb[0].mxu0
        %v6379 = vadd.f32 %v6154, %v6378
        %v6380 = vpop.f32.mrb[0].mxu0
        %6381 = vmatprep.mubr.bf16.mxu0 %v5318
        %6382 = vmatmul.mubr.bf16.gmra.mrb[0].mxu0 %v5360
        %v6383 = vpop.f32.mrb[0].mxu0
        %v6384 = vadd.f32 %v6159, %v6383
        %v6385 = vpop.f32.mrb[0].mxu0
        %v6386 = vpop.f32.mrb[0].mxu0
        %v6387 = vadd.f32 %v6162, %v6386
        %v6388 = vpop.f32.mrb[0].mxu0
        %6389 = vmatprep.mubr.bf16.mxu0 %v5367
        %6390 = vmatmul.mubr.bf16.gmra.mrb[0].mxu0 %v5361
        %v6391 = vpop.f32.mrb[0].mxu0
        %v6392 = vadd.f32 %v6167, %v6391
        %v6393 = vpop.f32.mrb[0].mxu0
        %v6394 = vpop.f32.mrb[0].mxu0
        %v6395 = vadd.f32 %v6170, %v6394
        %v6396 = vpop.f32.mrb[0].mxu0
        %6397 = vmatprep.mubr.bf16.mxu0 %v5368
        %6398 = vmatmul.mubr.bf16.gmra.mrb[0].mxu0 %v5362
        %v6399 = vpop.f32.mrb[0].mxu0
        %v6400 = vadd.f32 %v6175, %v6399
        %v6401 = vpop.f32.mrb[0].mxu0
        %v6402 = vpop.f32.mrb[0].mxu0
        %v6403 = vadd.f32 %v6178, %v6402
        %v6404 = vpop.f32.mrb[0].mxu0
        %6405 = vmatprep.mubr.bf16.mxu0 %v5369
        %6406 = vmatmul.mubr.bf16.gmra.mrb[0].mxu0 %v5363
        %v6407 = vpop.f32.mrb[0].mxu0
        %v6408 = vadd.f32 %v6183, %v6407
        %v6409 = vpop.f32.mrb[0].mxu0
        %v6410 = vpop.f32.mrb[0].mxu0
        %v6411 = vadd.f32 %v6186, %v6410
        %v6412 = vpop.f32.mrb[0].mxu0
        %6413 = vmatprep.mubr.bf16.mxu0 %v5370
        %6414 = vmatmul.mubr.bf16.gmra.mrb[0].mxu0 %v5364
        %v6415 = vpop.f32.mrb[0].mxu0
        %v6416 = vadd.f32 %v6191, %v6415
        %v6417 = vpop.f32.mrb[0].mxu0
        %v6418 = vpop.f32.mrb[0].mxu0
        %v6419 = vadd.f32 %v6194, %v6418
        %v6420 = vpop.f32.mrb[0].mxu0
        %6421 = vmatprep.mubr.bf16.mxu0 %v5371
        %6422 = vmatmul.mubr.bf16.gmra.mrb[0].mxu0 %v5365
        %v6423 = vpop.f32.mrb[0].mxu0
        %v6424 = vadd.f32 %v6199, %v6423
        %v6425 = vpop.f32.mrb[0].mxu0
        %v6426 = vpop.f32.mrb[0].mxu0
        %v6427 = vadd.f32 %v6202, %v6426
        %v6428 = vpop.f32.mrb[0].mxu0
        %6429 = vmatprep.mubr.bf16.mxu0 %v5372
        %6430 = vmatmul.mubr.bf16.gmra.mrb[0].mxu0 %v5366
        %v6431 = vpop.f32.mrb[0].mxu0
        %v6432 = vadd.f32 %v6207, %v6431
        %v6433 = vpop.f32.mrb[0].mxu0
        %v6434 = vpop.f32.mrb[0].mxu0
        %v6435 = vadd.f32 %v6210, %v6434
        %v6436 = vpop.f32.mrb[0].mxu0
        %6437 = vdwg.mxu0
        %6438 = vmatprep.subr.bf16.mxu0 0
        %6439 = vmatpush1.bf16.msra.mxu0 %v5876
        %6440 = vmatprep.subr.bf16.mxu0 0
        %6441 = vmatpush1.bf16.msra.mxu0 %v5877
        %6442 = vmatprep.subr.bf16.mxu0 0
        %6443 = vmatpush1.bf16.msra.mxu0 %v5878
        %6444 = vmatprep.subr.bf16.mxu0 0
        %6445 = vmatpush1.bf16.msra.mxu0 %v5879
        %6446 = vmatprep.subr.bf16.mxu0 0
        %6447 = vmatpush1.bf16.msra.mxu0 %v5880
        %6448 = vmatprep.subr.bf16.mxu0 0
        %6449 = vmatpush1.bf16.msra.mxu0 %v5881
        %6450 = vmatprep.subr.bf16.mxu0 0
        %6451 = vmatpush1.bf16.msra.mxu0 %v5882
        %6452 = vmatprep.subr.bf16.mxu0 0
        %6453 = vmatpush1.bf16.msra.mxu0 %v5883
        %6454 = vmatprep.subr.bf16.mxu0 0
        %6455 = vmatpush1.bf16.msra.mxu0 %v5884
        %6456 = vmatprep.subr.bf16.mxu0 0
        %6457 = vmatpush1.bf16.msra.mxu0 %v5885
        %6458 = vmatprep.subr.bf16.mxu0 0
        %6459 = vmatpush1.bf16.msra.mxu0 %v5886
        %6460 = vmatprep.subr.bf16.mxu0 0
        %6461 = vmatpush1.bf16.msra.mxu0 %v5887
        %6462 = vmatprep.subr.bf16.mxu0 0
        %6463 = vmatpush1.bf16.msra.mxu0 %v5888
        %6464 = vmatprep.subr.bf16.mxu0 0
        %6465 = vmatpush1.bf16.msra.mxu0 %v5889
        %6466 = vmatprep.subr.bf16.mxu0 0
        %6467 = vmatpush1.bf16.msra.mxu0 %v5890
        %6468 = vmatprep.subr.bf16.mxu0 0
        %6469 = vmatpush1.bf16.msra.mxu0 %v5891
        %6470 = vmatprep.mubr.bf16.mxu0 %v5349
        %6471 = vmatmul.mubr.bf16.gmra.mrb[0].mxu0 %v5325
        %v6472 = vpop.f32.mrb[0].mxu0
        %v6473 = vadd.f32 %v6248, %v6472
        %v6474 = vpop.f32.mrb[0].mxu0
        %v6475 = vpop.f32.mrb[0].mxu0
        %v6476 = vadd.f32 %v6251, %v6475
        %v6477 = vpop.f32.mrb[0].mxu0
        %6478 = vmatprep.mubr.bf16.mxu0 %v5350
        %6479 = vmatmul.mubr.bf16.gmra.mrb[0].mxu0 %v5326
        %v6480 = vpop.f32.mrb[0].mxu0
        %v6481 = vadd.f32 %v6256, %v6480
        %v6482 = vpop.f32.mrb[0].mxu0
        %v6483 = vpop.f32.mrb[0].mxu0
        %v6484 = vadd.f32 %v6259, %v6483
        %v6485 = vpop.f32.mrb[0].mxu0
        %6486 = vmatprep.mubr.bf16.mxu0 %v5351
        %6487 = vmatmul.mubr.bf16.gmra.mrb[0].mxu0 %v5327
        %v6488 = vpop.f32.mrb[0].mxu0
        %v6489 = vadd.f32 %v6264, %v6488
        %v6490 = vpop.f32.mrb[0].mxu0
        %v6491 = vpop.f32.mrb[0].mxu0
        %v6492 = vadd.f32 %v6267, %v6491
        %v6493 = vpop.f32.mrb[0].mxu0
        %6494 = vmatprep.mubr.bf16.mxu0 %v5352
        %6495 = vmatmul.mubr.bf16.gmra.mrb[0].mxu0 %v5328
        %v6496 = vpop.f32.mrb[0].mxu0
        %v6497 = vadd.f32 %v6272, %v6496
        %v6498 = vpop.f32.mrb[0].mxu0
        %v6499 = vpop.f32.mrb[0].mxu0
        %v6500 = vadd.f32 %v6275, %v6499
        %v6501 = vpop.f32.mrb[0].mxu0
        %6502 = vmatprep.mubr.bf16.mxu0 %v5353
        %6503 = vmatmul.mubr.bf16.gmra.mrb[0].mxu0 %v5329
        %v6504 = vpop.f32.mrb[0].mxu0
        %v6505 = vadd.f32 %v6280, %v6504
        %v6506 = vpop.f32.mrb[0].mxu0
        %v6507 = vpop.f32.mrb[0].mxu0
        %v6508 = vadd.f32 %v6283, %v6507
        %v6509 = vpop.f32.mrb[0].mxu0
        %6510 = vmatprep.mubr.bf16.mxu0 %v5354
        %6511 = vmatmul.mubr.bf16.gmra.mrb[0].mxu0 %v5330
        %v6512 = vpop.f32.mrb[0].mxu0
        %v6513 = vadd.f32 %v6288, %v6512
        %v6514 = vpop.f32.mrb[0].mxu0
        %v6515 = vpop.f32.mrb[0].mxu0
        %v6516 = vadd.f32 %v6291, %v6515
        %v6517 = vpop.f32.mrb[0].mxu0
        %6518 = vmatprep.mubr.bf16.mxu0 %v5355
        %6519 = vmatmul.mubr.bf16.gmra.mrb[0].mxu0 %v5331
        %v6520 = vpop.f32.mrb[0].mxu0
        %v6521 = vadd.f32 %v6296, %v6520
        %v6522 = vpop.f32.mrb[0].mxu0
        %v6523 = vpop.f32.mrb[0].mxu0
        %v6524 = vadd.f32 %v6299, %v6523
        %v6525 = vpop.f32.mrb[0].mxu0
        %6526 = vmatprep.mubr.bf16.mxu0 %v5356
        %6527 = vmatmul.mubr.bf16.gmra.mrb[0].mxu0 %v5332
        %v6528 = vpop.f32.mrb[0].mxu0
        %v6529 = vadd.f32 %v6304, %v6528
        %v6530 = vpop.f32.mrb[0].mxu0
        %v6531 = vpop.f32.mrb[0].mxu0
        %v6532 = vadd.f32 %v6307, %v6531
        %v6533 = vpop.f32.mrb[0].mxu0
        %6534 = vmatprep.mubr.bf16.mxu0 %v5357
        %6535 = vmatmul.mubr.bf16.gmra.mrb[0].mxu0 %v5333
        %v6536 = vpop.f32.mrb[0].mxu0
        %v6537 = vadd.f32 %v6312, %v6536
        %v6538 = vpop.f32.mrb[0].mxu0
        %v6539 = vpop.f32.mrb[0].mxu0
        %v6540 = vadd.f32 %v6315, %v6539
        %v6541 = vpop.f32.mrb[0].mxu0
        %6542 = vmatprep.mubr.bf16.mxu0 %v5358
        %6543 = vmatmul.mubr.bf16.gmra.mrb[0].mxu0 %v5334
        %v6544 = vpop.f32.mrb[0].mxu0
        %v6545 = vadd.f32 %v6320, %v6544
        %v6546 = vpop.f32.mrb[0].mxu0
        %v6547 = vpop.f32.mrb[0].mxu0
        %v6548 = vadd.f32 %v6323, %v6547
        %v6549 = vpop.f32.mrb[0].mxu0
        %6550 = vmatprep.mubr.bf16.mxu0 %v5359
        %6551 = vmatmul.mubr.bf16.gmra.mrb[0].mxu0 %v5335
        %v6552 = vpop.f32.mrb[0].mxu0
        %v6553 = vadd.f32 %v6328, %v6552
        %v6554 = vpop.f32.mrb[0].mxu0
        %v6555 = vpop.f32.mrb[0].mxu0
        %v6556 = vadd.f32 %v6331, %v6555
        %v6557 = vpop.f32.mrb[0].mxu0
        %6558 = vmatprep.mubr.bf16.mxu0 %v5360
        %6559 = vmatmul.mubr.bf16.gmra.mrb[0].mxu0 %v5336
        %v6560 = vpop.f32.mrb[0].mxu0
        %v6561 = vadd.f32 %v6336, %v6560
        %v6562 = vpop.f32.mrb[0].mxu0
        %v6563 = vpop.f32.mrb[0].mxu0
        %v6564 = vadd.f32 %v6339, %v6563
        %v6565 = vpop.f32.mrb[0].mxu0
        %6566 = vmatprep.mubr.bf16.mxu0 %v5361
        %6567 = vmatmul.mubr.bf16.gmra.mrb[0].mxu0 %v5337
        %v6568 = vpop.f32.mrb[0].mxu0
        %v6569 = vadd.f32 %v6344, %v6568
        %v6570 = vpop.f32.mrb[0].mxu0
        %v6571 = vpop.f32.mrb[0].mxu0
        %v6572 = vadd.f32 %v6347, %v6571
        %v6573 = vpop.f32.mrb[0].mxu0
        %6574 = vmatprep.mubr.bf16.mxu0 %v5362
        %6575 = vmatmul.mubr.bf16.gmra.mrb[0].mxu0 %v5338
        %v6576 = vpop.f32.mrb[0].mxu0
        %v6577 = vadd.f32 %v6352, %v6576
        %v6578 = vpop.f32.mrb[0].mxu0
        %v6579 = vpop.f32.mrb[0].mxu0
        %v6580 = vadd.f32 %v6355, %v6579
        %v6581 = vpop.f32.mrb[0].mxu0
        %6582 = vmatprep.mubr.bf16.mxu0 %v5363
        %6583 = vmatmul.mubr.bf16.gmra.mrb[0].mxu0 %v5339
        %v6584 = vpop.f32.mrb[0].mxu0
        %v6585 = vadd.f32 %v6360, %v6584
        %v6586 = vpop.f32.mrb[0].mxu0
        %v6587 = vpop.f32.mrb[0].mxu0
        %v6588 = vadd.f32 %v6363, %v6587
        %v6589 = vpop.f32.mrb[0].mxu0
        %6590 = vmatprep.mubr.bf16.mxu0 %v5364
        %6591 = vmatmul.mubr.bf16.gmra.mrb[0].mxu0 %v5340
        %v6592 = vpop.f32.mrb[0].mxu0
        %v6593 = vadd.f32 %v6368, %v6592
        %v6594 = vpop.f32.mrb[0].mxu0
        %v6595 = vpop.f32.mrb[0].mxu0
        %v6596 = vadd.f32 %v6371, %v6595
        %v6597 = vpop.f32.mrb[0].mxu0
        %6598 = vmatprep.mubr.bf16.mxu0 %v5365
        %6599 = vmatmul.mubr.bf16.gmra.mrb[0].mxu0 %v5341
        %v6600 = vpop.f32.mrb[0].mxu0
        %v6601 = vadd.f32 %v6376, %v6600
        %v6602 = vpop.f32.mrb[0].mxu0
        %v6603 = vpop.f32.mrb[0].mxu0
        %v6604 = vadd.f32 %v6379, %v6603
        %v6605 = vpop.f32.mrb[0].mxu0
        %6606 = vmatprep.mubr.bf16.mxu0 %v5366
        %6607 = vmatmul.mubr.bf16.gmra.mrb[0].mxu0 %v5342
        %v6608 = vpop.f32.mrb[0].mxu0
        %v6609 = vadd.f32 %v6384, %v6608
        %v6610 = vpop.f32.mrb[0].mxu0
        %v6611 = vpop.f32.mrb[0].mxu0
        %v6612 = vadd.f32 %v6387, %v6611
        %v6613 = vpop.f32.mrb[0].mxu0
        %6614 = vmatprep.mubr.bf16.mxu0 %v5379
        %6615 = vmatmul.mubr.bf16.gmra.mrb[0].mxu0 %v5373
        %v6616 = vpop.f32.mrb[0].mxu0
        %v6617 = vadd.f32 %v6392, %v6616
        %v6618 = vpop.f32.mrb[0].mxu0
        %v6619 = vpop.f32.mrb[0].mxu0
        %v6620 = vadd.f32 %v6395, %v6619
        %v6621 = vpop.f32.mrb[0].mxu0
        %6622 = vmatprep.mubr.bf16.mxu0 %v5380
        %6623 = vmatmul.mubr.bf16.gmra.mrb[0].mxu0 %v5374
        %v6624 = vpop.f32.mrb[0].mxu0
        %v6625 = vadd.f32 %v6400, %v6624
        %v6626 = vpop.f32.mrb[0].mxu0
        %v6627 = vpop.f32.mrb[0].mxu0
        %v6628 = vadd.f32 %v6403, %v6627
        %v6629 = vpop.f32.mrb[0].mxu0
        %6630 = vmatprep.mubr.bf16.mxu0 %v5381
        %6631 = vmatmul.mubr.bf16.gmra.mrb[0].mxu0 %v5375
        %v6632 = vpop.f32.mrb[0].mxu0
        %v6633 = vadd.f32 %v6408, %v6632
        %v6634 = vpop.f32.mrb[0].mxu0
        %v6635 = vpop.f32.mrb[0].mxu0
        %v6636 = vadd.f32 %v6411, %v6635
        %v6637 = vpop.f32.mrb[0].mxu0
        %6638 = vmatprep.mubr.bf16.mxu0 %v5382
        %6639 = vmatmul.mubr.bf16.gmra.mrb[0].mxu0 %v5376
        %v6640 = vpop.f32.mrb[0].mxu0
        %v6641 = vadd.f32 %v6416, %v6640
        %v6642 = vpop.f32.mrb[0].mxu0
        %v6643 = vpop.f32.mrb[0].mxu0
        %v6644 = vadd.f32 %v6419, %v6643
        %v6645 = vpop.f32.mrb[0].mxu0
        %6646 = vmatprep.mubr.bf16.mxu0 %v5383
        %6647 = vmatmul.mubr.bf16.gmra.mrb[0].mxu0 %v5377
        %v6648 = vpop.f32.mrb[0].mxu0
        %v6649 = vadd.f32 %v6424, %v6648
        %v6650 = vpop.f32.mrb[0].mxu0
        %v6651 = vpop.f32.mrb[0].mxu0
        %v6652 = vadd.f32 %v6427, %v6651
        %v6653 = vpop.f32.mrb[0].mxu0
        %6654 = vmatprep.mubr.bf16.mxu0 %v5384
        %6655 = vmatmul.mubr.bf16.gmra.mrb[0].mxu0 %v5378
        %v6656 = vpop.f32.mrb[0].mxu0
        %v6657 = vadd.f32 %v6432, %v6656
        %v6658 = vpop.f32.mrb[0].mxu0
        %v6659 = vpop.f32.mrb[0].mxu0
        %v6660 = vadd.f32 %v6435, %v6659
        %v6661 = vpop.f32.mrb[0].mxu0
        %6662 = vdwg.mxu0
        %6663 = vmatprep.subr.bf16.mxu0 0
        %6664 = vmatpush1.bf16.msra.mxu0 %v5892
        %6665 = vmatprep.subr.bf16.mxu0 0
        %6666 = vmatpush1.bf16.msra.mxu0 %v5893
        %6667 = vmatprep.subr.bf16.mxu0 0
        %6668 = vmatpush1.bf16.msra.mxu0 %v5894
        %6669 = vmatprep.subr.bf16.mxu0 0
        %6670 = vmatpush1.bf16.msra.mxu0 %v5895
        %6671 = vmatprep.subr.bf16.mxu0 0
        %6672 = vmatpush1.bf16.msra.mxu0 %v5896
        %6673 = vmatprep.subr.bf16.mxu0 0
        %6674 = vmatpush1.bf16.msra.mxu0 %v5897
        %6675 = vmatprep.subr.bf16.mxu0 0
        %6676 = vmatpush1.bf16.msra.mxu0 %v5898
        %6677 = vmatprep.subr.bf16.mxu0 0
        %6678 = vmatpush1.bf16.msra.mxu0 %v5899
        %6679 = vmatprep.subr.bf16.mxu0 0
        %6680 = vmatpush1.bf16.msra.mxu0 %v5900
        %6681 = vmatprep.subr.bf16.mxu0 0
        %6682 = vmatpush1.bf16.msra.mxu0 %v5901
        %6683 = vmatprep.subr.bf16.mxu0 0
        %6684 = vmatpush1.bf16.msra.mxu0 %v5902
        %6685 = vmatprep.subr.bf16.mxu0 0
        %6686 = vmatpush1.bf16.msra.mxu0 %v5903
        %6687 = vmatprep.subr.bf16.mxu0 0
        %6688 = vmatpush1.bf16.msra.mxu0 %v5904
        %6689 = vmatprep.subr.bf16.mxu0 0
        %6690 = vmatpush1.bf16.msra.mxu0 %v5905
        %6691 = vmatprep.subr.bf16.mxu0 0
        %6692 = vmatpush1.bf16.msra.mxu0 %v5906
        %6693 = vmatprep.subr.bf16.mxu0 0
        %6694 = vmatpush1.bf16.msra.mxu0 %v5907
        %6695 = vmatprep.mubr.bf16.mxu0 %v5331
        %6696 = vmatmul.mubr.bf16.gmra.mrb[0].mxu0 %v5307
        %v6697 = vpop.f32.mrb[0].mxu0
        %v6698 = vadd.f32 %v6473, %v6697
        %v6699 = vpop.f32.mrb[0].mxu0
        %v6700 = vpop.f32.mrb[0].mxu0
        %v6701 = vadd.f32 %v6476, %v6700
        %v6702 = vpop.f32.mrb[0].mxu0
        %6703 = vmatprep.mubr.bf16.mxu0 %v5332
        %6704 = vmatmul.mubr.bf16.gmra.mrb[0].mxu0 %v5308
        %v6705 = vpop.f32.mrb[0].mxu0
        %v6706 = vadd.f32 %v6481, %v6705
        %v6707 = vpop.f32.mrb[0].mxu0
        %v6708 = vpop.f32.mrb[0].mxu0
        %v6709 = vadd.f32 %v6484, %v6708
        %v6710 = vpop.f32.mrb[0].mxu0
        %6711 = vmatprep.mubr.bf16.mxu0 %v5333
        %6712 = vmatmul.mubr.bf16.gmra.mrb[0].mxu0 %v5309
        %v6713 = vpop.f32.mrb[0].mxu0
        %v6714 = vadd.f32 %v6489, %v6713
        %v6715 = vpop.f32.mrb[0].mxu0
        %v6716 = vpop.f32.mrb[0].mxu0
        %v6717 = vadd.f32 %v6492, %v6716
        %v6718 = vpop.f32.mrb[0].mxu0
        %6719 = vmatprep.mubr.bf16.mxu0 %v5334
        %6720 = vmatmul.mubr.bf16.gmra.mrb[0].mxu0 %v5310
        %v6721 = vpop.f32.mrb[0].mxu0
        %v6722 = vadd.f32 %v6497, %v6721
        %v6723 = vpop.f32.mrb[0].mxu0
        %v6724 = vpop.f32.mrb[0].mxu0
        %v6725 = vadd.f32 %v6500, %v6724
        %v6726 = vpop.f32.mrb[0].mxu0
        %6727 = vmatprep.mubr.bf16.mxu0 %v5335
        %6728 = vmatmul.mubr.bf16.gmra.mrb[0].mxu0 %v5311
        %v6729 = vpop.f32.mrb[0].mxu0
        %v6730 = vadd.f32 %v6505, %v6729
        %v6731 = vpop.f32.mrb[0].mxu0
        %v6732 = vpop.f32.mrb[0].mxu0
        %v6733 = vadd.f32 %v6508, %v6732
        %v6734 = vpop.f32.mrb[0].mxu0
        %6735 = vmatprep.mubr.bf16.mxu0 %v5336
        %6736 = vmatmul.mubr.bf16.gmra.mrb[0].mxu0 %v5312
        %v6737 = vpop.f32.mrb[0].mxu0
        %v6738 = vadd.f32 %v6513, %v6737
        %v6739 = vpop.f32.mrb[0].mxu0
        %v6740 = vpop.f32.mrb[0].mxu0
        %v6741 = vadd.f32 %v6516, %v6740
        %v6742 = vpop.f32.mrb[0].mxu0
        %6743 = vmatprep.mubr.bf16.mxu0 %v5337
        %6744 = vmatmul.mubr.bf16.gmra.mrb[0].mxu0 %v5313
        %v6745 = vpop.f32.mrb[0].mxu0
        %v6746 = vadd.f32 %v6521, %v6745
        %v6747 = vpop.f32.mrb[0].mxu0
        %v6748 = vpop.f32.mrb[0].mxu0
        %v6749 = vadd.f32 %v6524, %v6748
        %v6750 = vpop.f32.mrb[0].mxu0
        %6751 = vmatprep.mubr.bf16.mxu0 %v5338
        %6752 = vmatmul.mubr.bf16.gmra.mrb[0].mxu0 %v5314
        %v6753 = vpop.f32.mrb[0].mxu0
        %v6754 = vadd.f32 %v6529, %v6753
        %v6755 = vpop.f32.mrb[0].mxu0
        %v6756 = vpop.f32.mrb[0].mxu0
        %v6757 = vadd.f32 %v6532, %v6756
        %v6758 = vpop.f32.mrb[0].mxu0
        %6759 = vmatprep.mubr.bf16.mxu0 %v5339
        %6760 = vmatmul.mubr.bf16.gmra.mrb[0].mxu0 %v5315
        %v6761 = vpop.f32.mrb[0].mxu0
        %v6762 = vadd.f32 %v6537, %v6761
        %v6763 = vpop.f32.mrb[0].mxu0
        %v6764 = vpop.f32.mrb[0].mxu0
        %v6765 = vadd.f32 %v6540, %v6764
        %v6766 = vpop.f32.mrb[0].mxu0
        %6767 = vmatprep.mubr.bf16.mxu0 %v5340
        %6768 = vmatmul.mubr.bf16.gmra.mrb[0].mxu0 %v5316
        %v6769 = vpop.f32.mrb[0].mxu0
        %v6770 = vadd.f32 %v6545, %v6769
        %v6771 = vpop.f32.mrb[0].mxu0
        %v6772 = vpop.f32.mrb[0].mxu0
        %v6773 = vadd.f32 %v6548, %v6772
        %v6774 = vpop.f32.mrb[0].mxu0
        %6775 = vmatprep.mubr.bf16.mxu0 %v5341
        %6776 = vmatmul.mubr.bf16.gmra.mrb[0].mxu0 %v5317
        %v6777 = vpop.f32.mrb[0].mxu0
        %v6778 = vadd.f32 %v6553, %v6777
        %v6779 = vpop.f32.mrb[0].mxu0
        %v6780 = vpop.f32.mrb[0].mxu0
        %v6781 = vadd.f32 %v6556, %v6780
        %v6782 = vpop.f32.mrb[0].mxu0
        %6783 = vmatprep.mubr.bf16.mxu0 %v5342
        %6784 = vmatmul.mubr.bf16.gmra.mrb[0].mxu0 %v5318
        %v6785 = vpop.f32.mrb[0].mxu0
        %v6786 = vadd.f32 %v6561, %v6785
        %v6787 = vpop.f32.mrb[0].mxu0
        %v6788 = vpop.f32.mrb[0].mxu0
        %v6789 = vadd.f32 %v6564, %v6788
        %v6790 = vpop.f32.mrb[0].mxu0
        %6791 = vmatprep.mubr.bf16.mxu0 %v5373
        %6792 = vmatmul.mubr.bf16.gmra.mrb[0].mxu0 %v5367
        %v6793 = vpop.f32.mrb[0].mxu0
        %v6794 = vadd.f32 %v6569, %v6793
        %v6795 = vpop.f32.mrb[0].mxu0
        %v6796 = vpop.f32.mrb[0].mxu0
        %v6797 = vadd.f32 %v6572, %v6796
        %v6798 = vpop.f32.mrb[0].mxu0
        %6799 = vmatprep.mubr.bf16.mxu0 %v5374
        %6800 = vmatmul.mubr.bf16.gmra.mrb[0].mxu0 %v5368
        %v6801 = vpop.f32.mrb[0].mxu0
        %v6802 = vadd.f32 %v6577, %v6801
        %v6803 = vpop.f32.mrb[0].mxu0
        %v6804 = vpop.f32.mrb[0].mxu0
        %v6805 = vadd.f32 %v6580, %v6804
        %v6806 = vpop.f32.mrb[0].mxu0
        %6807 = vmatprep.mubr.bf16.mxu0 %v5375
        %6808 = vmatmul.mubr.bf16.gmra.mrb[0].mxu0 %v5369
        %v6809 = vpop.f32.mrb[0].mxu0
        %v6810 = vadd.f32 %v6585, %v6809
        %v6811 = vpop.f32.mrb[0].mxu0
        %v6812 = vpop.f32.mrb[0].mxu0
        %v6813 = vadd.f32 %v6588, %v6812
        %v6814 = vpop.f32.mrb[0].mxu0
        %6815 = vmatprep.mubr.bf16.mxu0 %v5376
        %6816 = vmatmul.mubr.bf16.gmra.mrb[0].mxu0 %v5370
        %v6817 = vpop.f32.mrb[0].mxu0
        %v6818 = vadd.f32 %v6593, %v6817
        %v6819 = vpop.f32.mrb[0].mxu0
        %v6820 = vpop.f32.mrb[0].mxu0
        %v6821 = vadd.f32 %v6596, %v6820
        %v6822 = vpop.f32.mrb[0].mxu0
        %6823 = vmatprep.mubr.bf16.mxu0 %v5377
        %6824 = vmatmul.mubr.bf16.gmra.mrb[0].mxu0 %v5371
        %v6825 = vpop.f32.mrb[0].mxu0
        %v6826 = vadd.f32 %v6601, %v6825
        %v6827 = vpop.f32.mrb[0].mxu0
        %v6828 = vpop.f32.mrb[0].mxu0
        %v6829 = vadd.f32 %v6604, %v6828
        %v6830 = vpop.f32.mrb[0].mxu0
        %6831 = vmatprep.mubr.bf16.mxu0 %v5378
        %6832 = vmatmul.mubr.bf16.gmra.mrb[0].mxu0 %v5372
        %v6833 = vpop.f32.mrb[0].mxu0
        %v6834 = vadd.f32 %v6609, %v6833
        %v6835 = vpop.f32.mrb[0].mxu0
        %v6836 = vpop.f32.mrb[0].mxu0
        %v6837 = vadd.f32 %v6612, %v6836
        %v6838 = vpop.f32.mrb[0].mxu0
        %6839 = vmatprep.mubr.bf16.mxu0 %v5391
        %6840 = vmatmul.mubr.bf16.gmra.mrb[0].mxu0 %v5385
        %v6841 = vpop.f32.mrb[0].mxu0
        %v6842 = vadd.f32 %v6617, %v6841
        %v6843 = vpop.f32.mrb[0].mxu0
        %v6844 = vpop.f32.mrb[0].mxu0
        %v6845 = vadd.f32 %v6620, %v6844
        %v6846 = vpop.f32.mrb[0].mxu0
        %6847 = vmatprep.mubr.bf16.mxu0 %v5392
        %6848 = vmatmul.mubr.bf16.gmra.mrb[0].mxu0 %v5386
        %v6849 = vpop.f32.mrb[0].mxu0
        %v6850 = vadd.f32 %v6625, %v6849
        %v6851 = vpop.f32.mrb[0].mxu0
        %v6852 = vpop.f32.mrb[0].mxu0
        %v6853 = vadd.f32 %v6628, %v6852
        %v6854 = vpop.f32.mrb[0].mxu0
        %6855 = vmatprep.mubr.bf16.mxu0 %v5393
        %6856 = vmatmul.mubr.bf16.gmra.mrb[0].mxu0 %v5387
        %v6857 = vpop.f32.mrb[0].mxu0
        %v6858 = vadd.f32 %v6633, %v6857
        %v6859 = vpop.f32.mrb[0].mxu0
        %v6860 = vpop.f32.mrb[0].mxu0
        %v6861 = vadd.f32 %v6636, %v6860
        %v6862 = vpop.f32.mrb[0].mxu0
        %6863 = vmatprep.mubr.bf16.mxu0 %v5394
        %6864 = vmatmul.mubr.bf16.gmra.mrb[0].mxu0 %v5388
        %v6865 = vpop.f32.mrb[0].mxu0
        %v6866 = vadd.f32 %v6641, %v6865
        %v6867 = vpop.f32.mrb[0].mxu0
        %v6868 = vpop.f32.mrb[0].mxu0
        %v6869 = vadd.f32 %v6644, %v6868
        %v6870 = vpop.f32.mrb[0].mxu0
        %6871 = vmatprep.mubr.bf16.mxu0 %v5395
        %6872 = vmatmul.mubr.bf16.gmra.mrb[0].mxu0 %v5389
        %v6873 = vpop.f32.mrb[0].mxu0
        %v6874 = vadd.f32 %v6649, %v6873
        %v6875 = vpop.f32.mrb[0].mxu0
        %v6876 = vpop.f32.mrb[0].mxu0
        %v6877 = vadd.f32 %v6652, %v6876
        %v6878 = vpop.f32.mrb[0].mxu0
        %6879 = vmatprep.mubr.bf16.mxu0 %v5396
        %6880 = vmatmul.mubr.bf16.gmra.mrb[0].mxu0 %v5390
        %v6881 = vpop.f32.mrb[0].mxu0
        %v6882 = vadd.f32 %v6657, %v6881
        %v6883 = vpop.f32.mrb[0].mxu0
        %v6884 = vpop.f32.mrb[0].mxu0
        %v6885 = vadd.f32 %v6660, %v6884
        %v6886 = vpop.f32.mrb[0].mxu0
        %6887 = vdwg.mxu0
        %6888 = vmatprep.subr.bf16.mxu0 0
        %6889 = vmatpush1.bf16.msra.mxu0 %v5908
        %6890 = vmatprep.subr.bf16.mxu0 0
        %6891 = vmatpush1.bf16.msra.mxu0 %v5909
        %6892 = vmatprep.subr.bf16.mxu0 0
        %6893 = vmatpush1.bf16.msra.mxu0 %v5910
        %6894 = vmatprep.subr.bf16.mxu0 0
        %6895 = vmatpush1.bf16.msra.mxu0 %v5911
        %6896 = vmatprep.subr.bf16.mxu0 0
        %6897 = vmatpush1.bf16.msra.mxu0 %v5912
        %6898 = vmatprep.subr.bf16.mxu0 0
        %6899 = vmatpush1.bf16.msra.mxu0 %v5913
        %6900 = vmatprep.subr.bf16.mxu0 0
        %6901 = vmatpush1.bf16.msra.mxu0 %v5914
        %6902 = vmatprep.subr.bf16.mxu0 0
        %6903 = vmatpush1.bf16.msra.mxu0 %v5915
        %6904 = vmatprep.subr.bf16.mxu0 0
        %6905 = vmatpush1.bf16.msra.mxu0 0
        %6906 = vmatprep.subr.bf16.mxu0 0
        %6907 = vmatpush1.bf16.msra.mxu0 0
        %6908 = vmatprep.subr.bf16.mxu0 0
        %6909 = vmatpush1.bf16.msra.mxu0 0
        %6910 = vmatprep.subr.bf16.mxu0 0
        %6911 = vmatpush1.bf16.msra.mxu0 0
        %6912 = vmatprep.subr.bf16.mxu0 0
        %6913 = vmatpush1.bf16.msra.mxu0 0
        %6914 = vmatprep.subr.bf16.mxu0 0
        %6915 = vmatpush1.bf16.msra.mxu0 0
        %6916 = vmatprep.subr.bf16.mxu0 0
        %6917 = vmatpush1.bf16.msra.mxu0 0
        %6918 = vmatprep.subr.bf16.mxu0 0
        %6919 = vmatpush1.bf16.msra.mxu0 0
        %6920 = vmatprep.mubr.bf16.mxu0 0
        %6921 = vmatmul.mubr.bf16.gmra.mrb[0].mxu0 %v5355
        %v6922 = vpop.f32.mrb[0].mxu0
        %v6923 = vadd.f32 %v6698, %v6922
        %v6924 = vpop.f32.mrb[0].mxu0
        %v6925 = vpop.f32.mrb[0].mxu0
        %v6926 = vadd.f32 %v6701, %v6925
        %v6927 = vpop.f32.mrb[0].mxu0
        %6928 = vmatprep.mubr.bf16.mxu0 0
        %6929 = vmatmul.mubr.bf16.gmra.mrb[0].mxu0 %v5356
        %v6930 = vpop.f32.mrb[0].mxu0
        %v6931 = vadd.f32 %v6706, %v6930
        %v6932 = vpop.f32.mrb[0].mxu0
        %v6933 = vpop.f32.mrb[0].mxu0
        %v6934 = vadd.f32 %v6709, %v6933
        %v6935 = vpop.f32.mrb[0].mxu0
        %6936 = vmatprep.mubr.bf16.mxu0 0
        %6937 = vmatmul.mubr.bf16.gmra.mrb[0].mxu0 %v5357
        %v6938 = vpop.f32.mrb[0].mxu0
        %v6939 = vadd.f32 %v6714, %v6938
        %v6940 = vpop.f32.mrb[0].mxu0
        %v6941 = vpop.f32.mrb[0].mxu0
        %v6942 = vadd.f32 %v6717, %v6941
        %v6943 = vpop.f32.mrb[0].mxu0
        %6944 = vmatprep.mubr.bf16.mxu0 0
        %6945 = vmatmul.mubr.bf16.gmra.mrb[0].mxu0 %v5358
        %v6946 = vpop.f32.mrb[0].mxu0
        %v6947 = vadd.f32 %v6722, %v6946
        %v6948 = vpop.f32.mrb[0].mxu0
        %v6949 = vpop.f32.mrb[0].mxu0
        %v6950 = vadd.f32 %v6725, %v6949
        %v6951 = vpop.f32.mrb[0].mxu0
        %6952 = vmatprep.mubr.bf16.mxu0 0
        %6953 = vmatmul.mubr.bf16.gmra.mrb[0].mxu0 %v5359
        %v6954 = vpop.f32.mrb[0].mxu0
        %v6955 = vadd.f32 %v6730, %v6954
        %v6956 = vpop.f32.mrb[0].mxu0
        %v6957 = vpop.f32.mrb[0].mxu0
        %v6958 = vadd.f32 %v6733, %v6957
        %v6959 = vpop.f32.mrb[0].mxu0
        %6960 = vmatprep.mubr.bf16.mxu0 0
        %6961 = vmatmul.mubr.bf16.gmra.mrb[0].mxu0 %v5360
        %v6962 = vpop.f32.mrb[0].mxu0
        %v6963 = vadd.f32 %v6738, %v6962
        %v6964 = vpop.f32.mrb[0].mxu0
        %v6965 = vpop.f32.mrb[0].mxu0
        %v6966 = vadd.f32 %v6741, %v6965
        %v6967 = vpop.f32.mrb[0].mxu0
        %6968 = vmatprep.mubr.bf16.mxu0 0
        %6969 = vmatmul.mubr.bf16.gmra.mrb[0].mxu0 %v5361
        %v6970 = vpop.f32.mrb[0].mxu0
        %v6971 = vadd.f32 %v6746, %v6970
        %v6972 = vpop.f32.mrb[0].mxu0
        %v6973 = vpop.f32.mrb[0].mxu0
        %v6974 = vadd.f32 %v6749, %v6973
        %v6975 = vpop.f32.mrb[0].mxu0
        %6976 = vmatprep.mubr.bf16.mxu0 0
        %6977 = vmatmul.mubr.bf16.gmra.mrb[0].mxu0 %v5362
        %v6978 = vpop.f32.mrb[0].mxu0
        %v6979 = vadd.f32 %v6754, %v6978
        %v6980 = vpop.f32.mrb[0].mxu0
        %v6981 = vpop.f32.mrb[0].mxu0
        %v6982 = vadd.f32 %v6757, %v6981
        %v6983 = vpop.f32.mrb[0].mxu0
        %6984 = vmatprep.mubr.bf16.mxu0 0
        %6985 = vmatmul.mubr.bf16.gmra.mrb[0].mxu0 %v5363
        %v6986 = vpop.f32.mrb[0].mxu0
        %v6987 = vadd.f32 %v6762, %v6986
        %v6988 = vpop.f32.mrb[0].mxu0
        %v6989 = vpop.f32.mrb[0].mxu0
        %v6990 = vadd.f32 %v6765, %v6989
        %v6991 = vpop.f32.mrb[0].mxu0
        %6992 = vmatprep.mubr.bf16.mxu0 0
        %6993 = vmatmul.mubr.bf16.gmra.mrb[0].mxu0 %v5364
        %v6994 = vpop.f32.mrb[0].mxu0
        %v6995 = vadd.f32 %v6770, %v6994
        %v6996 = vpop.f32.mrb[0].mxu0
        %v6997 = vpop.f32.mrb[0].mxu0
        %v6998 = vadd.f32 %v6773, %v6997
        %v6999 = vpop.f32.mrb[0].mxu0
        %7000 = vmatprep.mubr.bf16.mxu0 0
        %7001 = vmatmul.mubr.bf16.gmra.mrb[0].mxu0 %v5365
        %v7002 = vpop.f32.mrb[0].mxu0
        %v7003 = vadd.f32 %v6778, %v7002
        %v7004 = vpop.f32.mrb[0].mxu0
        %v7005 = vpop.f32.mrb[0].mxu0
        %v7006 = vadd.f32 %v6781, %v7005
        %v7007 = vpop.f32.mrb[0].mxu0
        %7008 = vmatprep.mubr.bf16.mxu0 0
        %7009 = vmatmul.mubr.bf16.gmra.mrb[0].mxu0 %v5366
        %v7010 = vpop.f32.mrb[0].mxu0
        %v7011 = vadd.f32 %v6786, %v7010
        %v7012 = vpop.f32.mrb[0].mxu0
        %v7013 = vpop.f32.mrb[0].mxu0
        %v7014 = vadd.f32 %v6789, %v7013
        %v7015 = vpop.f32.mrb[0].mxu0
        %7016 = vmatprep.mubr.bf16.mxu0 0
        %7017 = vmatmul.mubr.bf16.gmra.mrb[0].mxu0 %v5379
        %v7018 = vpop.f32.mrb[0].mxu0
        %v7019 = vadd.f32 %v6794, %v7018
        %v7020 = vpop.f32.mrb[0].mxu0
        %v7021 = vpop.f32.mrb[0].mxu0
        %v7022 = vadd.f32 %v6797, %v7021
        %v7023 = vpop.f32.mrb[0].mxu0
        %7024 = vmatprep.mubr.bf16.mxu0 0
        %7025 = vmatmul.mubr.bf16.gmra.mrb[0].mxu0 %v5380
        %v7026 = vpop.f32.mrb[0].mxu0
        %v7027 = vadd.f32 %v6802, %v7026
        %v7028 = vpop.f32.mrb[0].mxu0
        %v7029 = vpop.f32.mrb[0].mxu0
        %v7030 = vadd.f32 %v6805, %v7029
        %v7031 = vpop.f32.mrb[0].mxu0
        %7032 = vmatprep.mubr.bf16.mxu0 0
        %7033 = vmatmul.mubr.bf16.gmra.mrb[0].mxu0 %v5381
        %v7034 = vpop.f32.mrb[0].mxu0
        %v7035 = vadd.f32 %v6810, %v7034
        %v7036 = vpop.f32.mrb[0].mxu0
        %v7037 = vpop.f32.mrb[0].mxu0
        %v7038 = vadd.f32 %v6813, %v7037
        %v7039 = vpop.f32.mrb[0].mxu0
        %7040 = vmatprep.mubr.bf16.mxu0 0
        %7041 = vmatmul.mubr.bf16.gmra.mrb[0].mxu0 %v5382
        %v7042 = vpop.f32.mrb[0].mxu0
        %v7043 = vadd.f32 %v6818, %v7042
        %v7044 = vpop.f32.mrb[0].mxu0
        %v7045 = vpop.f32.mrb[0].mxu0
        %v7046 = vadd.f32 %v6821, %v7045
        %v7047 = vpop.f32.mrb[0].mxu0
        %7048 = vmatprep.mubr.bf16.mxu0 0
        %7049 = vmatmul.mubr.bf16.gmra.mrb[0].mxu0 %v5383
        %v7050 = vpop.f32.mrb[0].mxu0
        %v7051 = vadd.f32 %v6826, %v7050
        %v7052 = vpop.f32.mrb[0].mxu0
        %v7053 = vpop.f32.mrb[0].mxu0
        %v7054 = vadd.f32 %v6829, %v7053
        %v7055 = vpop.f32.mrb[0].mxu0
        %7056 = vmatprep.mubr.bf16.mxu0 0
        %7057 = vmatmul.mubr.bf16.gmra.mrb[0].mxu0 %v5384
        %v7058 = vpop.f32.mrb[0].mxu0
        %v7059 = vadd.f32 %v6834, %v7058
        %v7060 = vpop.f32.mrb[0].mxu0
        %v7061 = vpop.f32.mrb[0].mxu0
        %v7062 = vadd.f32 %v6837, %v7061
        %v7063 = vpop.f32.mrb[0].mxu0
        %7064 = vmatprep.mubr.bf16.mxu0 0
        %7065 = vmatmul.mubr.bf16.gmra.mrb[0].mxu0 %v5397
        %v7066 = vpop.f32.mrb[0].mxu0
        %v7067 = vadd.f32 %v6842, %v7066
        %v7068 = vpop.f32.mrb[0].mxu0
        %v7069 = vpop.f32.mrb[0].mxu0
        %v7070 = vadd.f32 %v6845, %v7069
        %v7071 = vpop.f32.mrb[0].mxu0
        %7072 = vmatprep.mubr.bf16.mxu0 0
        %7073 = vmatmul.mubr.bf16.gmra.mrb[0].mxu0 %v5398
        %v7074 = vpop.f32.mrb[0].mxu0
        %v7075 = vadd.f32 %v6850, %v7074
        %v7076 = vpop.f32.mrb[0].mxu0
        %v7077 = vpop.f32.mrb[0].mxu0
        %v7078 = vadd.f32 %v6853, %v7077
        %v7079 = vpop.f32.mrb[0].mxu0
        %7080 = vmatprep.mubr.bf16.mxu0 0
        %7081 = vmatmul.mubr.bf16.gmra.mrb[0].mxu0 %v5399
        %v7082 = vpop.f32.mrb[0].mxu0
        %v7083 = vadd.f32 %v6858, %v7082
        %v7084 = vpop.f32.mrb[0].mxu0
        %v7085 = vpop.f32.mrb[0].mxu0
        %v7086 = vadd.f32 %v6861, %v7085
        %v7087 = vpop.f32.mrb[0].mxu0
        %7088 = vmatprep.mubr.bf16.mxu0 0
        %7089 = vmatmul.mubr.bf16.gmra.mrb[0].mxu0 %v5400
        %v7090 = vpop.f32.mrb[0].mxu0
        %v7091 = vadd.f32 %v6866, %v7090
        %v7092 = vpop.f32.mrb[0].mxu0
        %v7093 = vpop.f32.mrb[0].mxu0
        %v7094 = vadd.f32 %v6869, %v7093
        %v7095 = vpop.f32.mrb[0].mxu0
        %7096 = vmatprep.mubr.bf16.mxu0 0
        %7097 = vmatmul.mubr.bf16.gmra.mrb[0].mxu0 %v5401
        %v7098 = vpop.f32.mrb[0].mxu0
        %v7099 = vadd.f32 %v6874, %v7098
        %v7100 = vpop.f32.mrb[0].mxu0
        %v7101 = vpop.f32.mrb[0].mxu0
        %v7102 = vadd.f32 %v6877, %v7101
        %v7103 = vpop.f32.mrb[0].mxu0
        %7104 = vmatprep.mubr.bf16.mxu0 0
        %7105 = vmatmul.mubr.bf16.gmra.mrb[0].mxu0 %v5402
        %v7106 = vpop.f32.mrb[0].mxu0
        %v7107 = vadd.f32 %v6882, %v7106
        %v7108 = vpop.f32.mrb[0].mxu0
        %v7109 = vpop.f32.mrb[0].mxu0
        %v7110 = vadd.f32 %v6885, %v7109
        %v7111 = vpop.f32.mrb[0].mxu0
        %7112 = vdwg.mxu0
        %vm7113 = vcmp.ge.f32.partialorder %v6923, 0.0
        %vm7114 = vcmp.ge.f32.partialorder %v6926, 0.0
        %vm7115 = vcmp.ge.f32.partialorder %v6931, 0.0
        %vm7116 = vcmp.ge.f32.partialorder %v6934, 0.0
        %vm7117 = vcmp.ge.f32.partialorder %v6939, 0.0
        %vm7118 = vcmp.ge.f32.partialorder %v6942, 0.0
        %vm7119 = vcmp.ge.f32.partialorder %v6947, 0.0
        %vm7120 = vcmp.ge.f32.partialorder %v6950, 0.0
        %vm7121 = vcmp.ge.f32.partialorder %v6955, 0.0
        %vm7122 = vcmp.ge.f32.partialorder %v6958, 0.0
        %vm7123 = vcmp.ge.f32.partialorder %v6963, 0.0
        %vm7124 = vcmp.ge.f32.partialorder %v6966, 0.0
        %vm7125 = vcmp.ge.f32.partialorder %v6971, 0.0
        %vm7126 = vcmp.ge.f32.partialorder %v6974, 0.0
        %vm7127 = vcmp.ge.f32.partialorder %v6979, 0.0
        %vm7128 = vcmp.ge.f32.partialorder %v6982, 0.0
        %vm7129 = vcmp.ge.f32.partialorder %v6987, 0.0
        %vm7130 = vcmp.ge.f32.partialorder %v6990, 0.0
        %vm7131 = vcmp.ge.f32.partialorder %v6995, 0.0
        %vm7132 = vcmp.ge.f32.partialorder %v6998, 0.0
        %vm7133 = vcmp.ge.f32.partialorder %v7003, 0.0
        %vm7134 = vcmp.ge.f32.partialorder %v7006, 0.0
        %vm7135 = vcmp.ge.f32.partialorder %v7011, 0.0
        %vm7136 = vcmp.ge.f32.partialorder %v7014, 0.0
        %vm7137 = vcmp.ge.f32.partialorder %v7019, 0.0
        %vm7138 = vcmp.ge.f32.partialorder %v7022, 0.0
        %vm7139 = vcmp.ge.f32.partialorder %v7027, 0.0
        %vm7140 = vcmp.ge.f32.partialorder %v7030, 0.0
        %vm7141 = vcmp.ge.f32.partialorder %v7035, 0.0
        %vm7142 = vcmp.ge.f32.partialorder %v7038, 0.0
        %vm7143 = vcmp.ge.f32.partialorder %v7043, 0.0
        %vm7144 = vcmp.ge.f32.partialorder %v7046, 0.0
        %vm7145 = vcmp.ge.f32.partialorder %v7051, 0.0
        %vm7146 = vcmp.ge.f32.partialorder %v7054, 0.0
        %vm7147 = vcmp.ge.f32.partialorder %v7059, 0.0
        %vm7148 = vcmp.ge.f32.partialorder %v7062, 0.0
        %vm7149 = vcmp.ge.f32.partialorder %v7067, 0.0
        %vm7150 = vcmp.ge.f32.partialorder %v7070, 0.0
        %vm7151 = vcmp.ge.f32.partialorder %v7075, 0.0
        %vm7152 = vcmp.ge.f32.partialorder %v7078, 0.0
        %vm7153 = vcmp.ge.f32.partialorder %v7083, 0.0
        %vm7154 = vcmp.ge.f32.partialorder %v7086, 0.0
        %vm7155 = vcmp.ge.f32.partialorder %v7091, 0.0
        %vm7156 = vcmp.ge.f32.partialorder %v7094, 0.0
        %vm7157 = vcmp.ge.f32.partialorder %v7099, 0.0
        %vm7158 = vcmp.ge.f32.partialorder %v7102, 0.0
        %vm7159 = vcmp.ge.f32.partialorder %v7107, 0.0
        %vm7160 = vcmp.ge.f32.partialorder %v7110, 0.0
        %v7161 = vmul.f32 %v6923, 0.1
        %v7162 = vmul.f32 %v6926, 0.1
        %v7163 = vmul.f32 %v6931, 0.1
        %v7164 = vmul.f32 %v6934, 0.1
        %v7165 = vmul.f32 %v6939, 0.1
        %v7166 = vmul.f32 %v6942, 0.1
        %v7167 = vmul.f32 %v6947, 0.1
        %v7168 = vmul.f32 %v6950, 0.1
        %v7169 = vmul.f32 %v6955, 0.1
        %v7170 = vmul.f32 %v6958, 0.1
        %v7171 = vmul.f32 %v6963, 0.1
        %v7172 = vmul.f32 %v6966, 0.1
        %v7173 = vmul.f32 %v6971, 0.1
        %v7174 = vmul.f32 %v6974, 0.1
        %v7175 = vmul.f32 %v6979, 0.1
        %v7176 = vmul.f32 %v6982, 0.1
        %v7177 = vmul.f32 %v6987, 0.1
        %v7178 = vmul.f32 %v6990, 0.1
        %v7179 = vmul.f32 %v6995, 0.1
        %v7180 = vmul.f32 %v6998, 0.1
        %v7181 = vmul.f32 %v7003, 0.1
        %v7182 = vmul.f32 %v7006, 0.1
        %v7183 = vmul.f32 %v7011, 0.1
        %v7184 = vmul.f32 %v7014, 0.1
        %v7185 = vmul.f32 %v7019, 0.1
        %v7186 = vmul.f32 %v7022, 0.1
        %v7187 = vmul.f32 %v7027, 0.1
        %v7188 = vmul.f32 %v7030, 0.1
        %v7189 = vmul.f32 %v7035, 0.1
        %v7190 = vmul.f32 %v7038, 0.1
        %v7191 = vmul.f32 %v7043, 0.1
        %v7192 = vmul.f32 %v7046, 0.1
        %v7193 = vmul.f32 %v7051, 0.1
        %v7194 = vmul.f32 %v7054, 0.1
        %v7195 = vmul.f32 %v7059, 0.1
        %v7196 = vmul.f32 %v7062, 0.1
        %v7197 = vmul.f32 %v7067, 0.1
        %v7198 = vmul.f32 %v7070, 0.1
        %v7199 = vmul.f32 %v7075, 0.1
        %v7200 = vmul.f32 %v7078, 0.1
        %v7201 = vmul.f32 %v7083, 0.1
        %v7202 = vmul.f32 %v7086, 0.1
        %v7203 = vmul.f32 %v7091, 0.1
        %v7204 = vmul.f32 %v7094, 0.1
        %v7205 = vmul.f32 %v7099, 0.1
        %v7206 = vmul.f32 %v7102, 0.1
        %v7207 = vmul.f32 %v7107, 0.1
        %v7208 = vmul.f32 %v7110, 0.1
        %v7209 = vsel %vm7113, %v6923, %v7161
        %v7210 = vsel %vm7114, %v6926, %v7162
        %v7211 = vsel %vm7115, %v6931, %v7163
        %v7212 = vsel %vm7116, %v6934, %v7164
        %v7213 = vsel %vm7117, %v6939, %v7165
        %v7214 = vsel %vm7118, %v6942, %v7166
        %v7215 = vsel %vm7119, %v6947, %v7167
        %v7216 = vsel %vm7120, %v6950, %v7168
        %v7217 = vsel %vm7121, %v6955, %v7169
        %v7218 = vsel %vm7122, %v6958, %v7170
        %v7219 = vsel %vm7123, %v6963, %v7171
        %v7220 = vsel %vm7124, %v6966, %v7172
        %v7221 = vsel %vm7125, %v6971, %v7173
        %v7222 = vsel %vm7126, %v6974, %v7174
        %v7223 = vsel %vm7127, %v6979, %v7175
        %v7224 = vsel %vm7128, %v6982, %v7176
        %v7225 = vsel %vm7129, %v6987, %v7177
        %v7226 = vsel %vm7130, %v6990, %v7178
        %v7227 = vsel %vm7131, %v6995, %v7179
        %v7228 = vsel %vm7132, %v6998, %v7180
        %v7229 = vsel %vm7133, %v7003, %v7181
        %v7230 = vsel %vm7134, %v7006, %v7182
        %v7231 = vsel %vm7135, %v7011, %v7183
        %v7232 = vsel %vm7136, %v7014, %v7184
        %v7233 = vsel %vm7137, %v7019, %v7185
        %v7234 = vsel %vm7138, %v7022, %v7186
        %v7235 = vsel %vm7139, %v7027, %v7187
        %v7236 = vsel %vm7140, %v7030, %v7188
        %v7237 = vsel %vm7141, %v7035, %v7189
        %v7238 = vsel %vm7142, %v7038, %v7190
        %v7239 = vsel %vm7143, %v7043, %v7191
        %v7240 = vsel %vm7144, %v7046, %v7192
        %v7241 = vsel %vm7145, %v7051, %v7193
        %v7242 = vsel %vm7146, %v7054, %v7194
        %v7243 = vsel %vm7147, %v7059, %v7195
        %v7244 = vsel %vm7148, %v7062, %v7196
        %v7245 = vsel %vm7149, %v7067, %v7197
        %v7246 = vsel %vm7150, %v7070, %v7198
        %v7247 = vsel %vm7151, %v7075, %v7199
        %v7248 = vsel %vm7152, %v7078, %v7200
        %v7249 = vsel %vm7153, %v7083, %v7201
        %v7250 = vsel %vm7154, %v7086, %v7202
        %v7251 = vsel %vm7155, %v7091, %v7203
        %v7252 = vsel %vm7156, %v7094, %v7204
        %v7253 = vsel %vm7157, %v7099, %v7205
        %v7254 = vsel %vm7158, %v7102, %v7206
        %v7255 = vsel %vm7159, %v7107, %v7207
        %v7256 = vsel %vm7160, %v7110, %v7208
        %v7257 = vmul.f32 %v7209, %v228
        %v7258 = vmul.f32 %v7210, %v229
        %v7259 = vmul.f32 %v7211, %v230
        %v7260 = vmul.f32 %v7212, %v228
        %v7261 = vmul.f32 %v7213, %v229
        %v7262 = vmul.f32 %v7214, %v230
        %v7263 = vmul.f32 %v7215, %v228
        %v7264 = vmul.f32 %v7216, %v229
        %v7265 = vmul.f32 %v7217, %v230
        %v7266 = vmul.f32 %v7218, %v228
        %v7267 = vmul.f32 %v7219, %v229
        %v7268 = vmul.f32 %v7220, %v230
        %v7269 = vmul.f32 %v7221, %v228
        %v7270 = vmul.f32 %v7222, %v229
        %v7271 = vmul.f32 %v7223, %v230
        %v7272 = vmul.f32 %v7224, %v228
        %v7273 = vmul.f32 %v7225, %v229
        %v7274 = vmul.f32 %v7226, %v230
        %v7275 = vmul.f32 %v7227, %v228
        %v7276 = vmul.f32 %v7228, %v229
        %v7277 = vmul.f32 %v7229, %v230
        %v7278 = vmul.f32 %v7230, %v228
        %v7279 = vmul.f32 %v7231, %v229
        %v7280 = vmul.f32 %v7232, %v230
        %v7281 = vmul.f32 %v7233, %v228
        %v7282 = vmul.f32 %v7234, %v229
        %v7283 = vmul.f32 %v7235, %v230
        %v7284 = vmul.f32 %v7236, %v228
        %v7285 = vmul.f32 %v7237, %v229
        %v7286 = vmul.f32 %v7238, %v230
        %v7287 = vmul.f32 %v7239, %v228
        %v7288 = vmul.f32 %v7240, %v229
        %v7289 = vmul.f32 %v7241, %v230
        %v7290 = vmul.f32 %v7242, %v228
        %v7291 = vmul.f32 %v7243, %v229
        %v7292 = vmul.f32 %v7244, %v230
        %v7293 = vmul.f32 %v7245, %v228
        %v7294 = vmul.f32 %v7246, %v229
        %v7295 = vmul.f32 %v7247, %v230
        %v7296 = vmul.f32 %v7248, %v228
        %v7297 = vmul.f32 %v7249, %v229
        %v7298 = vmul.f32 %v7250, %v230
        %v7299 = vmul.f32 %v7251, %v228
        %v7300 = vmul.f32 %v7252, %v229
        %v7301 = vmul.f32 %v7253, %v230
        %v7302 = vmul.f32 %v7254, %v228
        %v7303 = vmul.f32 %v7255, %v229
        %v7304 = vmul.f32 %v7256, %v230
        %v7305 = vpack.c.bf16 %v7258, %v7257
        %v7306 = vpack.c.bf16 %v7260, %v7259
        %v7307 = vpack.c.bf16 %v7262, %v7261
        %v7308 = vpack.c.bf16 %v7264, %v7263
        %v7309 = vpack.c.bf16 %v7266, %v7265
        %v7310 = vpack.c.bf16 %v7268, %v7267
        %v7311 = vpack.c.bf16 %v7270, %v7269
        %v7312 = vpack.c.bf16 %v7272, %v7271
        %v7313 = vpack.c.bf16 %v7274, %v7273
        %v7314 = vpack.c.bf16 %v7276, %v7275
        %v7315 = vpack.c.bf16 %v7278, %v7277
        %v7316 = vpack.c.bf16 %v7280, %v7279
        %v7317 = vpack.c.bf16 %v7282, %v7281
        %v7318 = vpack.c.bf16 %v7284, %v7283
        %v7319 = vpack.c.bf16 %v7286, %v7285
        %v7320 = vpack.c.bf16 %v7288, %v7287
        %v7321 = vpack.c.bf16 %v7290, %v7289
        %v7322 = vpack.c.bf16 %v7292, %v7291
        %v7323 = vpack.c.bf16 %v7294, %v7293
        %v7324 = vpack.c.bf16 %v7296, %v7295
        %v7325 = vpack.c.bf16 %v7298, %v7297
        %v7326 = vpack.c.bf16 %v7300, %v7299
        %v7327 = vpack.c.bf16 %v7302, %v7301
        %v7328 = vpack.c.bf16 %v7304, %v7303
        %7329 = vst [vmem:[#allocation2 + $0x30] sm:$0xff] %v7305
        %7330 = vst [vmem:[#allocation2 + $0x38] sm:$0xff] %v7306
        %7331 = vst [vmem:[#allocation2 + $0x40] sm:$0xff] %v7307
        %7332 = vst [vmem:[#allocation2 + $0x48] sm:$0xff] %v7308
        %7333 = vst [vmem:[#allocation2 + $0x50] sm:$0xff] %v7309
        %7334 = vst [vmem:[#allocation2 + $0x58] sm:$0xff] %v7310
        %7335 = vst [vmem:[#allocation2 + $0x60] sm:$0xff] %v7311
        %7336 = vst [vmem:[#allocation2 + $0x68] sm:$0xff] %v7312
        %7337 = vst [vmem:[#allocation2 + $0x70] sm:$0xff] %v7313
        %7338 = vst [vmem:[#allocation2 + $0x78] sm:$0xff] %v7314
        %7339 = vst [vmem:[#allocation2 + $0x80] sm:$0xff] %v7315
        %7340 = vst [vmem:[#allocation2 + $0x88] sm:$0xff] %v7316
        %7341 = vst [vmem:[#allocation2 + $0x90] sm:$0xff] %v7317
        %7342 = vst [vmem:[#allocation2 + $0x98] sm:$0xff] %v7318
        %7343 = vst [vmem:[#allocation2 + $0xa0] sm:$0xff] %v7319
        %7344 = vst [vmem:[#allocation2 + $0xa8] sm:$0xff] %v7320
        %7345 = vst [vmem:[#allocation2 + $0xb0] sm:$0xff] %v7321
        %7346 = vst [vmem:[#allocation2 + $0xb8] sm:$0xff] %v7322
        %7347 = vst [vmem:[#allocation2 + $0xc0] sm:$0xff] %v7323
        %7348 = vst [vmem:[#allocation2 + $0xc8] sm:$0xff] %v7324
        %7349 = vst [vmem:[#allocation2 + $0xd0] sm:$0xff] %v7325
        %7350 = vst [vmem:[#allocation2 + $0xd8] sm:$0xff] %v7326
        %7351 = vst [vmem:[#allocation2 + $0xe0] sm:$0xff] %v7327
        %7352 = vst [vmem:[#allocation2 + $0xe8] sm:$0xff] %v7328
        %v7353 = vld [vmem:[#allocation2 + $0x20] sm:$0xff]
        %v7354 = vld [vmem:[#allocation2 + $0x28] sm:$0xff]
        %v7355 = vld [vmem:[#allocation2 + $0x30] sm:$0xff]
        %v7356 = vld [vmem:[#allocation2 + $0x38] sm:$0xff]
        %v7357 = vld [vmem:[#allocation2 + $0x40] sm:$0xff]
        %v7358 = vld [vmem:[#allocation2 + $0x48] sm:$0xff]
        %v7359 = vld [vmem:[#allocation2 + $0x50] sm:$0xff]
        %v7360 = vld [vmem:[#allocation2 + $0x58] sm:$0xff]
        %v7361 = vld [vmem:[#allocation2 + $0x60] sm:$0xff]
        %v7362 = vld [vmem:[#allocation2 + $0x68] sm:$0xff]
        %v7363 = vld [vmem:[#allocation2 + $0x70] sm:$0xff]
        %v7364 = vld [vmem:[#allocation2 + $0x78] sm:$0xff]
        %v7365 = vld [vmem:[#allocation2 + $0x80] sm:$0xff]
        %v7366 = vld [vmem:[#allocation2 + $0x88] sm:$0xff]
        %v7367 = vld [vmem:[#allocation2 + $0x90] sm:$0xff]
        %v7368 = vld [vmem:[#allocation2 + $0x98] sm:$0xff]
        %v7369 = vld [vmem:[#allocation2 + $0xa0] sm:$0xff]
        %v7370 = vld [vmem:[#allocation2 + $0xa8] sm:$0xff]
        %v7371 = vld [vmem:[#allocation2 + $0xb0] sm:$0xff]
        %v7372 = vld [vmem:[#allocation2 + $0xb8] sm:$0xff]
        %v7373 = vld [vmem:[#allocation2 + $0xc0] sm:$0xff]
        %v7374 = vld [vmem:[#allocation2 + $0xc8] sm:$0xff]
        %v7375 = vld [vmem:[#allocation2 + $0xd0] sm:$0xff]
        %v7376 = vld [vmem:[#allocation2 + $0xd8] sm:$0xff]
        %v7377 = vld [vmem:[#allocation2 + $0xe0] sm:$0xff]
        %v7378 = vld [vmem:[#allocation2 + $0xe8] sm:$0xff]
        %v7379 = vld [vmem:[#allocation2 + $0xf0] sm:$0xff]
        %v7380 = vld [vmem:[#allocation2 + $0xf8] sm:$0xff]
        %v7381 = vunpack.c.l.bf16 %v7353
        %v7382 = vunpack.c.h.bf16 %v7353
        %v7383 = vunpack.c.l.bf16 %v7354
        %v7384 = vunpack.c.h.bf16 %v7354
        %v7385 = vunpack.c.l.bf16 %v7355
        %v7386 = vunpack.c.h.bf16 %v7355
        %v7387 = vunpack.c.l.bf16 %v7356
        %v7388 = vunpack.c.h.bf16 %v7356
        %v7389 = vunpack.c.l.bf16 %v7357
        %v7390 = vunpack.c.h.bf16 %v7357
        %v7391 = vunpack.c.l.bf16 %v7358
        %v7392 = vunpack.c.h.bf16 %v7358
        %v7393 = vunpack.c.l.bf16 %v7359
        %v7394 = vunpack.c.h.bf16 %v7359
        %v7395 = vunpack.c.l.bf16 %v7360
        %v7396 = vunpack.c.h.bf16 %v7360
        %v7397 = vunpack.c.l.bf16 %v7361
        %v7398 = vunpack.c.h.bf16 %v7361
        %v7399 = vunpack.c.l.bf16 %v7362
        %v7400 = vunpack.c.h.bf16 %v7362
        %v7401 = vunpack.c.l.bf16 %v7363
        %v7402 = vunpack.c.h.bf16 %v7363
        %v7403 = vunpack.c.l.bf16 %v7364
        %v7404 = vunpack.c.h.bf16 %v7364
        %v7405 = vunpack.c.l.bf16 %v7365
        %v7406 = vunpack.c.h.bf16 %v7365
        %v7407 = vunpack.c.l.bf16 %v7366
        %v7408 = vunpack.c.h.bf16 %v7366
        %v7409 = vunpack.c.l.bf16 %v7367
        %v7410 = vunpack.c.h.bf16 %v7367
        %v7411 = vunpack.c.l.bf16 %v7368
        %v7412 = vunpack.c.h.bf16 %v7368
        %v7413 = vunpack.c.l.bf16 %v7369
        %v7414 = vunpack.c.h.bf16 %v7369
        %v7415 = vunpack.c.l.bf16 %v7370
        %v7416 = vunpack.c.h.bf16 %v7370
        %v7417 = vunpack.c.l.bf16 %v7371
        %v7418 = vunpack.c.h.bf16 %v7371
        %v7419 = vunpack.c.l.bf16 %v7372
        %v7420 = vunpack.c.h.bf16 %v7372
        %v7421 = vunpack.c.l.bf16 %v7373
        %v7422 = vunpack.c.h.bf16 %v7373
        %v7423 = vunpack.c.l.bf16 %v7374
        %v7424 = vunpack.c.h.bf16 %v7374
        %v7425 = vunpack.c.l.bf16 %v7375
        %v7426 = vunpack.c.h.bf16 %v7375
        %v7427 = vunpack.c.l.bf16 %v7376
        %v7428 = vunpack.c.h.bf16 %v7376
        %v7429 = vunpack.c.l.bf16 %v7377
        %v7430 = vunpack.c.h.bf16 %v7377
        %v7431 = vunpack.c.l.bf16 %v7378
        %v7432 = vunpack.c.h.bf16 %v7378
        %v7433 = vunpack.c.l.bf16 %v7379
        %v7434 = vunpack.c.h.bf16 %v7379
        %v7435 = vunpack.c.l.bf16 %v7380
        %v7436 = vunpack.c.h.bf16 %v7380
        %v7437 = vrot.slane %v7381, 7
        %v7438 = vrot.slane %v7382, 7
        %v7439 = vrot.slane %v7383, 7
        %v7440 = vrot.slane %v7384, 7
        %v7441 = vrot.slane %v7385, 7
        %v7442 = vrot.slane %v7386, 7
        %v7443 = vrot.slane %v7387, 7
        %v7444 = vrot.slane %v7388, 7
        %v7445 = vrot.slane %v7389, 7
        %v7446 = vrot.slane %v7390, 7
        %v7447 = vrot.slane %v7391, 7
        %v7448 = vrot.slane %v7392, 7
        %v7449 = vrot.slane %v7393, 7
        %v7450 = vrot.slane %v7394, 7
        %v7451 = vrot.slane %v7395, 7
        %v7452 = vrot.slane %v7396, 7
        %v7453 = vrot.slane %v7397, 7
        %v7454 = vrot.slane %v7398, 7
        %v7455 = vrot.slane %v7399, 7
        %v7456 = vrot.slane %v7400, 7
        %v7457 = vrot.slane %v7401, 7
        %v7458 = vrot.slane %v7402, 7
        %v7459 = vrot.slane %v7403, 7
        %v7460 = vrot.slane %v7404, 7
        %v7461 = vrot.slane %v7405, 7
        %v7462 = vrot.slane %v7406, 7
        %v7463 = vrot.slane %v7407, 7
        %v7464 = vrot.slane %v7408, 7
        %v7465 = vrot.slane %v7409, 7
        %v7466 = vrot.slane %v7410, 7
        %v7467 = vrot.slane %v7411, 7
        %v7468 = vrot.slane %v7412, 7
        %v7469 = vrot.slane %v7413, 7
        %v7470 = vrot.slane %v7414, 7
        %v7471 = vrot.slane %v7415, 7
        %v7472 = vrot.slane %v7416, 7
        %v7473 = vrot.slane %v7417, 7
        %v7474 = vrot.slane %v7418, 7
        %v7475 = vrot.slane %v7419, 7
        %v7476 = vrot.slane %v7420, 7
        %v7477 = vrot.slane %v7421, 7
        %v7478 = vrot.slane %v7422, 7
        %v7479 = vrot.slane %v7423, 7
        %v7480 = vrot.slane %v7424, 7
        %v7481 = vrot.slane %v7425, 7
        %v7482 = vrot.slane %v7426, 7
        %v7483 = vrot.slane %v7427, 7
        %v7484 = vrot.slane %v7428, 7
        %v7485 = vrot.slane %v7429, 7
        %v7486 = vrot.slane %v7430, 7
        %v7487 = vrot.slane %v7431, 7
        %v7488 = vrot.slane %v7432, 7
        %v7489 = vrot.slane %v7433, 7
        %v7490 = vrot.slane %v7434, 7
        %v7491 = vrot.slane %v7435, 7
        %v7492 = vsel %vm398, %v7490, %v7491
        %v7493 = vsel %vm398, %v7489, %v7490
        %v7494 = vsel %vm398, %v7488, %v7489
        %v7495 = vsel %vm398, %v7487, %v7488
        %v7496 = vsel %vm398, %v7486, %v7487
        %v7497 = vsel %vm398, %v7485, %v7486
        %v7498 = vsel %vm398, %v7484, %v7485
        %v7499 = vsel %vm398, %v7483, %v7484
        %v7500 = vsel %vm398, %v7482, %v7483
        %v7501 = vsel %vm398, %v7481, %v7482
        %v7502 = vsel %vm398, %v7480, %v7481
        %v7503 = vsel %vm398, %v7479, %v7480
        %v7504 = vsel %vm398, %v7478, %v7479
        %v7505 = vsel %vm398, %v7477, %v7478
        %v7506 = vsel %vm398, %v7476, %v7477
        %v7507 = vsel %vm398, %v7475, %v7476
        %v7508 = vsel %vm398, %v7474, %v7475
        %v7509 = vsel %vm398, %v7473, %v7474
        %v7510 = vsel %vm398, %v7472, %v7473
        %v7511 = vsel %vm398, %v7471, %v7472
        %v7512 = vsel %vm398, %v7470, %v7471
        %v7513 = vsel %vm398, %v7469, %v7470
        %v7514 = vsel %vm398, %v7468, %v7469
        %v7515 = vsel %vm398, %v7467, %v7468
        %v7516 = vsel %vm398, %v7466, %v7467
        %v7517 = vsel %vm398, %v7465, %v7466
        %v7518 = vsel %vm398, %v7464, %v7465
        %v7519 = vsel %vm398, %v7463, %v7464
        %v7520 = vsel %vm398, %v7462, %v7463
        %v7521 = vsel %vm398, %v7461, %v7462
        %v7522 = vsel %vm398, %v7460, %v7461
        %v7523 = vsel %vm398, %v7459, %v7460
        %v7524 = vsel %vm398, %v7458, %v7459
        %v7525 = vsel %vm398, %v7457, %v7458
        %v7526 = vsel %vm398, %v7456, %v7457
        %v7527 = vsel %vm398, %v7455, %v7456
        %v7528 = vsel %vm398, %v7454, %v7455
        %v7529 = vsel %vm398, %v7453, %v7454
        %v7530 = vsel %vm398, %v7452, %v7453
        %v7531 = vsel %vm398, %v7451, %v7452
        %v7532 = vsel %vm398, %v7450, %v7451
        %v7533 = vsel %vm398, %v7449, %v7450
        %v7534 = vsel %vm398, %v7448, %v7449
        %v7535 = vsel %vm398, %v7447, %v7448
        %v7536 = vsel %vm398, %v7446, %v7447
        %v7537 = vsel %vm398, %v7445, %v7446
        %v7538 = vsel %vm398, %v7444, %v7445
        %v7539 = vsel %vm398, %v7443, %v7444
        %v7540 = vsel %vm398, %v7442, %v7443
        %v7541 = vsel %vm398, %v7441, %v7442
        %v7542 = vsel %vm398, %v7440, %v7441
        %v7543 = vsel %vm398, %v7439, %v7440
        %v7544 = vsel %vm398, %v7438, %v7439
        %v7545 = vsel %vm398, %v7437, %v7438
        %v7546 = vrot.slane %v7382, 1
        %v7547 = vrot.slane %v7383, 1
        %v7548 = vrot.slane %v7384, 1
        %v7549 = vrot.slane %v7385, 1
        %v7550 = vrot.slane %v7386, 1
        %v7551 = vrot.slane %v7387, 1
        %v7552 = vrot.slane %v7388, 1
        %v7553 = vrot.slane %v7389, 1
        %v7554 = vrot.slane %v7390, 1
        %v7555 = vrot.slane %v7391, 1
        %v7556 = vrot.slane %v7392, 1
        %v7557 = vrot.slane %v7393, 1
        %v7558 = vrot.slane %v7394, 1
        %v7559 = vrot.slane %v7395, 1
        %v7560 = vrot.slane %v7396, 1
        %v7561 = vrot.slane %v7397, 1
        %v7562 = vrot.slane %v7398, 1
        %v7563 = vrot.slane %v7399, 1
        %v7564 = vrot.slane %v7400, 1
        %v7565 = vrot.slane %v7401, 1
        %v7566 = vrot.slane %v7402, 1
        %v7567 = vrot.slane %v7403, 1
        %v7568 = vrot.slane %v7404, 1
        %v7569 = vrot.slane %v7405, 1
        %v7570 = vrot.slane %v7406, 1
        %v7571 = vrot.slane %v7407, 1
        %v7572 = vrot.slane %v7408, 1
        %v7573 = vrot.slane %v7409, 1
        %v7574 = vrot.slane %v7410, 1
        %v7575 = vrot.slane %v7411, 1
        %v7576 = vrot.slane %v7412, 1
        %v7577 = vrot.slane %v7413, 1
        %v7578 = vrot.slane %v7414, 1
        %v7579 = vrot.slane %v7415, 1
        %v7580 = vrot.slane %v7416, 1
        %v7581 = vrot.slane %v7417, 1
        %v7582 = vrot.slane %v7418, 1
        %v7583 = vrot.slane %v7419, 1
        %v7584 = vrot.slane %v7420, 1
        %v7585 = vrot.slane %v7421, 1
        %v7586 = vrot.slane %v7422, 1
        %v7587 = vrot.slane %v7423, 1
        %v7588 = vrot.slane %v7424, 1
        %v7589 = vrot.slane %v7425, 1
        %v7590 = vrot.slane %v7426, 1
        %v7591 = vrot.slane %v7427, 1
        %v7592 = vrot.slane %v7428, 1
        %v7593 = vrot.slane %v7429, 1
        %v7594 = vrot.slane %v7430, 1
        %v7595 = vrot.slane %v7431, 1
        %v7596 = vrot.slane %v7432, 1
        %v7597 = vrot.slane %v7433, 1
        %v7598 = vrot.slane %v7434, 1
        %v7599 = vrot.slane %v7435, 1
        %v7600 = vrot.slane %v7436, 1
        %v7601 = vsel %vm508, %v7599, %v7600
        %v7602 = vsel %vm508, %v7598, %v7599
        %v7603 = vsel %vm508, %v7597, %v7598
        %v7604 = vsel %vm508, %v7596, %v7597
        %v7605 = vsel %vm508, %v7595, %v7596
        %v7606 = vsel %vm508, %v7594, %v7595
        %v7607 = vsel %vm508, %v7593, %v7594
        %v7608 = vsel %vm508, %v7592, %v7593
        %v7609 = vsel %vm508, %v7591, %v7592
        %v7610 = vsel %vm508, %v7590, %v7591
        %v7611 = vsel %vm508, %v7589, %v7590
        %v7612 = vsel %vm508, %v7588, %v7589
        %v7613 = vsel %vm508, %v7587, %v7588
        %v7614 = vsel %vm508, %v7586, %v7587
        %v7615 = vsel %vm508, %v7585, %v7586
        %v7616 = vsel %vm508, %v7584, %v7585
        %v7617 = vsel %vm508, %v7583, %v7584
        %v7618 = vsel %vm508, %v7582, %v7583
        %v7619 = vsel %vm508, %v7581, %v7582
        %v7620 = vsel %vm508, %v7580, %v7581
        %v7621 = vsel %vm508, %v7579, %v7580
        %v7622 = vsel %vm508, %v7578, %v7579
        %v7623 = vsel %vm508, %v7577, %v7578
        %v7624 = vsel %vm508, %v7576, %v7577
        %v7625 = vsel %vm508, %v7575, %v7576
        %v7626 = vsel %vm508, %v7574, %v7575
        %v7627 = vsel %vm508, %v7573, %v7574
        %v7628 = vsel %vm508, %v7572, %v7573
        %v7629 = vsel %vm508, %v7571, %v7572
        %v7630 = vsel %vm508, %v7570, %v7571
        %v7631 = vsel %vm508, %v7569, %v7570
        %v7632 = vsel %vm508, %v7568, %v7569
        %v7633 = vsel %vm508, %v7567, %v7568
        %v7634 = vsel %vm508, %v7566, %v7567
        %v7635 = vsel %vm508, %v7565, %v7566
        %v7636 = vsel %vm508, %v7564, %v7565
        %v7637 = vsel %vm508, %v7563, %v7564
        %v7638 = vsel %vm508, %v7562, %v7563
        %v7639 = vsel %vm508, %v7561, %v7562
        %v7640 = vsel %vm508, %v7560, %v7561
        %v7641 = vsel %vm508, %v7559, %v7560
        %v7642 = vsel %vm508, %v7558, %v7559
        %v7643 = vsel %vm508, %v7557, %v7558
        %v7644 = vsel %vm508, %v7556, %v7557
        %v7645 = vsel %vm508, %v7555, %v7556
        %v7646 = vsel %vm508, %v7554, %v7555
        %v7647 = vsel %vm508, %v7553, %v7554
        %v7648 = vsel %vm508, %v7552, %v7553
        %v7649 = vsel %vm508, %v7551, %v7552
        %v7650 = vsel %vm508, %v7550, %v7551
        %v7651 = vsel %vm508, %v7549, %v7550
        %v7652 = vsel %vm508, %v7548, %v7549
        %v7653 = vsel %vm508, %v7547, %v7548
        %v7654 = vsel %vm508, %v7546, %v7547
        %v7655 = vpack.c.bf16 %v7544, %v7545
        %v7656 = vpack.c.bf16 %v7542, %v7543
        %v7657 = vpack.c.bf16 %v7540, %v7541
        %v7658 = vpack.c.bf16 %v7538, %v7539
        %v7659 = vpack.c.bf16 %v7536, %v7537
        %v7660 = vpack.c.bf16 %v7534, %v7535
        %v7661 = vpack.c.bf16 %v7532, %v7533
        %v7662 = vpack.c.bf16 %v7530, %v7531
        %v7663 = vpack.c.bf16 %v7528, %v7529
        %v7664 = vpack.c.bf16 %v7526, %v7527
        %v7665 = vpack.c.bf16 %v7524, %v7525
        %v7666 = vpack.c.bf16 %v7522, %v7523
        %v7667 = vpack.c.bf16 %v7520, %v7521
        %v7668 = vpack.c.bf16 %v7518, %v7519
        %v7669 = vpack.c.bf16 %v7516, %v7517
        %v7670 = vpack.c.bf16 %v7514, %v7515
        %v7671 = vpack.c.bf16 %v7512, %v7513
        %v7672 = vpack.c.bf16 %v7510, %v7511
        %v7673 = vpack.c.bf16 %v7508, %v7509
        %v7674 = vpack.c.bf16 %v7506, %v7507
        %v7675 = vpack.c.bf16 %v7504, %v7505
        %v7676 = vpack.c.bf16 %v7502, %v7503
        %v7677 = vpack.c.bf16 %v7500, %v7501
        %v7678 = vpack.c.bf16 %v7498, %v7499
        %v7679 = vpack.c.bf16 %v7383, %v7382
        %v7680 = vpack.c.bf16 %v7385, %v7384
        %v7681 = vpack.c.bf16 %v7387, %v7386
        %v7682 = vpack.c.bf16 %v7389, %v7388
        %v7683 = vpack.c.bf16 %v7391, %v7390
        %v7684 = vpack.c.bf16 %v7393, %v7392
        %v7685 = vpack.c.bf16 %v7395, %v7394
        %v7686 = vpack.c.bf16 %v7397, %v7396
        %v7687 = vpack.c.bf16 %v7399, %v7398
        %v7688 = vpack.c.bf16 %v7401, %v7400
        %v7689 = vpack.c.bf16 %v7403, %v7402
        %v7690 = vpack.c.bf16 %v7405, %v7404
        %v7691 = vpack.c.bf16 %v7407, %v7406
        %v7692 = vpack.c.bf16 %v7409, %v7408
        %v7693 = vpack.c.bf16 %v7411, %v7410
        %v7694 = vpack.c.bf16 %v7413, %v7412
        %v7695 = vpack.c.bf16 %v7415, %v7414
        %v7696 = vpack.c.bf16 %v7417, %v7416
        %v7697 = vpack.c.bf16 %v7419, %v7418
        %v7698 = vpack.c.bf16 %v7421, %v7420
        %v7699 = vpack.c.bf16 %v7423, %v7422
        %v7700 = vpack.c.bf16 %v7425, %v7424
        %v7701 = vpack.c.bf16 %v7427, %v7426
        %v7702 = vpack.c.bf16 %v7429, %v7428
        %v7703 = vpack.c.bf16 %v7653, %v7654
        %v7704 = vpack.c.bf16 %v7651, %v7652
        %v7705 = vpack.c.bf16 %v7649, %v7650
        %v7706 = vpack.c.bf16 %v7647, %v7648
        %v7707 = vpack.c.bf16 %v7645, %v7646
        %v7708 = vpack.c.bf16 %v7643, %v7644
        %v7709 = vpack.c.bf16 %v7641, %v7642
        %v7710 = vpack.c.bf16 %v7639, %v7640
        %v7711 = vpack.c.bf16 %v7637, %v7638
        %v7712 = vpack.c.bf16 %v7635, %v7636
        %v7713 = vpack.c.bf16 %v7633, %v7634
        %v7714 = vpack.c.bf16 %v7631, %v7632
        %v7715 = vpack.c.bf16 %v7629, %v7630
        %v7716 = vpack.c.bf16 %v7627, %v7628
        %v7717 = vpack.c.bf16 %v7625, %v7626
        %v7718 = vpack.c.bf16 %v7623, %v7624
        %v7719 = vpack.c.bf16 %v7621, %v7622
        %v7720 = vpack.c.bf16 %v7619, %v7620
        %v7721 = vpack.c.bf16 %v7617, %v7618
        %v7722 = vpack.c.bf16 %v7615, %v7616
        %v7723 = vpack.c.bf16 %v7613, %v7614
        %v7724 = vpack.c.bf16 %v7611, %v7612
        %v7725 = vpack.c.bf16 %v7609, %v7610
        %v7726 = vpack.c.bf16 %v7607, %v7608
        %v7727 = vpack.c.bf16 %v7541, %v7542
        %v7728 = vpack.c.bf16 %v7539, %v7540
        %v7729 = vpack.c.bf16 %v7537, %v7538
        %v7730 = vpack.c.bf16 %v7535, %v7536
        %v7731 = vpack.c.bf16 %v7533, %v7534
        %v7732 = vpack.c.bf16 %v7531, %v7532
        %v7733 = vpack.c.bf16 %v7529, %v7530
        %v7734 = vpack.c.bf16 %v7527, %v7528
        %v7735 = vpack.c.bf16 %v7525, %v7526
        %v7736 = vpack.c.bf16 %v7523, %v7524
        %v7737 = vpack.c.bf16 %v7521, %v7522
        %v7738 = vpack.c.bf16 %v7519, %v7520
        %v7739 = vpack.c.bf16 %v7517, %v7518
        %v7740 = vpack.c.bf16 %v7515, %v7516
        %v7741 = vpack.c.bf16 %v7513, %v7514
        %v7742 = vpack.c.bf16 %v7511, %v7512
        %v7743 = vpack.c.bf16 %v7509, %v7510
        %v7744 = vpack.c.bf16 %v7507, %v7508
        %v7745 = vpack.c.bf16 %v7505, %v7506
        %v7746 = vpack.c.bf16 %v7503, %v7504
        %v7747 = vpack.c.bf16 %v7501, %v7502
        %v7748 = vpack.c.bf16 %v7499, %v7500
        %v7749 = vpack.c.bf16 %v7497, %v7498
        %v7750 = vpack.c.bf16 %v7495, %v7496
        %v7751 = vpack.c.bf16 %v7386, %v7385
        %v7752 = vpack.c.bf16 %v7388, %v7387
        %v7753 = vpack.c.bf16 %v7390, %v7389
        %v7754 = vpack.c.bf16 %v7392, %v7391
        %v7755 = vpack.c.bf16 %v7394, %v7393
        %v7756 = vpack.c.bf16 %v7396, %v7395
        %v7757 = vpack.c.bf16 %v7398, %v7397
        %v7758 = vpack.c.bf16 %v7400, %v7399
        %v7759 = vpack.c.bf16 %v7402, %v7401
        %v7760 = vpack.c.bf16 %v7404, %v7403
        %v7761 = vpack.c.bf16 %v7406, %v7405
        %v7762 = vpack.c.bf16 %v7408, %v7407
        %v7763 = vpack.c.bf16 %v7410, %v7409
        %v7764 = vpack.c.bf16 %v7412, %v7411
        %v7765 = vpack.c.bf16 %v7414, %v7413
        %v7766 = vpack.c.bf16 %v7416, %v7415
        %v7767 = vpack.c.bf16 %v7418, %v7417
        %v7768 = vpack.c.bf16 %v7420, %v7419
        %v7769 = vpack.c.bf16 %v7422, %v7421
        %v7770 = vpack.c.bf16 %v7424, %v7423
        %v7771 = vpack.c.bf16 %v7426, %v7425
        %v7772 = vpack.c.bf16 %v7428, %v7427
        %v7773 = vpack.c.bf16 %v7430, %v7429
        %v7774 = vpack.c.bf16 %v7432, %v7431
        %v7775 = vpack.c.bf16 %v7650, %v7651
        %v7776 = vpack.c.bf16 %v7648, %v7649
        %v7777 = vpack.c.bf16 %v7646, %v7647
        %v7778 = vpack.c.bf16 %v7644, %v7645
        %v7779 = vpack.c.bf16 %v7642, %v7643
        %v7780 = vpack.c.bf16 %v7640, %v7641
        %v7781 = vpack.c.bf16 %v7638, %v7639
        %v7782 = vpack.c.bf16 %v7636, %v7637
        %v7783 = vpack.c.bf16 %v7634, %v7635
        %v7784 = vpack.c.bf16 %v7632, %v7633
        %v7785 = vpack.c.bf16 %v7630, %v7631
        %v7786 = vpack.c.bf16 %v7628, %v7629
        %v7787 = vpack.c.bf16 %v7626, %v7627
        %v7788 = vpack.c.bf16 %v7624, %v7625
        %v7789 = vpack.c.bf16 %v7622, %v7623
        %v7790 = vpack.c.bf16 %v7620, %v7621
        %v7791 = vpack.c.bf16 %v7618, %v7619
        %v7792 = vpack.c.bf16 %v7616, %v7617
        %v7793 = vpack.c.bf16 %v7614, %v7615
        %v7794 = vpack.c.bf16 %v7612, %v7613
        %v7795 = vpack.c.bf16 %v7610, %v7611
        %v7796 = vpack.c.bf16 %v7608, %v7609
        %v7797 = vpack.c.bf16 %v7606, %v7607
        %v7798 = vpack.c.bf16 %v7604, %v7605
        %v7799 = vpack.c.bf16 %v7496, %v7497
        %v7800 = vpack.c.bf16 %v7494, %v7495
        %v7801 = vpack.c.bf16 %v7492, %v7493
        %v7802 = vpack.c.bf16 %v7431, %v7430
        %v7803 = vpack.c.bf16 %v7433, %v7432
        %v7804 = vpack.c.bf16 %v7435, %v7434
        %v7805 = vpack.c.bf16 %v7605, %v7606
        %v7806 = vpack.c.bf16 %v7603, %v7604
        %v7807 = vpack.c.bf16 %v7601, %v7602
        %s7808 = scalar_lea.vmem [#allocation3], 1728
        %v7809 = vld [vmem:[%s7808] sm:$0xf]
        %v7810 = vld [vmem:[%s7808 + $0x4] sm:$0xf]
        %v7811 = vld [vmem:[%s7808 + $0x8] sm:$0xf]
        %v7812 = vld [vmem:[%s7808 + $0xc] sm:$0xf]
        %v7813 = vld [vmem:[%s7808 + $0x10] sm:$0xf]
        %v7814 = vld [vmem:[%s7808 + $0x14] sm:$0xf]
        %v7815 = vld [vmem:[%s7808 + $0x18] sm:$0xf]
        %v7816 = vld [vmem:[%s7808 + $0x1c] sm:$0xf]
        %v7817 = vld [vmem:[%s7808 + $0x20] sm:$0xf]
        %v7818 = vld [vmem:[%s7808 + $0x24] sm:$0xf]
        %v7819 = vld [vmem:[%s7808 + $0x28] sm:$0xf]
        %v7820 = vld [vmem:[%s7808 + $0x2c] sm:$0xf]
        %v7821 = vld [vmem:[%s7808 + $0x30] sm:$0xf]
        %v7822 = vld [vmem:[%s7808 + $0x34] sm:$0xf]
        %v7823 = vld [vmem:[%s7808 + $0x38] sm:$0xf]
        %v7824 = vld [vmem:[%s7808 + $0x3c] sm:$0xf]
        %v7825 = vld [vmem:[%s7808 + $0x40] sm:$0xf]
        %v7826 = vld [vmem:[%s7808 + $0x44] sm:$0xf]
        %v7827 = vld [vmem:[%s7808 + $0x48] sm:$0xf]
        %v7828 = vld [vmem:[%s7808 + $0x4c] sm:$0xf]
        %v7829 = vld [vmem:[%s7808 + $0x50] sm:$0xf]
        %v7830 = vld [vmem:[%s7808 + $0x54] sm:$0xf]
        %v7831 = vld [vmem:[%s7808 + $0x58] sm:$0xf]
        %v7832 = vld [vmem:[%s7808 + $0x5c] sm:$0xf]
        %v7833 = vld [vmem:[%s7808 + $0x60] sm:$0xf]
        %v7834 = vld [vmem:[%s7808 + $0x64] sm:$0xf]
        %v7835 = vld [vmem:[%s7808 + $0x68] sm:$0xf]
        %v7836 = vld [vmem:[%s7808 + $0x6c] sm:$0xf]
        %v7837 = vld [vmem:[%s7808 + $0x70] sm:$0xf]
        %v7838 = vld [vmem:[%s7808 + $0x74] sm:$0xf]
        %v7839 = vld [vmem:[%s7808 + $0x78] sm:$0xf]
        %v7840 = vld [vmem:[%s7808 + $0x7c] sm:$0xf]
        %v7841 = vld [vmem:[%s7808 + $0x80] sm:$0xf]
        %v7842 = vld [vmem:[%s7808 + $0x84] sm:$0xf]
        %v7843 = vld [vmem:[%s7808 + $0x88] sm:$0xf]
        %v7844 = vld [vmem:[%s7808 + $0x8c] sm:$0xf]
        %v7845 = vld [vmem:[%s7808 + $0x90] sm:$0xf]
        %v7846 = vld [vmem:[%s7808 + $0x94] sm:$0xf]
        %v7847 = vld [vmem:[%s7808 + $0x98] sm:$0xf]
        %v7848 = vld [vmem:[%s7808 + $0x9c] sm:$0xf]
        %v7849 = vld [vmem:[%s7808 + $0xa0] sm:$0xf]
        %v7850 = vld [vmem:[%s7808 + $0xa4] sm:$0xf]
        %v7851 = vld [vmem:[%s7808 + $0xa8] sm:$0xf]
        %v7852 = vld [vmem:[%s7808 + $0xac] sm:$0xf]
        %v7853 = vld [vmem:[%s7808 + $0xb0] sm:$0xf]
        %v7854 = vld [vmem:[%s7808 + $0xb4] sm:$0xf]
        %v7855 = vld [vmem:[%s7808 + $0xb8] sm:$0xf]
        %v7856 = vld [vmem:[%s7808 + $0xbc] sm:$0xf]
        %v7857 = vld [vmem:[%s7808 + $0xc0] sm:$0xf]
        %v7858 = vld [vmem:[%s7808 + $0xc4] sm:$0xf]
        %v7859 = vld [vmem:[%s7808 + $0xc8] sm:$0xf]
        %v7860 = vld [vmem:[%s7808 + $0xcc] sm:$0xf]
        %v7861 = vld [vmem:[%s7808 + $0xd0] sm:$0xf]
        %v7862 = vld [vmem:[%s7808 + $0xd4] sm:$0xf]
        %v7863 = vld [vmem:[%s7808 + $0xd8] sm:$0xf]
        %v7864 = vld [vmem:[%s7808 + $0xdc] sm:$0xf]
        %v7865 = vld [vmem:[%s7808 + $0xe0] sm:$0xf]
        %v7866 = vld [vmem:[%s7808 + $0xe4] sm:$0xf]
        %v7867 = vld [vmem:[%s7808 + $0xe8] sm:$0xf]
        %v7868 = vld [vmem:[%s7808 + $0xec] sm:$0xf]
        %v7869 = vld [vmem:[%s7808 + $0xf0] sm:$0xf]
        %v7870 = vld [vmem:[%s7808 + $0xf4] sm:$0xf]
        %v7871 = vld [vmem:[%s7808 + $0xf8] sm:$0xf]
        %v7872 = vld [vmem:[%s7808 + $0xfc] sm:$0xf]
        %v7873 = vld [vmem:[%s7808 + $0x100] sm:$0xf]
        %v7874 = vld [vmem:[%s7808 + $0x104] sm:$0xf]
        %v7875 = vld [vmem:[%s7808 + $0x108] sm:$0xf]
        %v7876 = vld [vmem:[%s7808 + $0x10c] sm:$0xf]
        %v7877 = vld [vmem:[%s7808 + $0x110] sm:$0xf]
        %v7878 = vld [vmem:[%s7808 + $0x114] sm:$0xf]
        %v7879 = vld [vmem:[%s7808 + $0x118] sm:$0xf]
        %v7880 = vld [vmem:[%s7808 + $0x11c] sm:$0xf]
        %v7881 = vld [vmem:[%s7808 + $0x120] sm:$0xf]
        %v7882 = vld [vmem:[%s7808 + $0x124] sm:$0xf]
        %v7883 = vld [vmem:[%s7808 + $0x128] sm:$0xf]
        %v7884 = vld [vmem:[%s7808 + $0x12c] sm:$0xf]
        %v7885 = vld [vmem:[%s7808 + $0x130] sm:$0xf]
        %v7886 = vld [vmem:[%s7808 + $0x134] sm:$0xf]
        %v7887 = vld [vmem:[%s7808 + $0x138] sm:$0xf]
        %v7888 = vld [vmem:[%s7808 + $0x13c] sm:$0xf]
        %v7889 = vld [vmem:[%s7808 + $0x140] sm:$0xf]
        %v7890 = vld [vmem:[%s7808 + $0x144] sm:$0xf]
        %v7891 = vld [vmem:[%s7808 + $0x148] sm:$0xf]
        %v7892 = vld [vmem:[%s7808 + $0x14c] sm:$0xf]
        %v7893 = vld [vmem:[%s7808 + $0x150] sm:$0xf]
        %v7894 = vld [vmem:[%s7808 + $0x154] sm:$0xf]
        %v7895 = vld [vmem:[%s7808 + $0x158] sm:$0xf]
        %v7896 = vld [vmem:[%s7808 + $0x15c] sm:$0xf]
        %v7897 = vld [vmem:[%s7808 + $0x160] sm:$0xf]
        %v7898 = vld [vmem:[%s7808 + $0x164] sm:$0xf]
        %v7899 = vld [vmem:[%s7808 + $0x168] sm:$0xf]
        %v7900 = vld [vmem:[%s7808 + $0x16c] sm:$0xf]
        %v7901 = vld [vmem:[%s7808 + $0x170] sm:$0xf]
        %v7902 = vld [vmem:[%s7808 + $0x174] sm:$0xf]
        %v7903 = vld [vmem:[%s7808 + $0x178] sm:$0xf]
        %v7904 = vld [vmem:[%s7808 + $0x17c] sm:$0xf]
        %v7905 = vld [vmem:[%s7808 + $0x180] sm:$0xf]
        %v7906 = vld [vmem:[%s7808 + $0x184] sm:$0xf]
        %v7907 = vld [vmem:[%s7808 + $0x188] sm:$0xf]
        %v7908 = vld [vmem:[%s7808 + $0x18c] sm:$0xf]
        %v7909 = vld [vmem:[%s7808 + $0x190] sm:$0xf]
        %v7910 = vld [vmem:[%s7808 + $0x194] sm:$0xf]
        %v7911 = vld [vmem:[%s7808 + $0x198] sm:$0xf]
        %v7912 = vld [vmem:[%s7808 + $0x19c] sm:$0xf]
        %v7913 = vld [vmem:[%s7808 + $0x1a0] sm:$0xf]
        %v7914 = vld [vmem:[%s7808 + $0x1a4] sm:$0xf]
        %v7915 = vld [vmem:[%s7808 + $0x1a8] sm:$0xf]
        %v7916 = vld [vmem:[%s7808 + $0x1ac] sm:$0xf]
        %v7917 = vld [vmem:[%s7808 + $0x1b0] sm:$0xf]
        %v7918 = vld [vmem:[%s7808 + $0x1b4] sm:$0xf]
        %v7919 = vld [vmem:[%s7808 + $0x1b8] sm:$0xf]
        %v7920 = vld [vmem:[%s7808 + $0x1bc] sm:$0xf]
        %v7921 = vld [vmem:[%s7808 + $0x1c0] sm:$0xf]
        %v7922 = vld [vmem:[%s7808 + $0x1c4] sm:$0xf]
        %v7923 = vld [vmem:[%s7808 + $0x1c8] sm:$0xf]
        %v7924 = vld [vmem:[%s7808 + $0x1cc] sm:$0xf]
        %v7925 = vld [vmem:[%s7808 + $0x1d0] sm:$0xf]
        %v7926 = vld [vmem:[%s7808 + $0x1d4] sm:$0xf]
        %v7927 = vld [vmem:[%s7808 + $0x1d8] sm:$0xf]
        %v7928 = vld [vmem:[%s7808 + $0x1dc] sm:$0xf]
        %v7929 = vld [vmem:[%s7808 + $0x1e0] sm:$0xf]
        %v7930 = vld [vmem:[%s7808 + $0x1e4] sm:$0xf]
        %v7931 = vld [vmem:[%s7808 + $0x1e8] sm:$0xf]
        %v7932 = vld [vmem:[%s7808 + $0x1ec] sm:$0xf]
        %v7933 = vld [vmem:[%s7808 + $0x1f0] sm:$0xf]
        %v7934 = vld [vmem:[%s7808 + $0x1f4] sm:$0xf]
        %v7935 = vld [vmem:[%s7808 + $0x1f8] sm:$0xf]
        %v7936 = vld [vmem:[%s7808 + $0x1fc] sm:$0xf]
        %v7937 = vld [vmem:[%s7808 + $0x200] sm:$0xf]
        %v7938 = vld [vmem:[%s7808 + $0x204] sm:$0xf]
        %v7939 = vld [vmem:[%s7808 + $0x208] sm:$0xf]
        %v7940 = vld [vmem:[%s7808 + $0x20c] sm:$0xf]
        %v7941 = vld [vmem:[%s7808 + $0x210] sm:$0xf]
        %v7942 = vld [vmem:[%s7808 + $0x214] sm:$0xf]
        %v7943 = vld [vmem:[%s7808 + $0x218] sm:$0xf]
        %v7944 = vld [vmem:[%s7808 + $0x21c] sm:$0xf]
        %v7945 = vld [vmem:[%s7808 + $0x220] sm:$0xf]
        %v7946 = vld [vmem:[%s7808 + $0x224] sm:$0xf]
        %v7947 = vld [vmem:[%s7808 + $0x228] sm:$0xf]
        %v7948 = vld [vmem:[%s7808 + $0x22c] sm:$0xf]
        %v7949 = vld [vmem:[%s7808 + $0x230] sm:$0xf]
        %v7950 = vld [vmem:[%s7808 + $0x234] sm:$0xf]
        %v7951 = vld [vmem:[%s7808 + $0x238] sm:$0xf]
        %v7952 = vld [vmem:[%s7808 + $0x23c] sm:$0xf]
        %s7953 = scalar_lea.vmem [#allocation6], 3
        %v7954 = vld [vmem:[%s7953] sm:$0x1]
        %v7956 = vlaneseq
        %v7957 = vshrl.u32 %v7956, 7
        %v7958 = vsub.s32 0, %v7957
        %v7959 = vrot.slane %v7954, %v7958
        %v8105 = vunpack.c.l.b16 %v7809
        %v8106 = vunpack.c.l.b16 %v7810
        %v8107 = vunpack.c.l.b16 %v7811
        %v8108 = vunpack.c.l.b16 %v7812
        %v8109 = vunpack.c.l.b16 %v7813
        %v8110 = vunpack.c.l.b16 %v7814
        %v8111 = vunpack.c.l.b16 %v7815
        %v8112 = vunpack.c.l.b16 %v7816
        %v8113 = vunpack.c.l.b16 %v7817
        %v8114 = vunpack.c.l.b16 %v7818
        %v8115 = vunpack.c.l.b16 %v7819
        %v8116 = vunpack.c.l.b16 %v7820
        %v8117 = vunpack.c.l.b16 %v7821
        %v8118 = vunpack.c.l.b16 %v7822
        %v8119 = vunpack.c.l.b16 %v7823
        %v8120 = vunpack.c.l.b16 %v7824
        %v8121 = vunpack.c.l.b16 %v7825
        %v8122 = vunpack.c.l.b16 %v7826
        %v8123 = vunpack.c.l.b16 %v7827
        %v8124 = vunpack.c.l.b16 %v7828
        %v8125 = vunpack.c.l.b16 %v7829
        %v8126 = vunpack.c.l.b16 %v7830
        %v8127 = vunpack.c.l.b16 %v7831
        %v8128 = vunpack.c.l.b16 %v7832
        %v8129 = vunpack.c.l.b16 %v7833
        %v8130 = vunpack.c.l.b16 %v7834
        %v8131 = vunpack.c.l.b16 %v7835
        %v8132 = vunpack.c.l.b16 %v7836
        %v8133 = vunpack.c.l.b16 %v7837
        %v8134 = vunpack.c.l.b16 %v7838
        %v8135 = vunpack.c.l.b16 %v7839
        %v8136 = vunpack.c.l.b16 %v7840
        %v8137 = vunpack.c.l.b16 %v7841
        %v8138 = vunpack.c.l.b16 %v7842
        %v8139 = vunpack.c.l.b16 %v7843
        %v8140 = vunpack.c.l.b16 %v7844
        %v8141 = vunpack.c.l.b16 %v7845
        %v8142 = vunpack.c.l.b16 %v7846
        %v8143 = vunpack.c.l.b16 %v7847
        %v8144 = vunpack.c.l.b16 %v7848
        %v8145 = vunpack.c.l.b16 %v7849
        %v8146 = vunpack.c.l.b16 %v7850
        %v8147 = vunpack.c.l.b16 %v7851
        %v8148 = vunpack.c.l.b16 %v7852
        %v8149 = vunpack.c.l.b16 %v7853
        %v8150 = vunpack.c.l.b16 %v7854
        %v8151 = vunpack.c.l.b16 %v7855
        %v8152 = vunpack.c.l.b16 %v7856
        %v8153 = vunpack.c.l.b16 %v7857
        %v8154 = vunpack.c.l.b16 %v7858
        %v8155 = vunpack.c.l.b16 %v7859
        %v8156 = vunpack.c.l.b16 %v7860
        %v8157 = vunpack.c.l.b16 %v7861
        %v8158 = vunpack.c.l.b16 %v7862
        %v8159 = vunpack.c.l.b16 %v7863
        %v8160 = vunpack.c.l.b16 %v7864
        %v8161 = vunpack.c.l.b16 %v7865
        %v8162 = vunpack.c.l.b16 %v7866
        %v8163 = vunpack.c.l.b16 %v7867
        %v8164 = vunpack.c.l.b16 %v7868
        %v8165 = vunpack.c.l.b16 %v7869
        %v8166 = vunpack.c.l.b16 %v7870
        %v8167 = vunpack.c.l.b16 %v7871
        %v8168 = vunpack.c.l.b16 %v7872
        %v8169 = vunpack.c.l.b16 %v7873
        %v8170 = vunpack.c.l.b16 %v7874
        %v8171 = vunpack.c.l.b16 %v7875
        %v8172 = vunpack.c.l.b16 %v7876
        %v8173 = vunpack.c.l.b16 %v7877
        %v8174 = vunpack.c.l.b16 %v7878
        %v8175 = vunpack.c.l.b16 %v7879
        %v8176 = vunpack.c.l.b16 %v7880
        %v8177 = vunpack.c.l.b16 %v7881
        %v8178 = vunpack.c.l.b16 %v7882
        %v8179 = vunpack.c.l.b16 %v7883
        %v8180 = vunpack.c.l.b16 %v7884
        %v8181 = vunpack.c.l.b16 %v7885
        %v8182 = vunpack.c.l.b16 %v7886
        %v8183 = vunpack.c.l.b16 %v7887
        %v8184 = vunpack.c.l.b16 %v7888
        %v8185 = vunpack.c.l.b16 %v7889
        %v8186 = vunpack.c.l.b16 %v7890
        %v8187 = vunpack.c.l.b16 %v7891
        %v8188 = vunpack.c.l.b16 %v7892
        %v8189 = vunpack.c.l.b16 %v7893
        %v8190 = vunpack.c.l.b16 %v7894
        %v8191 = vunpack.c.l.b16 %v7895
        %v8192 = vunpack.c.l.b16 %v7896
        %v8193 = vunpack.c.l.b16 %v7897
        %v8194 = vunpack.c.l.b16 %v7898
        %v8195 = vunpack.c.l.b16 %v7899
        %v8196 = vunpack.c.l.b16 %v7900
        %v8197 = vunpack.c.l.b16 %v7901
        %v8198 = vunpack.c.l.b16 %v7902
        %v8199 = vunpack.c.l.b16 %v7903
        %v8200 = vunpack.c.l.b16 %v7904
        %v8201 = vunpack.c.l.b16 %v7905
        %v8202 = vunpack.c.l.b16 %v7906
        %v8203 = vunpack.c.l.b16 %v7907
        %v8204 = vunpack.c.l.b16 %v7908
        %v8205 = vunpack.c.l.b16 %v7909
        %v8206 = vunpack.c.l.b16 %v7910
        %v8207 = vunpack.c.l.b16 %v7911
        %v8208 = vunpack.c.l.b16 %v7912
        %v8209 = vunpack.c.l.b16 %v7913
        %v8210 = vunpack.c.l.b16 %v7914
        %v8211 = vunpack.c.l.b16 %v7915
        %v8212 = vunpack.c.l.b16 %v7916
        %v8213 = vunpack.c.l.b16 %v7917
        %v8214 = vunpack.c.l.b16 %v7918
        %v8215 = vunpack.c.l.b16 %v7919
        %v8216 = vunpack.c.l.b16 %v7920
        %v8217 = vunpack.c.l.b16 %v7921
        %v8218 = vunpack.c.l.b16 %v7922
        %v8219 = vunpack.c.l.b16 %v7923
        %v8220 = vunpack.c.l.b16 %v7924
        %v8221 = vunpack.c.l.b16 %v7925
        %v8222 = vunpack.c.l.b16 %v7926
        %v8223 = vunpack.c.l.b16 %v7927
        %v8224 = vunpack.c.l.b16 %v7928
        %v8225 = vunpack.c.l.b16 %v7929
        %v8226 = vunpack.c.l.b16 %v7930
        %v8227 = vunpack.c.l.b16 %v7931
        %v8228 = vunpack.c.l.b16 %v7932
        %v8229 = vunpack.c.l.b16 %v7933
        %v8230 = vunpack.c.l.b16 %v7934
        %v8231 = vunpack.c.l.b16 %v7935
        %v8232 = vunpack.c.l.b16 %v7936
        %v8233 = vunpack.c.l.b16 %v7937
        %v8234 = vunpack.c.l.b16 %v7938
        %v8235 = vunpack.c.l.b16 %v7939
        %v8236 = vunpack.c.l.b16 %v7940
        %v8237 = vunpack.c.l.b16 %v7941
        %v8238 = vunpack.c.l.b16 %v7942
        %v8239 = vunpack.c.l.b16 %v7943
        %v8240 = vunpack.c.l.b16 %v7944
        %v8241 = vunpack.c.l.b16 %v7945
        %v8242 = vunpack.c.l.b16 %v7946
        %v8243 = vunpack.c.l.b16 %v7947
        %v8244 = vunpack.c.l.b16 %v7948
        %v8245 = vunpack.c.l.b16 %v7949
        %v8246 = vunpack.c.l.b16 %v7950
        %v8247 = vunpack.c.l.b16 %v7951
        %v8248 = vunpack.c.l.b16 %v7952
        %v8249 = vpack.c.b16 %v8106, %v8105
        %v8250 = vpack.c.b16 %v8108, %v8107
        %v8251 = vpack.c.b16 %v8110, %v8109
        %v8252 = vpack.c.b16 %v8112, %v8111
        %v8253 = vpack.c.b16 %v8114, %v8113
        %v8254 = vpack.c.b16 %v8116, %v8115
        %v8255 = vpack.c.b16 %v8118, %v8117
        %v8256 = vpack.c.b16 %v8120, %v8119
        %v8257 = vpack.c.b16 %v8122, %v8121
        %v8258 = vpack.c.b16 %v8124, %v8123
        %v8259 = vpack.c.b16 %v8126, %v8125
        %v8260 = vpack.c.b16 %v8128, %v8127
        %v8261 = vpack.c.b16 %v8130, %v8129
        %v8262 = vpack.c.b16 %v8132, %v8131
        %v8263 = vpack.c.b16 %v8134, %v8133
        %v8264 = vpack.c.b16 %v8136, %v8135
        %v8265 = vpack.c.b16 %v8138, %v8137
        %v8266 = vpack.c.b16 %v8140, %v8139
        %v8267 = vpack.c.b16 %v8142, %v8141
        %v8268 = vpack.c.b16 %v8144, %v8143
        %v8269 = vpack.c.b16 %v8146, %v8145
        %v8270 = vpack.c.b16 %v8148, %v8147
        %v8271 = vpack.c.b16 %v8150, %v8149
        %v8272 = vpack.c.b16 %v8152, %v8151
        %v8273 = vpack.c.b16 %v8154, %v8153
        %v8274 = vpack.c.b16 %v8156, %v8155
        %v8275 = vpack.c.b16 %v8158, %v8157
        %v8276 = vpack.c.b16 %v8160, %v8159
        %v8277 = vpack.c.b16 %v8162, %v8161
        %v8278 = vpack.c.b16 %v8164, %v8163
        %v8279 = vpack.c.b16 %v8166, %v8165
        %v8280 = vpack.c.b16 %v8168, %v8167
        %v8281 = vpack.c.b16 %v8170, %v8169
        %v8282 = vpack.c.b16 %v8172, %v8171
        %v8283 = vpack.c.b16 %v8174, %v8173
        %v8284 = vpack.c.b16 %v8176, %v8175
        %v8285 = vpack.c.b16 %v8178, %v8177
        %v8286 = vpack.c.b16 %v8180, %v8179
        %v8287 = vpack.c.b16 %v8182, %v8181
        %v8288 = vpack.c.b16 %v8184, %v8183
        %v8289 = vpack.c.b16 %v8186, %v8185
        %v8290 = vpack.c.b16 %v8188, %v8187
        %v8291 = vpack.c.b16 %v8190, %v8189
        %v8292 = vpack.c.b16 %v8192, %v8191
        %v8293 = vpack.c.b16 %v8194, %v8193
        %v8294 = vpack.c.b16 %v8196, %v8195
        %v8295 = vpack.c.b16 %v8198, %v8197
        %v8296 = vpack.c.b16 %v8200, %v8199
        %v8297 = vpack.c.b16 %v8202, %v8201
        %v8298 = vpack.c.b16 %v8204, %v8203
        %v8299 = vpack.c.b16 %v8206, %v8205
        %v8300 = vpack.c.b16 %v8208, %v8207
        %v8301 = vpack.c.b16 %v8210, %v8209
        %v8302 = vpack.c.b16 %v8212, %v8211
        %v8303 = vpack.c.b16 %v8214, %v8213
        %v8304 = vpack.c.b16 %v8216, %v8215
        %v8305 = vpack.c.b16 %v8218, %v8217
        %v8306 = vpack.c.b16 %v8220, %v8219
        %v8307 = vpack.c.b16 %v8222, %v8221
        %v8308 = vpack.c.b16 %v8224, %v8223
        %v8309 = vpack.c.b16 %v8226, %v8225
        %v8310 = vpack.c.b16 %v8228, %v8227
        %v8311 = vpack.c.b16 %v8230, %v8229
        %v8312 = vpack.c.b16 %v8232, %v8231
        %v8313 = vpack.c.b16 %v8234, %v8233
        %v8314 = vpack.c.b16 %v8236, %v8235
        %v8315 = vpack.c.b16 %v8238, %v8237
        %v8316 = vpack.c.b16 %v8240, %v8239
        %v8317 = vpack.c.b16 %v8242, %v8241
        %v8318 = vpack.c.b16 %v8244, %v8243
        %v8319 = vpack.c.b16 %v8246, %v8245
        %v8320 = vpack.c.b16 %v8248, %v8247
        %8393 = vmatprep.subr.bf16.mxu0 0
        %8394 = vmatpush1.bf16.msra.mxu0 %v8249
        %8395 = vmatprep.subr.bf16.mxu0 0
        %8396 = vmatpush1.bf16.msra.mxu0 %v8250
        %8397 = vmatprep.subr.bf16.mxu0 0
        %8398 = vmatpush1.bf16.msra.mxu0 %v8251
        %8399 = vmatprep.subr.bf16.mxu0 0
        %8400 = vmatpush1.bf16.msra.mxu0 %v8252
        %8401 = vmatprep.subr.bf16.mxu0 0
        %8402 = vmatpush1.bf16.msra.mxu0 %v8253
        %8403 = vmatprep.subr.bf16.mxu0 0
        %8404 = vmatpush1.bf16.msra.mxu0 %v8254
        %8405 = vmatprep.subr.bf16.mxu0 0
        %8406 = vmatpush1.bf16.msra.mxu0 %v8255
        %8407 = vmatprep.subr.bf16.mxu0 0
        %8408 = vmatpush1.bf16.msra.mxu0 %v8256
        %8409 = vmatprep.subr.bf16.mxu0 0
        %8410 = vmatpush1.bf16.msra.mxu0 %v8257
        %8411 = vmatprep.subr.bf16.mxu0 0
        %8412 = vmatpush1.bf16.msra.mxu0 %v8258
        %8413 = vmatprep.subr.bf16.mxu0 0
        %8414 = vmatpush1.bf16.msra.mxu0 %v8259
        %8415 = vmatprep.subr.bf16.mxu0 0
        %8416 = vmatpush1.bf16.msra.mxu0 %v8260
        %8417 = vmatprep.subr.bf16.mxu0 0
        %8418 = vmatpush1.bf16.msra.mxu0 %v8261
        %8419 = vmatprep.subr.bf16.mxu0 0
        %8420 = vmatpush1.bf16.msra.mxu0 %v8262
        %8421 = vmatprep.subr.bf16.mxu0 0
        %8422 = vmatpush1.bf16.msra.mxu0 %v8263
        %8423 = vmatprep.subr.bf16.mxu0 0
        %8424 = vmatpush1.bf16.msra.mxu0 %v8264
        %8425 = vmatprep.mubr.bf16.mxu0 %v7679
        %8426 = vmatmul.mubr.bf16.gmra.mrb[0].mxu0 %v7655
        %v8427 = vpop.f32.mrb[0].mxu0
        %v8428 = vadd.f32 %v7959, %v8427
        %v8429 = vpop.f32.mrb[0].mxu0
        %v8430 = vpop.f32.mrb[0].mxu0
        %v8431 = vadd.f32 %v7959, %v8430
        %v8432 = vpop.f32.mrb[0].mxu0
        %8433 = vmatprep.mubr.bf16.mxu0 %v7680
        %8434 = vmatmul.mubr.bf16.gmra.mrb[0].mxu0 %v7656
        %v8435 = vpop.f32.mrb[0].mxu0
        %v8436 = vadd.f32 %v7959, %v8435
        %v8437 = vpop.f32.mrb[0].mxu0
        %v8438 = vpop.f32.mrb[0].mxu0
        %v8439 = vadd.f32 %v7959, %v8438
        %v8440 = vpop.f32.mrb[0].mxu0
        %8441 = vmatprep.mubr.bf16.mxu0 %v7681
        %8442 = vmatmul.mubr.bf16.gmra.mrb[0].mxu0 %v7657
        %v8443 = vpop.f32.mrb[0].mxu0
        %v8444 = vadd.f32 %v7959, %v8443
        %v8445 = vpop.f32.mrb[0].mxu0
        %v8446 = vpop.f32.mrb[0].mxu0
        %v8447 = vadd.f32 %v7959, %v8446
        %v8448 = vpop.f32.mrb[0].mxu0
        %8449 = vmatprep.mubr.bf16.mxu0 %v7682
        %8450 = vmatmul.mubr.bf16.gmra.mrb[0].mxu0 %v7658
        %v8451 = vpop.f32.mrb[0].mxu0
        %v8452 = vadd.f32 %v7959, %v8451
        %v8453 = vpop.f32.mrb[0].mxu0
        %v8454 = vpop.f32.mrb[0].mxu0
        %v8455 = vadd.f32 %v7959, %v8454
        %v8456 = vpop.f32.mrb[0].mxu0
        %8457 = vmatprep.mubr.bf16.mxu0 %v7683
        %8458 = vmatmul.mubr.bf16.gmra.mrb[0].mxu0 %v7659
        %v8459 = vpop.f32.mrb[0].mxu0
        %v8460 = vadd.f32 %v7959, %v8459
        %v8461 = vpop.f32.mrb[0].mxu0
        %v8462 = vpop.f32.mrb[0].mxu0
        %v8463 = vadd.f32 %v7959, %v8462
        %v8464 = vpop.f32.mrb[0].mxu0
        %8465 = vmatprep.mubr.bf16.mxu0 %v7684
        %8466 = vmatmul.mubr.bf16.gmra.mrb[0].mxu0 %v7660
        %v8467 = vpop.f32.mrb[0].mxu0
        %v8468 = vadd.f32 %v7959, %v8467
        %v8469 = vpop.f32.mrb[0].mxu0
        %v8470 = vpop.f32.mrb[0].mxu0
        %v8471 = vadd.f32 %v7959, %v8470
        %v8472 = vpop.f32.mrb[0].mxu0
        %8473 = vmatprep.mubr.bf16.mxu0 %v7685
        %8474 = vmatmul.mubr.bf16.gmra.mrb[0].mxu0 %v7661
        %v8475 = vpop.f32.mrb[0].mxu0
        %v8476 = vadd.f32 %v7959, %v8475
        %v8477 = vpop.f32.mrb[0].mxu0
        %v8478 = vpop.f32.mrb[0].mxu0
        %v8479 = vadd.f32 %v7959, %v8478
        %v8480 = vpop.f32.mrb[0].mxu0
        %8481 = vmatprep.mubr.bf16.mxu0 %v7686
        %8482 = vmatmul.mubr.bf16.gmra.mrb[0].mxu0 %v7662
        %v8483 = vpop.f32.mrb[0].mxu0
        %v8484 = vadd.f32 %v7959, %v8483
        %v8485 = vpop.f32.mrb[0].mxu0
        %v8486 = vpop.f32.mrb[0].mxu0
        %v8487 = vadd.f32 %v7959, %v8486
        %v8488 = vpop.f32.mrb[0].mxu0
        %8489 = vmatprep.mubr.bf16.mxu0 %v7687
        %8490 = vmatmul.mubr.bf16.gmra.mrb[0].mxu0 %v7663
        %v8491 = vpop.f32.mrb[0].mxu0
        %v8492 = vadd.f32 %v7959, %v8491
        %v8493 = vpop.f32.mrb[0].mxu0
        %v8494 = vpop.f32.mrb[0].mxu0
        %v8495 = vadd.f32 %v7959, %v8494
        %v8496 = vpop.f32.mrb[0].mxu0
        %8497 = vmatprep.mubr.bf16.mxu0 %v7688
        %8498 = vmatmul.mubr.bf16.gmra.mrb[0].mxu0 %v7664
        %v8499 = vpop.f32.mrb[0].mxu0
        %v8500 = vadd.f32 %v7959, %v8499
        %v8501 = vpop.f32.mrb[0].mxu0
        %v8502 = vpop.f32.mrb[0].mxu0
        %v8503 = vadd.f32 %v7959, %v8502
        %v8504 = vpop.f32.mrb[0].mxu0
        %8505 = vmatprep.mubr.bf16.mxu0 %v7689
        %8506 = vmatmul.mubr.bf16.gmra.mrb[0].mxu0 %v7665
        %v8507 = vpop.f32.mrb[0].mxu0
        %v8508 = vadd.f32 %v7959, %v8507
        %v8509 = vpop.f32.mrb[0].mxu0
        %v8510 = vpop.f32.mrb[0].mxu0
        %v8511 = vadd.f32 %v7959, %v8510
        %v8512 = vpop.f32.mrb[0].mxu0
        %8513 = vmatprep.mubr.bf16.mxu0 %v7690
        %8514 = vmatmul.mubr.bf16.gmra.mrb[0].mxu0 %v7666
        %v8515 = vpop.f32.mrb[0].mxu0
        %v8516 = vadd.f32 %v7959, %v8515
        %v8517 = vpop.f32.mrb[0].mxu0
        %v8518 = vpop.f32.mrb[0].mxu0
        %v8519 = vadd.f32 %v7959, %v8518
        %v8520 = vpop.f32.mrb[0].mxu0
        %8521 = vmatprep.mubr.bf16.mxu0 %v7691
        %8522 = vmatmul.mubr.bf16.gmra.mrb[0].mxu0 %v7667
        %v8523 = vpop.f32.mrb[0].mxu0
        %v8524 = vadd.f32 %v7959, %v8523
        %v8525 = vpop.f32.mrb[0].mxu0
        %v8526 = vpop.f32.mrb[0].mxu0
        %v8527 = vadd.f32 %v7959, %v8526
        %v8528 = vpop.f32.mrb[0].mxu0
        %8529 = vmatprep.mubr.bf16.mxu0 %v7692
        %8530 = vmatmul.mubr.bf16.gmra.mrb[0].mxu0 %v7668
        %v8531 = vpop.f32.mrb[0].mxu0
        %v8532 = vadd.f32 %v7959, %v8531
        %v8533 = vpop.f32.mrb[0].mxu0
        %v8534 = vpop.f32.mrb[0].mxu0
        %v8535 = vadd.f32 %v7959, %v8534
        %v8536 = vpop.f32.mrb[0].mxu0
        %8537 = vmatprep.mubr.bf16.mxu0 %v7693
        %8538 = vmatmul.mubr.bf16.gmra.mrb[0].mxu0 %v7669
        %v8539 = vpop.f32.mrb[0].mxu0
        %v8540 = vadd.f32 %v7959, %v8539
        %v8541 = vpop.f32.mrb[0].mxu0
        %v8542 = vpop.f32.mrb[0].mxu0
        %v8543 = vadd.f32 %v7959, %v8542
        %v8544 = vpop.f32.mrb[0].mxu0
        %8545 = vmatprep.mubr.bf16.mxu0 %v7694
        %8546 = vmatmul.mubr.bf16.gmra.mrb[0].mxu0 %v7670
        %v8547 = vpop.f32.mrb[0].mxu0
        %v8548 = vadd.f32 %v7959, %v8547
        %v8549 = vpop.f32.mrb[0].mxu0
        %v8550 = vpop.f32.mrb[0].mxu0
        %v8551 = vadd.f32 %v7959, %v8550
        %v8552 = vpop.f32.mrb[0].mxu0
        %8553 = vmatprep.mubr.bf16.mxu0 %v7695
        %8554 = vmatmul.mubr.bf16.gmra.mrb[0].mxu0 %v7671
        %v8555 = vpop.f32.mrb[0].mxu0
        %v8556 = vadd.f32 %v7959, %v8555
        %v8557 = vpop.f32.mrb[0].mxu0
        %v8558 = vpop.f32.mrb[0].mxu0
        %v8559 = vadd.f32 %v7959, %v8558
        %v8560 = vpop.f32.mrb[0].mxu0
        %8561 = vmatprep.mubr.bf16.mxu0 %v7696
        %8562 = vmatmul.mubr.bf16.gmra.mrb[0].mxu0 %v7672
        %v8563 = vpop.f32.mrb[0].mxu0
        %v8564 = vadd.f32 %v7959, %v8563
        %v8565 = vpop.f32.mrb[0].mxu0
        %v8566 = vpop.f32.mrb[0].mxu0
        %v8567 = vadd.f32 %v7959, %v8566
        %v8568 = vpop.f32.mrb[0].mxu0
        %8569 = vmatprep.mubr.bf16.mxu0 %v7697
        %8570 = vmatmul.mubr.bf16.gmra.mrb[0].mxu0 %v7673
        %v8571 = vpop.f32.mrb[0].mxu0
        %v8572 = vadd.f32 %v7959, %v8571
        %v8573 = vpop.f32.mrb[0].mxu0
        %v8574 = vpop.f32.mrb[0].mxu0
        %v8575 = vadd.f32 %v7959, %v8574
        %v8576 = vpop.f32.mrb[0].mxu0
        %8577 = vmatprep.mubr.bf16.mxu0 %v7698
        %8578 = vmatmul.mubr.bf16.gmra.mrb[0].mxu0 %v7674
        %v8579 = vpop.f32.mrb[0].mxu0
        %v8580 = vadd.f32 %v7959, %v8579
        %v8581 = vpop.f32.mrb[0].mxu0
        %v8582 = vpop.f32.mrb[0].mxu0
        %v8583 = vadd.f32 %v7959, %v8582
        %v8584 = vpop.f32.mrb[0].mxu0
        %8585 = vmatprep.mubr.bf16.mxu0 %v7699
        %8586 = vmatmul.mubr.bf16.gmra.mrb[0].mxu0 %v7675
        %v8587 = vpop.f32.mrb[0].mxu0
        %v8588 = vadd.f32 %v7959, %v8587
        %v8589 = vpop.f32.mrb[0].mxu0
        %v8590 = vpop.f32.mrb[0].mxu0
        %v8591 = vadd.f32 %v7959, %v8590
        %v8592 = vpop.f32.mrb[0].mxu0
        %8593 = vmatprep.mubr.bf16.mxu0 %v7700
        %8594 = vmatmul.mubr.bf16.gmra.mrb[0].mxu0 %v7676
        %v8595 = vpop.f32.mrb[0].mxu0
        %v8596 = vadd.f32 %v7959, %v8595
        %v8597 = vpop.f32.mrb[0].mxu0
        %v8598 = vpop.f32.mrb[0].mxu0
        %v8599 = vadd.f32 %v7959, %v8598
        %v8600 = vpop.f32.mrb[0].mxu0
        %8601 = vmatprep.mubr.bf16.mxu0 %v7701
        %8602 = vmatmul.mubr.bf16.gmra.mrb[0].mxu0 %v7677
        %v8603 = vpop.f32.mrb[0].mxu0
        %v8604 = vadd.f32 %v7959, %v8603
        %v8605 = vpop.f32.mrb[0].mxu0
        %v8606 = vpop.f32.mrb[0].mxu0
        %v8607 = vadd.f32 %v7959, %v8606
        %v8608 = vpop.f32.mrb[0].mxu0
        %8609 = vmatprep.mubr.bf16.mxu0 %v7702
        %8610 = vmatmul.mubr.bf16.gmra.mrb[0].mxu0 %v7678
        %v8611 = vpop.f32.mrb[0].mxu0
        %v8612 = vadd.f32 %v7959, %v8611
        %v8613 = vpop.f32.mrb[0].mxu0
        %v8614 = vpop.f32.mrb[0].mxu0
        %v8615 = vadd.f32 %v7959, %v8614
        %v8616 = vpop.f32.mrb[0].mxu0
        %8617 = vdwg.mxu0
        %8618 = vmatprep.subr.bf16.mxu0 0
        %8619 = vmatpush1.bf16.msra.mxu0 %v8265
        %8620 = vmatprep.subr.bf16.mxu0 0
        %8621 = vmatpush1.bf16.msra.mxu0 %v8266
        %8622 = vmatprep.subr.bf16.mxu0 0
        %8623 = vmatpush1.bf16.msra.mxu0 %v8267
        %8624 = vmatprep.subr.bf16.mxu0 0
        %8625 = vmatpush1.bf16.msra.mxu0 %v8268
        %8626 = vmatprep.subr.bf16.mxu0 0
        %8627 = vmatpush1.bf16.msra.mxu0 %v8269
        %8628 = vmatprep.subr.bf16.mxu0 0
        %8629 = vmatpush1.bf16.msra.mxu0 %v8270
        %8630 = vmatprep.subr.bf16.mxu0 0
        %8631 = vmatpush1.bf16.msra.mxu0 %v8271
        %8632 = vmatprep.subr.bf16.mxu0 0
        %8633 = vmatpush1.bf16.msra.mxu0 %v8272
        %8634 = vmatprep.subr.bf16.mxu0 0
        %8635 = vmatpush1.bf16.msra.mxu0 %v8273
        %8636 = vmatprep.subr.bf16.mxu0 0
        %8637 = vmatpush1.bf16.msra.mxu0 %v8274
        %8638 = vmatprep.subr.bf16.mxu0 0
        %8639 = vmatpush1.bf16.msra.mxu0 %v8275
        %8640 = vmatprep.subr.bf16.mxu0 0
        %8641 = vmatpush1.bf16.msra.mxu0 %v8276
        %8642 = vmatprep.subr.bf16.mxu0 0
        %8643 = vmatpush1.bf16.msra.mxu0 %v8277
        %8644 = vmatprep.subr.bf16.mxu0 0
        %8645 = vmatpush1.bf16.msra.mxu0 %v8278
        %8646 = vmatprep.subr.bf16.mxu0 0
        %8647 = vmatpush1.bf16.msra.mxu0 %v8279
        %8648 = vmatprep.subr.bf16.mxu0 0
        %8649 = vmatpush1.bf16.msra.mxu0 %v8280
        %8650 = vmatprep.mubr.bf16.mxu0 %v7727
        %8651 = vmatmul.mubr.bf16.gmra.mrb[0].mxu0 %v7703
        %v8652 = vpop.f32.mrb[0].mxu0
        %v8653 = vadd.f32 %v8428, %v8652
        %v8654 = vpop.f32.mrb[0].mxu0
        %v8655 = vpop.f32.mrb[0].mxu0
        %v8656 = vadd.f32 %v8431, %v8655
        %v8657 = vpop.f32.mrb[0].mxu0
        %8658 = vmatprep.mubr.bf16.mxu0 %v7728
        %8659 = vmatmul.mubr.bf16.gmra.mrb[0].mxu0 %v7704
        %v8660 = vpop.f32.mrb[0].mxu0
        %v8661 = vadd.f32 %v8436, %v8660
        %v8662 = vpop.f32.mrb[0].mxu0
        %v8663 = vpop.f32.mrb[0].mxu0
        %v8664 = vadd.f32 %v8439, %v8663
        %v8665 = vpop.f32.mrb[0].mxu0
        %8666 = vmatprep.mubr.bf16.mxu0 %v7729
        %8667 = vmatmul.mubr.bf16.gmra.mrb[0].mxu0 %v7705
        %v8668 = vpop.f32.mrb[0].mxu0
        %v8669 = vadd.f32 %v8444, %v8668
        %v8670 = vpop.f32.mrb[0].mxu0
        %v8671 = vpop.f32.mrb[0].mxu0
        %v8672 = vadd.f32 %v8447, %v8671
        %v8673 = vpop.f32.mrb[0].mxu0
        %8674 = vmatprep.mubr.bf16.mxu0 %v7730
        %8675 = vmatmul.mubr.bf16.gmra.mrb[0].mxu0 %v7706
        %v8676 = vpop.f32.mrb[0].mxu0
        %v8677 = vadd.f32 %v8452, %v8676
        %v8678 = vpop.f32.mrb[0].mxu0
        %v8679 = vpop.f32.mrb[0].mxu0
        %v8680 = vadd.f32 %v8455, %v8679
        %v8681 = vpop.f32.mrb[0].mxu0
        %8682 = vmatprep.mubr.bf16.mxu0 %v7731
        %8683 = vmatmul.mubr.bf16.gmra.mrb[0].mxu0 %v7707
        %v8684 = vpop.f32.mrb[0].mxu0
        %v8685 = vadd.f32 %v8460, %v8684
        %v8686 = vpop.f32.mrb[0].mxu0
        %v8687 = vpop.f32.mrb[0].mxu0
        %v8688 = vadd.f32 %v8463, %v8687
        %v8689 = vpop.f32.mrb[0].mxu0
        %8690 = vmatprep.mubr.bf16.mxu0 %v7732
        %8691 = vmatmul.mubr.bf16.gmra.mrb[0].mxu0 %v7708
        %v8692 = vpop.f32.mrb[0].mxu0
        %v8693 = vadd.f32 %v8468, %v8692
        %v8694 = vpop.f32.mrb[0].mxu0
        %v8695 = vpop.f32.mrb[0].mxu0
        %v8696 = vadd.f32 %v8471, %v8695
        %v8697 = vpop.f32.mrb[0].mxu0
        %8698 = vmatprep.mubr.bf16.mxu0 %v7733
        %8699 = vmatmul.mubr.bf16.gmra.mrb[0].mxu0 %v7709
        %v8700 = vpop.f32.mrb[0].mxu0
        %v8701 = vadd.f32 %v8476, %v8700
        %v8702 = vpop.f32.mrb[0].mxu0
        %v8703 = vpop.f32.mrb[0].mxu0
        %v8704 = vadd.f32 %v8479, %v8703
        %v8705 = vpop.f32.mrb[0].mxu0
        %8706 = vmatprep.mubr.bf16.mxu0 %v7734
        %8707 = vmatmul.mubr.bf16.gmra.mrb[0].mxu0 %v7710
        %v8708 = vpop.f32.mrb[0].mxu0
        %v8709 = vadd.f32 %v8484, %v8708
        %v8710 = vpop.f32.mrb[0].mxu0
        %v8711 = vpop.f32.mrb[0].mxu0
        %v8712 = vadd.f32 %v8487, %v8711
        %v8713 = vpop.f32.mrb[0].mxu0
        %8714 = vmatprep.mubr.bf16.mxu0 %v7735
        %8715 = vmatmul.mubr.bf16.gmra.mrb[0].mxu0 %v7711
        %v8716 = vpop.f32.mrb[0].mxu0
        %v8717 = vadd.f32 %v8492, %v8716
        %v8718 = vpop.f32.mrb[0].mxu0
        %v8719 = vpop.f32.mrb[0].mxu0
        %v8720 = vadd.f32 %v8495, %v8719
        %v8721 = vpop.f32.mrb[0].mxu0
        %8722 = vmatprep.mubr.bf16.mxu0 %v7736
        %8723 = vmatmul.mubr.bf16.gmra.mrb[0].mxu0 %v7712
        %v8724 = vpop.f32.mrb[0].mxu0
        %v8725 = vadd.f32 %v8500, %v8724
        %v8726 = vpop.f32.mrb[0].mxu0
        %v8727 = vpop.f32.mrb[0].mxu0
        %v8728 = vadd.f32 %v8503, %v8727
        %v8729 = vpop.f32.mrb[0].mxu0
        %8730 = vmatprep.mubr.bf16.mxu0 %v7737
        %8731 = vmatmul.mubr.bf16.gmra.mrb[0].mxu0 %v7713
        %v8732 = vpop.f32.mrb[0].mxu0
        %v8733 = vadd.f32 %v8508, %v8732
        %v8734 = vpop.f32.mrb[0].mxu0
        %v8735 = vpop.f32.mrb[0].mxu0
        %v8736 = vadd.f32 %v8511, %v8735
        %v8737 = vpop.f32.mrb[0].mxu0
        %8738 = vmatprep.mubr.bf16.mxu0 %v7738
        %8739 = vmatmul.mubr.bf16.gmra.mrb[0].mxu0 %v7714
        %v8740 = vpop.f32.mrb[0].mxu0
        %v8741 = vadd.f32 %v8516, %v8740
        %v8742 = vpop.f32.mrb[0].mxu0
        %v8743 = vpop.f32.mrb[0].mxu0
        %v8744 = vadd.f32 %v8519, %v8743
        %v8745 = vpop.f32.mrb[0].mxu0
        %8746 = vmatprep.mubr.bf16.mxu0 %v7739
        %8747 = vmatmul.mubr.bf16.gmra.mrb[0].mxu0 %v7715
        %v8748 = vpop.f32.mrb[0].mxu0
        %v8749 = vadd.f32 %v8524, %v8748
        %v8750 = vpop.f32.mrb[0].mxu0
        %v8751 = vpop.f32.mrb[0].mxu0
        %v8752 = vadd.f32 %v8527, %v8751
        %v8753 = vpop.f32.mrb[0].mxu0
        %8754 = vmatprep.mubr.bf16.mxu0 %v7740
        %8755 = vmatmul.mubr.bf16.gmra.mrb[0].mxu0 %v7716
        %v8756 = vpop.f32.mrb[0].mxu0
        %v8757 = vadd.f32 %v8532, %v8756
        %v8758 = vpop.f32.mrb[0].mxu0
        %v8759 = vpop.f32.mrb[0].mxu0
        %v8760 = vadd.f32 %v8535, %v8759
        %v8761 = vpop.f32.mrb[0].mxu0
        %8762 = vmatprep.mubr.bf16.mxu0 %v7741
        %8763 = vmatmul.mubr.bf16.gmra.mrb[0].mxu0 %v7717
        %v8764 = vpop.f32.mrb[0].mxu0
        %v8765 = vadd.f32 %v8540, %v8764
        %v8766 = vpop.f32.mrb[0].mxu0
        %v8767 = vpop.f32.mrb[0].mxu0
        %v8768 = vadd.f32 %v8543, %v8767
        %v8769 = vpop.f32.mrb[0].mxu0
        %8770 = vmatprep.mubr.bf16.mxu0 %v7742
        %8771 = vmatmul.mubr.bf16.gmra.mrb[0].mxu0 %v7718
        %v8772 = vpop.f32.mrb[0].mxu0
        %v8773 = vadd.f32 %v8548, %v8772
        %v8774 = vpop.f32.mrb[0].mxu0
        %v8775 = vpop.f32.mrb[0].mxu0
        %v8776 = vadd.f32 %v8551, %v8775
        %v8777 = vpop.f32.mrb[0].mxu0
        %8778 = vmatprep.mubr.bf16.mxu0 %v7743
        %8779 = vmatmul.mubr.bf16.gmra.mrb[0].mxu0 %v7719
        %v8780 = vpop.f32.mrb[0].mxu0
        %v8781 = vadd.f32 %v8556, %v8780
        %v8782 = vpop.f32.mrb[0].mxu0
        %v8783 = vpop.f32.mrb[0].mxu0
        %v8784 = vadd.f32 %v8559, %v8783
        %v8785 = vpop.f32.mrb[0].mxu0
        %8786 = vmatprep.mubr.bf16.mxu0 %v7744
        %8787 = vmatmul.mubr.bf16.gmra.mrb[0].mxu0 %v7720
        %v8788 = vpop.f32.mrb[0].mxu0
        %v8789 = vadd.f32 %v8564, %v8788
        %v8790 = vpop.f32.mrb[0].mxu0
        %v8791 = vpop.f32.mrb[0].mxu0
        %v8792 = vadd.f32 %v8567, %v8791
        %v8793 = vpop.f32.mrb[0].mxu0
        %8794 = vmatprep.mubr.bf16.mxu0 %v7745
        %8795 = vmatmul.mubr.bf16.gmra.mrb[0].mxu0 %v7721
        %v8796 = vpop.f32.mrb[0].mxu0
        %v8797 = vadd.f32 %v8572, %v8796
        %v8798 = vpop.f32.mrb[0].mxu0
        %v8799 = vpop.f32.mrb[0].mxu0
        %v8800 = vadd.f32 %v8575, %v8799
        %v8801 = vpop.f32.mrb[0].mxu0
        %8802 = vmatprep.mubr.bf16.mxu0 %v7746
        %8803 = vmatmul.mubr.bf16.gmra.mrb[0].mxu0 %v7722
        %v8804 = vpop.f32.mrb[0].mxu0
        %v8805 = vadd.f32 %v8580, %v8804
        %v8806 = vpop.f32.mrb[0].mxu0
        %v8807 = vpop.f32.mrb[0].mxu0
        %v8808 = vadd.f32 %v8583, %v8807
        %v8809 = vpop.f32.mrb[0].mxu0
        %8810 = vmatprep.mubr.bf16.mxu0 %v7747
        %8811 = vmatmul.mubr.bf16.gmra.mrb[0].mxu0 %v7723
        %v8812 = vpop.f32.mrb[0].mxu0
        %v8813 = vadd.f32 %v8588, %v8812
        %v8814 = vpop.f32.mrb[0].mxu0
        %v8815 = vpop.f32.mrb[0].mxu0
        %v8816 = vadd.f32 %v8591, %v8815
        %v8817 = vpop.f32.mrb[0].mxu0
        %8818 = vmatprep.mubr.bf16.mxu0 %v7748
        %8819 = vmatmul.mubr.bf16.gmra.mrb[0].mxu0 %v7724
        %v8820 = vpop.f32.mrb[0].mxu0
        %v8821 = vadd.f32 %v8596, %v8820
        %v8822 = vpop.f32.mrb[0].mxu0
        %v8823 = vpop.f32.mrb[0].mxu0
        %v8824 = vadd.f32 %v8599, %v8823
        %v8825 = vpop.f32.mrb[0].mxu0
        %8826 = vmatprep.mubr.bf16.mxu0 %v7749
        %8827 = vmatmul.mubr.bf16.gmra.mrb[0].mxu0 %v7725
        %v8828 = vpop.f32.mrb[0].mxu0
        %v8829 = vadd.f32 %v8604, %v8828
        %v8830 = vpop.f32.mrb[0].mxu0
        %v8831 = vpop.f32.mrb[0].mxu0
        %v8832 = vadd.f32 %v8607, %v8831
        %v8833 = vpop.f32.mrb[0].mxu0
        %8834 = vmatprep.mubr.bf16.mxu0 %v7750
        %8835 = vmatmul.mubr.bf16.gmra.mrb[0].mxu0 %v7726
        %v8836 = vpop.f32.mrb[0].mxu0
        %v8837 = vadd.f32 %v8612, %v8836
        %v8838 = vpop.f32.mrb[0].mxu0
        %v8839 = vpop.f32.mrb[0].mxu0
        %v8840 = vadd.f32 %v8615, %v8839
        %v8841 = vpop.f32.mrb[0].mxu0
        %8842 = vdwg.mxu0
        %8843 = vmatprep.subr.bf16.mxu0 0
        %8844 = vmatpush1.bf16.msra.mxu0 %v8281
        %8845 = vmatprep.subr.bf16.mxu0 0
        %8846 = vmatpush1.bf16.msra.mxu0 %v8282
        %8847 = vmatprep.subr.bf16.mxu0 0
        %8848 = vmatpush1.bf16.msra.mxu0 %v8283
        %8849 = vmatprep.subr.bf16.mxu0 0
        %8850 = vmatpush1.bf16.msra.mxu0 %v8284
        %8851 = vmatprep.subr.bf16.mxu0 0
        %8852 = vmatpush1.bf16.msra.mxu0 %v8285
        %8853 = vmatprep.subr.bf16.mxu0 0
        %8854 = vmatpush1.bf16.msra.mxu0 %v8286
        %8855 = vmatprep.subr.bf16.mxu0 0
        %8856 = vmatpush1.bf16.msra.mxu0 %v8287
        %8857 = vmatprep.subr.bf16.mxu0 0
        %8858 = vmatpush1.bf16.msra.mxu0 %v8288
        %8859 = vmatprep.subr.bf16.mxu0 0
        %8860 = vmatpush1.bf16.msra.mxu0 %v8289
        %8861 = vmatprep.subr.bf16.mxu0 0
        %8862 = vmatpush1.bf16.msra.mxu0 %v8290
        %8863 = vmatprep.subr.bf16.mxu0 0
        %8864 = vmatpush1.bf16.msra.mxu0 %v8291
        %8865 = vmatprep.subr.bf16.mxu0 0
        %8866 = vmatpush1.bf16.msra.mxu0 %v8292
        %8867 = vmatprep.subr.bf16.mxu0 0
        %8868 = vmatpush1.bf16.msra.mxu0 %v8293
        %8869 = vmatprep.subr.bf16.mxu0 0
        %8870 = vmatpush1.bf16.msra.mxu0 %v8294
        %8871 = vmatprep.subr.bf16.mxu0 0
        %8872 = vmatpush1.bf16.msra.mxu0 %v8295
        %8873 = vmatprep.subr.bf16.mxu0 0
        %8874 = vmatpush1.bf16.msra.mxu0 %v8296
        %8875 = vmatprep.mubr.bf16.mxu0 %v7775
        %8876 = vmatmul.mubr.bf16.gmra.mrb[0].mxu0 %v7751
        %v8877 = vpop.f32.mrb[0].mxu0
        %v8878 = vadd.f32 %v8653, %v8877
        %v8879 = vpop.f32.mrb[0].mxu0
        %v8880 = vpop.f32.mrb[0].mxu0
        %v8881 = vadd.f32 %v8656, %v8880
        %v8882 = vpop.f32.mrb[0].mxu0
        %8883 = vmatprep.mubr.bf16.mxu0 %v7776
        %8884 = vmatmul.mubr.bf16.gmra.mrb[0].mxu0 %v7752
        %v8885 = vpop.f32.mrb[0].mxu0
        %v8886 = vadd.f32 %v8661, %v8885
        %v8887 = vpop.f32.mrb[0].mxu0
        %v8888 = vpop.f32.mrb[0].mxu0
        %v8889 = vadd.f32 %v8664, %v8888
        %v8890 = vpop.f32.mrb[0].mxu0
        %8891 = vmatprep.mubr.bf16.mxu0 %v7777
        %8892 = vmatmul.mubr.bf16.gmra.mrb[0].mxu0 %v7753
        %v8893 = vpop.f32.mrb[0].mxu0
        %v8894 = vadd.f32 %v8669, %v8893
        %v8895 = vpop.f32.mrb[0].mxu0
        %v8896 = vpop.f32.mrb[0].mxu0
        %v8897 = vadd.f32 %v8672, %v8896
        %v8898 = vpop.f32.mrb[0].mxu0
        %8899 = vmatprep.mubr.bf16.mxu0 %v7778
        %8900 = vmatmul.mubr.bf16.gmra.mrb[0].mxu0 %v7754
        %v8901 = vpop.f32.mrb[0].mxu0
        %v8902 = vadd.f32 %v8677, %v8901
        %v8903 = vpop.f32.mrb[0].mxu0
        %v8904 = vpop.f32.mrb[0].mxu0
        %v8905 = vadd.f32 %v8680, %v8904
        %v8906 = vpop.f32.mrb[0].mxu0
        %8907 = vmatprep.mubr.bf16.mxu0 %v7779
        %8908 = vmatmul.mubr.bf16.gmra.mrb[0].mxu0 %v7755
        %v8909 = vpop.f32.mrb[0].mxu0
        %v8910 = vadd.f32 %v8685, %v8909
        %v8911 = vpop.f32.mrb[0].mxu0
        %v8912 = vpop.f32.mrb[0].mxu0
        %v8913 = vadd.f32 %v8688, %v8912
        %v8914 = vpop.f32.mrb[0].mxu0
        %8915 = vmatprep.mubr.bf16.mxu0 %v7780
        %8916 = vmatmul.mubr.bf16.gmra.mrb[0].mxu0 %v7756
        %v8917 = vpop.f32.mrb[0].mxu0
        %v8918 = vadd.f32 %v8693, %v8917
        %v8919 = vpop.f32.mrb[0].mxu0
        %v8920 = vpop.f32.mrb[0].mxu0
        %v8921 = vadd.f32 %v8696, %v8920
        %v8922 = vpop.f32.mrb[0].mxu0
        %8923 = vmatprep.mubr.bf16.mxu0 %v7781
        %8924 = vmatmul.mubr.bf16.gmra.mrb[0].mxu0 %v7757
        %v8925 = vpop.f32.mrb[0].mxu0
        %v8926 = vadd.f32 %v8701, %v8925
        %v8927 = vpop.f32.mrb[0].mxu0
        %v8928 = vpop.f32.mrb[0].mxu0
        %v8929 = vadd.f32 %v8704, %v8928
        %v8930 = vpop.f32.mrb[0].mxu0
        %8931 = vmatprep.mubr.bf16.mxu0 %v7782
        %8932 = vmatmul.mubr.bf16.gmra.mrb[0].mxu0 %v7758
        %v8933 = vpop.f32.mrb[0].mxu0
        %v8934 = vadd.f32 %v8709, %v8933
        %v8935 = vpop.f32.mrb[0].mxu0
        %v8936 = vpop.f32.mrb[0].mxu0
        %v8937 = vadd.f32 %v8712, %v8936
        %v8938 = vpop.f32.mrb[0].mxu0
        %8939 = vmatprep.mubr.bf16.mxu0 %v7783
        %8940 = vmatmul.mubr.bf16.gmra.mrb[0].mxu0 %v7759
        %v8941 = vpop.f32.mrb[0].mxu0
        %v8942 = vadd.f32 %v8717, %v8941
        %v8943 = vpop.f32.mrb[0].mxu0
        %v8944 = vpop.f32.mrb[0].mxu0
        %v8945 = vadd.f32 %v8720, %v8944
        %v8946 = vpop.f32.mrb[0].mxu0
        %8947 = vmatprep.mubr.bf16.mxu0 %v7784
        %8948 = vmatmul.mubr.bf16.gmra.mrb[0].mxu0 %v7760
        %v8949 = vpop.f32.mrb[0].mxu0
        %v8950 = vadd.f32 %v8725, %v8949
        %v8951 = vpop.f32.mrb[0].mxu0
        %v8952 = vpop.f32.mrb[0].mxu0
        %v8953 = vadd.f32 %v8728, %v8952
        %v8954 = vpop.f32.mrb[0].mxu0
        %8955 = vmatprep.mubr.bf16.mxu0 %v7785
        %8956 = vmatmul.mubr.bf16.gmra.mrb[0].mxu0 %v7761
        %v8957 = vpop.f32.mrb[0].mxu0
        %v8958 = vadd.f32 %v8733, %v8957
        %v8959 = vpop.f32.mrb[0].mxu0
        %v8960 = vpop.f32.mrb[0].mxu0
        %v8961 = vadd.f32 %v8736, %v8960
        %v8962 = vpop.f32.mrb[0].mxu0
        %8963 = vmatprep.mubr.bf16.mxu0 %v7786
        %8964 = vmatmul.mubr.bf16.gmra.mrb[0].mxu0 %v7762
        %v8965 = vpop.f32.mrb[0].mxu0
        %v8966 = vadd.f32 %v8741, %v8965
        %v8967 = vpop.f32.mrb[0].mxu0
        %v8968 = vpop.f32.mrb[0].mxu0
        %v8969 = vadd.f32 %v8744, %v8968
        %v8970 = vpop.f32.mrb[0].mxu0
        %8971 = vmatprep.mubr.bf16.mxu0 %v7787
        %8972 = vmatmul.mubr.bf16.gmra.mrb[0].mxu0 %v7763
        %v8973 = vpop.f32.mrb[0].mxu0
        %v8974 = vadd.f32 %v8749, %v8973
        %v8975 = vpop.f32.mrb[0].mxu0
        %v8976 = vpop.f32.mrb[0].mxu0
        %v8977 = vadd.f32 %v8752, %v8976
        %v8978 = vpop.f32.mrb[0].mxu0
        %8979 = vmatprep.mubr.bf16.mxu0 %v7788
        %8980 = vmatmul.mubr.bf16.gmra.mrb[0].mxu0 %v7764
        %v8981 = vpop.f32.mrb[0].mxu0
        %v8982 = vadd.f32 %v8757, %v8981
        %v8983 = vpop.f32.mrb[0].mxu0
        %v8984 = vpop.f32.mrb[0].mxu0
        %v8985 = vadd.f32 %v8760, %v8984
        %v8986 = vpop.f32.mrb[0].mxu0
        %8987 = vmatprep.mubr.bf16.mxu0 %v7789
        %8988 = vmatmul.mubr.bf16.gmra.mrb[0].mxu0 %v7765
        %v8989 = vpop.f32.mrb[0].mxu0
        %v8990 = vadd.f32 %v8765, %v8989
        %v8991 = vpop.f32.mrb[0].mxu0
        %v8992 = vpop.f32.mrb[0].mxu0
        %v8993 = vadd.f32 %v8768, %v8992
        %v8994 = vpop.f32.mrb[0].mxu0
        %8995 = vmatprep.mubr.bf16.mxu0 %v7790
        %8996 = vmatmul.mubr.bf16.gmra.mrb[0].mxu0 %v7766
        %v8997 = vpop.f32.mrb[0].mxu0
        %v8998 = vadd.f32 %v8773, %v8997
        %v8999 = vpop.f32.mrb[0].mxu0
        %v9000 = vpop.f32.mrb[0].mxu0
        %v9001 = vadd.f32 %v8776, %v9000
        %v9002 = vpop.f32.mrb[0].mxu0
        %9003 = vmatprep.mubr.bf16.mxu0 %v7791
        %9004 = vmatmul.mubr.bf16.gmra.mrb[0].mxu0 %v7767
        %v9005 = vpop.f32.mrb[0].mxu0
        %v9006 = vadd.f32 %v8781, %v9005
        %v9007 = vpop.f32.mrb[0].mxu0
        %v9008 = vpop.f32.mrb[0].mxu0
        %v9009 = vadd.f32 %v8784, %v9008
        %v9010 = vpop.f32.mrb[0].mxu0
        %9011 = vmatprep.mubr.bf16.mxu0 %v7792
        %9012 = vmatmul.mubr.bf16.gmra.mrb[0].mxu0 %v7768
        %v9013 = vpop.f32.mrb[0].mxu0
        %v9014 = vadd.f32 %v8789, %v9013
        %v9015 = vpop.f32.mrb[0].mxu0
        %v9016 = vpop.f32.mrb[0].mxu0
        %v9017 = vadd.f32 %v8792, %v9016
        %v9018 = vpop.f32.mrb[0].mxu0
        %9019 = vmatprep.mubr.bf16.mxu0 %v7793
        %9020 = vmatmul.mubr.bf16.gmra.mrb[0].mxu0 %v7769
        %v9021 = vpop.f32.mrb[0].mxu0
        %v9022 = vadd.f32 %v8797, %v9021
        %v9023 = vpop.f32.mrb[0].mxu0
        %v9024 = vpop.f32.mrb[0].mxu0
        %v9025 = vadd.f32 %v8800, %v9024
        %v9026 = vpop.f32.mrb[0].mxu0
        %9027 = vmatprep.mubr.bf16.mxu0 %v7794
        %9028 = vmatmul.mubr.bf16.gmra.mrb[0].mxu0 %v7770
        %v9029 = vpop.f32.mrb[0].mxu0
        %v9030 = vadd.f32 %v8805, %v9029
        %v9031 = vpop.f32.mrb[0].mxu0
        %v9032 = vpop.f32.mrb[0].mxu0
        %v9033 = vadd.f32 %v8808, %v9032
        %v9034 = vpop.f32.mrb[0].mxu0
        %9035 = vmatprep.mubr.bf16.mxu0 %v7795
        %9036 = vmatmul.mubr.bf16.gmra.mrb[0].mxu0 %v7771
        %v9037 = vpop.f32.mrb[0].mxu0
        %v9038 = vadd.f32 %v8813, %v9037
        %v9039 = vpop.f32.mrb[0].mxu0
        %v9040 = vpop.f32.mrb[0].mxu0
        %v9041 = vadd.f32 %v8816, %v9040
        %v9042 = vpop.f32.mrb[0].mxu0
        %9043 = vmatprep.mubr.bf16.mxu0 %v7796
        %9044 = vmatmul.mubr.bf16.gmra.mrb[0].mxu0 %v7772
        %v9045 = vpop.f32.mrb[0].mxu0
        %v9046 = vadd.f32 %v8821, %v9045
        %v9047 = vpop.f32.mrb[0].mxu0
        %v9048 = vpop.f32.mrb[0].mxu0
        %v9049 = vadd.f32 %v8824, %v9048
        %v9050 = vpop.f32.mrb[0].mxu0
        %9051 = vmatprep.mubr.bf16.mxu0 %v7797
        %9052 = vmatmul.mubr.bf16.gmra.mrb[0].mxu0 %v7773
        %v9053 = vpop.f32.mrb[0].mxu0
        %v9054 = vadd.f32 %v8829, %v9053
        %v9055 = vpop.f32.mrb[0].mxu0
        %v9056 = vpop.f32.mrb[0].mxu0
        %v9057 = vadd.f32 %v8832, %v9056
        %v9058 = vpop.f32.mrb[0].mxu0
        %9059 = vmatprep.mubr.bf16.mxu0 %v7798
        %9060 = vmatmul.mubr.bf16.gmra.mrb[0].mxu0 %v7774
        %v9061 = vpop.f32.mrb[0].mxu0
        %v9062 = vadd.f32 %v8837, %v9061
        %v9063 = vpop.f32.mrb[0].mxu0
        %v9064 = vpop.f32.mrb[0].mxu0
        %v9065 = vadd.f32 %v8840, %v9064
        %v9066 = vpop.f32.mrb[0].mxu0
        %9067 = vdwg.mxu0
        %9068 = vmatprep.subr.bf16.mxu0 0
        %9069 = vmatpush1.bf16.msra.mxu0 %v8297
        %9070 = vmatprep.subr.bf16.mxu0 0
        %9071 = vmatpush1.bf16.msra.mxu0 %v8298
        %9072 = vmatprep.subr.bf16.mxu0 0
        %9073 = vmatpush1.bf16.msra.mxu0 %v8299
        %9074 = vmatprep.subr.bf16.mxu0 0
        %9075 = vmatpush1.bf16.msra.mxu0 %v8300
        %9076 = vmatprep.subr.bf16.mxu0 0
        %9077 = vmatpush1.bf16.msra.mxu0 %v8301
        %9078 = vmatprep.subr.bf16.mxu0 0
        %9079 = vmatpush1.bf16.msra.mxu0 %v8302
        %9080 = vmatprep.subr.bf16.mxu0 0
        %9081 = vmatpush1.bf16.msra.mxu0 %v8303
        %9082 = vmatprep.subr.bf16.mxu0 0
        %9083 = vmatpush1.bf16.msra.mxu0 %v8304
        %9084 = vmatprep.subr.bf16.mxu0 0
        %9085 = vmatpush1.bf16.msra.mxu0 %v8305
        %9086 = vmatprep.subr.bf16.mxu0 0
        %9087 = vmatpush1.bf16.msra.mxu0 %v8306
        %9088 = vmatprep.subr.bf16.mxu0 0
        %9089 = vmatpush1.bf16.msra.mxu0 %v8307
        %9090 = vmatprep.subr.bf16.mxu0 0
        %9091 = vmatpush1.bf16.msra.mxu0 %v8308
        %9092 = vmatprep.subr.bf16.mxu0 0
        %9093 = vmatpush1.bf16.msra.mxu0 %v8309
        %9094 = vmatprep.subr.bf16.mxu0 0
        %9095 = vmatpush1.bf16.msra.mxu0 %v8310
        %9096 = vmatprep.subr.bf16.mxu0 0
        %9097 = vmatpush1.bf16.msra.mxu0 %v8311
        %9098 = vmatprep.subr.bf16.mxu0 0
        %9099 = vmatpush1.bf16.msra.mxu0 %v8312
        %9100 = vmatprep.mubr.bf16.mxu0 %v7682
        %9101 = vmatmul.mubr.bf16.gmra.mrb[0].mxu0 %v7658
        %v9102 = vpop.f32.mrb[0].mxu0
        %v9103 = vadd.f32 %v8878, %v9102
        %v9104 = vpop.f32.mrb[0].mxu0
        %v9105 = vpop.f32.mrb[0].mxu0
        %v9106 = vadd.f32 %v8881, %v9105
        %v9107 = vpop.f32.mrb[0].mxu0
        %9108 = vmatprep.mubr.bf16.mxu0 %v7683
        %9109 = vmatmul.mubr.bf16.gmra.mrb[0].mxu0 %v7659
        %v9110 = vpop.f32.mrb[0].mxu0
        %v9111 = vadd.f32 %v8886, %v9110
        %v9112 = vpop.f32.mrb[0].mxu0
        %v9113 = vpop.f32.mrb[0].mxu0
        %v9114 = vadd.f32 %v8889, %v9113
        %v9115 = vpop.f32.mrb[0].mxu0
        %9116 = vmatprep.mubr.bf16.mxu0 %v7684
        %9117 = vmatmul.mubr.bf16.gmra.mrb[0].mxu0 %v7660
        %v9118 = vpop.f32.mrb[0].mxu0
        %v9119 = vadd.f32 %v8894, %v9118
        %v9120 = vpop.f32.mrb[0].mxu0
        %v9121 = vpop.f32.mrb[0].mxu0
        %v9122 = vadd.f32 %v8897, %v9121
        %v9123 = vpop.f32.mrb[0].mxu0
        %9124 = vmatprep.mubr.bf16.mxu0 %v7685
        %9125 = vmatmul.mubr.bf16.gmra.mrb[0].mxu0 %v7661
        %v9126 = vpop.f32.mrb[0].mxu0
        %v9127 = vadd.f32 %v8902, %v9126
        %v9128 = vpop.f32.mrb[0].mxu0
        %v9129 = vpop.f32.mrb[0].mxu0
        %v9130 = vadd.f32 %v8905, %v9129
        %v9131 = vpop.f32.mrb[0].mxu0
        %9132 = vmatprep.mubr.bf16.mxu0 %v7686
        %9133 = vmatmul.mubr.bf16.gmra.mrb[0].mxu0 %v7662
        %v9134 = vpop.f32.mrb[0].mxu0
        %v9135 = vadd.f32 %v8910, %v9134
        %v9136 = vpop.f32.mrb[0].mxu0
        %v9137 = vpop.f32.mrb[0].mxu0
        %v9138 = vadd.f32 %v8913, %v9137
        %v9139 = vpop.f32.mrb[0].mxu0
        %9140 = vmatprep.mubr.bf16.mxu0 %v7687
        %9141 = vmatmul.mubr.bf16.gmra.mrb[0].mxu0 %v7663
        %v9142 = vpop.f32.mrb[0].mxu0
        %v9143 = vadd.f32 %v8918, %v9142
        %v9144 = vpop.f32.mrb[0].mxu0
        %v9145 = vpop.f32.mrb[0].mxu0
        %v9146 = vadd.f32 %v8921, %v9145
        %v9147 = vpop.f32.mrb[0].mxu0
        %9148 = vmatprep.mubr.bf16.mxu0 %v7688
        %9149 = vmatmul.mubr.bf16.gmra.mrb[0].mxu0 %v7664
        %v9150 = vpop.f32.mrb[0].mxu0
        %v9151 = vadd.f32 %v8926, %v9150
        %v9152 = vpop.f32.mrb[0].mxu0
        %v9153 = vpop.f32.mrb[0].mxu0
        %v9154 = vadd.f32 %v8929, %v9153
        %v9155 = vpop.f32.mrb[0].mxu0
        %9156 = vmatprep.mubr.bf16.mxu0 %v7689
        %9157 = vmatmul.mubr.bf16.gmra.mrb[0].mxu0 %v7665
        %v9158 = vpop.f32.mrb[0].mxu0
        %v9159 = vadd.f32 %v8934, %v9158
        %v9160 = vpop.f32.mrb[0].mxu0
        %v9161 = vpop.f32.mrb[0].mxu0
        %v9162 = vadd.f32 %v8937, %v9161
        %v9163 = vpop.f32.mrb[0].mxu0
        %9164 = vmatprep.mubr.bf16.mxu0 %v7690
        %9165 = vmatmul.mubr.bf16.gmra.mrb[0].mxu0 %v7666
        %v9166 = vpop.f32.mrb[0].mxu0
        %v9167 = vadd.f32 %v8942, %v9166
        %v9168 = vpop.f32.mrb[0].mxu0
        %v9169 = vpop.f32.mrb[0].mxu0
        %v9170 = vadd.f32 %v8945, %v9169
        %v9171 = vpop.f32.mrb[0].mxu0
        %9172 = vmatprep.mubr.bf16.mxu0 %v7691
        %9173 = vmatmul.mubr.bf16.gmra.mrb[0].mxu0 %v7667
        %v9174 = vpop.f32.mrb[0].mxu0
        %v9175 = vadd.f32 %v8950, %v9174
        %v9176 = vpop.f32.mrb[0].mxu0
        %v9177 = vpop.f32.mrb[0].mxu0
        %v9178 = vadd.f32 %v8953, %v9177
        %v9179 = vpop.f32.mrb[0].mxu0
        %9180 = vmatprep.mubr.bf16.mxu0 %v7692
        %9181 = vmatmul.mubr.bf16.gmra.mrb[0].mxu0 %v7668
        %v9182 = vpop.f32.mrb[0].mxu0
        %v9183 = vadd.f32 %v8958, %v9182
        %v9184 = vpop.f32.mrb[0].mxu0
        %v9185 = vpop.f32.mrb[0].mxu0
        %v9186 = vadd.f32 %v8961, %v9185
        %v9187 = vpop.f32.mrb[0].mxu0
        %9188 = vmatprep.mubr.bf16.mxu0 %v7693
        %9189 = vmatmul.mubr.bf16.gmra.mrb[0].mxu0 %v7669
        %v9190 = vpop.f32.mrb[0].mxu0
        %v9191 = vadd.f32 %v8966, %v9190
        %v9192 = vpop.f32.mrb[0].mxu0
        %v9193 = vpop.f32.mrb[0].mxu0
        %v9194 = vadd.f32 %v8969, %v9193
        %v9195 = vpop.f32.mrb[0].mxu0
        %9196 = vmatprep.mubr.bf16.mxu0 %v7694
        %9197 = vmatmul.mubr.bf16.gmra.mrb[0].mxu0 %v7670
        %v9198 = vpop.f32.mrb[0].mxu0
        %v9199 = vadd.f32 %v8974, %v9198
        %v9200 = vpop.f32.mrb[0].mxu0
        %v9201 = vpop.f32.mrb[0].mxu0
        %v9202 = vadd.f32 %v8977, %v9201
        %v9203 = vpop.f32.mrb[0].mxu0
        %9204 = vmatprep.mubr.bf16.mxu0 %v7695
        %9205 = vmatmul.mubr.bf16.gmra.mrb[0].mxu0 %v7671
        %v9206 = vpop.f32.mrb[0].mxu0
        %v9207 = vadd.f32 %v8982, %v9206
        %v9208 = vpop.f32.mrb[0].mxu0
        %v9209 = vpop.f32.mrb[0].mxu0
        %v9210 = vadd.f32 %v8985, %v9209
        %v9211 = vpop.f32.mrb[0].mxu0
        %9212 = vmatprep.mubr.bf16.mxu0 %v7696
        %9213 = vmatmul.mubr.bf16.gmra.mrb[0].mxu0 %v7672
        %v9214 = vpop.f32.mrb[0].mxu0
        %v9215 = vadd.f32 %v8990, %v9214
        %v9216 = vpop.f32.mrb[0].mxu0
        %v9217 = vpop.f32.mrb[0].mxu0
        %v9218 = vadd.f32 %v8993, %v9217
        %v9219 = vpop.f32.mrb[0].mxu0
        %9220 = vmatprep.mubr.bf16.mxu0 %v7697
        %9221 = vmatmul.mubr.bf16.gmra.mrb[0].mxu0 %v7673
        %v9222 = vpop.f32.mrb[0].mxu0
        %v9223 = vadd.f32 %v8998, %v9222
        %v9224 = vpop.f32.mrb[0].mxu0
        %v9225 = vpop.f32.mrb[0].mxu0
        %v9226 = vadd.f32 %v9001, %v9225
        %v9227 = vpop.f32.mrb[0].mxu0
        %9228 = vmatprep.mubr.bf16.mxu0 %v7698
        %9229 = vmatmul.mubr.bf16.gmra.mrb[0].mxu0 %v7674
        %v9230 = vpop.f32.mrb[0].mxu0
        %v9231 = vadd.f32 %v9006, %v9230
        %v9232 = vpop.f32.mrb[0].mxu0
        %v9233 = vpop.f32.mrb[0].mxu0
        %v9234 = vadd.f32 %v9009, %v9233
        %v9235 = vpop.f32.mrb[0].mxu0
        %9236 = vmatprep.mubr.bf16.mxu0 %v7699
        %9237 = vmatmul.mubr.bf16.gmra.mrb[0].mxu0 %v7675
        %v9238 = vpop.f32.mrb[0].mxu0
        %v9239 = vadd.f32 %v9014, %v9238
        %v9240 = vpop.f32.mrb[0].mxu0
        %v9241 = vpop.f32.mrb[0].mxu0
        %v9242 = vadd.f32 %v9017, %v9241
        %v9243 = vpop.f32.mrb[0].mxu0
        %9244 = vmatprep.mubr.bf16.mxu0 %v7700
        %9245 = vmatmul.mubr.bf16.gmra.mrb[0].mxu0 %v7676
        %v9246 = vpop.f32.mrb[0].mxu0
        %v9247 = vadd.f32 %v9022, %v9246
        %v9248 = vpop.f32.mrb[0].mxu0
        %v9249 = vpop.f32.mrb[0].mxu0
        %v9250 = vadd.f32 %v9025, %v9249
        %v9251 = vpop.f32.mrb[0].mxu0
        %9252 = vmatprep.mubr.bf16.mxu0 %v7701
        %9253 = vmatmul.mubr.bf16.gmra.mrb[0].mxu0 %v7677
        %v9254 = vpop.f32.mrb[0].mxu0
        %v9255 = vadd.f32 %v9030, %v9254
        %v9256 = vpop.f32.mrb[0].mxu0
        %v9257 = vpop.f32.mrb[0].mxu0
        %v9258 = vadd.f32 %v9033, %v9257
        %v9259 = vpop.f32.mrb[0].mxu0
        %9260 = vmatprep.mubr.bf16.mxu0 %v7702
        %9261 = vmatmul.mubr.bf16.gmra.mrb[0].mxu0 %v7678
        %v9262 = vpop.f32.mrb[0].mxu0
        %v9263 = vadd.f32 %v9038, %v9262
        %v9264 = vpop.f32.mrb[0].mxu0
        %v9265 = vpop.f32.mrb[0].mxu0
        %v9266 = vadd.f32 %v9041, %v9265
        %v9267 = vpop.f32.mrb[0].mxu0
        %9268 = vmatprep.mubr.bf16.mxu0 %v7802
        %9269 = vmatmul.mubr.bf16.gmra.mrb[0].mxu0 %v7799
        %v9270 = vpop.f32.mrb[0].mxu0
        %v9271 = vadd.f32 %v9046, %v9270
        %v9272 = vpop.f32.mrb[0].mxu0
        %v9273 = vpop.f32.mrb[0].mxu0
        %v9274 = vadd.f32 %v9049, %v9273
        %v9275 = vpop.f32.mrb[0].mxu0
        %9276 = vmatprep.mubr.bf16.mxu0 %v7803
        %9277 = vmatmul.mubr.bf16.gmra.mrb[0].mxu0 %v7800
        %v9278 = vpop.f32.mrb[0].mxu0
        %v9279 = vadd.f32 %v9054, %v9278
        %v9280 = vpop.f32.mrb[0].mxu0
        %v9281 = vpop.f32.mrb[0].mxu0
        %v9282 = vadd.f32 %v9057, %v9281
        %v9283 = vpop.f32.mrb[0].mxu0
        %9284 = vmatprep.mubr.bf16.mxu0 %v7804
        %9285 = vmatmul.mubr.bf16.gmra.mrb[0].mxu0 %v7801
        %v9286 = vpop.f32.mrb[0].mxu0
        %v9287 = vadd.f32 %v9062, %v9286
        %v9288 = vpop.f32.mrb[0].mxu0
        %v9289 = vpop.f32.mrb[0].mxu0
        %v9290 = vadd.f32 %v9065, %v9289
        %v9291 = vpop.f32.mrb[0].mxu0
        %9292 = vdwg.mxu0
        %9293 = vmatprep.subr.bf16.mxu0 0
        %9294 = vmatpush1.bf16.msra.mxu0 %v8313
        %9295 = vmatprep.subr.bf16.mxu0 0
        %9296 = vmatpush1.bf16.msra.mxu0 %v8314
        %9297 = vmatprep.subr.bf16.mxu0 0
        %9298 = vmatpush1.bf16.msra.mxu0 %v8315
        %9299 = vmatprep.subr.bf16.mxu0 0
        %9300 = vmatpush1.bf16.msra.mxu0 %v8316
        %9301 = vmatprep.subr.bf16.mxu0 0
        %9302 = vmatpush1.bf16.msra.mxu0 %v8317
        %9303 = vmatprep.subr.bf16.mxu0 0
        %9304 = vmatpush1.bf16.msra.mxu0 %v8318
        %9305 = vmatprep.subr.bf16.mxu0 0
        %9306 = vmatpush1.bf16.msra.mxu0 %v8319
        %9307 = vmatprep.subr.bf16.mxu0 0
        %9308 = vmatpush1.bf16.msra.mxu0 %v8320
        %9309 = vmatprep.subr.bf16.mxu0 0
        %9310 = vmatpush1.bf16.msra.mxu0 0
        %9311 = vmatprep.subr.bf16.mxu0 0
        %9312 = vmatpush1.bf16.msra.mxu0 0
        %9313 = vmatprep.subr.bf16.mxu0 0
        %9314 = vmatpush1.bf16.msra.mxu0 0
        %9315 = vmatprep.subr.bf16.mxu0 0
        %9316 = vmatpush1.bf16.msra.mxu0 0
        %9317 = vmatprep.subr.bf16.mxu0 0
        %9318 = vmatpush1.bf16.msra.mxu0 0
        %9319 = vmatprep.subr.bf16.mxu0 0
        %9320 = vmatpush1.bf16.msra.mxu0 0
        %9321 = vmatprep.subr.bf16.mxu0 0
        %9322 = vmatpush1.bf16.msra.mxu0 0
        %9323 = vmatprep.subr.bf16.mxu0 0
        %9324 = vmatpush1.bf16.msra.mxu0 0
        %9325 = vmatprep.mubr.bf16.mxu0 0
        %9326 = vmatmul.mubr.bf16.gmra.mrb[0].mxu0 %v7706
        %v9327 = vpop.f32.mrb[0].mxu0
        %v9328 = vadd.f32 %v9103, %v9327
        %v9329 = vpop.f32.mrb[0].mxu0
        %v9330 = vpop.f32.mrb[0].mxu0
        %v9331 = vadd.f32 %v9106, %v9330
        %v9332 = vpop.f32.mrb[0].mxu0
        %9333 = vmatprep.mubr.bf16.mxu0 0
        %9334 = vmatmul.mubr.bf16.gmra.mrb[0].mxu0 %v7707
        %v9335 = vpop.f32.mrb[0].mxu0
        %v9336 = vadd.f32 %v9111, %v9335
        %v9337 = vpop.f32.mrb[0].mxu0
        %v9338 = vpop.f32.mrb[0].mxu0
        %v9339 = vadd.f32 %v9114, %v9338
        %v9340 = vpop.f32.mrb[0].mxu0
        %9341 = vmatprep.mubr.bf16.mxu0 0
        %9342 = vmatmul.mubr.bf16.gmra.mrb[0].mxu0 %v7708
        %v9343 = vpop.f32.mrb[0].mxu0
        %v9344 = vadd.f32 %v9119, %v9343
        %v9345 = vpop.f32.mrb[0].mxu0
        %v9346 = vpop.f32.mrb[0].mxu0
        %v9347 = vadd.f32 %v9122, %v9346
        %v9348 = vpop.f32.mrb[0].mxu0
        %9349 = vmatprep.mubr.bf16.mxu0 0
        %9350 = vmatmul.mubr.bf16.gmra.mrb[0].mxu0 %v7709
        %v9351 = vpop.f32.mrb[0].mxu0
        %v9352 = vadd.f32 %v9127, %v9351
        %v9353 = vpop.f32.mrb[0].mxu0
        %v9354 = vpop.f32.mrb[0].mxu0
        %v9355 = vadd.f32 %v9130, %v9354
        %v9356 = vpop.f32.mrb[0].mxu0
        %9357 = vmatprep.mubr.bf16.mxu0 0
        %9358 = vmatmul.mubr.bf16.gmra.mrb[0].mxu0 %v7710
        %v9359 = vpop.f32.mrb[0].mxu0
        %v9360 = vadd.f32 %v9135, %v9359
        %v9361 = vpop.f32.mrb[0].mxu0
        %v9362 = vpop.f32.mrb[0].mxu0
        %v9363 = vadd.f32 %v9138, %v9362
        %v9364 = vpop.f32.mrb[0].mxu0
        %9365 = vmatprep.mubr.bf16.mxu0 0
        %9366 = vmatmul.mubr.bf16.gmra.mrb[0].mxu0 %v7711
        %v9367 = vpop.f32.mrb[0].mxu0
        %v9368 = vadd.f32 %v9143, %v9367
        %v9369 = vpop.f32.mrb[0].mxu0
        %v9370 = vpop.f32.mrb[0].mxu0
        %v9371 = vadd.f32 %v9146, %v9370
        %v9372 = vpop.f32.mrb[0].mxu0
        %9373 = vmatprep.mubr.bf16.mxu0 0
        %9374 = vmatmul.mubr.bf16.gmra.mrb[0].mxu0 %v7712
        %v9375 = vpop.f32.mrb[0].mxu0
        %v9376 = vadd.f32 %v9151, %v9375
        %v9377 = vpop.f32.mrb[0].mxu0
        %v9378 = vpop.f32.mrb[0].mxu0
        %v9379 = vadd.f32 %v9154, %v9378
        %v9380 = vpop.f32.mrb[0].mxu0
        %9381 = vmatprep.mubr.bf16.mxu0 0
        %9382 = vmatmul.mubr.bf16.gmra.mrb[0].mxu0 %v7713
        %v9383 = vpop.f32.mrb[0].mxu0
        %v9384 = vadd.f32 %v9159, %v9383
        %v9385 = vpop.f32.mrb[0].mxu0
        %v9386 = vpop.f32.mrb[0].mxu0
        %v9387 = vadd.f32 %v9162, %v9386
        %v9388 = vpop.f32.mrb[0].mxu0
        %9389 = vmatprep.mubr.bf16.mxu0 0
        %9390 = vmatmul.mubr.bf16.gmra.mrb[0].mxu0 %v7714
        %v9391 = vpop.f32.mrb[0].mxu0
        %v9392 = vadd.f32 %v9167, %v9391
        %v9393 = vpop.f32.mrb[0].mxu0
        %v9394 = vpop.f32.mrb[0].mxu0
        %v9395 = vadd.f32 %v9170, %v9394
        %v9396 = vpop.f32.mrb[0].mxu0
        %9397 = vmatprep.mubr.bf16.mxu0 0
        %9398 = vmatmul.mubr.bf16.gmra.mrb[0].mxu0 %v7715
        %v9399 = vpop.f32.mrb[0].mxu0
        %v9400 = vadd.f32 %v9175, %v9399
        %v9401 = vpop.f32.mrb[0].mxu0
        %v9402 = vpop.f32.mrb[0].mxu0
        %v9403 = vadd.f32 %v9178, %v9402
        %v9404 = vpop.f32.mrb[0].mxu0
        %9405 = vmatprep.mubr.bf16.mxu0 0
        %9406 = vmatmul.mubr.bf16.gmra.mrb[0].mxu0 %v7716
        %v9407 = vpop.f32.mrb[0].mxu0
        %v9408 = vadd.f32 %v9183, %v9407
        %v9409 = vpop.f32.mrb[0].mxu0
        %v9410 = vpop.f32.mrb[0].mxu0
        %v9411 = vadd.f32 %v9186, %v9410
        %v9412 = vpop.f32.mrb[0].mxu0
        %9413 = vmatprep.mubr.bf16.mxu0 0
        %9414 = vmatmul.mubr.bf16.gmra.mrb[0].mxu0 %v7717
        %v9415 = vpop.f32.mrb[0].mxu0
        %v9416 = vadd.f32 %v9191, %v9415
        %v9417 = vpop.f32.mrb[0].mxu0
        %v9418 = vpop.f32.mrb[0].mxu0
        %v9419 = vadd.f32 %v9194, %v9418
        %v9420 = vpop.f32.mrb[0].mxu0
        %9421 = vmatprep.mubr.bf16.mxu0 0
        %9422 = vmatmul.mubr.bf16.gmra.mrb[0].mxu0 %v7718
        %v9423 = vpop.f32.mrb[0].mxu0
        %v9424 = vadd.f32 %v9199, %v9423
        %v9425 = vpop.f32.mrb[0].mxu0
        %v9426 = vpop.f32.mrb[0].mxu0
        %v9427 = vadd.f32 %v9202, %v9426
        %v9428 = vpop.f32.mrb[0].mxu0
        %9429 = vmatprep.mubr.bf16.mxu0 0
        %9430 = vmatmul.mubr.bf16.gmra.mrb[0].mxu0 %v7719
        %v9431 = vpop.f32.mrb[0].mxu0
        %v9432 = vadd.f32 %v9207, %v9431
        %v9433 = vpop.f32.mrb[0].mxu0
        %v9434 = vpop.f32.mrb[0].mxu0
        %v9435 = vadd.f32 %v9210, %v9434
        %v9436 = vpop.f32.mrb[0].mxu0
        %9437 = vmatprep.mubr.bf16.mxu0 0
        %9438 = vmatmul.mubr.bf16.gmra.mrb[0].mxu0 %v7720
        %v9439 = vpop.f32.mrb[0].mxu0
        %v9440 = vadd.f32 %v9215, %v9439
        %v9441 = vpop.f32.mrb[0].mxu0
        %v9442 = vpop.f32.mrb[0].mxu0
        %v9443 = vadd.f32 %v9218, %v9442
        %v9444 = vpop.f32.mrb[0].mxu0
        %9445 = vmatprep.mubr.bf16.mxu0 0
        %9446 = vmatmul.mubr.bf16.gmra.mrb[0].mxu0 %v7721
        %v9447 = vpop.f32.mrb[0].mxu0
        %v9448 = vadd.f32 %v9223, %v9447
        %v9449 = vpop.f32.mrb[0].mxu0
        %v9450 = vpop.f32.mrb[0].mxu0
        %v9451 = vadd.f32 %v9226, %v9450
        %v9452 = vpop.f32.mrb[0].mxu0
        %9453 = vmatprep.mubr.bf16.mxu0 0
        %9454 = vmatmul.mubr.bf16.gmra.mrb[0].mxu0 %v7722
        %v9455 = vpop.f32.mrb[0].mxu0
        %v9456 = vadd.f32 %v9231, %v9455
        %v9457 = vpop.f32.mrb[0].mxu0
        %v9458 = vpop.f32.mrb[0].mxu0
        %v9459 = vadd.f32 %v9234, %v9458
        %v9460 = vpop.f32.mrb[0].mxu0
        %9461 = vmatprep.mubr.bf16.mxu0 0
        %9462 = vmatmul.mubr.bf16.gmra.mrb[0].mxu0 %v7723
        %v9463 = vpop.f32.mrb[0].mxu0
        %v9464 = vadd.f32 %v9239, %v9463
        %v9465 = vpop.f32.mrb[0].mxu0
        %v9466 = vpop.f32.mrb[0].mxu0
        %v9467 = vadd.f32 %v9242, %v9466
        %v9468 = vpop.f32.mrb[0].mxu0
        %9469 = vmatprep.mubr.bf16.mxu0 0
        %9470 = vmatmul.mubr.bf16.gmra.mrb[0].mxu0 %v7724
        %v9471 = vpop.f32.mrb[0].mxu0
        %v9472 = vadd.f32 %v9247, %v9471
        %v9473 = vpop.f32.mrb[0].mxu0
        %v9474 = vpop.f32.mrb[0].mxu0
        %v9475 = vadd.f32 %v9250, %v9474
        %v9476 = vpop.f32.mrb[0].mxu0
        %9477 = vmatprep.mubr.bf16.mxu0 0
        %9478 = vmatmul.mubr.bf16.gmra.mrb[0].mxu0 %v7725
        %v9479 = vpop.f32.mrb[0].mxu0
        %v9480 = vadd.f32 %v9255, %v9479
        %v9481 = vpop.f32.mrb[0].mxu0
        %v9482 = vpop.f32.mrb[0].mxu0
        %v9483 = vadd.f32 %v9258, %v9482
        %v9484 = vpop.f32.mrb[0].mxu0
        %9485 = vmatprep.mubr.bf16.mxu0 0
        %9486 = vmatmul.mubr.bf16.gmra.mrb[0].mxu0 %v7726
        %v9487 = vpop.f32.mrb[0].mxu0
        %v9488 = vadd.f32 %v9263, %v9487
        %v9489 = vpop.f32.mrb[0].mxu0
        %v9490 = vpop.f32.mrb[0].mxu0
        %v9491 = vadd.f32 %v9266, %v9490
        %v9492 = vpop.f32.mrb[0].mxu0
        %9493 = vmatprep.mubr.bf16.mxu0 0
        %9494 = vmatmul.mubr.bf16.gmra.mrb[0].mxu0 %v7805
        %v9495 = vpop.f32.mrb[0].mxu0
        %v9496 = vadd.f32 %v9271, %v9495
        %v9497 = vpop.f32.mrb[0].mxu0
        %v9498 = vpop.f32.mrb[0].mxu0
        %v9499 = vadd.f32 %v9274, %v9498
        %v9500 = vpop.f32.mrb[0].mxu0
        %9501 = vmatprep.mubr.bf16.mxu0 0
        %9502 = vmatmul.mubr.bf16.gmra.mrb[0].mxu0 %v7806
        %v9503 = vpop.f32.mrb[0].mxu0
        %v9504 = vadd.f32 %v9279, %v9503
        %v9505 = vpop.f32.mrb[0].mxu0
        %v9506 = vpop.f32.mrb[0].mxu0
        %v9507 = vadd.f32 %v9282, %v9506
        %v9508 = vpop.f32.mrb[0].mxu0
        %9509 = vmatprep.mubr.bf16.mxu0 0
        %9510 = vmatmul.mubr.bf16.gmra.mrb[0].mxu0 %v7807
        %v9511 = vpop.f32.mrb[0].mxu0
        %v9512 = vadd.f32 %v9287, %v9511
        %v9513 = vpop.f32.mrb[0].mxu0
        %v9514 = vpop.f32.mrb[0].mxu0
        %v9515 = vadd.f32 %v9290, %v9514
        %v9516 = vpop.f32.mrb[0].mxu0
        %9517 = vdwg.mxu0
        %vm9518 = vcmp.ge.f32.partialorder %v9328, 0.0
        %vm9519 = vcmp.ge.f32.partialorder %v9331, 0.0
        %vm9520 = vcmp.ge.f32.partialorder %v9336, 0.0
        %vm9521 = vcmp.ge.f32.partialorder %v9339, 0.0
        %vm9522 = vcmp.ge.f32.partialorder %v9344, 0.0
        %vm9523 = vcmp.ge.f32.partialorder %v9347, 0.0
        %vm9524 = vcmp.ge.f32.partialorder %v9352, 0.0
        %vm9525 = vcmp.ge.f32.partialorder %v9355, 0.0
        %vm9526 = vcmp.ge.f32.partialorder %v9360, 0.0
        %vm9527 = vcmp.ge.f32.partialorder %v9363, 0.0
        %vm9528 = vcmp.ge.f32.partialorder %v9368, 0.0
        %vm9529 = vcmp.ge.f32.partialorder %v9371, 0.0
        %vm9530 = vcmp.ge.f32.partialorder %v9376, 0.0
        %vm9531 = vcmp.ge.f32.partialorder %v9379, 0.0
        %vm9532 = vcmp.ge.f32.partialorder %v9384, 0.0
        %vm9533 = vcmp.ge.f32.partialorder %v9387, 0.0
        %vm9534 = vcmp.ge.f32.partialorder %v9392, 0.0
        %vm9535 = vcmp.ge.f32.partialorder %v9395, 0.0
        %vm9536 = vcmp.ge.f32.partialorder %v9400, 0.0
        %vm9537 = vcmp.ge.f32.partialorder %v9403, 0.0
        %vm9538 = vcmp.ge.f32.partialorder %v9408, 0.0
        %vm9539 = vcmp.ge.f32.partialorder %v9411, 0.0
        %vm9540 = vcmp.ge.f32.partialorder %v9416, 0.0
        %vm9541 = vcmp.ge.f32.partialorder %v9419, 0.0
        %vm9542 = vcmp.ge.f32.partialorder %v9424, 0.0
        %vm9543 = vcmp.ge.f32.partialorder %v9427, 0.0
        %vm9544 = vcmp.ge.f32.partialorder %v9432, 0.0
        %vm9545 = vcmp.ge.f32.partialorder %v9435, 0.0
        %vm9546 = vcmp.ge.f32.partialorder %v9440, 0.0
        %vm9547 = vcmp.ge.f32.partialorder %v9443, 0.0
        %vm9548 = vcmp.ge.f32.partialorder %v9448, 0.0
        %vm9549 = vcmp.ge.f32.partialorder %v9451, 0.0
        %vm9550 = vcmp.ge.f32.partialorder %v9456, 0.0
        %vm9551 = vcmp.ge.f32.partialorder %v9459, 0.0
        %vm9552 = vcmp.ge.f32.partialorder %v9464, 0.0
        %vm9553 = vcmp.ge.f32.partialorder %v9467, 0.0
        %vm9554 = vcmp.ge.f32.partialorder %v9472, 0.0
        %vm9555 = vcmp.ge.f32.partialorder %v9475, 0.0
        %vm9556 = vcmp.ge.f32.partialorder %v9480, 0.0
        %vm9557 = vcmp.ge.f32.partialorder %v9483, 0.0
        %vm9558 = vcmp.ge.f32.partialorder %v9488, 0.0
        %vm9559 = vcmp.ge.f32.partialorder %v9491, 0.0
        %vm9560 = vcmp.ge.f32.partialorder %v9496, 0.0
        %vm9561 = vcmp.ge.f32.partialorder %v9499, 0.0
        %vm9562 = vcmp.ge.f32.partialorder %v9504, 0.0
        %vm9563 = vcmp.ge.f32.partialorder %v9507, 0.0
        %vm9564 = vcmp.ge.f32.partialorder %v9512, 0.0
        %vm9565 = vcmp.ge.f32.partialorder %v9515, 0.0
        %v9566 = vmul.f32 %v9328, 0.1
        %v9567 = vmul.f32 %v9331, 0.1
        %v9568 = vmul.f32 %v9336, 0.1
        %v9569 = vmul.f32 %v9339, 0.1
        %v9570 = vmul.f32 %v9344, 0.1
        %v9571 = vmul.f32 %v9347, 0.1
        %v9572 = vmul.f32 %v9352, 0.1
        %v9573 = vmul.f32 %v9355, 0.1
        %v9574 = vmul.f32 %v9360, 0.1
        %v9575 = vmul.f32 %v9363, 0.1
        %v9576 = vmul.f32 %v9368, 0.1
        %v9577 = vmul.f32 %v9371, 0.1
        %v9578 = vmul.f32 %v9376, 0.1
        %v9579 = vmul.f32 %v9379, 0.1
        %v9580 = vmul.f32 %v9384, 0.1
        %v9581 = vmul.f32 %v9387, 0.1
        %v9582 = vmul.f32 %v9392, 0.1
        %v9583 = vmul.f32 %v9395, 0.1
        %v9584 = vmul.f32 %v9400, 0.1
        %v9585 = vmul.f32 %v9403, 0.1
        %v9586 = vmul.f32 %v9408, 0.1
        %v9587 = vmul.f32 %v9411, 0.1
        %v9588 = vmul.f32 %v9416, 0.1
        %v9589 = vmul.f32 %v9419, 0.1
        %v9590 = vmul.f32 %v9424, 0.1
        %v9591 = vmul.f32 %v9427, 0.1
        %v9592 = vmul.f32 %v9432, 0.1
        %v9593 = vmul.f32 %v9435, 0.1
        %v9594 = vmul.f32 %v9440, 0.1
        %v9595 = vmul.f32 %v9443, 0.1
        %v9596 = vmul.f32 %v9448, 0.1
        %v9597 = vmul.f32 %v9451, 0.1
        %v9598 = vmul.f32 %v9456, 0.1
        %v9599 = vmul.f32 %v9459, 0.1
        %v9600 = vmul.f32 %v9464, 0.1
        %v9601 = vmul.f32 %v9467, 0.1
        %v9602 = vmul.f32 %v9472, 0.1
        %v9603 = vmul.f32 %v9475, 0.1
        %v9604 = vmul.f32 %v9480, 0.1
        %v9605 = vmul.f32 %v9483, 0.1
        %v9606 = vmul.f32 %v9488, 0.1
        %v9607 = vmul.f32 %v9491, 0.1
        %v9608 = vmul.f32 %v9496, 0.1
        %v9609 = vmul.f32 %v9499, 0.1
        %v9610 = vmul.f32 %v9504, 0.1
        %v9611 = vmul.f32 %v9507, 0.1
        %v9612 = vmul.f32 %v9512, 0.1
        %v9613 = vmul.f32 %v9515, 0.1
        %v9614 = vsel %vm9518, %v9328, %v9566
        %v9615 = vsel %vm9519, %v9331, %v9567
        %v9616 = vsel %vm9520, %v9336, %v9568
        %v9617 = vsel %vm9521, %v9339, %v9569
        %v9618 = vsel %vm9522, %v9344, %v9570
        %v9619 = vsel %vm9523, %v9347, %v9571
        %v9620 = vsel %vm9524, %v9352, %v9572
        %v9621 = vsel %vm9525, %v9355, %v9573
        %v9622 = vsel %vm9526, %v9360, %v9574
        %v9623 = vsel %vm9527, %v9363, %v9575
        %v9624 = vsel %vm9528, %v9368, %v9576
        %v9625 = vsel %vm9529, %v9371, %v9577
        %v9626 = vsel %vm9530, %v9376, %v9578
        %v9627 = vsel %vm9531, %v9379, %v9579
        %v9628 = vsel %vm9532, %v9384, %v9580
        %v9629 = vsel %vm9533, %v9387, %v9581
        %v9630 = vsel %vm9534, %v9392, %v9582
        %v9631 = vsel %vm9535, %v9395, %v9583
        %v9632 = vsel %vm9536, %v9400, %v9584
        %v9633 = vsel %vm9537, %v9403, %v9585
        %v9634 = vsel %vm9538, %v9408, %v9586
        %v9635 = vsel %vm9539, %v9411, %v9587
        %v9636 = vsel %vm9540, %v9416, %v9588
        %v9637 = vsel %vm9541, %v9419, %v9589
        %v9638 = vsel %vm9542, %v9424, %v9590
        %v9639 = vsel %vm9543, %v9427, %v9591
        %v9640 = vsel %vm9544, %v9432, %v9592
        %v9641 = vsel %vm9545, %v9435, %v9593
        %v9642 = vsel %vm9546, %v9440, %v9594
        %v9643 = vsel %vm9547, %v9443, %v9595
        %v9644 = vsel %vm9548, %v9448, %v9596
        %v9645 = vsel %vm9549, %v9451, %v9597
        %v9646 = vsel %vm9550, %v9456, %v9598
        %v9647 = vsel %vm9551, %v9459, %v9599
        %v9648 = vsel %vm9552, %v9464, %v9600
        %v9649 = vsel %vm9553, %v9467, %v9601
        %v9650 = vsel %vm9554, %v9472, %v9602
        %v9651 = vsel %vm9555, %v9475, %v9603
        %v9652 = vsel %vm9556, %v9480, %v9604
        %v9653 = vsel %vm9557, %v9483, %v9605
        %v9654 = vsel %vm9558, %v9488, %v9606
        %v9655 = vsel %vm9559, %v9491, %v9607
        %v9656 = vsel %vm9560, %v9496, %v9608
        %v9657 = vsel %vm9561, %v9499, %v9609
        %v9658 = vsel %vm9562, %v9504, %v9610
        %v9659 = vsel %vm9563, %v9507, %v9611
        %v9660 = vsel %vm9564, %v9512, %v9612
        %v9661 = vsel %vm9565, %v9515, %v9613
        %9662 = vadd.xlane.f32.xlu0 %v9614
        %v9663 = vpop.xlane.xlu0 %9662
        %9664 = vadd.xlane.f32.xlu0 %v9615
        %v9665 = vpop.xlane.xlu0 %9664
        %9666 = vadd.xlane.f32.xlu0 %v9616
        %v9667 = vpop.xlane.xlu0 %9666
        %9668 = vadd.xlane.f32.xlu0 %v9617
        %v9669 = vpop.xlane.xlu0 %9668
        %9670 = vadd.xlane.f32.xlu0 %v9618
        %v9671 = vpop.xlane.xlu0 %9670
        %9672 = vadd.xlane.f32.xlu0 %v9619
        %v9673 = vpop.xlane.xlu0 %9672
        %9674 = vadd.xlane.f32.xlu0 %v9620
        %v9675 = vpop.xlane.xlu0 %9674
        %9676 = vadd.xlane.f32.xlu0 %v9621
        %v9677 = vpop.xlane.xlu0 %9676
        %9678 = vadd.xlane.f32.xlu0 %v9622
        %v9679 = vpop.xlane.xlu0 %9678
        %9680 = vadd.xlane.f32.xlu0 %v9623
        %v9681 = vpop.xlane.xlu0 %9680
        %9682 = vadd.xlane.f32.xlu0 %v9624
        %v9683 = vpop.xlane.xlu0 %9682
        %9684 = vadd.xlane.f32.xlu0 %v9625
        %v9685 = vpop.xlane.xlu0 %9684
        %9686 = vadd.xlane.f32.xlu0 %v9626
        %v9687 = vpop.xlane.xlu0 %9686
        %9688 = vadd.xlane.f32.xlu0 %v9627
        %v9689 = vpop.xlane.xlu0 %9688
        %9690 = vadd.xlane.f32.xlu0 %v9628
        %v9691 = vpop.xlane.xlu0 %9690
        %9692 = vadd.xlane.f32.xlu0 %v9629
        %v9693 = vpop.xlane.xlu0 %9692
        %9694 = vadd.xlane.f32.xlu0 %v9630
        %v9695 = vpop.xlane.xlu0 %9694
        %9696 = vadd.xlane.f32.xlu0 %v9631
        %v9697 = vpop.xlane.xlu0 %9696
        %9698 = vadd.xlane.f32.xlu0 %v9632
        %v9699 = vpop.xlane.xlu0 %9698
        %9700 = vadd.xlane.f32.xlu0 %v9633
        %v9701 = vpop.xlane.xlu0 %9700
        %9702 = vadd.xlane.f32.xlu0 %v9634
        %v9703 = vpop.xlane.xlu0 %9702
        %9704 = vadd.xlane.f32.xlu0 %v9635
        %v9705 = vpop.xlane.xlu0 %9704
        %9706 = vadd.xlane.f32.xlu0 %v9636
        %v9707 = vpop.xlane.xlu0 %9706
        %9708 = vadd.xlane.f32.xlu0 %v9637
        %v9709 = vpop.xlane.xlu0 %9708
        %9710 = vadd.xlane.f32.xlu0 %v9638
        %v9711 = vpop.xlane.xlu0 %9710
        %9712 = vadd.xlane.f32.xlu0 %v9639
        %v9713 = vpop.xlane.xlu0 %9712
        %9714 = vadd.xlane.f32.xlu0 %v9640
        %v9715 = vpop.xlane.xlu0 %9714
        %9716 = vadd.xlane.f32.xlu0 %v9641
        %v9717 = vpop.xlane.xlu0 %9716
        %9718 = vadd.xlane.f32.xlu0 %v9642
        %v9719 = vpop.xlane.xlu0 %9718
        %9720 = vadd.xlane.f32.xlu0 %v9643
        %v9721 = vpop.xlane.xlu0 %9720
        %9722 = vadd.xlane.f32.xlu0 %v9644
        %v9723 = vpop.xlane.xlu0 %9722
        %9724 = vadd.xlane.f32.xlu0 %v9645
        %v9725 = vpop.xlane.xlu0 %9724
        %9726 = vadd.xlane.f32.xlu0 %v9646
        %v9727 = vpop.xlane.xlu0 %9726
        %9728 = vadd.xlane.f32.xlu0 %v9647
        %v9729 = vpop.xlane.xlu0 %9728
        %9730 = vadd.xlane.f32.xlu0 %v9648
        %v9731 = vpop.xlane.xlu0 %9730
        %9732 = vadd.xlane.f32.xlu0 %v9649
        %v9733 = vpop.xlane.xlu0 %9732
        %9734 = vadd.xlane.f32.xlu0 %v9650
        %v9735 = vpop.xlane.xlu0 %9734
        %9736 = vadd.xlane.f32.xlu0 %v9651
        %v9737 = vpop.xlane.xlu0 %9736
        %9738 = vadd.xlane.f32.xlu0 %v9652
        %v9739 = vpop.xlane.xlu0 %9738
        %9740 = vadd.xlane.f32.xlu0 %v9653
        %v9741 = vpop.xlane.xlu0 %9740
        %9742 = vadd.xlane.f32.xlu0 %v9654
        %v9743 = vpop.xlane.xlu0 %9742
        %9744 = vadd.xlane.f32.xlu0 %v9655
        %v9745 = vpop.xlane.xlu0 %9744
        %9746 = vadd.xlane.f32.xlu0 %v9656
        %v9747 = vpop.xlane.xlu0 %9746
        %9748 = vadd.xlane.f32.xlu0 %v9657
        %v9749 = vpop.xlane.xlu0 %9748
        %9750 = vadd.xlane.f32.xlu0 %v9658
        %v9751 = vpop.xlane.xlu0 %9750
        %9752 = vadd.xlane.f32.xlu0 %v9659
        %v9753 = vpop.xlane.xlu0 %9752
        %9754 = vadd.xlane.f32.xlu0 %v9660
        %v9755 = vpop.xlane.xlu0 %9754
        %9756 = vadd.xlane.f32.xlu0 %v9661
        %v9757 = vpop.xlane.xlu0 %9756
        %v9758 = vsub.f32 0.0, %v9663
        %v9759 = vsub.f32 0.0, %v9665
        %v9760 = vsub.f32 0.0, %v9667
        %v9761 = vsub.f32 0.0, %v9669
        %v9762 = vsub.f32 0.0, %v9671
        %v9763 = vsub.f32 0.0, %v9673
        %v9764 = vsub.f32 0.0, %v9675
        %v9765 = vsub.f32 0.0, %v9677
        %v9766 = vsub.f32 0.0, %v9679
        %v9767 = vsub.f32 0.0, %v9681
        %v9768 = vsub.f32 0.0, %v9683
        %v9769 = vsub.f32 0.0, %v9685
        %v9770 = vsub.f32 0.0, %v9687
        %v9771 = vsub.f32 0.0, %v9689
        %v9772 = vsub.f32 0.0, %v9691
        %v9773 = vsub.f32 0.0, %v9693
        %v9774 = vsub.f32 0.0, %v9695
        %v9775 = vsub.f32 0.0, %v9697
        %v9776 = vsub.f32 0.0, %v9699
        %v9777 = vsub.f32 0.0, %v9701
        %v9778 = vsub.f32 0.0, %v9703
        %v9779 = vsub.f32 0.0, %v9705
        %v9780 = vsub.f32 0.0, %v9707
        %v9781 = vsub.f32 0.0, %v9709
        %v9782 = vsub.f32 0.0, %v9711
        %v9783 = vsub.f32 0.0, %v9713
        %v9784 = vsub.f32 0.0, %v9715
        %v9785 = vsub.f32 0.0, %v9717
        %v9786 = vsub.f32 0.0, %v9719
        %v9787 = vsub.f32 0.0, %v9721
        %v9788 = vsub.f32 0.0, %v9723
        %v9789 = vsub.f32 0.0, %v9725
        %v9790 = vsub.f32 0.0, %v9727
        %v9791 = vsub.f32 0.0, %v9729
        %v9792 = vsub.f32 0.0, %v9731
        %v9793 = vsub.f32 0.0, %v9733
        %v9794 = vsub.f32 0.0, %v9735
        %v9795 = vsub.f32 0.0, %v9737
        %v9796 = vsub.f32 0.0, %v9739
        %v9797 = vsub.f32 0.0, %v9741
        %v9798 = vsub.f32 0.0, %v9743
        %v9799 = vsub.f32 0.0, %v9745
        %v9800 = vsub.f32 0.0, %v9747
        %v9801 = vsub.f32 0.0, %v9749
        %v9802 = vsub.f32 0.0, %v9751
        %v9803 = vsub.f32 0.0, %v9753
        %v9804 = vsub.f32 0.0, %v9755
        %v9805 = vsub.f32 0.0, %v9757
        %v9806 = vmul.f32 %v9758, 1.442695
        %v9807 = vpow.pop %v9806
        %v9808 = vmul.f32 %v9759, 1.442695
        %v9809 = vpow.pop %v9808
        %v9810 = vmul.f32 %v9760, 1.442695
        %v9811 = vpow.pop %v9810
        %v9812 = vmul.f32 %v9761, 1.442695
        %v9813 = vpow.pop %v9812
        %v9814 = vmul.f32 %v9762, 1.442695
        %v9815 = vpow.pop %v9814
        %v9816 = vmul.f32 %v9763, 1.442695
        %v9817 = vpow.pop %v9816
        %v9818 = vmul.f32 %v9764, 1.442695
        %v9819 = vpow.pop %v9818
        %v9820 = vmul.f32 %v9765, 1.442695
        %v9821 = vpow.pop %v9820
        %v9822 = vmul.f32 %v9766, 1.442695
        %v9823 = vpow.pop %v9822
        %v9824 = vmul.f32 %v9767, 1.442695
        %v9825 = vpow.pop %v9824
        %v9826 = vmul.f32 %v9768, 1.442695
        %v9827 = vpow.pop %v9826
        %v9828 = vmul.f32 %v9769, 1.442695
        %v9829 = vpow.pop %v9828
        %v9830 = vmul.f32 %v9770, 1.442695
        %v9831 = vpow.pop %v9830
        %v9832 = vmul.f32 %v9771, 1.442695
        %v9833 = vpow.pop %v9832
        %v9834 = vmul.f32 %v9772, 1.442695
        %v9835 = vpow.pop %v9834
        %v9836 = vmul.f32 %v9773, 1.442695
        %v9837 = vpow.pop %v9836
        %v9838 = vmul.f32 %v9774, 1.442695
        %v9839 = vpow.pop %v9838
        %v9840 = vmul.f32 %v9775, 1.442695
        %v9841 = vpow.pop %v9840
        %v9842 = vmul.f32 %v9776, 1.442695
        %v9843 = vpow.pop %v9842
        %v9844 = vmul.f32 %v9777, 1.442695
        %v9845 = vpow.pop %v9844
        %v9846 = vmul.f32 %v9778, 1.442695
        %v9847 = vpow.pop %v9846
        %v9848 = vmul.f32 %v9779, 1.442695
        %v9849 = vpow.pop %v9848
        %v9850 = vmul.f32 %v9780, 1.442695
        %v9851 = vpow.pop %v9850
        %v9852 = vmul.f32 %v9781, 1.442695
        %v9853 = vpow.pop %v9852
        %v9854 = vmul.f32 %v9782, 1.442695
        %v9855 = vpow.pop %v9854
        %v9856 = vmul.f32 %v9783, 1.442695
        %v9857 = vpow.pop %v9856
        %v9858 = vmul.f32 %v9784, 1.442695
        %v9859 = vpow.pop %v9858
        %v9860 = vmul.f32 %v9785, 1.442695
        %v9861 = vpow.pop %v9860
        %v9862 = vmul.f32 %v9786, 1.442695
        %v9863 = vpow.pop %v9862
        %v9864 = vmul.f32 %v9787, 1.442695
        %v9865 = vpow.pop %v9864
        %v9866 = vmul.f32 %v9788, 1.442695
        %v9867 = vpow.pop %v9866
        %v9868 = vmul.f32 %v9789, 1.442695
        %v9869 = vpow.pop %v9868
        %v9870 = vmul.f32 %v9790, 1.442695
        %v9871 = vpow.pop %v9870
        %v9872 = vmul.f32 %v9791, 1.442695
        %v9873 = vpow.pop %v9872
        %v9874 = vmul.f32 %v9792, 1.442695
        %v9875 = vpow.pop %v9874
        %v9876 = vmul.f32 %v9793, 1.442695
        %v9877 = vpow.pop %v9876
        %v9878 = vmul.f32 %v9794, 1.442695
        %v9879 = vpow.pop %v9878
        %v9880 = vmul.f32 %v9795, 1.442695
        %v9881 = vpow.pop %v9880
        %v9882 = vmul.f32 %v9796, 1.442695
        %v9883 = vpow.pop %v9882
        %v9884 = vmul.f32 %v9797, 1.442695
        %v9885 = vpow.pop %v9884
        %v9886 = vmul.f32 %v9798, 1.442695
        %v9887 = vpow.pop %v9886
        %v9888 = vmul.f32 %v9799, 1.442695
        %v9889 = vpow.pop %v9888
        %v9890 = vmul.f32 %v9800, 1.442695
        %v9891 = vpow.pop %v9890
        %v9892 = vmul.f32 %v9801, 1.442695
        %v9893 = vpow.pop %v9892
        %v9894 = vmul.f32 %v9802, 1.442695
        %v9895 = vpow.pop %v9894
        %v9896 = vmul.f32 %v9803, 1.442695
        %v9897 = vpow.pop %v9896
        %v9898 = vmul.f32 %v9804, 1.442695
        %v9899 = vpow.pop %v9898
        %v9900 = vmul.f32 %v9805, 1.442695
        %v9901 = vpow.pop %v9900
        %v9902 = vadd.f32 %v9807, 1.0
        %v9903 = vadd.f32 %v9809, 1.0
        %v9904 = vadd.f32 %v9811, 1.0
        %v9905 = vadd.f32 %v9813, 1.0
        %v9906 = vadd.f32 %v9815, 1.0
        %v9907 = vadd.f32 %v9817, 1.0
        %v9908 = vadd.f32 %v9819, 1.0
        %v9909 = vadd.f32 %v9821, 1.0
        %v9910 = vadd.f32 %v9823, 1.0
        %v9911 = vadd.f32 %v9825, 1.0
        %v9912 = vadd.f32 %v9827, 1.0
        %v9913 = vadd.f32 %v9829, 1.0
        %v9914 = vadd.f32 %v9831, 1.0
        %v9915 = vadd.f32 %v9833, 1.0
        %v9916 = vadd.f32 %v9835, 1.0
        %v9917 = vadd.f32 %v9837, 1.0
        %v9918 = vadd.f32 %v9839, 1.0
        %v9919 = vadd.f32 %v9841, 1.0
        %v9920 = vadd.f32 %v9843, 1.0
        %v9921 = vadd.f32 %v9845, 1.0
        %v9922 = vadd.f32 %v9847, 1.0
        %v9923 = vadd.f32 %v9849, 1.0
        %v9924 = vadd.f32 %v9851, 1.0
        %v9925 = vadd.f32 %v9853, 1.0
        %v9926 = vadd.f32 %v9855, 1.0
        %v9927 = vadd.f32 %v9857, 1.0
        %v9928 = vadd.f32 %v9859, 1.0
        %v9929 = vadd.f32 %v9861, 1.0
        %v9930 = vadd.f32 %v9863, 1.0
        %v9931 = vadd.f32 %v9865, 1.0
        %v9932 = vadd.f32 %v9867, 1.0
        %v9933 = vadd.f32 %v9869, 1.0
        %v9934 = vadd.f32 %v9871, 1.0
        %v9935 = vadd.f32 %v9873, 1.0
        %v9936 = vadd.f32 %v9875, 1.0
        %v9937 = vadd.f32 %v9877, 1.0
        %v9938 = vadd.f32 %v9879, 1.0
        %v9939 = vadd.f32 %v9881, 1.0
        %v9940 = vadd.f32 %v9883, 1.0
        %v9941 = vadd.f32 %v9885, 1.0
        %v9942 = vadd.f32 %v9887, 1.0
        %v9943 = vadd.f32 %v9889, 1.0
        %v9944 = vadd.f32 %v9891, 1.0
        %v9945 = vadd.f32 %v9893, 1.0
        %v9946 = vadd.f32 %v9895, 1.0
        %v9947 = vadd.f32 %v9897, 1.0
        %v9948 = vadd.f32 %v9899, 1.0
        %v9949 = vadd.f32 %v9901, 1.0
        %v9950 = vrcp.pop %v9902
        %v9951 = vrcp.pop %v9903
        %v9952 = vrcp.pop %v9904
        %v9953 = vrcp.pop %v9905
        %v9954 = vrcp.pop %v9906
        %v9955 = vrcp.pop %v9907
        %v9956 = vrcp.pop %v9908
        %v9957 = vrcp.pop %v9909
        %v9958 = vrcp.pop %v9910
        %v9959 = vrcp.pop %v9911
        %v9960 = vrcp.pop %v9912
        %v9961 = vrcp.pop %v9913
        %v9962 = vrcp.pop %v9914
        %v9963 = vrcp.pop %v9915
        %v9964 = vrcp.pop %v9916
        %v9965 = vrcp.pop %v9917
        %v9966 = vrcp.pop %v9918
        %v9967 = vrcp.pop %v9919
        %v9968 = vrcp.pop %v9920
        %v9969 = vrcp.pop %v9921
        %v9970 = vrcp.pop %v9922
        %v9971 = vrcp.pop %v9923
        %v9972 = vrcp.pop %v9924
        %v9973 = vrcp.pop %v9925
        %v9974 = vrcp.pop %v9926
        %v9975 = vrcp.pop %v9927
        %v9976 = vrcp.pop %v9928
        %v9977 = vrcp.pop %v9929
        %v9978 = vrcp.pop %v9930
        %v9979 = vrcp.pop %v9931
        %v9980 = vrcp.pop %v9932
        %v9981 = vrcp.pop %v9933
        %v9982 = vrcp.pop %v9934
        %v9983 = vrcp.pop %v9935
        %v9984 = vrcp.pop %v9936
        %v9985 = vrcp.pop %v9937
        %v9986 = vrcp.pop %v9938
        %v9987 = vrcp.pop %v9939
        %v9988 = vrcp.pop %v9940
        %v9989 = vrcp.pop %v9941
        %v9990 = vrcp.pop %v9942
        %v9991 = vrcp.pop %v9943
        %v9992 = vrcp.pop %v9944
        %v9993 = vrcp.pop %v9945
        %v9994 = vrcp.pop %v9946
        %v9995 = vrcp.pop %v9947
        %v9996 = vrcp.pop %v9948
        %v9997 = vrcp.pop %v9949
        %v10046 = vlaneseq
        %v10047 = vand.u32 %v10046, 127
        %v10048 = vadd.s32 %v10047, 4
        %v10049 = vlaneseq
        %v10050 = vshrl.u32 %v10049, 7
        %v10051 = vsub.s32 %v10048, %v10050
        %v10052 = vrot.slane %v9950, %v10051
        %v10053 = vadd.s32 %v10047, 4294967292
        %v10054 = vlaneseq
        %v10055 = vshrl.u32 %v10054, 7
        %v10056 = vsub.s32 %v10053, %v10055
        %v10057 = vrot.slane %v9951, %v10056
        %vm10058 = vcmask 97312
        %v10059 = vsel %vm10058, %v10057, %v10052
        %v10060 = vadd.s32 %v10047, 4294967284
        %v10061 = vlaneseq
        %v10062 = vshrl.u32 %v10061, 7
        %v10063 = vsub.s32 %v10060, %v10062
        %v10064 = vrot.slane %v9952, %v10063
        %vm10065 = vcmask 162912
        %v10066 = vsel %vm10065, %v10064, %v10059
        %v10067 = vlaneseq
        %v10068 = vshrl.u32 %v10067, 7
        %v10069 = vsub.s32 %v10048, %v10068
        %v10070 = vrot.slane %v9953, %v10069
        %v10071 = vlaneseq
        %v10072 = vshrl.u32 %v10071, 7
        %v10073 = vsub.s32 %v10053, %v10072
        %v10074 = vrot.slane %v9954, %v10073
        %v10075 = vsel %vm10058, %v10074, %v10070
        %v10076 = vlaneseq
        %v10077 = vshrl.u32 %v10076, 7
        %v10078 = vsub.s32 %v10060, %v10077
        %v10079 = vrot.slane %v9955, %v10078
        %v10080 = vsel %vm10065, %v10079, %v10075
        %v10081 = vlaneseq
        %v10082 = vshrl.u32 %v10081, 7
        %v10083 = vsub.s32 %v10048, %v10082
        %v10084 = vrot.slane %v9956, %v10083
        %v10085 = vlaneseq
        %v10086 = vshrl.u32 %v10085, 7
        %v10087 = vsub.s32 %v10053, %v10086
        %v10088 = vrot.slane %v9957, %v10087
        %v10089 = vsel %vm10058, %v10088, %v10084
        %v10090 = vlaneseq
        %v10091 = vshrl.u32 %v10090, 7
        %v10092 = vsub.s32 %v10060, %v10091
        %v10093 = vrot.slane %v9958, %v10092
        %v10094 = vsel %vm10065, %v10093, %v10089
        %v10095 = vlaneseq
        %v10096 = vshrl.u32 %v10095, 7
        %v10097 = vsub.s32 %v10048, %v10096
        %v10098 = vrot.slane %v9959, %v10097
        %v10099 = vlaneseq
        %v10100 = vshrl.u32 %v10099, 7
        %v10101 = vsub.s32 %v10053, %v10100
        %v10102 = vrot.slane %v9960, %v10101
        %v10103 = vsel %vm10058, %v10102, %v10098
        %v10104 = vlaneseq
        %v10105 = vshrl.u32 %v10104, 7
        %v10106 = vsub.s32 %v10060, %v10105
        %v10107 = vrot.slane %v9961, %v10106
        %v10108 = vsel %vm10065, %v10107, %v10103
        %v10109 = vlaneseq
        %v10110 = vshrl.u32 %v10109, 7
        %v10111 = vsub.s32 %v10048, %v10110
        %v10112 = vrot.slane %v9962, %v10111
        %v10113 = vlaneseq
        %v10114 = vshrl.u32 %v10113, 7
        %v10115 = vsub.s32 %v10053, %v10114
        %v10116 = vrot.slane %v9963, %v10115
        %v10117 = vsel %vm10058, %v10116, %v10112
        %v10118 = vlaneseq
        %v10119 = vshrl.u32 %v10118, 7
        %v10120 = vsub.s32 %v10060, %v10119
        %v10121 = vrot.slane %v9964, %v10120
        %v10122 = vsel %vm10065, %v10121, %v10117
        %v10123 = vlaneseq
        %v10124 = vshrl.u32 %v10123, 7
        %v10125 = vsub.s32 %v10048, %v10124
        %v10126 = vrot.slane %v9965, %v10125
        %v10127 = vlaneseq
        %v10128 = vshrl.u32 %v10127, 7
        %v10129 = vsub.s32 %v10053, %v10128
        %v10130 = vrot.slane %v9966, %v10129
        %v10131 = vsel %vm10058, %v10130, %v10126
        %v10132 = vlaneseq
        %v10133 = vshrl.u32 %v10132, 7
        %v10134 = vsub.s32 %v10060, %v10133
        %v10135 = vrot.slane %v9967, %v10134
        %v10136 = vsel %vm10065, %v10135, %v10131
        %v10137 = vlaneseq
        %v10138 = vshrl.u32 %v10137, 7
        %v10139 = vsub.s32 %v10048, %v10138
        %v10140 = vrot.slane %v9968, %v10139
        %v10141 = vlaneseq
        %v10142 = vshrl.u32 %v10141, 7
        %v10143 = vsub.s32 %v10053, %v10142
        %v10144 = vrot.slane %v9969, %v10143
        %v10145 = vsel %vm10058, %v10144, %v10140
        %v10146 = vlaneseq
        %v10147 = vshrl.u32 %v10146, 7
        %v10148 = vsub.s32 %v10060, %v10147
        %v10149 = vrot.slane %v9970, %v10148
        %v10150 = vsel %vm10065, %v10149, %v10145
        %v10151 = vlaneseq
        %v10152 = vshrl.u32 %v10151, 7
        %v10153 = vsub.s32 %v10048, %v10152
        %v10154 = vrot.slane %v9971, %v10153
        %v10155 = vlaneseq
        %v10156 = vshrl.u32 %v10155, 7
        %v10157 = vsub.s32 %v10053, %v10156
        %v10158 = vrot.slane %v9972, %v10157
        %v10159 = vsel %vm10058, %v10158, %v10154
        %v10160 = vlaneseq
        %v10161 = vshrl.u32 %v10160, 7
        %v10162 = vsub.s32 %v10060, %v10161
        %v10163 = vrot.slane %v9973, %v10162
        %v10164 = vsel %vm10065, %v10163, %v10159
        %v10165 = vlaneseq
        %v10166 = vshrl.u32 %v10165, 7
        %v10167 = vsub.s32 %v10048, %v10166
        %v10168 = vrot.slane %v9974, %v10167
        %v10169 = vlaneseq
        %v10170 = vshrl.u32 %v10169, 7
        %v10171 = vsub.s32 %v10053, %v10170
        %v10172 = vrot.slane %v9975, %v10171
        %v10173 = vsel %vm10058, %v10172, %v10168
        %v10174 = vlaneseq
        %v10175 = vshrl.u32 %v10174, 7
        %v10176 = vsub.s32 %v10060, %v10175
        %v10177 = vrot.slane %v9976, %v10176
        %v10178 = vsel %vm10065, %v10177, %v10173
        %v10179 = vlaneseq
        %v10180 = vshrl.u32 %v10179, 7
        %v10181 = vsub.s32 %v10048, %v10180
        %v10182 = vrot.slane %v9977, %v10181
        %v10183 = vlaneseq
        %v10184 = vshrl.u32 %v10183, 7
        %v10185 = vsub.s32 %v10053, %v10184
        %v10186 = vrot.slane %v9978, %v10185
        %v10187 = vsel %vm10058, %v10186, %v10182
        %v10188 = vlaneseq
        %v10189 = vshrl.u32 %v10188, 7
        %v10190 = vsub.s32 %v10060, %v10189
        %v10191 = vrot.slane %v9979, %v10190
        %v10192 = vsel %vm10065, %v10191, %v10187
        %v10193 = vlaneseq
        %v10194 = vshrl.u32 %v10193, 7
        %v10195 = vsub.s32 %v10048, %v10194
        %v10196 = vrot.slane %v9980, %v10195
        %v10197 = vlaneseq
        %v10198 = vshrl.u32 %v10197, 7
        %v10199 = vsub.s32 %v10053, %v10198
        %v10200 = vrot.slane %v9981, %v10199
        %v10201 = vsel %vm10058, %v10200, %v10196
        %v10202 = vlaneseq
        %v10203 = vshrl.u32 %v10202, 7
        %v10204 = vsub.s32 %v10060, %v10203
        %v10205 = vrot.slane %v9982, %v10204
        %v10206 = vsel %vm10065, %v10205, %v10201
        %v10207 = vlaneseq
        %v10208 = vshrl.u32 %v10207, 7
        %v10209 = vsub.s32 %v10048, %v10208
        %v10210 = vrot.slane %v9983, %v10209
        %v10211 = vlaneseq
        %v10212 = vshrl.u32 %v10211, 7
        %v10213 = vsub.s32 %v10053, %v10212
        %v10214 = vrot.slane %v9984, %v10213
        %v10215 = vsel %vm10058, %v10214, %v10210
        %v10216 = vlaneseq
        %v10217 = vshrl.u32 %v10216, 7
        %v10218 = vsub.s32 %v10060, %v10217
        %v10219 = vrot.slane %v9985, %v10218
        %v10220 = vsel %vm10065, %v10219, %v10215
        %v10221 = vlaneseq
        %v10222 = vshrl.u32 %v10221, 7
        %v10223 = vsub.s32 %v10048, %v10222
        %v10224 = vrot.slane %v9986, %v10223
        %v10225 = vlaneseq
        %v10226 = vshrl.u32 %v10225, 7
        %v10227 = vsub.s32 %v10053, %v10226
        %v10228 = vrot.slane %v9987, %v10227
        %v10229 = vsel %vm10058, %v10228, %v10224
        %v10230 = vlaneseq
        %v10231 = vshrl.u32 %v10230, 7
        %v10232 = vsub.s32 %v10060, %v10231
        %v10233 = vrot.slane %v9988, %v10232
        %v10234 = vsel %vm10065, %v10233, %v10229
        %v10235 = vlaneseq
        %v10236 = vshrl.u32 %v10235, 7
        %v10237 = vsub.s32 %v10048, %v10236
        %v10238 = vrot.slane %v9989, %v10237
        %v10239 = vlaneseq
        %v10240 = vshrl.u32 %v10239, 7
        %v10241 = vsub.s32 %v10053, %v10240
        %v10242 = vrot.slane %v9990, %v10241
        %v10243 = vsel %vm10058, %v10242, %v10238
        %v10244 = vlaneseq
        %v10245 = vshrl.u32 %v10244, 7
        %v10246 = vsub.s32 %v10060, %v10245
        %v10247 = vrot.slane %v9991, %v10246
        %v10248 = vsel %vm10065, %v10247, %v10243
        %v10249 = vlaneseq
        %v10250 = vshrl.u32 %v10249, 7
        %v10251 = vsub.s32 %v10048, %v10250
        %v10252 = vrot.slane %v9992, %v10251
        %v10253 = vlaneseq
        %v10254 = vshrl.u32 %v10253, 7
        %v10255 = vsub.s32 %v10053, %v10254
        %v10256 = vrot.slane %v9993, %v10255
        %v10257 = vsel %vm10058, %v10256, %v10252
        %v10258 = vlaneseq
        %v10259 = vshrl.u32 %v10258, 7
        %v10260 = vsub.s32 %v10060, %v10259
        %v10261 = vrot.slane %v9994, %v10260
        %v10262 = vsel %vm10065, %v10261, %v10257
        %v10263 = vlaneseq
        %v10264 = vshrl.u32 %v10263, 7
        %v10265 = vsub.s32 %v10048, %v10264
        %v10266 = vrot.slane %v9995, %v10265
        %v10267 = vlaneseq
        %v10268 = vshrl.u32 %v10267, 7
        %v10269 = vsub.s32 %v10053, %v10268
        %v10270 = vrot.slane %v9996, %v10269
        %v10271 = vsel %vm10058, %v10270, %v10266
        %v10272 = vlaneseq
        %v10273 = vshrl.u32 %v10272, 7
        %v10274 = vsub.s32 %v10060, %v10273
        %v10275 = vrot.slane %v9997, %v10274
        %v10276 = vsel %vm10065, %v10275, %v10271
        %vm10277 = vcmask 1045509
        %v10278 = vsel %vm10277, %v10080, %v10066
        %vm10279 = vcmask 1046534
        %v10280 = vsel %vm10279, %v10094, %v10278
        %vm10281 = vcmask 1047559
        %v10282 = vsel %vm10281, %v10108, %v10280
        %vm10283 = vcmask 1041409
        %v10284 = vsel %vm10283, %v10136, %v10122
        %vm10285 = vcmask 1042434
        %v10286 = vsel %vm10285, %v10150, %v10284
        %vm10287 = vcmask 1043459
        %v10288 = vsel %vm10287, %v10164, %v10286
        %vm10289 = vcmask 1044484
        %v10290 = vsel %vm10289, %v10178, %v10288
        %v10291 = vsel %vm10277, %v10192, %v10290
        %v10292 = vsel %vm10279, %v10206, %v10291
        %v10293 = vsel %vm10281, %v10220, %v10292
        %v10294 = vsel %vm10283, %v10248, %v10234
        %v10295 = vsel %vm10285, %v10262, %v10294
        %v10296 = vsel %vm10287, %v10276, %v10295
        %vm10300 = vcmask 130052
        %10301 = vst.msk [vmem:[%s193 - $0x4] sm:$0xf0] %vm10300, %v10282
        %vm10302 = vcmask 130048
        %10303 = vst.msk [vmem:[%s193 + $0x4] sm:$0xff] %vm10302, %v10293
        %vm10304 = vcmask 125952
        %10305 = vst.msk [vmem:[%s193 + $0xc] sm:$0xf] %vm10304, %v10296
        %s10306 = sand.u32 %s95, 1
        %s10307 = scalar_lea.sflag [#allocation5], %s10306
        %s10308 = sand.u32 %s95, 1
        %s10309 = smul.addr %s10308, 16
        %s10310 = scalar_lea.vmem [#allocation8], %s10309
        // Predicated region
        $region41: #{deep_robust_estimator_forward.1} parent=31 // pred_check
          %p10311 = pneg %p105
        $region42: #{deep_robust_estimator_forward.1} parent=31 // pred_check_branch
          %10313 = sbr.rel (%p10311) target = $region44
        $region43: #{deep_robust_estimator_forward.1} parent=31 // pred_region
          %s10315 = ssub.s32 256, 256
          %10316 = vsyncadd %s10307, %s10315
          %s10317 = smul.addr %s19, 2
          %s10318 = smul.addr %s10317, 128
          %s10319 = scalar_lea.hbm %s3, %s10318
          %s10320 = sshll.u32 %s10310, 4
          %s10321 = int_to_ptr.vmem [resolvable:$true] %s10320
          %10326 = dma.vmem_to_hbm [thread:$0]  %s10321, 256, %s10319, %s10307, 128, 128, 8
        $region44: #{deep_robust_estimator_forward.1} parent=31 // pred_fallthru
          _
      $region32: #{deep_robust_estimator_forward.1} parent=5 // pred_fallthru
        _
      %p10327 = scmp.le.s32.totalorder 2, %s14
      // Predicated region
      $region45: #{deep_robust_estimator_forward.1} parent=5 // pred_check
        %p10328 = pneg %p10327
      $region46: #{deep_robust_estimator_forward.1} parent=5 // pred_check_branch
        %10330 = sbr.rel (%p10328) target = $region48
      $region47: #{deep_robust_estimator_forward.1} parent=5 // pred_region
        %s10331 = ssub.s32 %s14, 2
        // Predicated region
        $region49: #{deep_robust_estimator_forward.1} parent=47 // pred_check
          %p10332 = pneg %p111
        $region50: #{deep_robust_estimator_forward.1} parent=47 // pred_check_branch
          %10334 = sbr.rel (%p10332) target = $region52
        $region51: #{deep_robust_estimator_forward.1} parent=47 // pred_region
          %s10335 = sand.u32 %s96, 1
          %s10336 = scalar_lea.sflag [#allocation5], %s10335
          %s10337 = sand.u32 %s96, 1
          %s10338 = smul.addr %s10337, 16
          %s10339 = scalar_lea.vmem [#allocation8], %s10338
          %10340 = dma.done %s10336, 256
        $region52: #{deep_robust_estimator_forward.1} parent=47 // pred_fallthru
          _
      $region48: #{deep_robust_estimator_forward.1} parent=5 // pred_fallthru
        _
    $region6: #{deep_robust_estimator_forward.1} parent=1 // loop_footer
      %s18 = sadd.s32 1, %s14
    $region7: #{deep_robust_estimator_forward.1} parent=1 // loop_footer_branch
      %13 = sbr.rel target = $region3
    $region8: #{deep_robust_estimator_forward.1} parent=1 // loop_exit
      _
    %10341 = vsyncpa [#allocation4], 1
    %s10342 = scalar_lea.sflag [#allocation4], 1
    %10343 = vsyncpa %s10342, 1
    %10344 = vsyncpa [#allocation7], 1
    %10345 = vsyncpa [#allocation5], 1
    %s10346 = scalar_lea.sflag [#allocation5], 1
    %10347 = vsyncpa %s10346, 1

</llo_original>
